<compile_context>
chip_gen: v5e
topology: v5e:2x2
jax: 0.10.0
libtpu: 0.0.40
codegen_flags: <defaults>
</compile_context>

<pallas_src>
import functools

import jax
import jax.numpy as jnp
from jax.experimental import pallas as pl
from jax.experimental.pallas import tpu as pltpu


_VMEM_LIMIT_BYTES = 64 * 1024 * 1024  # <= physical VMEM on v5e/v6e/v7x


def _cparams():
    return pltpu.CompilerParams(
        dimension_semantics=("parallel", "parallel"),
        vmem_limit_bytes=_VMEM_LIMIT_BYTES)


# ---------------------------------------------------------------------------
# Pallas kernels
# ---------------------------------------------------------------------------

def _dist_kernel(xq_ref, xd_ref, out_ref):
    # Pairwise squared distances, query tile vs full database (per batch).
    # xq_ref: (1, tq, 3)   query points (BNC layout -> coords on lanes)
    # xd_ref: (1, 3, N)    database points (channel-first -> N on lanes)
    # out_ref: (1, tq, N)
    # TODO(synk): for very large N also tile the database axis and keep a
    # running in-kernel top-k so the (B, N, N) matrix never hits HBM.
    xq = xq_ref[0]                                   # (tq, 3)
    xd = xd_ref[0]                                   # (3, N)
    d0 = xq[:, 0:1] - xd[0:1, :]                     # (tq, N) VPU broadcast
    d1 = xq[:, 1:2] - xd[1:2, :]
    d2 = xq[:, 2:3] - xd[2:3, :]
    out_ref[0] = d0 * d0 + d1 * d1 + d2 * d2


def _mlp1_kernel(x_ref, w1_ref, b1_ref, w2_ref, b2_ref, out_ref):
    # mlp1: Conv1d 3->32 + ReLU, Conv1d 32->64 + ReLU  (per batch, N-tiled).
    # The 3-wide contraction is unrolled onto the VPU; 32->64 uses the MXU
    # with bf16 operands.  Output is stored in bf16 (halves the f / f_knn
    # HBM streams downstream).
    x = x_ref[0]                                     # (3, tn) f32
    w1 = w1_ref[...]                                 # (32, 3) f32
    h = (w1[:, 0:1] * x[0:1, :]
         + w1[:, 1:2] * x[1:2, :]
         + w1[:, 2:3] * x[2:3, :]
         + b1_ref[...])                              # (32, tn)
    h = jnp.maximum(h, 0.0)
    f = jnp.dot(w2_ref[...], h.astype(jnp.bfloat16),
                preferred_element_type=jnp.float32) + b2_ref[...]
    out_ref[0] = jnp.maximum(f, 0.0).astype(out_ref.dtype)   # (64, tn) bf16


def _re_feature_kernel(knn_ref, fk_ref, wp_ref, ws_ref, bs_ref,
                       wa1_ref, ba1_ref, wa2_ref, ba2_ref,
                       w31_ref, b31_ref, w32_ref, b32_ref, out_ref):
    # knn_ref: (1, 3, K1, tn)  relative neighbor coords (self excluded), f32
    # fk_ref:  (1, K, C, tn)   grouped features minus center, bf16
    # wp_ref:  (P, 3) f32          mlp_planes 1x1 conv weight (no bias)
    # ws_ref:  (S, P) bf16, bs_ref: (S, 1) f32     mlp_shapes
    # wa1_ref: (A, C) bf16, ba1_ref: (A, 1) f32    attention layer 1
    # wa2_ref: (C, A) bf16, ba2_ref: (C, 1) f32    attention layer 2 (no act)
    # w31_ref: (H, C+S) bf16, b31_ref: (H, 1) f32  mlp3 layer 1
    # w32_ref: (3r, H) bf16,  b32_ref: (3r, 1) f32 mlp3 layer 2 (no act)
    # out_ref: (1, 3r, tn) f32
    K1 = knn_ref.shape[2]
    K = fk_ref.shape[1]

    # ------------- LocalShape: streaming max over the K-1 neighbors --------
    k0 = knn_ref[0, 0]                               # (K1, tn)
    k1v = knn_ref[0, 1]
    k2 = knn_ref[0, 2]
    wp = wp_ref[...]                                 # (P, 3)
    wpx, wpy, wpz = wp[:, 0:1], wp[:, 1:2], wp[:, 2:3]
    planes_max = None
    for kk in range(K1):
        d0 = k0[kk:kk + 1, :]                        # (1, tn)
        d1 = k1v[kk:kk + 1, :]
        d2 = k2[kk:kk + 1, :]
        norm = jnp.sqrt(d0 * d0 + d1 * d1 + d2 * d2) + 1e-8
        inv_norm = pl.reciprocal(norm, approx=True)  # EUP, ~free
        # 1x1 conv 3 -> P unrolled over the size-3 contraction (VPU).
        pp = wpx * d0 + wpy * d1 + wpz * d2          # (P, tn)
        # norm * (pp/norm) * |pp/norm| == pp * |pp| / norm
        score = pp * jnp.abs(pp) * inv_norm          # (P, tn)
        planes_max = score if planes_max is None else jnp.maximum(planes_max, score)

    shapes = jnp.dot(ws_ref[...], planes_max.astype(jnp.bfloat16),
                     preferred_element_type=jnp.float32) + bs_ref[...]
    shapes = jnp.maximum(shapes, 0.0)                # (S, tn) f32

    # ------------- attention over the K neighbors (resident weights) -------
    wa1 = wa1_ref[...]                               # (A, C) bf16
    wa2 = wa2_ref[...]                               # (C, A) bf16
    ba1 = ba1_ref[...]                               # (A, 1) f32
    ba2 = ba2_ref[...]                               # (C, 1) f32
    logits = []
    m = None
    for kk in range(K):
        fkk = fk_ref[0, kk]                          # (C, tn) bf16
        hk = jnp.maximum(
            jnp.dot(wa1, fkk, preferred_element_type=jnp.float32) + ba1, 0.0)
        lk = jnp.dot(wa2, hk.astype(jnp.bfloat16),
                     preferred_element_type=jnp.float32) + ba2   # (C, tn) f32
        logits.append(lk)
        m = lk if m is None else jnp.maximum(m, lk)

    # softmax over the neighbor axis + weighted sum, streamed over K (f32).
    ssum = jnp.zeros_like(m)
    acc = jnp.zeros_like(m)
    for kk in range(K):
        e = jnp.exp(logits[kk] - m)
        ssum = ssum + e
        acc = acc + e * fk_ref[0, kk].astype(jnp.float32)
    f_att = acc * pl.reciprocal(ssum, approx=True)   # (C, tn) f32

    # ------------- concat([f_att, shapes]) + mlp3 (single fused matmul) ----
    feat = jnp.concatenate([f_att, shapes], axis=0).astype(jnp.bfloat16)  # (C+S, tn)
    h3 = jnp.maximum(
        jnp.dot(w31_ref[...], feat, preferred_element_type=jnp.float32)
        + b31_ref[...], 0.0)                         # (H, tn)
    delta = jnp.dot(w32_ref[...], h3.astype(jnp.bfloat16),
                    preferred_element_type=jnp.float32) + b32_ref[...]
    out_ref[0] = delta.astype(out_ref.dtype)         # (3r, tn)


# ---------------------------------------------------------------------------
# pallas_call wrappers
# ---------------------------------------------------------------------------

def pairwise_sqdist(xyz_bnc, xyz_cn, *, tq):
    # xyz_bnc: (B, N, 3) queries, xyz_cn: (B, 3, N) database -> (B, N, N)
    B, N, _ = xyz_bnc.shape
    return pl.pallas_call(
        _dist_kernel,
        out_shape=jax.ShapeDtypeStruct((B, N, N), jnp.float32),
        grid=(B, N // tq),
        in_specs=[
            pl.BlockSpec((1, tq, 3), lambda b, i: (b, i, 0)),
            pl.BlockSpec((1, 3, N), lambda b, i: (b, 0, 0)),
        ],
        out_specs=pl.BlockSpec((1, tq, N), lambda b, i: (b, i, 0)),
        compiler_params=_cparams(),
    )(xyz_bnc, xyz_cn)


def mlp1_apply(xyz, w1, b1, w2, b2, *, tn):
    # xyz: (B, 3, N) f32 -> (B, 64, N) bf16
    B, _, N = xyz.shape
    C2 = w2.shape[0]
    return pl.pallas_call(
        _mlp1_kernel,
        out_shape=jax.ShapeDtypeStruct((B, C2, N), jnp.bfloat16),
        grid=(B, N // tn),
        in_specs=[
            pl.BlockSpec((1, 3, tn), lambda b, j: (b, 0, j)),
            pl.BlockSpec(w1.shape, lambda b, j: (0, 0)),
            pl.BlockSpec(b1.shape, lambda b, j: (0, 0)),
            pl.BlockSpec(w2.shape, lambda b, j: (0, 0)),
            pl.BlockSpec(b2.shape, lambda b, j: (0, 0)),
        ],
        out_specs=pl.BlockSpec((1, C2, tn), lambda b, j: (b, 0, j)),
        compiler_params=_cparams(),
    )(xyz, w1, b1, w2.astype(jnp.bfloat16), b2)


def re_feature(knn_rel, f_knn, params, *, tn):
    # knn_rel: (B, 3, K-1, N) f32, f_knn: (B, K, C, N) bf16 -> (B, 3r, N) f32
    B, _, K1, N = knn_rel.shape
    K, C = f_knn.shape[1], f_knn.shape[2]
    wp = params["wp"]                                   # f32 (VPU path)
    ws = params["ws"].astype(jnp.bfloat16)
    bs = params["bs"]
    wa1 = params["wa1"].astype(jnp.bfloat16)
    ba1 = params["ba1"]
    wa2 = params["wa2"].astype(jnp.bfloat16)
    ba2 = params["ba2"]
    w31 = params["w31"].astype(jnp.bfloat16)
    b31 = params["b31"]
    w32 = params["w32"].astype(jnp.bfloat16)
    b32 = params["b32"]
    Cout = w32.shape[0]

    def rep(shape):
        return pl.BlockSpec(shape, lambda b, j: (0, 0))

    return pl.pallas_call(
        _re_feature_kernel,
        out_shape=jax.ShapeDtypeStruct((B, Cout, N), jnp.float32),
        grid=(B, N // tn),
        in_specs=[
            pl.BlockSpec((1, 3, K1, tn), lambda b, j: (b, 0, 0, j)),
            pl.BlockSpec((1, K, C, tn), lambda b, j: (b, 0, 0, j)),
            rep(wp.shape), rep(ws.shape), rep(bs.shape),
            rep(wa1.shape), rep(ba1.shape), rep(wa2.shape), rep(ba2.shape),
            rep(w31.shape), rep(b31.shape), rep(w32.shape), rep(b32.shape),
        ],
        out_specs=pl.BlockSpec((1, Cout, tn), lambda b, j: (b, 0, j)),
        compiler_params=_cparams(),
    )(knn_rel, f_knn, wp, ws, bs, wa1, ba1, wa2, ba2, w31, b31, w32, b32)


# ---------------------------------------------------------------------------
# Tile selection (generation-aware), plain-JAX glue, forward pass
# ---------------------------------------------------------------------------

def _pick_tile(n, b, target, min_steps=4):
    # Largest multiple-of-128 divisor of n that is <= target; shrink further
    # (if possible) so the grid keeps >= min_steps so both v7x TCs stay fed.
    assert n % 128 == 0, f"N must be a multiple of 128, got {n}"
    t = max(128, (min(target, n) // 128) * 128)
    while n % t:
        t -= 128
    while t > 128 and b * (n // t) < min_steps:
        nt = t - 128
        while nt > 128 and n % nt:
            nt -= 128
        if n % nt:
            break
        t = nt
    return t


def _feature_tile_target():
    # v7x halves VMEM (64 MiB/TC) vs v5e/v6e (128 MiB) -> cap the feature tile.
    try:
        vmem = pltpu.get_tpu_info().vmem_capacity_bytes
        return 256 if vmem <= 64 * 1024 * 1024 else 512
    except Exception:
        return 256


def group_neighbors_ckn(feat, idx):
    # feat: (B, C, N), idx: (B, N, K) -> (B, C, K, N)   (N lane-dense)
    return jax.vmap(lambda fb, ib: fb[:, ib.T])(feat, idx)


def group_neighbors_kcn(feat, idx):
    # feat: (B, C, N), idx: (B, N, K) -> (B, K, C, N)   (N lane-dense)
    def one(fb, ib):
        return jnp.transpose(fb[:, ib.T], (1, 0, 2))
    return jax.vmap(one)(feat, idx)


def re_forward(params, xyz, *, k=16, r=2, tn=None, tq=None):
    # xyz: (B, 3, N) -> (B, 3, r*N)
    B, _, N = xyz.shape
    xyz_bnc = jnp.transpose(xyz, (0, 2, 1))                     # (B, N, 3)

    tq = tq if tq is not None else _pick_tile(N, B, 512)
    tn_mlp1 = tn if tn is not None else _pick_tile(N, B, 512)
    tn_feat = tn if tn is not None else _pick_tile(N, B, _feature_tile_target())

    # kNN (self included at position 0): Pallas distance kernel + top_k glue.
    dist = pairwise_sqdist(xyz_bnc, xyz, tq=tq)                 # (B, N, N)
    _, idx = jax.lax.top_k(-dist, k)                            # nearest first
    idx = idx.astype(jnp.int32)
    # TODO(synk): fuse top-k and the gathers below into the kernels (scalar
    # prefetch + manual DMA gather) to remove the HBM round-trips.

    # LocalShape grouping: k-1 neighbors (self excluded), recentered (f32).
    knn_rel = group_neighbors_ckn(xyz, idx[:, :, 1:]) - xyz[:, :, None, :]  # (B,3,k-1,N)

    # mlp1 features (bf16) + grouped relative features (all k, self incl.).
    f = mlp1_apply(xyz, params["w11"], params["b11"],
                   params["w12"], params["b12"], tn=tn_mlp1)     # (B, 64, N) bf16
    f_knn = group_neighbors_kcn(f, idx) - f[:, None, :, :]       # (B, k, 64, N) bf16

    delta = re_feature(knn_rel, f_knn, params, tn=tn_feat)       # (B, 3r, N) f32

    # x = xyz.repeat(1,1,r) + 0.15 * mlp3(f).view(B, 3, r*N)
    x = jnp.tile(xyz, (1, 1, r)) + 0.15 * delta.reshape(B, 3, r * N)
    return x


def init_params(key, *, r=2, nPlanes=64, nShapes=64):
    ks = jax.random.split(key, 15)

    def w(i, shape):
        return 0.1 * jax.random.normal(ks[i], shape, jnp.float32)

    return dict(
        # mlp1: [3, 32, 64], last_act=True
        w11=w(0, (32, 3)), b11=w(1, (32, 1)),
        w12=w(2, (64, 32)), b12=w(3, (64, 1)),
        # LocalShape: mlp_planes (3 -> nPlanes, no bias), mlp_shapes (nPlanes -> nShapes)
        wp=w(4, (nPlanes, 3)),
        ws=w(5, (nShapes, nPlanes)), bs=w(6, (nShapes, 1)),
        # attention: [64, 128, 64], 2D conv, last_act=False
        wa1=w(7, (128, 64)), ba1=w(8, (128, 1)),
        wa2=w(9, (64, 128)), ba2=w(10, (64, 1)),
        # mlp3: [64+64, 128, 3r], last_act=False
        w31=w(11, (128, 64 + nShapes)), b31=w(12, (128, 1)),
        w32=w(13, (3 * r, 128)), b32=w(14, (3 * r, 1)),
    )


if __name__ == "__main__":
    B, N = 2, 256        # N a multiple of 128 so every output is lane-dense
    k, r = 16, 2         # module defaults: k=16 neighbors, upsampling ratio r=2

    key = jax.random.PRNGKey(0)
    kx, kp = jax.random.split(key)
    xyz = jax.random.normal(kx, (B, 3, N), jnp.float32)
    params = init_params(kp, r=r)

    fwd = jax.jit(functools.partial(re_forward, k=k, r=r))
    x = fwd(params, xyz)
    jax.block_until_ready(x)

    assert x.shape == (B, 3, r * N), x.shape
    assert bool(jnp.all(jnp.isfinite(x)))
    print("KERNEL_OK")
</pallas_src>

<mosaic_0001>
module attributes {stable_mosaic.version = 11 : i64} {
  func.func @_dist_kernel(%arg0: i32, %arg1: i32, %arg2: memref<1x128x3xf32, #tpu.memory_space<vmem>>, %arg3: memref<1x3x256xf32, #tpu.memory_space<vmem>>, %arg4: memref<1x128x256xf32, #tpu.memory_space<vmem>>) attributes {dimension_semantics = [#tpu.dimension_semantics<parallel>, #tpu.dimension_semantics<parallel>], iteration_bounds = array<i64: 2, 2>, scalar_prefetch = 0 : i64, scratch_operands = 0 : i64, tpu.core_type = #tpu.core_type<tc>, window_params = [{transform_indices = @transform_0, window_bounds = array<i64: 1, 128, 3>}, {transform_indices = @transform_1, window_bounds = array<i64: 1, 3, 256>}, {transform_indices = @transform_2, window_bounds = array<i64: 1, 128, 256>}]} {
    %c0 = arith.constant 0 : index
    %c0_0 = arith.constant 0 : index
    %c0_1 = arith.constant 0 : index
    %0 = vector.load %arg2[%c0, %c0_0, %c0_1] : memref<1x128x3xf32, #tpu.memory_space<vmem>>, vector<1x128x3xf32>
    %1 = vector.shape_cast %0 : vector<1x128x3xf32> to vector<128x3xf32>
    %c0_2 = arith.constant 0 : index
    %c0_3 = arith.constant 0 : index
    %c0_4 = arith.constant 0 : index
    %2 = vector.load %arg3[%c0_2, %c0_3, %c0_4] : memref<1x3x256xf32, #tpu.memory_space<vmem>>, vector<1x3x256xf32>
    %3 = vector.shape_cast %2 : vector<1x3x256xf32> to vector<3x256xf32>
    %4 = vector.extract_strided_slice %1 {offsets = [0, 0], sizes = [128, 1], strides = [1, 1]} : vector<128x3xf32> to vector<128x1xf32>
    %5 = vector.extract_strided_slice %3 {offsets = [0, 0], sizes = [1, 256], strides = [1, 1]} : vector<3x256xf32> to vector<1x256xf32>
    %6 = vector.broadcast %4 : vector<128x1xf32> to vector<128x256xf32>
    %7 = vector.broadcast %5 : vector<1x256xf32> to vector<128x256xf32>
    %8 = arith.subf %6, %7 : vector<128x256xf32>
    %9 = vector.extract_strided_slice %1 {offsets = [0, 1], sizes = [128, 1], strides = [1, 1]} : vector<128x3xf32> to vector<128x1xf32>
    %10 = vector.extract_strided_slice %3 {offsets = [1, 0], sizes = [1, 256], strides = [1, 1]} : vector<3x256xf32> to vector<1x256xf32>
    %11 = vector.broadcast %9 : vector<128x1xf32> to vector<128x256xf32>
    %12 = vector.broadcast %10 : vector<1x256xf32> to vector<128x256xf32>
    %13 = arith.subf %11, %12 : vector<128x256xf32>
    %14 = vector.extract_strided_slice %1 {offsets = [0, 2], sizes = [128, 1], strides = [1, 1]} : vector<128x3xf32> to vector<128x1xf32>
    %15 = vector.extract_strided_slice %3 {offsets = [2, 0], sizes = [1, 256], strides = [1, 1]} : vector<3x256xf32> to vector<1x256xf32>
    %16 = vector.broadcast %14 : vector<128x1xf32> to vector<128x256xf32>
    %17 = vector.broadcast %15 : vector<1x256xf32> to vector<128x256xf32>
    %18 = arith.subf %16, %17 : vector<128x256xf32>
    %19 = arith.mulf %8, %8 : vector<128x256xf32>
    %20 = arith.mulf %13, %13 : vector<128x256xf32>
    %21 = arith.addf %19, %20 : vector<128x256xf32>
    %22 = arith.mulf %18, %18 : vector<128x256xf32>
    %23 = arith.addf %21, %22 : vector<128x256xf32>
    %c0_5 = arith.constant 0 : index
    %c0_6 = arith.constant 0 : index
    %c0_7 = arith.constant 0 : index
    %24 = vector.load %arg4[%c0_5, %c0_6, %c0_7] : memref<1x128x256xf32, #tpu.memory_space<vmem>>, vector<1x128x256xf32>
    %25 = vector.shape_cast %24 : vector<1x128x256xf32> to vector<128x256xf32>
    %26 = vector.shape_cast %23 : vector<128x256xf32> to vector<1x128x256xf32>
    tpu.vector_store %arg4[%c0_5, %c0_6, %c0_7], %26 {strides = array<i32>} : memref<1x128x256xf32, #tpu.memory_space<vmem>>, vector<1x128x256xf32>,
    return
  }
  func.func @transform_0(%arg0: i32, %arg1: i32) -> (i32, i32, i32) {
    %c0_i32 = arith.constant 0 : i32
    %c0_i32_0 = arith.constant 0 : i32
    return %arg0, %arg1, %c0_i32 : i32, i32, i32
  }
  func.func @transform_1(%arg0: i32, %arg1: i32) -> (i32, i32, i32) {
    %c0_i32 = arith.constant 0 : i32
    %c0_i32_0 = arith.constant 0 : i32
    %c0_i32_1 = arith.constant 0 : i32
    return %arg0, %c0_i32, %c0_i32_0 : i32, i32, i32
  }
  func.func @transform_2(%arg0: i32, %arg1: i32) -> (i32, i32, i32) {
    %c0_i32 = arith.constant 0 : i32
    %c0_i32_0 = arith.constant 0 : i32
    return %arg0, %arg1, %c0_i32 : i32, i32, i32
  }
}

module attributes {stable_mosaic.version = 11 : i64} {
  func.func @_mlp1_kernel(%arg0: i32, %arg1: i32, %arg2: memref<1x3x128xf32, #tpu.memory_space<vmem>>, %arg3: memref<32x3xf32, #tpu.memory_space<vmem>>, %arg4: memref<32x1xf32, #tpu.memory_space<vmem>>, %arg5: memref<64x32xbf16, #tpu.memory_space<vmem>>, %arg6: memref<64x1xf32, #tpu.memory_space<vmem>>, %arg7: memref<1x64x128xbf16, #tpu.memory_space<vmem>>) attributes {dimension_semantics = [#tpu.dimension_semantics<parallel>, #tpu.dimension_semantics<parallel>], iteration_bounds = array<i64: 2, 2>, scalar_prefetch = 0 : i64, scratch_operands = 0 : i64, tpu.core_type = #tpu.core_type<tc>, window_params = [{transform_indices = @transform_0, window_bounds = array<i64: 1, 3, 128>}, {pipeline_mode = #tpu.pipeline_mode<synchronous>, transform_indices = @transform_1, window_bounds = array<i64: 32, 3>}, {pipeline_mode = #tpu.pipeline_mode<synchronous>, transform_indices = @transform_2, window_bounds = array<i64: 32, 1>}, {pipeline_mode = #tpu.pipeline_mode<synchronous>, transform_indices = @transform_3, window_bounds = array<i64: 64, 32>}, {pipeline_mode = #tpu.pipeline_mode<synchronous>, transform_indices = @transform_4, window_bounds = array<i64: 64, 1>}, {transform_indices = @transform_5, window_bounds = array<i64: 1, 64, 128>}]} {
    %c0 = arith.constant 0 : index
    %c0_0 = arith.constant 0 : index
    %c0_1 = arith.constant 0 : index
    %0 = vector.load %arg2[%c0, %c0_0, %c0_1] : memref<1x3x128xf32, #tpu.memory_space<vmem>>, vector<1x3x128xf32>
    %1 = vector.shape_cast %0 : vector<1x3x128xf32> to vector<3x128xf32>
    %c0_2 = arith.constant 0 : index
    %c0_3 = arith.constant 0 : index
    %2 = vector.load %arg3[%c0_2, %c0_3] : memref<32x3xf32, #tpu.memory_space<vmem>>, vector<32x3xf32>
    %3 = vector.extract_strided_slice %2 {offsets = [0, 0], sizes = [32, 1], strides = [1, 1]} : vector<32x3xf32> to vector<32x1xf32>
    %4 = vector.extract_strided_slice %1 {offsets = [0, 0], sizes = [1, 128], strides = [1, 1]} : vector<3x128xf32> to vector<1x128xf32>
    %5 = vector.broadcast %3 : vector<32x1xf32> to vector<32x128xf32>
    %6 = vector.broadcast %4 : vector<1x128xf32> to vector<32x128xf32>
    %7 = arith.mulf %5, %6 : vector<32x128xf32>
    %8 = vector.extract_strided_slice %2 {offsets = [0, 1], sizes = [32, 1], strides = [1, 1]} : vector<32x3xf32> to vector<32x1xf32>
    %9 = vector.extract_strided_slice %1 {offsets = [1, 0], sizes = [1, 128], strides = [1, 1]} : vector<3x128xf32> to vector<1x128xf32>
    %10 = vector.broadcast %8 : vector<32x1xf32> to vector<32x128xf32>
    %11 = vector.broadcast %9 : vector<1x128xf32> to vector<32x128xf32>
    %12 = arith.mulf %10, %11 : vector<32x128xf32>
    %13 = arith.addf %7, %12 : vector<32x128xf32>
    %14 = vector.extract_strided_slice %2 {offsets = [0, 2], sizes = [32, 1], strides = [1, 1]} : vector<32x3xf32> to vector<32x1xf32>
    %15 = vector.extract_strided_slice %1 {offsets = [2, 0], sizes = [1, 128], strides = [1, 1]} : vector<3x128xf32> to vector<1x128xf32>
    %16 = vector.broadcast %14 : vector<32x1xf32> to vector<32x128xf32>
    %17 = vector.broadcast %15 : vector<1x128xf32> to vector<32x128xf32>
    %18 = arith.mulf %16, %17 : vector<32x128xf32>
    %19 = arith.addf %13, %18 : vector<32x128xf32>
    %c0_4 = arith.constant 0 : index
    %c0_5 = arith.constant 0 : index
    %20 = vector.load %arg4[%c0_4, %c0_5] : memref<32x1xf32, #tpu.memory_space<vmem>>, vector<32x1xf32>
    %21 = vector.broadcast %20 : vector<32x1xf32> to vector<32x128xf32>
    %22 = arith.addf %19, %21 : vector<32x128xf32>
    %cst = arith.constant 0.000000e+00 : f32
    %23 = vector.broadcast %cst : f32 to vector<32x128xf32>
    %24 = arith.maximumf %22, %23 : vector<32x128xf32>
    %c0_6 = arith.constant 0 : index
    %c0_7 = arith.constant 0 : index
    %25 = vector.load %arg5[%c0_6, %c0_7] : memref<64x32xbf16, #tpu.memory_space<vmem>>, vector<64x32xbf16>
    %26 = arith.truncf %24 : vector<32x128xf32> to vector<32x128xbf16>
    %cst_8 = arith.constant dense<0.000000e+00> : vector<64x128xf32>
    %27 = tpu.matmul %25, %26, %cst_8 {dimension_numbers = #tpu.dot_dimension_numbers<[1], [0], [0], [1], [0, 0, 1, 1], [], []>} : vector<64x32xbf16>, vector<32x128xbf16>, vector<64x128xf32> -> vector<64x128xf32>
    %c0_9 = arith.constant 0 : index
    %c0_10 = arith.constant 0 : index
    %28 = vector.load %arg6[%c0_9, %c0_10] : memref<64x1xf32, #tpu.memory_space<vmem>>, vector<64x1xf32>
    %29 = vector.broadcast %28 : vector<64x1xf32> to vector<64x128xf32>
    %30 = arith.addf %27, %29 : vector<64x128xf32>
    %cst_11 = arith.constant 0.000000e+00 : f32
    %31 = vector.broadcast %cst_11 : f32 to vector<64x128xf32>
    %32 = arith.maximumf %30, %31 : vector<64x128xf32>
    %33 = arith.truncf %32 : vector<64x128xf32> to vector<64x128xbf16>
    %c0_12 = arith.constant 0 : index
    %c0_13 = arith.constant 0 : index
    %c0_14 = arith.constant 0 : index
    %34 = vector.load %arg7[%c0_12, %c0_13, %c0_14] : memref<1x64x128xbf16, #tpu.memory_space<vmem>>, vector<1x64x128xbf16>
    %35 = vector.shape_cast %34 : vector<1x64x128xbf16> to vector<64x128xbf16>
    %36 = vector.shape_cast %33 : vector<64x128xbf16> to vector<1x64x128xbf16>
    tpu.vector_store %arg7[%c0_12, %c0_13, %c0_14], %36 {strides = array<i32>} : memref<1x64x128xbf16, #tpu.memory_space<vmem>>, vector<1x64x128xbf16>,
    return
  }
  func.func @transform_0(%arg0: i32, %arg1: i32) -> (i32, i32, i32) {
    %c0_i32 = arith.constant 0 : i32
    %c0_i32_0 = arith.constant 0 : i32
    return %arg0, %c0_i32, %arg1 : i32, i32, i32
  }
  func.func @transform_1(%arg0: i32, %arg1: i32) -> (i32, i32) {
    %c0_i32 = arith.constant 0 : i32
    %c0_i32_0 = arith.constant 0 : i32
    %c0_i32_1 = arith.constant 0 : i32
    return %c0_i32, %c0_i32_0 : i32, i32
  }
  func.func @transform_2(%arg0: i32, %arg1: i32) -> (i32, i32) {
    %c0_i32 = arith.constant 0 : i32
    %c0_i32_0 = arith.constant 0 : i32
    %c0_i32_1 = arith.constant 0 : i32
    return %c0_i32, %c0_i32_0 : i32, i32
  }
  func.func @transform_3(%arg0: i32, %arg1: i32) -> (i32, i32) {
    %c0_i32 = arith.constant 0 : i32
    %c0_i32_0 = arith.constant 0 : i32
    %c0_i32_1 = arith.constant 0 : i32
    return %c0_i32, %c0_i32_0 : i32, i32
  }
  func.func @transform_4(%arg0: i32, %arg1: i32) -> (i32, i32) {
    %c0_i32 = arith.constant 0 : i32
    %c0_i32_0 = arith.constant 0 : i32
    %c0_i32_1 = arith.constant 0 : i32
    return %c0_i32, %c0_i32_0 : i32, i32
  }
  func.func @transform_5(%arg0: i32, %arg1: i32) -> (i32, i32, i32) {
    %c0_i32 = arith.constant 0 : i32
    %c0_i32_0 = arith.constant 0 : i32
    return %arg0, %c0_i32, %arg1 : i32, i32, i32
  }
}

module attributes {stable_mosaic.version = 11 : i64} {
  func.func @_re_feature_kernel(%arg0: i32, %arg1: i32, %arg2: memref<1x3x15x128xf32, #tpu.memory_space<vmem>>, %arg3: memref<1x16x64x128xbf16, #tpu.memory_space<vmem>>, %arg4: memref<64x3xf32, #tpu.memory_space<vmem>>, %arg5: memref<64x64xbf16, #tpu.memory_space<vmem>>, %arg6: memref<64x1xf32, #tpu.memory_space<vmem>>, %arg7: memref<128x64xbf16, #tpu.memory_space<vmem>>, %arg8: memref<128x1xf32, #tpu.memory_space<vmem>>, %arg9: memref<64x128xbf16, #tpu.memory_space<vmem>>, %arg10: memref<64x1xf32, #tpu.memory_space<vmem>>, %arg11: memref<128x128xbf16, #tpu.memory_space<vmem>>, %arg12: memref<128x1xf32, #tpu.memory_space<vmem>>, %arg13: memref<6x128xbf16, #tpu.memory_space<vmem>>, %arg14: memref<6x1xf32, #tpu.memory_space<vmem>>, %arg15: memref<1x6x128xf32, #tpu.memory_space<vmem>>) attributes {dimension_semantics = [#tpu.dimension_semantics<parallel>, #tpu.dimension_semantics<parallel>], iteration_bounds = array<i64: 2, 2>, scalar_prefetch = 0 : i64, scratch_operands = 0 : i64, tpu.core_type = #tpu.core_type<tc>, window_params = [{transform_indices = @transform_0, window_bounds = array<i64: 1, 3, 15, 128>}, {transform_indices = @transform_1, window_bounds = array<i64: 1, 16, 64, 128>}, {pipeline_mode = #tpu.pipeline_mode<synchronous>, transform_indices = @transform_2, window_bounds = array<i64: 64, 3>}, {pipeline_mode = #tpu.pipeline_mode<synchronous>, transform_indices = @transform_3, window_bounds = array<i64: 64, 64>}, {pipeline_mode = #tpu.pipeline_mode<synchronous>, transform_indices = @transform_4, window_bounds = array<i64: 64, 1>}, {pipeline_mode = #tpu.pipeline_mode<synchronous>, transform_indices = @transform_5, window_bounds = array<i64: 128, 64>}, {pipeline_mode = #tpu.pipeline_mode<synchronous>, transform_indices = @transform_6, window_bounds = array<i64: 128, 1>}, {pipeline_mode = #tpu.pipeline_mode<synchronous>, transform_indices = @transform_7, window_bounds = array<i64: 64, 128>}, {pipeline_mode = #tpu.pipeline_mode<synchronous>, transform_indices = @transform_8, window_bounds = array<i64: 64, 1>}, {pipeline_mode = #tpu.pipeline_mode<synchronous>, transform_indices = @transform_9, window_bounds = array<i64: 128, 128>}, {pipeline_mode = #tpu.pipeline_mode<synchronous>, transform_indices = @transform_10, window_bounds = array<i64: 128, 1>}, {pipeline_mode = #tpu.pipeline_mode<synchronous>, transform_indices = @transform_11, window_bounds = array<i64: 6, 128>}, {pipeline_mode = #tpu.pipeline_mode<synchronous>, transform_indices = @transform_12, window_bounds = array<i64: 6, 1>}, {transform_indices = @transform_13, window_bounds = array<i64: 1, 6, 128>}]} {
    %c0 = arith.constant 0 : index
    %c0_0 = arith.constant 0 : index
    %c0_1 = arith.constant 0 : index
    %c0_2 = arith.constant 0 : index
    %0 = vector.load %arg2[%c0, %c0_0, %c0_1, %c0_2] : memref<1x3x15x128xf32, #tpu.memory_space<vmem>>, vector<1x1x15x128xf32>
    %1 = vector.shape_cast %0 : vector<1x1x15x128xf32> to vector<15x128xf32>
    %c0_3 = arith.constant 0 : index
    %c1 = arith.constant 1 : index
    %c0_4 = arith.constant 0 : index
    %c0_5 = arith.constant 0 : index
    %2 = vector.load %arg2[%c0_3, %c1, %c0_4, %c0_5] : memref<1x3x15x128xf32, #tpu.memory_space<vmem>>, vector<1x1x15x128xf32>
    %3 = vector.shape_cast %2 : vector<1x1x15x128xf32> to vector<15x128xf32>
    %c0_6 = arith.constant 0 : index
    %c2 = arith.constant 2 : index
    %c0_7 = arith.constant 0 : index
    %c0_8 = arith.constant 0 : index
    %4 = vector.load %arg2[%c0_6, %c2, %c0_7, %c0_8] : memref<1x3x15x128xf32, #tpu.memory_space<vmem>>, vector<1x1x15x128xf32>
    %5 = vector.shape_cast %4 : vector<1x1x15x128xf32> to vector<15x128xf32>
    %c0_9 = arith.constant 0 : index
    %c0_10 = arith.constant 0 : index
    %6 = vector.load %arg4[%c0_9, %c0_10] : memref<64x3xf32, #tpu.memory_space<vmem>>, vector<64x3xf32>
    %7 = vector.extract_strided_slice %6 {offsets = [0, 0], sizes = [64, 1], strides = [1, 1]} : vector<64x3xf32> to vector<64x1xf32>
    %8 = vector.extract_strided_slice %6 {offsets = [0, 1], sizes = [64, 1], strides = [1, 1]} : vector<64x3xf32> to vector<64x1xf32>
    %9 = vector.extract_strided_slice %6 {offsets = [0, 2], sizes = [64, 1], strides = [1, 1]} : vector<64x3xf32> to vector<64x1xf32>
    %10 = vector.extract_strided_slice %1 {offsets = [0, 0], sizes = [1, 128], strides = [1, 1]} : vector<15x128xf32> to vector<1x128xf32>
    %11 = vector.extract_strided_slice %3 {offsets = [0, 0], sizes = [1, 128], strides = [1, 1]} : vector<15x128xf32> to vector<1x128xf32>
    %12 = vector.extract_strided_slice %5 {offsets = [0, 0], sizes = [1, 128], strides = [1, 1]} : vector<15x128xf32> to vector<1x128xf32>
    %13 = arith.mulf %10, %10 : vector<1x128xf32>
    %14 = arith.mulf %11, %11 : vector<1x128xf32>
    %15 = arith.addf %13, %14 : vector<1x128xf32>
    %16 = arith.mulf %12, %12 : vector<1x128xf32>
    %17 = arith.addf %15, %16 : vector<1x128xf32>
    %18 = math.sqrt %17 : vector<1x128xf32>
    %cst = arith.constant 9.99999993E-9 : f32
    %19 = vector.broadcast %cst : f32 to vector<1x128xf32>
    %20 = arith.addf %18, %19 : vector<1x128xf32>
    %21 = tpu.reciprocal %20 {approx = true} : vector<1x128xf32> -> vector<1x128xf32>
    %22 = vector.broadcast %7 : vector<64x1xf32> to vector<64x128xf32>
    %23 = vector.broadcast %10 : vector<1x128xf32> to vector<64x128xf32>
    %24 = arith.mulf %22, %23 : vector<64x128xf32>
    %25 = vector.broadcast %8 : vector<64x1xf32> to vector<64x128xf32>
    %26 = vector.broadcast %11 : vector<1x128xf32> to vector<64x128xf32>
    %27 = arith.mulf %25, %26 : vector<64x128xf32>
    %28 = arith.addf %24, %27 : vector<64x128xf32>
    %29 = vector.broadcast %9 : vector<64x1xf32> to vector<64x128xf32>
    %30 = vector.broadcast %12 : vector<1x128xf32> to vector<64x128xf32>
    %31 = arith.mulf %29, %30 : vector<64x128xf32>
    %32 = arith.addf %28, %31 : vector<64x128xf32>
    %33 = math.absf %32 : vector<64x128xf32>
    %34 = arith.mulf %32, %33 : vector<64x128xf32>
    %35 = vector.broadcast %21 : vector<1x128xf32> to vector<64x128xf32>
    %36 = arith.mulf %34, %35 : vector<64x128xf32>
    %37 = vector.extract_strided_slice %1 {offsets = [1, 0], sizes = [1, 128], strides = [1, 1]} : vector<15x128xf32> to vector<1x128xf32>
    %38 = vector.extract_strided_slice %3 {offsets = [1, 0], sizes = [1, 128], strides = [1, 1]} : vector<15x128xf32> to vector<1x128xf32>
    %39 = vector.extract_strided_slice %5 {offsets = [1, 0], sizes = [1, 128], strides = [1, 1]} : vector<15x128xf32> to vector<1x128xf32>
    %40 = arith.mulf %37, %37 : vector<1x128xf32>
    %41 = arith.mulf %38, %38 : vector<1x128xf32>
    %42 = arith.addf %40, %41 : vector<1x128xf32>
    %43 = arith.mulf %39, %39 : vector<1x128xf32>
    %44 = arith.addf %42, %43 : vector<1x128xf32>
    %45 = math.sqrt %44 : vector<1x128xf32>
    %cst_11 = arith.constant 9.99999993E-9 : f32
    %46 = vector.broadcast %cst_11 : f32 to vector<1x128xf32>
    %47 = arith.addf %45, %46 : vector<1x128xf32>
    %48 = tpu.reciprocal %47 {approx = true} : vector<1x128xf32> -> vector<1x128xf32>
    %49 = vector.broadcast %7 : vector<64x1xf32> to vector<64x128xf32>
    %50 = vector.broadcast %37 : vector<1x128xf32> to vector<64x128xf32>
    %51 = arith.mulf %49, %50 : vector<64x128xf32>
    %52 = vector.broadcast %8 : vector<64x1xf32> to vector<64x128xf32>
    %53 = vector.broadcast %38 : vector<1x128xf32> to vector<64x128xf32>
    %54 = arith.mulf %52, %53 : vector<64x128xf32>
    %55 = arith.addf %51, %54 : vector<64x128xf32>
    %56 = vector.broadcast %9 : vector<64x1xf32> to vector<64x128xf32>
    %57 = vector.broadcast %39 : vector<1x128xf32> to vector<64x128xf32>
    %58 = arith.mulf %56, %57 : vector<64x128xf32>
    %59 = arith.addf %55, %58 : vector<64x128xf32>
    %60 = math.absf %59 : vector<64x128xf32>
    %61 = arith.mulf %59, %60 : vector<64x128xf32>
    %62 = vector.broadcast %48 : vector<1x128xf32> to vector<64x128xf32>
    %63 = arith.mulf %61, %62 : vector<64x128xf32>
    %64 = arith.maximumf %36, %63 : vector<64x128xf32>
    %65 = vector.extract_strided_slice %1 {offsets = [2, 0], sizes = [1, 128], strides = [1, 1]} : vector<15x128xf32> to vector<1x128xf32>
    %66 = vector.extract_strided_slice %3 {offsets = [2, 0], sizes = [1, 128], strides = [1, 1]} : vector<15x128xf32> to vector<1x128xf32>
    %67 = vector.extract_strided_slice %5 {offsets = [2, 0], sizes = [1, 128], strides = [1, 1]} : vector<15x128xf32> to vector<1x128xf32>
    %68 = arith.mulf %65, %65 : vector<1x128xf32>
    %69 = arith.mulf %66, %66 : vector<1x128xf32>
    %70 = arith.addf %68, %69 : vector<1x128xf32>
    %71 = arith.mulf %67, %67 : vector<1x128xf32>
    %72 = arith.addf %70, %71 : vector<1x128xf32>
    %73 = math.sqrt %72 : vector<1x128xf32>
    %cst_12 = arith.constant 9.99999993E-9 : f32
    %74 = vector.broadcast %cst_12 : f32 to vector<1x128xf32>
    %75 = arith.addf %73, %74 : vector<1x128xf32>
    %76 = tpu.reciprocal %75 {approx = true} : vector<1x128xf32> -> vector<1x128xf32>
    %77 = vector.broadcast %7 : vector<64x1xf32> to vector<64x128xf32>
    %78 = vector.broadcast %65 : vector<1x128xf32> to vector<64x128xf32>
    %79 = arith.mulf %77, %78 : vector<64x128xf32>
    %80 = vector.broadcast %8 : vector<64x1xf32> to vector<64x128xf32>
    %81 = vector.broadcast %66 : vector<1x128xf32> to vector<64x128xf32>
    %82 = arith.mulf %80, %81 : vector<64x128xf32>
    %83 = arith.addf %79, %82 : vector<64x128xf32>
    %84 = vector.broadcast %9 : vector<64x1xf32> to vector<64x128xf32>
    %85 = vector.broadcast %67 : vector<1x128xf32> to vector<64x128xf32>
    %86 = arith.mulf %84, %85 : vector<64x128xf32>
    %87 = arith.addf %83, %86 : vector<64x128xf32>
    %88 = math.absf %87 : vector<64x128xf32>
    %89 = arith.mulf %87, %88 : vector<64x128xf32>
    %90 = vector.broadcast %76 : vector<1x128xf32> to vector<64x128xf32>
    %91 = arith.mulf %89, %90 : vector<64x128xf32>
    %92 = arith.maximumf %64, %91 : vector<64x128xf32>
    %93 = vector.extract_strided_slice %1 {offsets = [3, 0], sizes = [1, 128], strides = [1, 1]} : vector<15x128xf32> to vector<1x128xf32>
    %94 = vector.extract_strided_slice %3 {offsets = [3, 0], sizes = [1, 128], strides = [1, 1]} : vector<15x128xf32> to vector<1x128xf32>
    %95 = vector.extract_strided_slice %5 {offsets = [3, 0], sizes = [1, 128], strides = [1, 1]} : vector<15x128xf32> to vector<1x128xf32>
    %96 = arith.mulf %93, %93 : vector<1x128xf32>
    %97 = arith.mulf %94, %94 : vector<1x128xf32>
    %98 = arith.addf %96, %97 : vector<1x128xf32>
    %99 = arith.mulf %95, %95 : vector<1x128xf32>
    %100 = arith.addf %98, %99 : vector<1x128xf32>
    %101 = math.sqrt %100 : vector<1x128xf32>
    %cst_13 = arith.constant 9.99999993E-9 : f32
    %102 = vector.broadcast %cst_13 : f32 to vector<1x128xf32>
    %103 = arith.addf %101, %102 : vector<1x128xf32>
    %104 = tpu.reciprocal %103 {approx = true} : vector<1x128xf32> -> vector<1x128xf32>
    %105 = vector.broadcast %7 : vector<64x1xf32> to vector<64x128xf32>
    %106 = vector.broadcast %93 : vector<1x128xf32> to vector<64x128xf32>
    %107 = arith.mulf %105, %106 : vector<64x128xf32>
    %108 = vector.broadcast %8 : vector<64x1xf32> to vector<64x128xf32>
    %109 = vector.broadcast %94 : vector<1x128xf32> to vector<64x128xf32>
    %110 = arith.mulf %108, %109 : vector<64x128xf32>
    %111 = arith.addf %107, %110 : vector<64x128xf32>
    %112 = vector.broadcast %9 : vector<64x1xf32> to vector<64x128xf32>
    %113 = vector.broadcast %95 : vector<1x128xf32> to vector<64x128xf32>
    %114 = arith.mulf %112, %113 : vector<64x128xf32>
    %115 = arith.addf %111, %114 : vector<64x128xf32>
    %116 = math.absf %115 : vector<64x128xf32>
    %117 = arith.mulf %115, %116 : vector<64x128xf32>
    %118 = vector.broadcast %104 : vector<1x128xf32> to vector<64x128xf32>
    %119 = arith.mulf %117, %118 : vector<64x128xf32>
    %120 = arith.maximumf %92, %119 : vector<64x128xf32>
    %121 = vector.extract_strided_slice %1 {offsets = [4, 0], sizes = [1, 128], strides = [1, 1]} : vector<15x128xf32> to vector<1x128xf32>
    %122 = vector.extract_strided_slice %3 {offsets = [4, 0], sizes = [1, 128], strides = [1, 1]} : vector<15x128xf32> to vector<1x128xf32>
    %123 = vector.extract_strided_slice %5 {offsets = [4, 0], sizes = [1, 128], strides = [1, 1]} : vector<15x128xf32> to vector<1x128xf32>
    %124 = arith.mulf %121, %121 : vector<1x128xf32>
    %125 = arith.mulf %122, %122 : vector<1x128xf32>
    %126 = arith.addf %124, %125 : vector<1x128xf32>
    %127 = arith.mulf %123, %123 : vector<1x128xf32>
    %128 = arith.addf %126, %127 : vector<1x128xf32>
    %129 = math.sqrt %128 : vector<1x128xf32>
    %cst_14 = arith.constant 9.99999993E-9 : f32
    %130 = vector.broadcast %cst_14 : f32 to vector<1x128xf32>
    %131 = arith.addf %129, %130 : vector<1x128xf32>
    %132 = tpu.reciprocal %131 {approx = true} : vector<1x128xf32> -> vector<1x128xf32>
    %133 = vector.broadcast %7 : vector<64x1xf32> to vector<64x128xf32>
    %134 = vector.broadcast %121 : vector<1x128xf32> to vector<64x128xf32>
    %135 = arith.mulf %133, %134 : vector<64x128xf32>
    %136 = vector.broadcast %8 : vector<64x1xf32> to vector<64x128xf32>
    %137 = vector.broadcast %122 : vector<1x128xf32> to vector<64x128xf32>
    %138 = arith.mulf %136, %137 : vector<64x128xf32>
    %139 = arith.addf %135, %138 : vector<64x128xf32>
    %140 = vector.broadcast %9 : vector<64x1xf32> to vector<64x128xf32>
    %141 = vector.broadcast %123 : vector<1x128xf32> to vector<64x128xf32>
    %142 = arith.mulf %140, %141 : vector<64x128xf32>
    %143 = arith.addf %139, %142 : vector<64x128xf32>
    %144 = math.absf %143 : vector<64x128xf32>
    %145 = arith.mulf %143, %144 : vector<64x128xf32>
    %146 = vector.broadcast %132 : vector<1x128xf32> to vector<64x128xf32>
    %147 = arith.mulf %145, %146 : vector<64x128xf32>
    %148 = arith.maximumf %120, %147 : vector<64x128xf32>
    %149 = vector.extract_strided_slice %1 {offsets = [5, 0], sizes = [1, 128], strides = [1, 1]} : vector<15x128xf32> to vector<1x128xf32>
    %150 = vector.extract_strided_slice %3 {offsets = [5, 0], sizes = [1, 128], strides = [1, 1]} : vector<15x128xf32> to vector<1x128xf32>
    %151 = vector.extract_strided_slice %5 {offsets = [5, 0], sizes = [1, 128], strides = [1, 1]} : vector<15x128xf32> to vector<1x128xf32>
    %152 = arith.mulf %149, %149 : vector<1x128xf32>
    %153 = arith.mulf %150, %150 : vector<1x128xf32>
    %154 = arith.addf %152, %153 : vector<1x128xf32>
    %155 = arith.mulf %151, %151 : vector<1x128xf32>
    %156 = arith.addf %154, %155 : vector<1x128xf32>
    %157 = math.sqrt %156 : vector<1x128xf32>
    %cst_15 = arith.constant 9.99999993E-9 : f32
    %158 = vector.broadcast %cst_15 : f32 to vector<1x128xf32>
    %159 = arith.addf %157, %158 : vector<1x128xf32>
    %160 = tpu.reciprocal %159 {approx = true} : vector<1x128xf32> -> vector<1x128xf32>
    %161 = vector.broadcast %7 : vector<64x1xf32> to vector<64x128xf32>
    %162 = vector.broadcast %149 : vector<1x128xf32> to vector<64x128xf32>
    %163 = arith.mulf %161, %162 : vector<64x128xf32>
    %164 = vector.broadcast %8 : vector<64x1xf32> to vector<64x128xf32>
    %165 = vector.broadcast %150 : vector<1x128xf32> to vector<64x128xf32>
    %166 = arith.mulf %164, %165 : vector<64x128xf32>
    %167 = arith.addf %163, %166 : vector<64x128xf32>
    %168 = vector.broadcast %9 : vector<64x1xf32> to vector<64x128xf32>
    %169 = vector.broadcast %151 : vector<1x128xf32> to vector<64x128xf32>
    %170 = arith.mulf %168, %169 : vector<64x128xf32>
    %171 = arith.addf %167, %170 : vector<64x128xf32>
    %172 = math.absf %171 : vector<64x128xf32>
    %173 = arith.mulf %171, %172 : vector<64x128xf32>
    %174 = vector.broadcast %160 : vector<1x128xf32> to vector<64x128xf32>
    %175 = arith.mulf %173, %174 : vector<64x128xf32>
    %176 = arith.maximumf %148, %175 : vector<64x128xf32>
    %177 = vector.extract_strided_slice %1 {offsets = [6, 0], sizes = [1, 128], strides = [1, 1]} : vector<15x128xf32> to vector<1x128xf32>
    %178 = vector.extract_strided_slice %3 {offsets = [6, 0], sizes = [1, 128], strides = [1, 1]} : vector<15x128xf32> to vector<1x128xf32>
    %179 = vector.extract_strided_slice %5 {offsets = [6, 0], sizes = [1, 128], strides = [1, 1]} : vector<15x128xf32> to vector<1x128xf32>
    %180 = arith.mulf %177, %177 : vector<1x128xf32>
    %181 = arith.mulf %178, %178 : vector<1x128xf32>
    %182 = arith.addf %180, %181 : vector<1x128xf32>
    %183 = arith.mulf %179, %179 : vector<1x128xf32>
    %184 = arith.addf %182, %183 : vector<1x128xf32>
    %185 = math.sqrt %184 : vector<1x128xf32>
    %cst_16 = arith.constant 9.99999993E-9 : f32
    %186 = vector.broadcast %cst_16 : f32 to vector<1x128xf32>
    %187 = arith.addf %185, %186 : vector<1x128xf32>
    %188 = tpu.reciprocal %187 {approx = true} : vector<1x128xf32> -> vector<1x128xf32>
    %189 = vector.broadcast %7 : vector<64x1xf32> to vector<64x128xf32>
    %190 = vector.broadcast %177 : vector<1x128xf32> to vector<64x128xf32>
    %191 = arith.mulf %189, %190 : vector<64x128xf32>
    %192 = vector.broadcast %8 : vector<64x1xf32> to vector<64x128xf32>
    %193 = vector.broadcast %178 : vector<1x128xf32> to vector<64x128xf32>
    %194 = arith.mulf %192, %193 : vector<64x128xf32>
    %195 = arith.addf %191, %194 : vector<64x128xf32>
    %196 = vector.broadcast %9 : vector<64x1xf32> to vector<64x128xf32>
    %197 = vector.broadcast %179 : vector<1x128xf32> to vector<64x128xf32>
    %198 = arith.mulf %196, %197 : vector<64x128xf32>
    %199 = arith.addf %195, %198 : vector<64x128xf32>
    %200 = math.absf %199 : vector<64x128xf32>
    %201 = arith.mulf %199, %200 : vector<64x128xf32>
    %202 = vector.broadcast %188 : vector<1x128xf32> to vector<64x128xf32>
    %203 = arith.mulf %201, %202 : vector<64x128xf32>
    %204 = arith.maximumf %176, %203 : vector<64x128xf32>
    %205 = vector.extract_strided_slice %1 {offsets = [7, 0], sizes = [1, 128], strides = [1, 1]} : vector<15x128xf32> to vector<1x128xf32>
    %206 = vector.extract_strided_slice %3 {offsets = [7, 0], sizes = [1, 128], strides = [1, 1]} : vector<15x128xf32> to vector<1x128xf32>
    %207 = vector.extract_strided_slice %5 {offsets = [7, 0], sizes = [1, 128], strides = [1, 1]} : vector<15x128xf32> to vector<1x128xf32>
    %208 = arith.mulf %205, %205 : vector<1x128xf32>
    %209 = arith.mulf %206, %206 : vector<1x128xf32>
    %210 = arith.addf %208, %209 : vector<1x128xf32>
    %211 = arith.mulf %207, %207 : vector<1x128xf32>
    %212 = arith.addf %210, %211 : vector<1x128xf32>
    %213 = math.sqrt %212 : vector<1x128xf32>
    %cst_17 = arith.constant 9.99999993E-9 : f32
    %214 = vector.broadcast %cst_17 : f32 to vector<1x128xf32>
    %215 = arith.addf %213, %214 : vector<1x128xf32>
    %216 = tpu.reciprocal %215 {approx = true} : vector<1x128xf32> -> vector<1x128xf32>
    %217 = vector.broadcast %7 : vector<64x1xf32> to vector<64x128xf32>
    %218 = vector.broadcast %205 : vector<1x128xf32> to vector<64x128xf32>
    %219 = arith.mulf %217, %218 : vector<64x128xf32>
    %220 = vector.broadcast %8 : vector<64x1xf32> to vector<64x128xf32>
    %221 = vector.broadcast %206 : vector<1x128xf32> to vector<64x128xf32>
    %222 = arith.mulf %220, %221 : vector<64x128xf32>
    %223 = arith.addf %219, %222 : vector<64x128xf32>
    %224 = vector.broadcast %9 : vector<64x1xf32> to vector<64x128xf32>
    %225 = vector.broadcast %207 : vector<1x128xf32> to vector<64x128xf32>
    %226 = arith.mulf %224, %225 : vector<64x128xf32>
    %227 = arith.addf %223, %226 : vector<64x128xf32>
    %228 = math.absf %227 : vector<64x128xf32>
    %229 = arith.mulf %227, %228 : vector<64x128xf32>
    %230 = vector.broadcast %216 : vector<1x128xf32> to vector<64x128xf32>
    %231 = arith.mulf %229, %230 : vector<64x128xf32>
    %232 = arith.maximumf %204, %231 : vector<64x128xf32>
    %233 = vector.extract_strided_slice %1 {offsets = [8, 0], sizes = [1, 128], strides = [1, 1]} : vector<15x128xf32> to vector<1x128xf32>
    %234 = vector.extract_strided_slice %3 {offsets = [8, 0], sizes = [1, 128], strides = [1, 1]} : vector<15x128xf32> to vector<1x128xf32>
    %235 = vector.extract_strided_slice %5 {offsets = [8, 0], sizes = [1, 128], strides = [1, 1]} : vector<15x128xf32> to vector<1x128xf32>
    %236 = arith.mulf %233, %233 : vector<1x128xf32>
    %237 = arith.mulf %234, %234 : vector<1x128xf32>
    %238 = arith.addf %236, %237 : vector<1x128xf32>
    %239 = arith.mulf %235, %235 : vector<1x128xf32>
    %240 = arith.addf %238, %239 : vector<1x128xf32>
    %241 = math.sqrt %240 : vector<1x128xf32>
    %cst_18 = arith.constant 9.99999993E-9 : f32
    %242 = vector.broadcast %cst_18 : f32 to vector<1x128xf32>
    %243 = arith.addf %241, %242 : vector<1x128xf32>
    %244 = tpu.reciprocal %243 {approx = true} : vector<1x128xf32> -> vector<1x128xf32>
    %245 = vector.broadcast %7 : vector<64x1xf32> to vector<64x128xf32>
    %246 = vector.broadcast %233 : vector<1x128xf32> to vector<64x128xf32>
    %247 = arith.mulf %245, %246 : vector<64x128xf32>
    %248 = vector.broadcast %8 : vector<64x1xf32> to vector<64x128xf32>
    %249 = vector.broadcast %234 : vector<1x128xf32> to vector<64x128xf32>
    %250 = arith.mulf %248, %249 : vector<64x128xf32>
    %251 = arith.addf %247, %250 : vector<64x128xf32>
    %252 = vector.broadcast %9 : vector<64x1xf32> to vector<64x128xf32>
    %253 = vector.broadcast %235 : vector<1x128xf32> to vector<64x128xf32>
    %254 = arith.mulf %252, %253 : vector<64x128xf32>
    %255 = arith.addf %251, %254 : vector<64x128xf32>
    %256 = math.absf %255 : vector<64x128xf32>
    %257 = arith.mulf %255, %256 : vector<64x128xf32>
    %258 = vector.broadcast %244 : vector<1x128xf32> to vector<64x128xf32>
    %259 = arith.mulf %257, %258 : vector<64x128xf32>
    %260 = arith.maximumf %232, %259 : vector<64x128xf32>
    %261 = vector.extract_strided_slice %1 {offsets = [9, 0], sizes = [1, 128], strides = [1, 1]} : vector<15x128xf32> to vector<1x128xf32>
    %262 = vector.extract_strided_slice %3 {offsets = [9, 0], sizes = [1, 128], strides = [1, 1]} : vector<15x128xf32> to vector<1x128xf32>
    %263 = vector.extract_strided_slice %5 {offsets = [9, 0], sizes = [1, 128], strides = [1, 1]} : vector<15x128xf32> to vector<1x128xf32>
    %264 = arith.mulf %261, %261 : vector<1x128xf32>
    %265 = arith.mulf %262, %262 : vector<1x128xf32>
    %266 = arith.addf %264, %265 : vector<1x128xf32>
    %267 = arith.mulf %263, %263 : vector<1x128xf32>
    %268 = arith.addf %266, %267 : vector<1x128xf32>
    %269 = math.sqrt %268 : vector<1x128xf32>
    %cst_19 = arith.constant 9.99999993E-9 : f32
    %270 = vector.broadcast %cst_19 : f32 to vector<1x128xf32>
    %271 = arith.addf %269, %270 : vector<1x128xf32>
    %272 = tpu.reciprocal %271 {approx = true} : vector<1x128xf32> -> vector<1x128xf32>
    %273 = vector.broadcast %7 : vector<64x1xf32> to vector<64x128xf32>
    %274 = vector.broadcast %261 : vector<1x128xf32> to vector<64x128xf32>
    %275 = arith.mulf %273, %274 : vector<64x128xf32>
    %276 = vector.broadcast %8 : vector<64x1xf32> to vector<64x128xf32>
    %277 = vector.broadcast %262 : vector<1x128xf32> to vector<64x128xf32>
    %278 = arith.mulf %276, %277 : vector<64x128xf32>
    %279 = arith.addf %275, %278 : vector<64x128xf32>
    %280 = vector.broadcast %9 : vector<64x1xf32> to vector<64x128xf32>
    %281 = vector.broadcast %263 : vector<1x128xf32> to vector<64x128xf32>
    %282 = arith.mulf %280, %281 : vector<64x128xf32>
    %283 = arith.addf %279, %282 : vector<64x128xf32>
    %284 = math.absf %283 : vector<64x128xf32>
    %285 = arith.mulf %283, %284 : vector<64x128xf32>
    %286 = vector.broadcast %272 : vector<1x128xf32> to vector<64x128xf32>
    %287 = arith.mulf %285, %286 : vector<64x128xf32>
    %288 = arith.maximumf %260, %287 : vector<64x128xf32>
    %289 = vector.extract_strided_slice %1 {offsets = [10, 0], sizes = [1, 128], strides = [1, 1]} : vector<15x128xf32> to vector<1x128xf32>
    %290 = vector.extract_strided_slice %3 {offsets = [10, 0], sizes = [1, 128], strides = [1, 1]} : vector<15x128xf32> to vector<1x128xf32>
    %291 = vector.extract_strided_slice %5 {offsets = [10, 0], sizes = [1, 128], strides = [1, 1]} : vector<15x128xf32> to vector<1x128xf32>
    %292 = arith.mulf %289, %289 : vector<1x128xf32>
    %293 = arith.mulf %290, %290 : vector<1x128xf32>
    %294 = arith.addf %292, %293 : vector<1x128xf32>
    %295 = arith.mulf %291, %291 : vector<1x128xf32>
    %296 = arith.addf %294, %295 : vector<1x128xf32>
    %297 = math.sqrt %296 : vector<1x128xf32>
    %cst_20 = arith.constant 9.99999993E-9 : f32
    %298 = vector.broadcast %cst_20 : f32 to vector<1x128xf32>
    %299 = arith.addf %297, %298 : vector<1x128xf32>
    %300 = tpu.reciprocal %299 {approx = true} : vector<1x128xf32> -> vector<1x128xf32>
    %301 = vector.broadcast %7 : vector<64x1xf32> to vector<64x128xf32>
    %302 = vector.broadcast %289 : vector<1x128xf32> to vector<64x128xf32>
    %303 = arith.mulf %301, %302 : vector<64x128xf32>
    %304 = vector.broadcast %8 : vector<64x1xf32> to vector<64x128xf32>
    %305 = vector.broadcast %290 : vector<1x128xf32> to vector<64x128xf32>
    %306 = arith.mulf %304, %305 : vector<64x128xf32>
    %307 = arith.addf %303, %306 : vector<64x128xf32>
    %308 = vector.broadcast %9 : vector<64x1xf32> to vector<64x128xf32>
    %309 = vector.broadcast %291 : vector<1x128xf32> to vector<64x128xf32>
    %310 = arith.mulf %308, %309 : vector<64x128xf32>
    %311 = arith.addf %307, %310 : vector<64x128xf32>
    %312 = math.absf %311 : vector<64x128xf32>
    %313 = arith.mulf %311, %312 : vector<64x128xf32>
    %314 = vector.broadcast %300 : vector<1x128xf32> to vector<64x128xf32>
    %315 = arith.mulf %313, %314 : vector<64x128xf32>
    %316 = arith.maximumf %288, %315 : vector<64x128xf32>
    %317 = vector.extract_strided_slice %1 {offsets = [11, 0], sizes = [1, 128], strides = [1, 1]} : vector<15x128xf32> to vector<1x128xf32>
    %318 = vector.extract_strided_slice %3 {offsets = [11, 0], sizes = [1, 128], strides = [1, 1]} : vector<15x128xf32> to vector<1x128xf32>
    %319 = vector.extract_strided_slice %5 {offsets = [11, 0], sizes = [1, 128], strides = [1, 1]} : vector<15x128xf32> to vector<1x128xf32>
    %320 = arith.mulf %317, %317 : vector<1x128xf32>
    %321 = arith.mulf %318, %318 : vector<1x128xf32>
    %322 = arith.addf %320, %321 : vector<1x128xf32>
    %323 = arith.mulf %319, %319 : vector<1x128xf32>
    %324 = arith.addf %322, %323 : vector<1x128xf32>
    %325 = math.sqrt %324 : vector<1x128xf32>
    %cst_21 = arith.constant 9.99999993E-9 : f32
    %326 = vector.broadcast %cst_21 : f32 to vector<1x128xf32>
    %327 = arith.addf %325, %326 : vector<1x128xf32>
    %328 = tpu.reciprocal %327 {approx = true} : vector<1x128xf32> -> vector<1x128xf32>
    %329 = vector.broadcast %7 : vector<64x1xf32> to vector<64x128xf32>
    %330 = vector.broadcast %317 : vector<1x128xf32> to vector<64x128xf32>
    %331 = arith.mulf %329, %330 : vector<64x128xf32>
    %332 = vector.broadcast %8 : vector<64x1xf32> to vector<64x128xf32>
    %333 = vector.broadcast %318 : vector<1x128xf32> to vector<64x128xf32>
    %334 = arith.mulf %332, %333 : vector<64x128xf32>
    %335 = arith.addf %331, %334 : vector<64x128xf32>
    %336 = vector.broadcast %9 : vector<64x1xf32> to vector<64x128xf32>
    %337 = vector.broadcast %319 : vector<1x128xf32> to vector<64x128xf32>
    %338 = arith.mulf %336, %337 : vector<64x128xf32>
    %339 = arith.addf %335, %338 : vector<64x128xf32>
    %340 = math.absf %339 : vector<64x128xf32>
    %341 = arith.mulf %339, %340 : vector<64x128xf32>
    %342 = vector.broadcast %328 : vector<1x128xf32> to vector<64x128xf32>
    %343 = arith.mulf %341, %342 : vector<64x128xf32>
    %344 = arith.maximumf %316, %343 : vector<64x128xf32>
    %345 = vector.extract_strided_slice %1 {offsets = [12, 0], sizes = [1, 128], strides = [1, 1]} : vector<15x128xf32> to vector<1x128xf32>
    %346 = vector.extract_strided_slice %3 {offsets = [12, 0], sizes = [1, 128], strides = [1, 1]} : vector<15x128xf32> to vector<1x128xf32>
    %347 = vector.extract_strided_slice %5 {offsets = [12, 0], sizes = [1, 128], strides = [1, 1]} : vector<15x128xf32> to vector<1x128xf32>
    %348 = arith.mulf %345, %345 : vector<1x128xf32>
    %349 = arith.mulf %346, %346 : vector<1x128xf32>
    %350 = arith.addf %348, %349 : vector<1x128xf32>
    %351 = arith.mulf %347, %347 : vector<1x128xf32>
    %352 = arith.addf %350, %351 : vector<1x128xf32>
    %353 = math.sqrt %352 : vector<1x128xf32>
    %cst_22 = arith.constant 9.99999993E-9 : f32
    %354 = vector.broadcast %cst_22 : f32 to vector<1x128xf32>
    %355 = arith.addf %353, %354 : vector<1x128xf32>
    %356 = tpu.reciprocal %355 {approx = true} : vector<1x128xf32> -> vector<1x128xf32>
    %357 = vector.broadcast %7 : vector<64x1xf32> to vector<64x128xf32>
    %358 = vector.broadcast %345 : vector<1x128xf32> to vector<64x128xf32>
    %359 = arith.mulf %357, %358 : vector<64x128xf32>
    %360 = vector.broadcast %8 : vector<64x1xf32> to vector<64x128xf32>
    %361 = vector.broadcast %346 : vector<1x128xf32> to vector<64x128xf32>
    %362 = arith.mulf %360, %361 : vector<64x128xf32>
    %363 = arith.addf %359, %362 : vector<64x128xf32>
    %364 = vector.broadcast %9 : vector<64x1xf32> to vector<64x128xf32>
    %365 = vector.broadcast %347 : vector<1x128xf32> to vector<64x128xf32>
    %366 = arith.mulf %364, %365 : vector<64x128xf32>
    %367 = arith.addf %363, %366 : vector<64x128xf32>
    %368 = math.absf %367 : vector<64x128xf32>
    %369 = arith.mulf %367, %368 : vector<64x128xf32>
    %370 = vector.broadcast %356 : vector<1x128xf32> to vector<64x128xf32>
    %371 = arith.mulf %369, %370 : vector<64x128xf32>
    %372 = arith.maximumf %344, %371 : vector<64x128xf32>
    %373 = vector.extract_strided_slice %1 {offsets = [13, 0], sizes = [1, 128], strides = [1, 1]} : vector<15x128xf32> to vector<1x128xf32>
    %374 = vector.extract_strided_slice %3 {offsets = [13, 0], sizes = [1, 128], strides = [1, 1]} : vector<15x128xf32> to vector<1x128xf32>
    %375 = vector.extract_strided_slice %5 {offsets = [13, 0], sizes = [1, 128], strides = [1, 1]} : vector<15x128xf32> to vector<1x128xf32>
    %376 = arith.mulf %373, %373 : vector<1x128xf32>
    %377 = arith.mulf %374, %374 : vector<1x128xf32>
    %378 = arith.addf %376, %377 : vector<1x128xf32>
    %379 = arith.mulf %375, %375 : vector<1x128xf32>
    %380 = arith.addf %378, %379 : vector<1x128xf32>
    %381 = math.sqrt %380 : vector<1x128xf32>
    %cst_23 = arith.constant 9.99999993E-9 : f32
    %382 = vector.broadcast %cst_23 : f32 to vector<1x128xf32>
    %383 = arith.addf %381, %382 : vector<1x128xf32>
    %384 = tpu.reciprocal %383 {approx = true} : vector<1x128xf32> -> vector<1x128xf32>
    %385 = vector.broadcast %7 : vector<64x1xf32> to vector<64x128xf32>
    %386 = vector.broadcast %373 : vector<1x128xf32> to vector<64x128xf32>
    %387 = arith.mulf %385, %386 : vector<64x128xf32>
    %388 = vector.broadcast %8 : vector<64x1xf32> to vector<64x128xf32>
    %389 = vector.broadcast %374 : vector<1x128xf32> to vector<64x128xf32>
    %390 = arith.mulf %388, %389 : vector<64x128xf32>
    %391 = arith.addf %387, %390 : vector<64x128xf32>
    %392 = vector.broadcast %9 : vector<64x1xf32> to vector<64x128xf32>
    %393 = vector.broadcast %375 : vector<1x128xf32> to vector<64x128xf32>
    %394 = arith.mulf %392, %393 : vector<64x128xf32>
    %395 = arith.addf %391, %394 : vector<64x128xf32>
    %396 = math.absf %395 : vector<64x128xf32>
    %397 = arith.mulf %395, %396 : vector<64x128xf32>
    %398 = vector.broadcast %384 : vector<1x128xf32> to vector<64x128xf32>
    %399 = arith.mulf %397, %398 : vector<64x128xf32>
    %400 = arith.maximumf %372, %399 : vector<64x128xf32>
    %401 = vector.extract_strided_slice %1 {offsets = [14, 0], sizes = [1, 128], strides = [1, 1]} : vector<15x128xf32> to vector<1x128xf32>
    %402 = vector.extract_strided_slice %3 {offsets = [14, 0], sizes = [1, 128], strides = [1, 1]} : vector<15x128xf32> to vector<1x128xf32>
    %403 = vector.extract_strided_slice %5 {offsets = [14, 0], sizes = [1, 128], strides = [1, 1]} : vector<15x128xf32> to vector<1x128xf32>
    %404 = arith.mulf %401, %401 : vector<1x128xf32>
    %405 = arith.mulf %402, %402 : vector<1x128xf32>
    %406 = arith.addf %404, %405 : vector<1x128xf32>
    %407 = arith.mulf %403, %403 : vector<1x128xf32>
    %408 = arith.addf %406, %407 : vector<1x128xf32>
    %409 = math.sqrt %408 : vector<1x128xf32>
    %cst_24 = arith.constant 9.99999993E-9 : f32
    %410 = vector.broadcast %cst_24 : f32 to vector<1x128xf32>
    %411 = arith.addf %409, %410 : vector<1x128xf32>
    %412 = tpu.reciprocal %411 {approx = true} : vector<1x128xf32> -> vector<1x128xf32>
    %413 = vector.broadcast %7 : vector<64x1xf32> to vector<64x128xf32>
    %414 = vector.broadcast %401 : vector<1x128xf32> to vector<64x128xf32>
    %415 = arith.mulf %413, %414 : vector<64x128xf32>
    %416 = vector.broadcast %8 : vector<64x1xf32> to vector<64x128xf32>
    %417 = vector.broadcast %402 : vector<1x128xf32> to vector<64x128xf32>
    %418 = arith.mulf %416, %417 : vector<64x128xf32>
    %419 = arith.addf %415, %418 : vector<64x128xf32>
    %420 = vector.broadcast %9 : vector<64x1xf32> to vector<64x128xf32>
    %421 = vector.broadcast %403 : vector<1x128xf32> to vector<64x128xf32>
    %422 = arith.mulf %420, %421 : vector<64x128xf32>
    %423 = arith.addf %419, %422 : vector<64x128xf32>
    %424 = math.absf %423 : vector<64x128xf32>
    %425 = arith.mulf %423, %424 : vector<64x128xf32>
    %426 = vector.broadcast %412 : vector<1x128xf32> to vector<64x128xf32>
    %427 = arith.mulf %425, %426 : vector<64x128xf32>
    %428 = arith.maximumf %400, %427 : vector<64x128xf32>
    %c0_25 = arith.constant 0 : index
    %c0_26 = arith.constant 0 : index
    %429 = vector.load %arg5[%c0_25, %c0_26] : memref<64x64xbf16, #tpu.memory_space<vmem>>, vector<64x64xbf16>
    %430 = arith.truncf %428 : vector<64x128xf32> to vector<64x128xbf16>
    %cst_27 = arith.constant dense<0.000000e+00> : vector<64x128xf32>
    %431 = tpu.matmul %429, %430, %cst_27 {dimension_numbers = #tpu.dot_dimension_numbers<[1], [0], [0], [1], [0, 0, 1, 1], [], []>} : vector<64x64xbf16>, vector<64x128xbf16>, vector<64x128xf32> -> vector<64x128xf32>
    %c0_28 = arith.constant 0 : index
    %c0_29 = arith.constant 0 : index
    %432 = vector.load %arg6[%c0_28, %c0_29] : memref<64x1xf32, #tpu.memory_space<vmem>>, vector<64x1xf32>
    %433 = vector.broadcast %432 : vector<64x1xf32> to vector<64x128xf32>
    %434 = arith.addf %431, %433 : vector<64x128xf32>
    %cst_30 = arith.constant 0.000000e+00 : f32
    %435 = vector.broadcast %cst_30 : f32 to vector<64x128xf32>
    %436 = arith.maximumf %434, %435 : vector<64x128xf32>
    %c0_31 = arith.constant 0 : index
    %c0_32 = arith.constant 0 : index
    %437 = vector.load %arg7[%c0_31, %c0_32] : memref<128x64xbf16, #tpu.memory_space<vmem>>, vector<128x64xbf16>
    %c0_33 = arith.constant 0 : index
    %c0_34 = arith.constant 0 : index
    %438 = vector.load %arg9[%c0_33, %c0_34] : memref<64x128xbf16, #tpu.memory_space<vmem>>, vector<64x128xbf16>
    %c0_35 = arith.constant 0 : index
    %c0_36 = arith.constant 0 : index
    %439 = vector.load %arg8[%c0_35, %c0_36] : memref<128x1xf32, #tpu.memory_space<vmem>>, vector<128x1xf32>
    %c0_37 = arith.constant 0 : index
    %c0_38 = arith.constant 0 : index
    %440 = vector.load %arg10[%c0_37, %c0_38] : memref<64x1xf32, #tpu.memory_space<vmem>>, vector<64x1xf32>
    %c0_39 = arith.constant 0 : index
    %c0_40 = arith.constant 0 : index
    %c0_41 = arith.constant 0 : index
    %c0_42 = arith.constant 0 : index
    %441 = vector.load %arg3[%c0_39, %c0_40, %c0_41, %c0_42] : memref<1x16x64x128xbf16, #tpu.memory_space<vmem>>, vector<1x1x64x128xbf16>
    %442 = vector.shape_cast %441 : vector<1x1x64x128xbf16> to vector<64x128xbf16>
    %cst_43 = arith.constant dense<0.000000e+00> : vector<128x128xf32>
    %443 = tpu.matmul %437, %442, %cst_43 {dimension_numbers = #tpu.dot_dimension_numbers<[1], [0], [0], [1], [0, 0, 1, 1], [], []>} : vector<128x64xbf16>, vector<64x128xbf16>, vector<128x128xf32> -> vector<128x128xf32>
    %444 = vector.broadcast %439 : vector<128x1xf32> to vector<128x128xf32>
    %445 = arith.addf %443, %444 : vector<128x128xf32>
    %cst_44 = arith.constant 0.000000e+00 : f32
    %446 = vector.broadcast %cst_44 : f32 to vector<128x128xf32>
    %447 = arith.maximumf %445, %446 : vector<128x128xf32>
    %448 = arith.truncf %447 : vector<128x128xf32> to vector<128x128xbf16>
    %cst_45 = arith.constant dense<0.000000e+00> : vector<64x128xf32>
    %449 = tpu.matmul %438, %448, %cst_45 {dimension_numbers = #tpu.dot_dimension_numbers<[1], [0], [0], [1], [0, 0, 1, 1], [], []>} : vector<64x128xbf16>, vector<128x128xbf16>, vector<64x128xf32> -> vector<64x128xf32>
    %450 = vector.broadcast %440 : vector<64x1xf32> to vector<64x128xf32>
    %451 = arith.addf %449, %450 : vector<64x128xf32>
    %c0_46 = arith.constant 0 : index
    %c1_47 = arith.constant 1 : index
    %c0_48 = arith.constant 0 : index
    %c0_49 = arith.constant 0 : index
    %452 = vector.load %arg3[%c0_46, %c1_47, %c0_48, %c0_49] : memref<1x16x64x128xbf16, #tpu.memory_space<vmem>>, vector<1x1x64x128xbf16>
    %453 = vector.shape_cast %452 : vector<1x1x64x128xbf16> to vector<64x128xbf16>
    %cst_50 = arith.constant dense<0.000000e+00> : vector<128x128xf32>
    %454 = tpu.matmul %437, %453, %cst_50 {dimension_numbers = #tpu.dot_dimension_numbers<[1], [0], [0], [1], [0, 0, 1, 1], [], []>} : vector<128x64xbf16>, vector<64x128xbf16>, vector<128x128xf32> -> vector<128x128xf32>
    %455 = vector.broadcast %439 : vector<128x1xf32> to vector<128x128xf32>
    %456 = arith.addf %454, %455 : vector<128x128xf32>
    %cst_51 = arith.constant 0.000000e+00 : f32
    %457 = vector.broadcast %cst_51 : f32 to vector<128x128xf32>
    %458 = arith.maximumf %456, %457 : vector<128x128xf32>
    %459 = arith.truncf %458 : vector<128x128xf32> to vector<128x128xbf16>
    %cst_52 = arith.constant dense<0.000000e+00> : vector<64x128xf32>
    %460 = tpu.matmul %438, %459, %cst_52 {dimension_numbers = #tpu.dot_dimension_numbers<[1], [0], [0], [1], [0, 0, 1, 1], [], []>} : vector<64x128xbf16>, vector<128x128xbf16>, vector<64x128xf32> -> vector<64x128xf32>
    %461 = vector.broadcast %440 : vector<64x1xf32> to vector<64x128xf32>
    %462 = arith.addf %460, %461 : vector<64x128xf32>
    %463 = arith.maximumf %451, %462 : vector<64x128xf32>
    %c0_53 = arith.constant 0 : index
    %c2_54 = arith.constant 2 : index
    %c0_55 = arith.constant 0 : index
    %c0_56 = arith.constant 0 : index
    %464 = vector.load %arg3[%c0_53, %c2_54, %c0_55, %c0_56] : memref<1x16x64x128xbf16, #tpu.memory_space<vmem>>, vector<1x1x64x128xbf16>
    %465 = vector.shape_cast %464 : vector<1x1x64x128xbf16> to vector<64x128xbf16>
    %cst_57 = arith.constant dense<0.000000e+00> : vector<128x128xf32>
    %466 = tpu.matmul %437, %465, %cst_57 {dimension_numbers = #tpu.dot_dimension_numbers<[1], [0], [0], [1], [0, 0, 1, 1], [], []>} : vector<128x64xbf16>, vector<64x128xbf16>, vector<128x128xf32> -> vector<128x128xf32>
    %467 = vector.broadcast %439 : vector<128x1xf32> to vector<128x128xf32>
    %468 = arith.addf %466, %467 : vector<128x128xf32>
    %cst_58 = arith.constant 0.000000e+00 : f32
    %469 = vector.broadcast %cst_58 : f32 to vector<128x128xf32>
    %470 = arith.maximumf %468, %469 : vector<128x128xf32>
    %471 = arith.truncf %470 : vector<128x128xf32> to vector<128x128xbf16>
    %cst_59 = arith.constant dense<0.000000e+00> : vector<64x128xf32>
    %472 = tpu.matmul %438, %471, %cst_59 {dimension_numbers = #tpu.dot_dimension_numbers<[1], [0], [0], [1], [0, 0, 1, 1], [], []>} : vector<64x128xbf16>, vector<128x128xbf16>, vector<64x128xf32> -> vector<64x128xf32>
    %473 = vector.broadcast %440 : vector<64x1xf32> to vector<64x128xf32>
    %474 = arith.addf %472, %473 : vector<64x128xf32>
    %475 = arith.maximumf %463, %474 : vector<64x128xf32>
    %c0_60 = arith.constant 0 : index
    %c3 = arith.constant 3 : index
    %c0_61 = arith.constant 0 : index
    %c0_62 = arith.constant 0 : index
    %476 = vector.load %arg3[%c0_60, %c3, %c0_61, %c0_62] : memref<1x16x64x128xbf16, #tpu.memory_space<vmem>>, vector<1x1x64x128xbf16>
    %477 = vector.shape_cast %476 : vector<1x1x64x128xbf16> to vector<64x128xbf16>
    %cst_63 = arith.constant dense<0.000000e+00> : vector<128x128xf32>
    %478 = tpu.matmul %437, %477, %cst_63 {dimension_numbers = #tpu.dot_dimension_numbers<[1], [0], [0], [1], [0, 0, 1, 1], [], []>} : vector<128x64xbf16>, vector<64x128xbf16>, vector<128x128xf32> -> vector<128x128xf32>
    %479 = vector.broadcast %439 : vector<128x1xf32> to vector<128x128xf32>
    %480 = arith.addf %478, %479 : vector<128x128xf32>
    %cst_64 = arith.constant 0.000000e+00 : f32
    %481 = vector.broadcast %cst_64 : f32 to vector<128x128xf32>
    %482 = arith.maximumf %480, %481 : vector<128x128xf32>
    %483 = arith.truncf %482 : vector<128x128xf32> to vector<128x128xbf16>
    %cst_65 = arith.constant dense<0.000000e+00> : vector<64x128xf32>
    %484 = tpu.matmul %438, %483, %cst_65 {dimension_numbers = #tpu.dot_dimension_numbers<[1], [0], [0], [1], [0, 0, 1, 1], [], []>} : vector<64x128xbf16>, vector<128x128xbf16>, vector<64x128xf32> -> vector<64x128xf32>
    %485 = vector.broadcast %440 : vector<64x1xf32> to vector<64x128xf32>
    %486 = arith.addf %484, %485 : vector<64x128xf32>
    %487 = arith.maximumf %475, %486 : vector<64x128xf32>
    %c0_66 = arith.constant 0 : index
    %c4 = arith.constant 4 : index
    %c0_67 = arith.constant 0 : index
    %c0_68 = arith.constant 0 : index
    %488 = vector.load %arg3[%c0_66, %c4, %c0_67, %c0_68] : memref<1x16x64x128xbf16, #tpu.memory_space<vmem>>, vector<1x1x64x128xbf16>
    %489 = vector.shape_cast %488 : vector<1x1x64x128xbf16> to vector<64x128xbf16>
    %cst_69 = arith.constant dense<0.000000e+00> : vector<128x128xf32>
    %490 = tpu.matmul %437, %489, %cst_69 {dimension_numbers = #tpu.dot_dimension_numbers<[1], [0], [0], [1], [0, 0, 1, 1], [], []>} : vector<128x64xbf16>, vector<64x128xbf16>, vector<128x128xf32> -> vector<128x128xf32>
    %491 = vector.broadcast %439 : vector<128x1xf32> to vector<128x128xf32>
    %492 = arith.addf %490, %491 : vector<128x128xf32>
    %cst_70 = arith.constant 0.000000e+00 : f32
    %493 = vector.broadcast %cst_70 : f32 to vector<128x128xf32>
    %494 = arith.maximumf %492, %493 : vector<128x128xf32>
    %495 = arith.truncf %494 : vector<128x128xf32> to vector<128x128xbf16>
    %cst_71 = arith.constant dense<0.000000e+00> : vector<64x128xf32>
    %496 = tpu.matmul %438, %495, %cst_71 {dimension_numbers = #tpu.dot_dimension_numbers<[1], [0], [0], [1], [0, 0, 1, 1], [], []>} : vector<64x128xbf16>, vector<128x128xbf16>, vector<64x128xf32> -> vector<64x128xf32>
    %497 = vector.broadcast %440 : vector<64x1xf32> to vector<64x128xf32>
    %498 = arith.addf %496, %497 : vector<64x128xf32>
    %499 = arith.maximumf %487, %498 : vector<64x128xf32>
    %c0_72 = arith.constant 0 : index
    %c5 = arith.constant 5 : index
    %c0_73 = arith.constant 0 : index
    %c0_74 = arith.constant 0 : index
    %500 = vector.load %arg3[%c0_72, %c5, %c0_73, %c0_74] : memref<1x16x64x128xbf16, #tpu.memory_space<vmem>>, vector<1x1x64x128xbf16>
    %501 = vector.shape_cast %500 : vector<1x1x64x128xbf16> to vector<64x128xbf16>
    %cst_75 = arith.constant dense<0.000000e+00> : vector<128x128xf32>
    %502 = tpu.matmul %437, %501, %cst_75 {dimension_numbers = #tpu.dot_dimension_numbers<[1], [0], [0], [1], [0, 0, 1, 1], [], []>} : vector<128x64xbf16>, vector<64x128xbf16>, vector<128x128xf32> -> vector<128x128xf32>
    %503 = vector.broadcast %439 : vector<128x1xf32> to vector<128x128xf32>
    %504 = arith.addf %502, %503 : vector<128x128xf32>
    %cst_76 = arith.constant 0.000000e+00 : f32
    %505 = vector.broadcast %cst_76 : f32 to vector<128x128xf32>
    %506 = arith.maximumf %504, %505 : vector<128x128xf32>
    %507 = arith.truncf %506 : vector<128x128xf32> to vector<128x128xbf16>
    %cst_77 = arith.constant dense<0.000000e+00> : vector<64x128xf32>
    %508 = tpu.matmul %438, %507, %cst_77 {dimension_numbers = #tpu.dot_dimension_numbers<[1], [0], [0], [1], [0, 0, 1, 1], [], []>} : vector<64x128xbf16>, vector<128x128xbf16>, vector<64x128xf32> -> vector<64x128xf32>
    %509 = vector.broadcast %440 : vector<64x1xf32> to vector<64x128xf32>
    %510 = arith.addf %508, %509 : vector<64x128xf32>
    %511 = arith.maximumf %499, %510 : vector<64x128xf32>
    %c0_78 = arith.constant 0 : index
    %c6 = arith.constant 6 : index
    %c0_79 = arith.constant 0 : index
    %c0_80 = arith.constant 0 : index
    %512 = vector.load %arg3[%c0_78, %c6, %c0_79, %c0_80] : memref<1x16x64x128xbf16, #tpu.memory_space<vmem>>, vector<1x1x64x128xbf16>
    %513 = vector.shape_cast %512 : vector<1x1x64x128xbf16> to vector<64x128xbf16>
    %cst_81 = arith.constant dense<0.000000e+00> : vector<128x128xf32>
    %514 = tpu.matmul %437, %513, %cst_81 {dimension_numbers = #tpu.dot_dimension_numbers<[1], [0], [0], [1], [0, 0, 1, 1], [], []>} : vector<128x64xbf16>, vector<64x128xbf16>, vector<128x128xf32> -> vector<128x128xf32>
    %515 = vector.broadcast %439 : vector<128x1xf32> to vector<128x128xf32>
    %516 = arith.addf %514, %515 : vector<128x128xf32>
    %cst_82 = arith.constant 0.000000e+00 : f32
    %517 = vector.broadcast %cst_82 : f32 to vector<128x128xf32>
    %518 = arith.maximumf %516, %517 : vector<128x128xf32>
    %519 = arith.truncf %518 : vector<128x128xf32> to vector<128x128xbf16>
    %cst_83 = arith.constant dense<0.000000e+00> : vector<64x128xf32>
    %520 = tpu.matmul %438, %519, %cst_83 {dimension_numbers = #tpu.dot_dimension_numbers<[1], [0], [0], [1], [0, 0, 1, 1], [], []>} : vector<64x128xbf16>, vector<128x128xbf16>, vector<64x128xf32> -> vector<64x128xf32>
    %521 = vector.broadcast %440 : vector<64x1xf32> to vector<64x128xf32>
    %522 = arith.addf %520, %521 : vector<64x128xf32>
    %523 = arith.maximumf %511, %522 : vector<64x128xf32>
    %c0_84 = arith.constant 0 : index
    %c7 = arith.constant 7 : index
    %c0_85 = arith.constant 0 : index
    %c0_86 = arith.constant 0 : index
    %524 = vector.load %arg3[%c0_84, %c7, %c0_85, %c0_86] : memref<1x16x64x128xbf16, #tpu.memory_space<vmem>>, vector<1x1x64x128xbf16>
    %525 = vector.shape_cast %524 : vector<1x1x64x128xbf16> to vector<64x128xbf16>
    %cst_87 = arith.constant dense<0.000000e+00> : vector<128x128xf32>
    %526 = tpu.matmul %437, %525, %cst_87 {dimension_numbers = #tpu.dot_dimension_numbers<[1], [0], [0], [1], [0, 0, 1, 1], [], []>} : vector<128x64xbf16>, vector<64x128xbf16>, vector<128x128xf32> -> vector<128x128xf32>
    %527 = vector.broadcast %439 : vector<128x1xf32> to vector<128x128xf32>
    %528 = arith.addf %526, %527 : vector<128x128xf32>
    %cst_88 = arith.constant 0.000000e+00 : f32
    %529 = vector.broadcast %cst_88 : f32 to vector<128x128xf32>
    %530 = arith.maximumf %528, %529 : vector<128x128xf32>
    %531 = arith.truncf %530 : vector<128x128xf32> to vector<128x128xbf16>
    %cst_89 = arith.constant dense<0.000000e+00> : vector<64x128xf32>
    %532 = tpu.matmul %438, %531, %cst_89 {dimension_numbers = #tpu.dot_dimension_numbers<[1], [0], [0], [1], [0, 0, 1, 1], [], []>} : vector<64x128xbf16>, vector<128x128xbf16>, vector<64x128xf32> -> vector<64x128xf32>
    %533 = vector.broadcast %440 : vector<64x1xf32> to vector<64x128xf32>
    %534 = arith.addf %532, %533 : vector<64x128xf32>
    %535 = arith.maximumf %523, %534 : vector<64x128xf32>
    %c0_90 = arith.constant 0 : index
    %c8 = arith.constant 8 : index
    %c0_91 = arith.constant 0 : index
    %c0_92 = arith.constant 0 : index
    %536 = vector.load %arg3[%c0_90, %c8, %c0_91, %c0_92] : memref<1x16x64x128xbf16, #tpu.memory_space<vmem>>, vector<1x1x64x128xbf16>
    %537 = vector.shape_cast %536 : vector<1x1x64x128xbf16> to vector<64x128xbf16>
    %cst_93 = arith.constant dense<0.000000e+00> : vector<128x128xf32>
    %538 = tpu.matmul %437, %537, %cst_93 {dimension_numbers = #tpu.dot_dimension_numbers<[1], [0], [0], [1], [0, 0, 1, 1], [], []>} : vector<128x64xbf16>, vector<64x128xbf16>, vector<128x128xf32> -> vector<128x128xf32>
    %539 = vector.broadcast %439 : vector<128x1xf32> to vector<128x128xf32>
    %540 = arith.addf %538, %539 : vector<128x128xf32>
    %cst_94 = arith.constant 0.000000e+00 : f32
    %541 = vector.broadcast %cst_94 : f32 to vector<128x128xf32>
    %542 = arith.maximumf %540, %541 : vector<128x128xf32>
    %543 = arith.truncf %542 : vector<128x128xf32> to vector<128x128xbf16>
    %cst_95 = arith.constant dense<0.000000e+00> : vector<64x128xf32>
    %544 = tpu.matmul %438, %543, %cst_95 {dimension_numbers = #tpu.dot_dimension_numbers<[1], [0], [0], [1], [0, 0, 1, 1], [], []>} : vector<64x128xbf16>, vector<128x128xbf16>, vector<64x128xf32> -> vector<64x128xf32>
    %545 = vector.broadcast %440 : vector<64x1xf32> to vector<64x128xf32>
    %546 = arith.addf %544, %545 : vector<64x128xf32>
    %547 = arith.maximumf %535, %546 : vector<64x128xf32>
    %c0_96 = arith.constant 0 : index
    %c9 = arith.constant 9 : index
    %c0_97 = arith.constant 0 : index
    %c0_98 = arith.constant 0 : index
    %548 = vector.load %arg3[%c0_96, %c9, %c0_97, %c0_98] : memref<1x16x64x128xbf16, #tpu.memory_space<vmem>>, vector<1x1x64x128xbf16>
    %549 = vector.shape_cast %548 : vector<1x1x64x128xbf16> to vector<64x128xbf16>
    %cst_99 = arith.constant dense<0.000000e+00> : vector<128x128xf32>
    %550 = tpu.matmul %437, %549, %cst_99 {dimension_numbers = #tpu.dot_dimension_numbers<[1], [0], [0], [1], [0, 0, 1, 1], [], []>} : vector<128x64xbf16>, vector<64x128xbf16>, vector<128x128xf32> -> vector<128x128xf32>
    %551 = vector.broadcast %439 : vector<128x1xf32> to vector<128x128xf32>
    %552 = arith.addf %550, %551 : vector<128x128xf32>
    %cst_100 = arith.constant 0.000000e+00 : f32
    %553 = vector.broadcast %cst_100 : f32 to vector<128x128xf32>
    %554 = arith.maximumf %552, %553 : vector<128x128xf32>
    %555 = arith.truncf %554 : vector<128x128xf32> to vector<128x128xbf16>
    %cst_101 = arith.constant dense<0.000000e+00> : vector<64x128xf32>
    %556 = tpu.matmul %438, %555, %cst_101 {dimension_numbers = #tpu.dot_dimension_numbers<[1], [0], [0], [1], [0, 0, 1, 1], [], []>} : vector<64x128xbf16>, vector<128x128xbf16>, vector<64x128xf32> -> vector<64x128xf32>
    %557 = vector.broadcast %440 : vector<64x1xf32> to vector<64x128xf32>
    %558 = arith.addf %556, %557 : vector<64x128xf32>
    %559 = arith.maximumf %547, %558 : vector<64x128xf32>
    %c0_102 = arith.constant 0 : index
    %c10 = arith.constant 10 : index
    %c0_103 = arith.constant 0 : index
    %c0_104 = arith.constant 0 : index
    %560 = vector.load %arg3[%c0_102, %c10, %c0_103, %c0_104] : memref<1x16x64x128xbf16, #tpu.memory_space<vmem>>, vector<1x1x64x128xbf16>
    %561 = vector.shape_cast %560 : vector<1x1x64x128xbf16> to vector<64x128xbf16>
    %cst_105 = arith.constant dense<0.000000e+00> : vector<128x128xf32>
    %562 = tpu.matmul %437, %561, %cst_105 {dimension_numbers = #tpu.dot_dimension_numbers<[1], [0], [0], [1], [0, 0, 1, 1], [], []>} : vector<128x64xbf16>, vector<64x128xbf16>, vector<128x128xf32> -> vector<128x128xf32>
    %563 = vector.broadcast %439 : vector<128x1xf32> to vector<128x128xf32>
    %564 = arith.addf %562, %563 : vector<128x128xf32>
    %cst_106 = arith.constant 0.000000e+00 : f32
    %565 = vector.broadcast %cst_106 : f32 to vector<128x128xf32>
    %566 = arith.maximumf %564, %565 : vector<128x128xf32>
    %567 = arith.truncf %566 : vector<128x128xf32> to vector<128x128xbf16>
    %cst_107 = arith.constant dense<0.000000e+00> : vector<64x128xf32>
    %568 = tpu.matmul %438, %567, %cst_107 {dimension_numbers = #tpu.dot_dimension_numbers<[1], [0], [0], [1], [0, 0, 1, 1], [], []>} : vector<64x128xbf16>, vector<128x128xbf16>, vector<64x128xf32> -> vector<64x128xf32>
    %569 = vector.broadcast %440 : vector<64x1xf32> to vector<64x128xf32>
    %570 = arith.addf %568, %569 : vector<64x128xf32>
    %571 = arith.maximumf %559, %570 : vector<64x128xf32>
    %c0_108 = arith.constant 0 : index
    %c11 = arith.constant 11 : index
    %c0_109 = arith.constant 0 : index
    %c0_110 = arith.constant 0 : index
    %572 = vector.load %arg3[%c0_108, %c11, %c0_109, %c0_110] : memref<1x16x64x128xbf16, #tpu.memory_space<vmem>>, vector<1x1x64x128xbf16>
    %573 = vector.shape_cast %572 : vector<1x1x64x128xbf16> to vector<64x128xbf16>
    %cst_111 = arith.constant dense<0.000000e+00> : vector<128x128xf32>
    %574 = tpu.matmul %437, %573, %cst_111 {dimension_numbers = #tpu.dot_dimension_numbers<[1], [0], [0], [1], [0, 0, 1, 1], [], []>} : vector<128x64xbf16>, vector<64x128xbf16>, vector<128x128xf32> -> vector<128x128xf32>
    %575 = vector.broadcast %439 : vector<128x1xf32> to vector<128x128xf32>
    %576 = arith.addf %574, %575 : vector<128x128xf32>
    %cst_112 = arith.constant 0.000000e+00 : f32
    %577 = vector.broadcast %cst_112 : f32 to vector<128x128xf32>
    %578 = arith.maximumf %576, %577 : vector<128x128xf32>
    %579 = arith.truncf %578 : vector<128x128xf32> to vector<128x128xbf16>
    %cst_113 = arith.constant dense<0.000000e+00> : vector<64x128xf32>
    %580 = tpu.matmul %438, %579, %cst_113 {dimension_numbers = #tpu.dot_dimension_numbers<[1], [0], [0], [1], [0, 0, 1, 1], [], []>} : vector<64x128xbf16>, vector<128x128xbf16>, vector<64x128xf32> -> vector<64x128xf32>
    %581 = vector.broadcast %440 : vector<64x1xf32> to vector<64x128xf32>
    %582 = arith.addf %580, %581 : vector<64x128xf32>
    %583 = arith.maximumf %571, %582 : vector<64x128xf32>
    %c0_114 = arith.constant 0 : index
    %c12 = arith.constant 12 : index
    %c0_115 = arith.constant 0 : index
    %c0_116 = arith.constant 0 : index
    %584 = vector.load %arg3[%c0_114, %c12, %c0_115, %c0_116] : memref<1x16x64x128xbf16, #tpu.memory_space<vmem>>, vector<1x1x64x128xbf16>
    %585 = vector.shape_cast %584 : vector<1x1x64x128xbf16> to vector<64x128xbf16>
    %cst_117 = arith.constant dense<0.000000e+00> : vector<128x128xf32>
    %586 = tpu.matmul %437, %585, %cst_117 {dimension_numbers = #tpu.dot_dimension_numbers<[1], [0], [0], [1], [0, 0, 1, 1], [], []>} : vector<128x64xbf16>, vector<64x128xbf16>, vector<128x128xf32> -> vector<128x128xf32>
    %587 = vector.broadcast %439 : vector<128x1xf32> to vector<128x128xf32>
    %588 = arith.addf %586, %587 : vector<128x128xf32>
    %cst_118 = arith.constant 0.000000e+00 : f32
    %589 = vector.broadcast %cst_118 : f32 to vector<128x128xf32>
    %590 = arith.maximumf %588, %589 : vector<128x128xf32>
    %591 = arith.truncf %590 : vector<128x128xf32> to vector<128x128xbf16>
    %cst_119 = arith.constant dense<0.000000e+00> : vector<64x128xf32>
    %592 = tpu.matmul %438, %591, %cst_119 {dimension_numbers = #tpu.dot_dimension_numbers<[1], [0], [0], [1], [0, 0, 1, 1], [], []>} : vector<64x128xbf16>, vector<128x128xbf16>, vector<64x128xf32> -> vector<64x128xf32>
    %593 = vector.broadcast %440 : vector<64x1xf32> to vector<64x128xf32>
    %594 = arith.addf %592, %593 : vector<64x128xf32>
    %595 = arith.maximumf %583, %594 : vector<64x128xf32>
    %c0_120 = arith.constant 0 : index
    %c13 = arith.constant 13 : index
    %c0_121 = arith.constant 0 : index
    %c0_122 = arith.constant 0 : index
    %596 = vector.load %arg3[%c0_120, %c13, %c0_121, %c0_122] : memref<1x16x64x128xbf16, #tpu.memory_space<vmem>>, vector<1x1x64x128xbf16>
    %597 = vector.shape_cast %596 : vector<1x1x64x128xbf16> to vector<64x128xbf16>
    %cst_123 = arith.constant dense<0.000000e+00> : vector<128x128xf32>
    %598 = tpu.matmul %437, %597, %cst_123 {dimension_numbers = #tpu.dot_dimension_numbers<[1], [0], [0], [1], [0, 0, 1, 1], [], []>} : vector<128x64xbf16>, vector<64x128xbf16>, vector<128x128xf32> -> vector<128x128xf32>
    %599 = vector.broadcast %439 : vector<128x1xf32> to vector<128x128xf32>
    %600 = arith.addf %598, %599 : vector<128x128xf32>
    %cst_124 = arith.constant 0.000000e+00 : f32
    %601 = vector.broadcast %cst_124 : f32 to vector<128x128xf32>
    %602 = arith.maximumf %600, %601 : vector<128x128xf32>
    %603 = arith.truncf %602 : vector<128x128xf32> to vector<128x128xbf16>
    %cst_125 = arith.constant dense<0.000000e+00> : vector<64x128xf32>
    %604 = tpu.matmul %438, %603, %cst_125 {dimension_numbers = #tpu.dot_dimension_numbers<[1], [0], [0], [1], [0, 0, 1, 1], [], []>} : vector<64x128xbf16>, vector<128x128xbf16>, vector<64x128xf32> -> vector<64x128xf32>
    %605 = vector.broadcast %440 : vector<64x1xf32> to vector<64x128xf32>
    %606 = arith.addf %604, %605 : vector<64x128xf32>
    %607 = arith.maximumf %595, %606 : vector<64x128xf32>
    %c0_126 = arith.constant 0 : index
    %c14 = arith.constant 14 : index
    %c0_127 = arith.constant 0 : index
    %c0_128 = arith.constant 0 : index
    %608 = vector.load %arg3[%c0_126, %c14, %c0_127, %c0_128] : memref<1x16x64x128xbf16, #tpu.memory_space<vmem>>, vector<1x1x64x128xbf16>
    %609 = vector.shape_cast %608 : vector<1x1x64x128xbf16> to vector<64x128xbf16>
    %cst_129 = arith.constant dense<0.000000e+00> : vector<128x128xf32>
    %610 = tpu.matmul %437, %609, %cst_129 {dimension_numbers = #tpu.dot_dimension_numbers<[1], [0], [0], [1], [0, 0, 1, 1], [], []>} : vector<128x64xbf16>, vector<64x128xbf16>, vector<128x128xf32> -> vector<128x128xf32>
    %611 = vector.broadcast %439 : vector<128x1xf32> to vector<128x128xf32>
    %612 = arith.addf %610, %611 : vector<128x128xf32>
    %cst_130 = arith.constant 0.000000e+00 : f32
    %613 = vector.broadcast %cst_130 : f32 to vector<128x128xf32>
    %614 = arith.maximumf %612, %613 : vector<128x128xf32>
    %615 = arith.truncf %614 : vector<128x128xf32> to vector<128x128xbf16>
    %cst_131 = arith.constant dense<0.000000e+00> : vector<64x128xf32>
    %616 = tpu.matmul %438, %615, %cst_131 {dimension_numbers = #tpu.dot_dimension_numbers<[1], [0], [0], [1], [0, 0, 1, 1], [], []>} : vector<64x128xbf16>, vector<128x128xbf16>, vector<64x128xf32> -> vector<64x128xf32>
    %617 = vector.broadcast %440 : vector<64x1xf32> to vector<64x128xf32>
    %618 = arith.addf %616, %617 : vector<64x128xf32>
    %619 = arith.maximumf %607, %618 : vector<64x128xf32>
    %c0_132 = arith.constant 0 : index
    %c15 = arith.constant 15 : index
    %c0_133 = arith.constant 0 : index
    %c0_134 = arith.constant 0 : index
    %620 = vector.load %arg3[%c0_132, %c15, %c0_133, %c0_134] : memref<1x16x64x128xbf16, #tpu.memory_space<vmem>>, vector<1x1x64x128xbf16>
    %621 = vector.shape_cast %620 : vector<1x1x64x128xbf16> to vector<64x128xbf16>
    %cst_135 = arith.constant dense<0.000000e+00> : vector<128x128xf32>
    %622 = tpu.matmul %437, %621, %cst_135 {dimension_numbers = #tpu.dot_dimension_numbers<[1], [0], [0], [1], [0, 0, 1, 1], [], []>} : vector<128x64xbf16>, vector<64x128xbf16>, vector<128x128xf32> -> vector<128x128xf32>
    %623 = vector.broadcast %439 : vector<128x1xf32> to vector<128x128xf32>
    %624 = arith.addf %622, %623 : vector<128x128xf32>
    %cst_136 = arith.constant 0.000000e+00 : f32
    %625 = vector.broadcast %cst_136 : f32 to vector<128x128xf32>
    %626 = arith.maximumf %624, %625 : vector<128x128xf32>
    %627 = arith.truncf %626 : vector<128x128xf32> to vector<128x128xbf16>
    %cst_137 = arith.constant dense<0.000000e+00> : vector<64x128xf32>
    %628 = tpu.matmul %438, %627, %cst_137 {dimension_numbers = #tpu.dot_dimension_numbers<[1], [0], [0], [1], [0, 0, 1, 1], [], []>} : vector<64x128xbf16>, vector<128x128xbf16>, vector<64x128xf32> -> vector<64x128xf32>
    %629 = vector.broadcast %440 : vector<64x1xf32> to vector<64x128xf32>
    %630 = arith.addf %628, %629 : vector<64x128xf32>
    %631 = arith.maximumf %619, %630 : vector<64x128xf32>
    %cst_138 = arith.constant 0.000000e+00 : f32
    %632 = vector.broadcast %cst_138 : f32 to vector<64x128xf32>
    %cst_139 = arith.constant 0.000000e+00 : f32
    %633 = vector.broadcast %cst_139 : f32 to vector<64x128xf32>
    %634 = arith.subf %451, %631 : vector<64x128xf32>
    %635 = math.exp %634 : vector<64x128xf32>
    %636 = arith.addf %632, %635 : vector<64x128xf32>
    %c0_140 = arith.constant 0 : index
    %c0_141 = arith.constant 0 : index
    %c0_142 = arith.constant 0 : index
    %c0_143 = arith.constant 0 : index
    %637 = vector.load %arg3[%c0_140, %c0_141, %c0_142, %c0_143] : memref<1x16x64x128xbf16, #tpu.memory_space<vmem>>, vector<1x1x64x128xbf16>
    %638 = vector.shape_cast %637 : vector<1x1x64x128xbf16> to vector<64x128xbf16>
    %639 = arith.extf %638 : vector<64x128xbf16> to vector<64x128xf32>
    %640 = arith.mulf %635, %639 : vector<64x128xf32>
    %641 = arith.addf %633, %640 : vector<64x128xf32>
    %642 = arith.subf %462, %631 : vector<64x128xf32>
    %643 = math.exp %642 : vector<64x128xf32>
    %644 = arith.addf %636, %643 : vector<64x128xf32>
    %c0_144 = arith.constant 0 : index
    %c1_145 = arith.constant 1 : index
    %c0_146 = arith.constant 0 : index
    %c0_147 = arith.constant 0 : index
    %645 = vector.load %arg3[%c0_144, %c1_145, %c0_146, %c0_147] : memref<1x16x64x128xbf16, #tpu.memory_space<vmem>>, vector<1x1x64x128xbf16>
    %646 = vector.shape_cast %645 : vector<1x1x64x128xbf16> to vector<64x128xbf16>
    %647 = arith.extf %646 : vector<64x128xbf16> to vector<64x128xf32>
    %648 = arith.mulf %643, %647 : vector<64x128xf32>
    %649 = arith.addf %641, %648 : vector<64x128xf32>
    %650 = arith.subf %474, %631 : vector<64x128xf32>
    %651 = math.exp %650 : vector<64x128xf32>
    %652 = arith.addf %644, %651 : vector<64x128xf32>
    %c0_148 = arith.constant 0 : index
    %c2_149 = arith.constant 2 : index
    %c0_150 = arith.constant 0 : index
    %c0_151 = arith.constant 0 : index
    %653 = vector.load %arg3[%c0_148, %c2_149, %c0_150, %c0_151] : memref<1x16x64x128xbf16, #tpu.memory_space<vmem>>, vector<1x1x64x128xbf16>
    %654 = vector.shape_cast %653 : vector<1x1x64x128xbf16> to vector<64x128xbf16>
    %655 = arith.extf %654 : vector<64x128xbf16> to vector<64x128xf32>
    %656 = arith.mulf %651, %655 : vector<64x128xf32>
    %657 = arith.addf %649, %656 : vector<64x128xf32>
    %658 = arith.subf %486, %631 : vector<64x128xf32>
    %659 = math.exp %658 : vector<64x128xf32>
    %660 = arith.addf %652, %659 : vector<64x128xf32>
    %c0_152 = arith.constant 0 : index
    %c3_153 = arith.constant 3 : index
    %c0_154 = arith.constant 0 : index
    %c0_155 = arith.constant 0 : index
    %661 = vector.load %arg3[%c0_152, %c3_153, %c0_154, %c0_155] : memref<1x16x64x128xbf16, #tpu.memory_space<vmem>>, vector<1x1x64x128xbf16>
    %662 = vector.shape_cast %661 : vector<1x1x64x128xbf16> to vector<64x128xbf16>
    %663 = arith.extf %662 : vector<64x128xbf16> to vector<64x128xf32>
    %664 = arith.mulf %659, %663 : vector<64x128xf32>
    %665 = arith.addf %657, %664 : vector<64x128xf32>
    %666 = arith.subf %498, %631 : vector<64x128xf32>
    %667 = math.exp %666 : vector<64x128xf32>
    %668 = arith.addf %660, %667 : vector<64x128xf32>
    %c0_156 = arith.constant 0 : index
    %c4_157 = arith.constant 4 : index
    %c0_158 = arith.constant 0 : index
    %c0_159 = arith.constant 0 : index
    %669 = vector.load %arg3[%c0_156, %c4_157, %c0_158, %c0_159] : memref<1x16x64x128xbf16, #tpu.memory_space<vmem>>, vector<1x1x64x128xbf16>
    %670 = vector.shape_cast %669 : vector<1x1x64x128xbf16> to vector<64x128xbf16>
    %671 = arith.extf %670 : vector<64x128xbf16> to vector<64x128xf32>
    %672 = arith.mulf %667, %671 : vector<64x128xf32>
    %673 = arith.addf %665, %672 : vector<64x128xf32>
    %674 = arith.subf %510, %631 : vector<64x128xf32>
    %675 = math.exp %674 : vector<64x128xf32>
    %676 = arith.addf %668, %675 : vector<64x128xf32>
    %c0_160 = arith.constant 0 : index
    %c5_161 = arith.constant 5 : index
    %c0_162 = arith.constant 0 : index
    %c0_163 = arith.constant 0 : index
    %677 = vector.load %arg3[%c0_160, %c5_161, %c0_162, %c0_163] : memref<1x16x64x128xbf16, #tpu.memory_space<vmem>>, vector<1x1x64x128xbf16>
    %678 = vector.shape_cast %677 : vector<1x1x64x128xbf16> to vector<64x128xbf16>
    %679 = arith.extf %678 : vector<64x128xbf16> to vector<64x128xf32>
    %680 = arith.mulf %675, %679 : vector<64x128xf32>
    %681 = arith.addf %673, %680 : vector<64x128xf32>
    %682 = arith.subf %522, %631 : vector<64x128xf32>
    %683 = math.exp %682 : vector<64x128xf32>
    %684 = arith.addf %676, %683 : vector<64x128xf32>
    %c0_164 = arith.constant 0 : index
    %c6_165 = arith.constant 6 : index
    %c0_166 = arith.constant 0 : index
    %c0_167 = arith.constant 0 : index
    %685 = vector.load %arg3[%c0_164, %c6_165, %c0_166, %c0_167] : memref<1x16x64x128xbf16, #tpu.memory_space<vmem>>, vector<1x1x64x128xbf16>
    %686 = vector.shape_cast %685 : vector<1x1x64x128xbf16> to vector<64x128xbf16>
    %687 = arith.extf %686 : vector<64x128xbf16> to vector<64x128xf32>
    %688 = arith.mulf %683, %687 : vector<64x128xf32>
    %689 = arith.addf %681, %688 : vector<64x128xf32>
    %690 = arith.subf %534, %631 : vector<64x128xf32>
    %691 = math.exp %690 : vector<64x128xf32>
    %692 = arith.addf %684, %691 : vector<64x128xf32>
    %c0_168 = arith.constant 0 : index
    %c7_169 = arith.constant 7 : index
    %c0_170 = arith.constant 0 : index
    %c0_171 = arith.constant 0 : index
    %693 = vector.load %arg3[%c0_168, %c7_169, %c0_170, %c0_171] : memref<1x16x64x128xbf16, #tpu.memory_space<vmem>>, vector<1x1x64x128xbf16>
    %694 = vector.shape_cast %693 : vector<1x1x64x128xbf16> to vector<64x128xbf16>
    %695 = arith.extf %694 : vector<64x128xbf16> to vector<64x128xf32>
    %696 = arith.mulf %691, %695 : vector<64x128xf32>
    %697 = arith.addf %689, %696 : vector<64x128xf32>
    %698 = arith.subf %546, %631 : vector<64x128xf32>
    %699 = math.exp %698 : vector<64x128xf32>
    %700 = arith.addf %692, %699 : vector<64x128xf32>
    %c0_172 = arith.constant 0 : index
    %c8_173 = arith.constant 8 : index
    %c0_174 = arith.constant 0 : index
    %c0_175 = arith.constant 0 : index
    %701 = vector.load %arg3[%c0_172, %c8_173, %c0_174, %c0_175] : memref<1x16x64x128xbf16, #tpu.memory_space<vmem>>, vector<1x1x64x128xbf16>
    %702 = vector.shape_cast %701 : vector<1x1x64x128xbf16> to vector<64x128xbf16>
    %703 = arith.extf %702 : vector<64x128xbf16> to vector<64x128xf32>
    %704 = arith.mulf %699, %703 : vector<64x128xf32>
    %705 = arith.addf %697, %704 : vector<64x128xf32>
    %706 = arith.subf %558, %631 : vector<64x128xf32>
    %707 = math.exp %706 : vector<64x128xf32>
    %708 = arith.addf %700, %707 : vector<64x128xf32>
    %c0_176 = arith.constant 0 : index
    %c9_177 = arith.constant 9 : index
    %c0_178 = arith.constant 0 : index
    %c0_179 = arith.constant 0 : index
    %709 = vector.load %arg3[%c0_176, %c9_177, %c0_178, %c0_179] : memref<1x16x64x128xbf16, #tpu.memory_space<vmem>>, vector<1x1x64x128xbf16>
    %710 = vector.shape_cast %709 : vector<1x1x64x128xbf16> to vector<64x128xbf16>
    %711 = arith.extf %710 : vector<64x128xbf16> to vector<64x128xf32>
    %712 = arith.mulf %707, %711 : vector<64x128xf32>
    %713 = arith.addf %705, %712 : vector<64x128xf32>
    %714 = arith.subf %570, %631 : vector<64x128xf32>
    %715 = math.exp %714 : vector<64x128xf32>
    %716 = arith.addf %708, %715 : vector<64x128xf32>
    %c0_180 = arith.constant 0 : index
    %c10_181 = arith.constant 10 : index
    %c0_182 = arith.constant 0 : index
    %c0_183 = arith.constant 0 : index
    %717 = vector.load %arg3[%c0_180, %c10_181, %c0_182, %c0_183] : memref<1x16x64x128xbf16, #tpu.memory_space<vmem>>, vector<1x1x64x128xbf16>
    %718 = vector.shape_cast %717 : vector<1x1x64x128xbf16> to vector<64x128xbf16>
    %719 = arith.extf %718 : vector<64x128xbf16> to vector<64x128xf32>
    %720 = arith.mulf %715, %719 : vector<64x128xf32>
    %721 = arith.addf %713, %720 : vector<64x128xf32>
    %722 = arith.subf %582, %631 : vector<64x128xf32>
    %723 = math.exp %722 : vector<64x128xf32>
    %724 = arith.addf %716, %723 : vector<64x128xf32>
    %c0_184 = arith.constant 0 : index
    %c11_185 = arith.constant 11 : index
    %c0_186 = arith.constant 0 : index
    %c0_187 = arith.constant 0 : index
    %725 = vector.load %arg3[%c0_184, %c11_185, %c0_186, %c0_187] : memref<1x16x64x128xbf16, #tpu.memory_space<vmem>>, vector<1x1x64x128xbf16>
    %726 = vector.shape_cast %725 : vector<1x1x64x128xbf16> to vector<64x128xbf16>
    %727 = arith.extf %726 : vector<64x128xbf16> to vector<64x128xf32>
    %728 = arith.mulf %723, %727 : vector<64x128xf32>
    %729 = arith.addf %721, %728 : vector<64x128xf32>
    %730 = arith.subf %594, %631 : vector<64x128xf32>
    %731 = math.exp %730 : vector<64x128xf32>
    %732 = arith.addf %724, %731 : vector<64x128xf32>
    %c0_188 = arith.constant 0 : index
    %c12_189 = arith.constant 12 : index
    %c0_190 = arith.constant 0 : index
    %c0_191 = arith.constant 0 : index
    %733 = vector.load %arg3[%c0_188, %c12_189, %c0_190, %c0_191] : memref<1x16x64x128xbf16, #tpu.memory_space<vmem>>, vector<1x1x64x128xbf16>
    %734 = vector.shape_cast %733 : vector<1x1x64x128xbf16> to vector<64x128xbf16>
    %735 = arith.extf %734 : vector<64x128xbf16> to vector<64x128xf32>
    %736 = arith.mulf %731, %735 : vector<64x128xf32>
    %737 = arith.addf %729, %736 : vector<64x128xf32>
    %738 = arith.subf %606, %631 : vector<64x128xf32>
    %739 = math.exp %738 : vector<64x128xf32>
    %740 = arith.addf %732, %739 : vector<64x128xf32>
    %c0_192 = arith.constant 0 : index
    %c13_193 = arith.constant 13 : index
    %c0_194 = arith.constant 0 : index
    %c0_195 = arith.constant 0 : index
    %741 = vector.load %arg3[%c0_192, %c13_193, %c0_194, %c0_195] : memref<1x16x64x128xbf16, #tpu.memory_space<vmem>>, vector<1x1x64x128xbf16>
    %742 = vector.shape_cast %741 : vector<1x1x64x128xbf16> to vector<64x128xbf16>
    %743 = arith.extf %742 : vector<64x128xbf16> to vector<64x128xf32>
    %744 = arith.mulf %739, %743 : vector<64x128xf32>
    %745 = arith.addf %737, %744 : vector<64x128xf32>
    %746 = arith.subf %618, %631 : vector<64x128xf32>
    %747 = math.exp %746 : vector<64x128xf32>
    %748 = arith.addf %740, %747 : vector<64x128xf32>
    %c0_196 = arith.constant 0 : index
    %c14_197 = arith.constant 14 : index
    %c0_198 = arith.constant 0 : index
    %c0_199 = arith.constant 0 : index
    %749 = vector.load %arg3[%c0_196, %c14_197, %c0_198, %c0_199] : memref<1x16x64x128xbf16, #tpu.memory_space<vmem>>, vector<1x1x64x128xbf16>
    %750 = vector.shape_cast %749 : vector<1x1x64x128xbf16> to vector<64x128xbf16>
    %751 = arith.extf %750 : vector<64x128xbf16> to vector<64x128xf32>
    %752 = arith.mulf %747, %751 : vector<64x128xf32>
    %753 = arith.addf %745, %752 : vector<64x128xf32>
    %754 = arith.subf %630, %631 : vector<64x128xf32>
    %755 = math.exp %754 : vector<64x128xf32>
    %756 = arith.addf %748, %755 : vector<64x128xf32>
    %c0_200 = arith.constant 0 : index
    %c15_201 = arith.constant 15 : index
    %c0_202 = arith.constant 0 : index
    %c0_203 = arith.constant 0 : index
    %757 = vector.load %arg3[%c0_200, %c15_201, %c0_202, %c0_203] : memref<1x16x64x128xbf16, #tpu.memory_space<vmem>>, vector<1x1x64x128xbf16>
    %758 = vector.shape_cast %757 : vector<1x1x64x128xbf16> to vector<64x128xbf16>
    %759 = arith.extf %758 : vector<64x128xbf16> to vector<64x128xf32>
    %760 = arith.mulf %755, %759 : vector<64x128xf32>
    %761 = arith.addf %753, %760 : vector<64x128xf32>
    %762 = tpu.reciprocal %756 {approx = true} : vector<64x128xf32> -> vector<64x128xf32>
    %763 = arith.mulf %761, %762 : vector<64x128xf32>
    %764 = tpu.concatenate %763, %436 in 0 : vector<64x128xf32>, vector<64x128xf32> -> vector<128x128xf32>
    %765 = arith.truncf %764 : vector<128x128xf32> to vector<128x128xbf16>
    %c0_204 = arith.constant 0 : index
    %c0_205 = arith.constant 0 : index
    %766 = vector.load %arg11[%c0_204, %c0_205] : memref<128x128xbf16, #tpu.memory_space<vmem>>, vector<128x128xbf16>
    %cst_206 = arith.constant dense<0.000000e+00> : vector<128x128xf32>
    %767 = tpu.matmul %766, %765, %cst_206 {dimension_numbers = #tpu.dot_dimension_numbers<[1], [0], [0], [1], [0, 0, 1, 1], [], []>} : vector<128x128xbf16>, vector<128x128xbf16>, vector<128x128xf32> -> vector<128x128xf32>
    %c0_207 = arith.constant 0 : index
    %c0_208 = arith.constant 0 : index
    %768 = vector.load %arg12[%c0_207, %c0_208] : memref<128x1xf32, #tpu.memory_space<vmem>>, vector<128x1xf32>
    %769 = vector.broadcast %768 : vector<128x1xf32> to vector<128x128xf32>
    %770 = arith.addf %767, %769 : vector<128x128xf32>
    %cst_209 = arith.constant 0.000000e+00 : f32
    %771 = vector.broadcast %cst_209 : f32 to vector<128x128xf32>
    %772 = arith.maximumf %770, %771 : vector<128x128xf32>
    %c0_210 = arith.constant 0 : index
    %c0_211 = arith.constant 0 : index
    %773 = vector.load %arg13[%c0_210, %c0_211] : memref<6x128xbf16, #tpu.memory_space<vmem>>, vector<6x128xbf16>
    %774 = arith.truncf %772 : vector<128x128xf32> to vector<128x128xbf16>
    %cst_212 = arith.constant dense<0.000000e+00> : vector<6x128xf32>
    %775 = tpu.matmul %773, %774, %cst_212 {dimension_numbers = #tpu.dot_dimension_numbers<[1], [0], [0], [1], [0, 0, 1, 1], [], []>} : vector<6x128xbf16>, vector<128x128xbf16>, vector<6x128xf32> -> vector<6x128xf32>
    %c0_213 = arith.constant 0 : index
    %c0_214 = arith.constant 0 : index
    %776 = vector.load %arg14[%c0_213, %c0_214] : memref<6x1xf32, #tpu.memory_space<vmem>>, vector<6x1xf32>
    %777 = vector.broadcast %776 : vector<6x1xf32> to vector<6x128xf32>
    %778 = arith.addf %775, %777 : vector<6x128xf32>
    %c0_215 = arith.constant 0 : index
    %c0_216 = arith.constant 0 : index
    %c0_217 = arith.constant 0 : index
    %779 = vector.load %arg15[%c0_215, %c0_216, %c0_217] : memref<1x6x128xf32, #tpu.memory_space<vmem>>, vector<1x6x128xf32>
    %780 = vector.shape_cast %779 : vector<1x6x128xf32> to vector<6x128xf32>
    %781 = vector.shape_cast %778 : vector<6x128xf32> to vector<1x6x128xf32>
    tpu.vector_store %arg15[%c0_215, %c0_216, %c0_217], %781 {strides = array<i32>} : memref<1x6x128xf32, #tpu.memory_space<vmem>>, vector<1x6x128xf32>,
    return
  }
  func.func @transform_0(%arg0: i32, %arg1: i32) -> (i32, i32, i32, i32) {
    %c0_i32 = arith.constant 0 : i32
    %c0_i32_0 = arith.constant 0 : i32
    %c0_i32_1 = arith.constant 0 : i32
    return %arg0, %c0_i32, %c0_i32_0, %arg1 : i32, i32, i32, i32
  }
  func.func @transform_1(%arg0: i32, %arg1: i32) -> (i32, i32, i32, i32) {
    %c0_i32 = arith.constant 0 : i32
    %c0_i32_0 = arith.constant 0 : i32
    %c0_i32_1 = arith.constant 0 : i32
    return %arg0, %c0_i32, %c0_i32_0, %arg1 : i32, i32, i32, i32
  }
  func.func @transform_2(%arg0: i32, %arg1: i32) -> (i32, i32) {
    %c0_i32 = arith.constant 0 : i32
    %c0_i32_0 = arith.constant 0 : i32
    %c0_i32_1 = arith.constant 0 : i32
    return %c0_i32, %c0_i32_0 : i32, i32
  }
  func.func @transform_3(%arg0: i32, %arg1: i32) -> (i32, i32) {
    %c0_i32 = arith.constant 0 : i32
    %c0_i32_0 = arith.constant 0 : i32
    %c0_i32_1 = arith.constant 0 : i32
    return %c0_i32, %c0_i32_0 : i32, i32
  }
  func.func @transform_4(%arg0: i32, %arg1: i32) -> (i32, i32) {
    %c0_i32 = arith.constant 0 : i32
    %c0_i32_0 = arith.constant 0 : i32
    %c0_i32_1 = arith.constant 0 : i32
    return %c0_i32, %c0_i32_0 : i32, i32
  }
  func.func @transform_5(%arg0: i32, %arg1: i32) -> (i32, i32) {
    %c0_i32 = arith.constant 0 : i32
    %c0_i32_0 = arith.constant 0 : i32
    %c0_i32_1 = arith.constant 0 : i32
    return %c0_i32, %c0_i32_0 : i32, i32
  }
  func.func @transform_6(%arg0: i32, %arg1: i32) -> (i32, i32) {
    %c0_i32 = arith.constant 0 : i32
    %c0_i32_0 = arith.constant 0 : i32
    %c0_i32_1 = arith.constant 0 : i32
    return %c0_i32, %c0_i32_0 : i32, i32
  }
  func.func @transform_7(%arg0: i32, %arg1: i32) -> (i32, i32) {
    %c0_i32 = arith.constant 0 : i32
    %c0_i32_0 = arith.constant 0 : i32
    %c0_i32_1 = arith.constant 0 : i32
    return %c0_i32, %c0_i32_0 : i32, i32
  }
  func.func @transform_8(%arg0: i32, %arg1: i32) -> (i32, i32) {
    %c0_i32 = arith.constant 0 : i32
    %c0_i32_0 = arith.constant 0 : i32
    %c0_i32_1 = arith.constant 0 : i32
    return %c0_i32, %c0_i32_0 : i32, i32
  }
  func.func @transform_9(%arg0: i32, %arg1: i32) -> (i32, i32) {
    %c0_i32 = arith.constant 0 : i32
    %c0_i32_0 = arith.constant 0 : i32
    %c0_i32_1 = arith.constant 0 : i32
    return %c0_i32, %c0_i32_0 : i32, i32
  }
  func.func @transform_10(%arg0: i32, %arg1: i32) -> (i32, i32) {
    %c0_i32 = arith.constant 0 : i32
    %c0_i32_0 = arith.constant 0 : i32
    %c0_i32_1 = arith.constant 0 : i32
    return %c0_i32, %c0_i32_0 : i32, i32
  }
  func.func @transform_11(%arg0: i32, %arg1: i32) -> (i32, i32) {
    %c0_i32 = arith.constant 0 : i32
    %c0_i32_0 = arith.constant 0 : i32
    %c0_i32_1 = arith.constant 0 : i32
    return %c0_i32, %c0_i32_0 : i32, i32
  }
  func.func @transform_12(%arg0: i32, %arg1: i32) -> (i32, i32) {
    %c0_i32 = arith.constant 0 : i32
    %c0_i32_0 = arith.constant 0 : i32
    %c0_i32_1 = arith.constant 0 : i32
    return %c0_i32, %c0_i32_0 : i32, i32
  }
  func.func @transform_13(%arg0: i32, %arg1: i32) -> (i32, i32, i32) {
    %c0_i32 = arith.constant 0 : i32
    %c0_i32_0 = arith.constant 0 : i32
    return %arg0, %c0_i32, %arg1 : i32, i32, i32
  }
}

</mosaic_0001>

<llo_original>
// kernel: tile.9
$region0: #{tile.9}
  %s0 = inlined_call_operand.vmem [shape: f32[2,3,2,256], index: 0, kind: input, shape index: {}]
  %s1 = inlined_call_operand.vmem [shape: f32[2,3,512], index: 1, kind: output, shape index: {}]
  $region1: #{tile.9} parent=0
    #allocation0 [shape = 'u8[49152]{0}', space=vmem, size = 0xc000, scoped, tag = 'scoped mem for output reshape']
    #allocation1 [shape = 'u8[49152]{0}', space=vmem, size = 0xc000, scoped, tag = 'scoped mem for input reshape']
    %s3 = ssub.s32 4, 1
    %s4 = scalar_lea.vmem %s0, 22
    %v5 = vld [vmem:[%s4] sm:%s3]
    %s6 = scalar_lea.vmem [#allocation1], 88
    %7 = vst [vmem:[%s6] sm:%s3] %v5
    %s8 = scalar_lea.vmem %s0, 20
    %v9 = vld [vmem:[%s8] sm:%s3]
    %s10 = scalar_lea.vmem [#allocation1], 80
    %11 = vst [vmem:[%s10] sm:%s3] %v9
    %s12 = scalar_lea.vmem %s0, 18
    %v13 = vld [vmem:[%s12] sm:%s3]
    %s14 = scalar_lea.vmem [#allocation1], 72
    %15 = vst [vmem:[%s14] sm:%s3] %v13
    %s16 = scalar_lea.vmem %s0, 16
    %v17 = vld [vmem:[%s16] sm:%s3]
    %s18 = scalar_lea.vmem [#allocation1], 64
    %19 = vst [vmem:[%s18] sm:%s3] %v17
    %s20 = scalar_lea.vmem %s0, 14
    %v21 = vld [vmem:[%s20] sm:%s3]
    %s22 = scalar_lea.vmem [#allocation1], 56
    %23 = vst [vmem:[%s22] sm:%s3] %v21
    %s24 = scalar_lea.vmem %s0, 12
    %v25 = vld [vmem:[%s24] sm:%s3]
    %s26 = scalar_lea.vmem [#allocation1], 48
    %27 = vst [vmem:[%s26] sm:%s3] %v25
    %s28 = scalar_lea.vmem %s0, 10
    %v29 = vld [vmem:[%s28] sm:%s3]
    %s30 = scalar_lea.vmem [#allocation1], 40
    %31 = vst [vmem:[%s30] sm:%s3] %v29
    %s32 = scalar_lea.vmem %s0, 8
    %v33 = vld [vmem:[%s32] sm:%s3]
    %s34 = scalar_lea.vmem [#allocation1], 32
    %35 = vst [vmem:[%s34] sm:%s3] %v33
    %s36 = scalar_lea.vmem %s0, 6
    %v37 = vld [vmem:[%s36] sm:%s3]
    %s38 = scalar_lea.vmem [#allocation1], 24
    %39 = vst [vmem:[%s38] sm:%s3] %v37
    %s40 = scalar_lea.vmem %s0, 4
    %v41 = vld [vmem:[%s40] sm:%s3]
    %s42 = scalar_lea.vmem [#allocation1], 16
    %43 = vst [vmem:[%s42] sm:%s3] %v41
    %s44 = scalar_lea.vmem %s0, 2
    %v45 = vld [vmem:[%s44] sm:%s3]
    %s46 = scalar_lea.vmem [#allocation1], 8
    %47 = vst [vmem:[%s46] sm:%s3] %v45
    %v48 = vld [vmem:[%s0] sm:%s3]
    %49 = vst [vmem:[#allocation1] sm:%s3] %v48
    %v50 = vld [vmem:[#allocation1] sm:$0x3]
    %51 = vst [vmem:[#allocation0] ss:$16 sm:$0x3] %v50
    %s52 = scalar_lea.vmem [#allocation1], 8
    %v53 = vld [vmem:[%s52] sm:$0x3]
    %s54 = scalar_lea.vmem [#allocation0], 8
    %55 = vst [vmem:[%s54] ss:$16 sm:$0x3] %v53
    %s56 = scalar_lea.vmem [#allocation1], 16
    %v57 = vld [vmem:[%s56] sm:$0x3]
    %s58 = scalar_lea.vmem [#allocation0], 1
    %59 = vst [vmem:[%s58] ss:$16 sm:$0x3] %v57
    %s60 = scalar_lea.vmem [#allocation1], 24
    %v61 = vld [vmem:[%s60] sm:$0x3]
    %s62 = scalar_lea.vmem [#allocation0], 9
    %63 = vst [vmem:[%s62] ss:$16 sm:$0x3] %v61
    %s64 = scalar_lea.vmem [#allocation1], 32
    %v65 = vld [vmem:[%s64] sm:$0x3]
    %s66 = scalar_lea.vmem [#allocation0], 32
    %67 = vst [vmem:[%s66] ss:$16 sm:$0x3] %v65
    %s68 = scalar_lea.vmem [#allocation1], 40
    %v69 = vld [vmem:[%s68] sm:$0x3]
    %s70 = scalar_lea.vmem [#allocation0], 40
    %71 = vst [vmem:[%s70] ss:$16 sm:$0x3] %v69
    %s72 = scalar_lea.vmem [#allocation1], 48
    %v73 = vld [vmem:[%s72] sm:$0x3]
    %s74 = scalar_lea.vmem [#allocation0], 33
    %75 = vst [vmem:[%s74] ss:$16 sm:$0x3] %v73
    %s76 = scalar_lea.vmem [#allocation1], 56
    %v77 = vld [vmem:[%s76] sm:$0x3]
    %s78 = scalar_lea.vmem [#allocation0], 41
    %79 = vst [vmem:[%s78] ss:$16 sm:$0x3] %v77
    %s80 = scalar_lea.vmem [#allocation1], 64
    %v81 = vld [vmem:[%s80] sm:$0x3]
    %s82 = scalar_lea.vmem [#allocation0], 64
    %83 = vst [vmem:[%s82] ss:$16 sm:$0x3] %v81
    %s84 = scalar_lea.vmem [#allocation1], 72
    %v85 = vld [vmem:[%s84] sm:$0x3]
    %s86 = scalar_lea.vmem [#allocation0], 72
    %87 = vst [vmem:[%s86] ss:$16 sm:$0x3] %v85
    %s88 = scalar_lea.vmem [#allocation1], 80
    %v89 = vld [vmem:[%s88] sm:$0x3]
    %s90 = scalar_lea.vmem [#allocation0], 65
    %91 = vst [vmem:[%s90] ss:$16 sm:$0x3] %v89
    %s92 = scalar_lea.vmem [#allocation1], 88
    %v93 = vld [vmem:[%s92] sm:$0x3]
    %s94 = scalar_lea.vmem [#allocation0], 73
    %95 = vst [vmem:[%s94] ss:$16 sm:$0x3] %v93
    %s97 = ssub.s32 4, 1
    %v98 = vld [vmem:[#allocation0] sm:%s97]
    %s100 = ssub.s32 4, 1
    %101 = vst [vmem:[%s1] sm:%s100] %v98
    %s102 = scalar_lea.vmem [#allocation0], 8
    %v103 = vld [vmem:[%s102] sm:%s97]
    %s105 = ssub.s32 4, 1
    %s106 = scalar_lea.vmem %s1, 2
    %107 = vst [vmem:[%s106] sm:%s105] %v103
    %s108 = scalar_lea.vmem [#allocation0], 16
    %v109 = vld [vmem:[%s108] sm:%s97]
    %s111 = ssub.s32 4, 1
    %s112 = scalar_lea.vmem %s1, 4
    %113 = vst [vmem:[%s112] sm:%s111] %v109
    %s114 = scalar_lea.vmem [#allocation0], 24
    %v115 = vld [vmem:[%s114] sm:%s97]
    %s117 = ssub.s32 4, 1
    %s118 = scalar_lea.vmem %s1, 6
    %119 = vst [vmem:[%s118] sm:%s117] %v115
    %s120 = scalar_lea.vmem [#allocation0], 32
    %v121 = vld [vmem:[%s120] sm:%s97]
    %s123 = ssub.s32 4, 1
    %s124 = scalar_lea.vmem %s1, 8
    %125 = vst [vmem:[%s124] sm:%s123] %v121
    %s126 = scalar_lea.vmem [#allocation0], 40
    %v127 = vld [vmem:[%s126] sm:%s97]
    %s129 = ssub.s32 4, 1
    %s130 = scalar_lea.vmem %s1, 10
    %131 = vst [vmem:[%s130] sm:%s129] %v127
    %s132 = scalar_lea.vmem [#allocation0], 48
    %v133 = vld [vmem:[%s132] sm:%s97]
    %s135 = ssub.s32 4, 1
    %s136 = scalar_lea.vmem %s1, 12
    %137 = vst [vmem:[%s136] sm:%s135] %v133
    %s138 = scalar_lea.vmem [#allocation0], 56
    %v139 = vld [vmem:[%s138] sm:%s97]
    %s141 = ssub.s32 4, 1
    %s142 = scalar_lea.vmem %s1, 14
    %143 = vst [vmem:[%s142] sm:%s141] %v139
    %s144 = scalar_lea.vmem [#allocation0], 64
    %v145 = vld [vmem:[%s144] sm:%s97]
    %s147 = ssub.s32 4, 1
    %s148 = scalar_lea.vmem %s1, 16
    %149 = vst [vmem:[%s148] sm:%s147] %v145
    %s150 = scalar_lea.vmem [#allocation0], 72
    %v151 = vld [vmem:[%s150] sm:%s97]
    %s153 = ssub.s32 4, 1
    %s154 = scalar_lea.vmem %s1, 18
    %155 = vst [vmem:[%s154] sm:%s153] %v151
    %s156 = scalar_lea.vmem [#allocation0], 80
    %v157 = vld [vmem:[%s156] sm:%s97]
    %s159 = ssub.s32 4, 1
    %s160 = scalar_lea.vmem %s1, 20
    %161 = vst [vmem:[%s160] sm:%s159] %v157
    %s162 = scalar_lea.vmem [#allocation0], 88
    %v163 = vld [vmem:[%s162] sm:%s97]
    %s165 = ssub.s32 4, 1
    %s166 = scalar_lea.vmem %s1, 22
    %167 = vst [vmem:[%s166] sm:%s165] %v163

// kernel: neg.1
$region0: #{neg.1}
  #allocation0 [shape = 's32[1]{0}', space=sflag, size = 0x4, scoped, tag = 'scoped memory for neg.1']
  %s0 = inlined_call_operand.vmem [shape: f32[2,256,256], index: 0, kind: input, shape index: {}]
  %s1 = inlined_call_operand.vmem [shape: f32[2,256,256], index: 1, kind: output, shape index: {}]
  %v2 = vld [vmem:[%s0] sm:$0xff]
  %3 = xla_tuple %v2
  %4 = xla_tuple %3
  %v5 = vxor.u32 %v2, 2147483648
  %6 = xla_tuple %v5
  %7 = vst [vmem:[%s1] sm:$0xff] %v5
  %s8 = scalar_lea.vmem %s0, 512
  %v9 = vld [vmem:[%s8] sm:$0xff]
  %10 = xla_tuple %v9
  %11 = xla_tuple %10
  %v12 = vxor.u32 %v9, 2147483648
  %13 = xla_tuple %v12
  %s14 = scalar_lea.vmem %s1, 512
  %15 = vst [vmem:[%s14] sm:$0xff] %v12
  %s16 = scalar_lea.vmem %s0, 16
  %v17 = vld [vmem:[%s16] sm:$0xff]
  %18 = xla_tuple %v17
  %19 = xla_tuple %18
  %v20 = vxor.u32 %v17, 2147483648
  %21 = xla_tuple %v20
  %s22 = scalar_lea.vmem %s1, 16
  %23 = vst [vmem:[%s22] sm:$0xff] %v20
  %s24 = scalar_lea.vmem %s0, 528
  %v25 = vld [vmem:[%s24] sm:$0xff]
  %26 = xla_tuple %v25
  %27 = xla_tuple %26
  %v28 = vxor.u32 %v25, 2147483648
  %29 = xla_tuple %v28
  %s30 = scalar_lea.vmem %s1, 528
  %31 = vst [vmem:[%s30] sm:$0xff] %v28
  %s32 = scalar_lea.vmem %s0, 32
  %v33 = vld [vmem:[%s32] sm:$0xff]
  %34 = xla_tuple %v33
  %35 = xla_tuple %34
  %v36 = vxor.u32 %v33, 2147483648
  %37 = xla_tuple %v36
  %s38 = scalar_lea.vmem %s1, 32
  %39 = vst [vmem:[%s38] sm:$0xff] %v36
  %s40 = scalar_lea.vmem %s0, 544
  %v41 = vld [vmem:[%s40] sm:$0xff]
  %42 = xla_tuple %v41
  %43 = xla_tuple %42
  %v44 = vxor.u32 %v41, 2147483648
  %45 = xla_tuple %v44
  %s46 = scalar_lea.vmem %s1, 544
  %47 = vst [vmem:[%s46] sm:$0xff] %v44
  %s48 = scalar_lea.vmem %s0, 48
  %v49 = vld [vmem:[%s48] sm:$0xff]
  %50 = xla_tuple %v49
  %51 = xla_tuple %50
  %v52 = vxor.u32 %v49, 2147483648
  %53 = xla_tuple %v52
  %s54 = scalar_lea.vmem %s1, 48
  %55 = vst [vmem:[%s54] sm:$0xff] %v52
  %s56 = scalar_lea.vmem %s0, 560
  %v57 = vld [vmem:[%s56] sm:$0xff]
  %58 = xla_tuple %v57
  %59 = xla_tuple %58
  %v60 = vxor.u32 %v57, 2147483648
  %61 = xla_tuple %v60
  %s62 = scalar_lea.vmem %s1, 560
  %63 = vst [vmem:[%s62] sm:$0xff] %v60
  %s64 = scalar_lea.vmem %s0, 64
  %v65 = vld [vmem:[%s64] sm:$0xff]
  %66 = xla_tuple %v65
  %67 = xla_tuple %66
  %v68 = vxor.u32 %v65, 2147483648
  %69 = xla_tuple %v68
  %s70 = scalar_lea.vmem %s1, 64
  %71 = vst [vmem:[%s70] sm:$0xff] %v68
  %s72 = scalar_lea.vmem %s0, 576
  %v73 = vld [vmem:[%s72] sm:$0xff]
  %74 = xla_tuple %v73
  %75 = xla_tuple %74
  %v76 = vxor.u32 %v73, 2147483648
  %77 = xla_tuple %v76
  %s78 = scalar_lea.vmem %s1, 576
  %79 = vst [vmem:[%s78] sm:$0xff] %v76
  %s80 = scalar_lea.vmem %s0, 80
  %v81 = vld [vmem:[%s80] sm:$0xff]
  %82 = xla_tuple %v81
  %83 = xla_tuple %82
  %v84 = vxor.u32 %v81, 2147483648
  %85 = xla_tuple %v84
  %s86 = scalar_lea.vmem %s1, 80
  %87 = vst [vmem:[%s86] sm:$0xff] %v84
  %s88 = scalar_lea.vmem %s0, 592
  %v89 = vld [vmem:[%s88] sm:$0xff]
  %90 = xla_tuple %v89
  %91 = xla_tuple %90
  %v92 = vxor.u32 %v89, 2147483648
  %93 = xla_tuple %v92
  %s94 = scalar_lea.vmem %s1, 592
  %95 = vst [vmem:[%s94] sm:$0xff] %v92
  %s96 = scalar_lea.vmem %s0, 96
  %v97 = vld [vmem:[%s96] sm:$0xff]
  %98 = xla_tuple %v97
  %99 = xla_tuple %98
  %v100 = vxor.u32 %v97, 2147483648
  %101 = xla_tuple %v100
  %s102 = scalar_lea.vmem %s1, 96
  %103 = vst [vmem:[%s102] sm:$0xff] %v100
  %s104 = scalar_lea.vmem %s0, 608
  %v105 = vld [vmem:[%s104] sm:$0xff]
  %106 = xla_tuple %v105
  %107 = xla_tuple %106
  %v108 = vxor.u32 %v105, 2147483648
  %109 = xla_tuple %v108
  %s110 = scalar_lea.vmem %s1, 608
  %111 = vst [vmem:[%s110] sm:$0xff] %v108
  %s112 = scalar_lea.vmem %s0, 112
  %v113 = vld [vmem:[%s112] sm:$0xff]
  %114 = xla_tuple %v113
  %115 = xla_tuple %114
  %v116 = vxor.u32 %v113, 2147483648
  %117 = xla_tuple %v116
  %s118 = scalar_lea.vmem %s1, 112
  %119 = vst [vmem:[%s118] sm:$0xff] %v116
  %s120 = scalar_lea.vmem %s0, 624
  %v121 = vld [vmem:[%s120] sm:$0xff]
  %122 = xla_tuple %v121
  %123 = xla_tuple %122
  %v124 = vxor.u32 %v121, 2147483648
  %125 = xla_tuple %v124
  %s126 = scalar_lea.vmem %s1, 624
  %127 = vst [vmem:[%s126] sm:$0xff] %v124
  %s128 = scalar_lea.vmem %s0, 128
  %v129 = vld [vmem:[%s128] sm:$0xff]
  %130 = xla_tuple %v129
  %131 = xla_tuple %130
  %v132 = vxor.u32 %v129, 2147483648
  %133 = xla_tuple %v132
  %s134 = scalar_lea.vmem %s1, 128
  %135 = vst [vmem:[%s134] sm:$0xff] %v132
  %s136 = scalar_lea.vmem %s0, 640
  %v137 = vld [vmem:[%s136] sm:$0xff]
  %138 = xla_tuple %v137
  %139 = xla_tuple %138
  %v140 = vxor.u32 %v137, 2147483648
  %141 = xla_tuple %v140
  %s142 = scalar_lea.vmem %s1, 640
  %143 = vst [vmem:[%s142] sm:$0xff] %v140
  %s144 = scalar_lea.vmem %s0, 144
  %v145 = vld [vmem:[%s144] sm:$0xff]
  %146 = xla_tuple %v145
  %147 = xla_tuple %146
  %v148 = vxor.u32 %v145, 2147483648
  %149 = xla_tuple %v148
  %s150 = scalar_lea.vmem %s1, 144
  %151 = vst [vmem:[%s150] sm:$0xff] %v148
  %s152 = scalar_lea.vmem %s0, 656
  %v153 = vld [vmem:[%s152] sm:$0xff]
  %154 = xla_tuple %v153
  %155 = xla_tuple %154
  %v156 = vxor.u32 %v153, 2147483648
  %157 = xla_tuple %v156
  %s158 = scalar_lea.vmem %s1, 656
  %159 = vst [vmem:[%s158] sm:$0xff] %v156
  %s160 = scalar_lea.vmem %s0, 160
  %v161 = vld [vmem:[%s160] sm:$0xff]
  %162 = xla_tuple %v161
  %163 = xla_tuple %162
  %v164 = vxor.u32 %v161, 2147483648
  %165 = xla_tuple %v164
  %s166 = scalar_lea.vmem %s1, 160
  %167 = vst [vmem:[%s166] sm:$0xff] %v164
  %s168 = scalar_lea.vmem %s0, 672
  %v169 = vld [vmem:[%s168] sm:$0xff]
  %170 = xla_tuple %v169
  %171 = xla_tuple %170
  %v172 = vxor.u32 %v169, 2147483648
  %173 = xla_tuple %v172
  %s174 = scalar_lea.vmem %s1, 672
  %175 = vst [vmem:[%s174] sm:$0xff] %v172
  %s176 = scalar_lea.vmem %s0, 176
  %v177 = vld [vmem:[%s176] sm:$0xff]
  %178 = xla_tuple %v177
  %179 = xla_tuple %178
  %v180 = vxor.u32 %v177, 2147483648
  %181 = xla_tuple %v180
  %s182 = scalar_lea.vmem %s1, 176
  %183 = vst [vmem:[%s182] sm:$0xff] %v180
  %s184 = scalar_lea.vmem %s0, 688
  %v185 = vld [vmem:[%s184] sm:$0xff]
  %186 = xla_tuple %v185
  %187 = xla_tuple %186
  %v188 = vxor.u32 %v185, 2147483648
  %189 = xla_tuple %v188
  %s190 = scalar_lea.vmem %s1, 688
  %191 = vst [vmem:[%s190] sm:$0xff] %v188
  %s192 = scalar_lea.vmem %s0, 192
  %v193 = vld [vmem:[%s192] sm:$0xff]
  %194 = xla_tuple %v193
  %195 = xla_tuple %194
  %v196 = vxor.u32 %v193, 2147483648
  %197 = xla_tuple %v196
  %s198 = scalar_lea.vmem %s1, 192
  %199 = vst [vmem:[%s198] sm:$0xff] %v196
  %s200 = scalar_lea.vmem %s0, 704
  %v201 = vld [vmem:[%s200] sm:$0xff]
  %202 = xla_tuple %v201
  %203 = xla_tuple %202
  %v204 = vxor.u32 %v201, 2147483648
  %205 = xla_tuple %v204
  %s206 = scalar_lea.vmem %s1, 704
  %207 = vst [vmem:[%s206] sm:$0xff] %v204
  %s208 = scalar_lea.vmem %s0, 208
  %v209 = vld [vmem:[%s208] sm:$0xff]
  %210 = xla_tuple %v209
  %211 = xla_tuple %210
  %v212 = vxor.u32 %v209, 2147483648
  %213 = xla_tuple %v212
  %s214 = scalar_lea.vmem %s1, 208
  %215 = vst [vmem:[%s214] sm:$0xff] %v212
  %s216 = scalar_lea.vmem %s0, 720
  %v217 = vld [vmem:[%s216] sm:$0xff]
  %218 = xla_tuple %v217
  %219 = xla_tuple %218
  %v220 = vxor.u32 %v217, 2147483648
  %221 = xla_tuple %v220
  %s222 = scalar_lea.vmem %s1, 720
  %223 = vst [vmem:[%s222] sm:$0xff] %v220
  %s224 = scalar_lea.vmem %s0, 224
  %v225 = vld [vmem:[%s224] sm:$0xff]
  %226 = xla_tuple %v225
  %227 = xla_tuple %226
  %v228 = vxor.u32 %v225, 2147483648
  %229 = xla_tuple %v228
  %s230 = scalar_lea.vmem %s1, 224
  %231 = vst [vmem:[%s230] sm:$0xff] %v228
  %s232 = scalar_lea.vmem %s0, 736
  %v233 = vld [vmem:[%s232] sm:$0xff]
  %234 = xla_tuple %v233
  %235 = xla_tuple %234
  %v236 = vxor.u32 %v233, 2147483648
  %237 = xla_tuple %v236
  %s238 = scalar_lea.vmem %s1, 736
  %239 = vst [vmem:[%s238] sm:$0xff] %v236
  %s240 = scalar_lea.vmem %s0, 240
  %v241 = vld [vmem:[%s240] sm:$0xff]
  %242 = xla_tuple %v241
  %243 = xla_tuple %242
  %v244 = vxor.u32 %v241, 2147483648
  %245 = xla_tuple %v244
  %s246 = scalar_lea.vmem %s1, 240
  %247 = vst [vmem:[%s246] sm:$0xff] %v244
  %s248 = scalar_lea.vmem %s0, 752
  %v249 = vld [vmem:[%s248] sm:$0xff]
  %250 = xla_tuple %v249
  %251 = xla_tuple %250
  %v252 = vxor.u32 %v249, 2147483648
  %253 = xla_tuple %v252
  %s254 = scalar_lea.vmem %s1, 752
  %255 = vst [vmem:[%s254] sm:$0xff] %v252
  %s256 = scalar_lea.vmem %s0, 256
  %v257 = vld [vmem:[%s256] sm:$0xff]
  %258 = xla_tuple %v257
  %259 = xla_tuple %258
  %v260 = vxor.u32 %v257, 2147483648
  %261 = xla_tuple %v260
  %s262 = scalar_lea.vmem %s1, 256
  %263 = vst [vmem:[%s262] sm:$0xff] %v260
  %s264 = scalar_lea.vmem %s0, 768
  %v265 = vld [vmem:[%s264] sm:$0xff]
  %266 = xla_tuple %v265
  %267 = xla_tuple %266
  %v268 = vxor.u32 %v265, 2147483648
  %269 = xla_tuple %v268
  %s270 = scalar_lea.vmem %s1, 768
  %271 = vst [vmem:[%s270] sm:$0xff] %v268
  %s272 = scalar_lea.vmem %s0, 272
  %v273 = vld [vmem:[%s272] sm:$0xff]
  %274 = xla_tuple %v273
  %275 = xla_tuple %274
  %v276 = vxor.u32 %v273, 2147483648
  %277 = xla_tuple %v276
  %s278 = scalar_lea.vmem %s1, 272
  %279 = vst [vmem:[%s278] sm:$0xff] %v276
  %s280 = scalar_lea.vmem %s0, 784
  %v281 = vld [vmem:[%s280] sm:$0xff]
  %282 = xla_tuple %v281
  %283 = xla_tuple %282
  %v284 = vxor.u32 %v281, 2147483648
  %285 = xla_tuple %v284
  %s286 = scalar_lea.vmem %s1, 784
  %287 = vst [vmem:[%s286] sm:$0xff] %v284
  %s288 = scalar_lea.vmem %s0, 288
  %v289 = vld [vmem:[%s288] sm:$0xff]
  %290 = xla_tuple %v289
  %291 = xla_tuple %290
  %v292 = vxor.u32 %v289, 2147483648
  %293 = xla_tuple %v292
  %s294 = scalar_lea.vmem %s1, 288
  %295 = vst [vmem:[%s294] sm:$0xff] %v292
  %s296 = scalar_lea.vmem %s0, 800
  %v297 = vld [vmem:[%s296] sm:$0xff]
  %298 = xla_tuple %v297
  %299 = xla_tuple %298
  %v300 = vxor.u32 %v297, 2147483648
  %301 = xla_tuple %v300
  %s302 = scalar_lea.vmem %s1, 800
  %303 = vst [vmem:[%s302] sm:$0xff] %v300
  %s304 = scalar_lea.vmem %s0, 304
  %v305 = vld [vmem:[%s304] sm:$0xff]
  %306 = xla_tuple %v305
  %307 = xla_tuple %306
  %v308 = vxor.u32 %v305, 2147483648
  %309 = xla_tuple %v308
  %s310 = scalar_lea.vmem %s1, 304
  %311 = vst [vmem:[%s310] sm:$0xff] %v308
  %s312 = scalar_lea.vmem %s0, 816
  %v313 = vld [vmem:[%s312] sm:$0xff]
  %314 = xla_tuple %v313
  %315 = xla_tuple %314
  %v316 = vxor.u32 %v313, 2147483648
  %317 = xla_tuple %v316
  %s318 = scalar_lea.vmem %s1, 816
  %319 = vst [vmem:[%s318] sm:$0xff] %v316
  %s320 = scalar_lea.vmem %s0, 320
  %v321 = vld [vmem:[%s320] sm:$0xff]
  %322 = xla_tuple %v321
  %323 = xla_tuple %322
  %v324 = vxor.u32 %v321, 2147483648
  %325 = xla_tuple %v324
  %s326 = scalar_lea.vmem %s1, 320
  %327 = vst [vmem:[%s326] sm:$0xff] %v324
  %s328 = scalar_lea.vmem %s0, 832
  %v329 = vld [vmem:[%s328] sm:$0xff]
  %330 = xla_tuple %v329
  %331 = xla_tuple %330
  %v332 = vxor.u32 %v329, 2147483648
  %333 = xla_tuple %v332
  %s334 = scalar_lea.vmem %s1, 832
  %335 = vst [vmem:[%s334] sm:$0xff] %v332
  %s336 = scalar_lea.vmem %s0, 336
  %v337 = vld [vmem:[%s336] sm:$0xff]
  %338 = xla_tuple %v337
  %339 = xla_tuple %338
  %v340 = vxor.u32 %v337, 2147483648
  %341 = xla_tuple %v340
  %s342 = scalar_lea.vmem %s1, 336
  %343 = vst [vmem:[%s342] sm:$0xff] %v340
  %s344 = scalar_lea.vmem %s0, 848
  %v345 = vld [vmem:[%s344] sm:$0xff]
  %346 = xla_tuple %v345
  %347 = xla_tuple %346
  %v348 = vxor.u32 %v345, 2147483648
  %349 = xla_tuple %v348
  %s350 = scalar_lea.vmem %s1, 848
  %351 = vst [vmem:[%s350] sm:$0xff] %v348
  %s352 = scalar_lea.vmem %s0, 352
  %v353 = vld [vmem:[%s352] sm:$0xff]
  %354 = xla_tuple %v353
  %355 = xla_tuple %354
  %v356 = vxor.u32 %v353, 2147483648
  %357 = xla_tuple %v356
  %s358 = scalar_lea.vmem %s1, 352
  %359 = vst [vmem:[%s358] sm:$0xff] %v356
  %s360 = scalar_lea.vmem %s0, 864
  %v361 = vld [vmem:[%s360] sm:$0xff]
  %362 = xla_tuple %v361
  %363 = xla_tuple %362
  %v364 = vxor.u32 %v361, 2147483648
  %365 = xla_tuple %v364
  %s366 = scalar_lea.vmem %s1, 864
  %367 = vst [vmem:[%s366] sm:$0xff] %v364
  %s368 = scalar_lea.vmem %s0, 368
  %v369 = vld [vmem:[%s368] sm:$0xff]
  %370 = xla_tuple %v369
  %371 = xla_tuple %370
  %v372 = vxor.u32 %v369, 2147483648
  %373 = xla_tuple %v372
  %s374 = scalar_lea.vmem %s1, 368
  %375 = vst [vmem:[%s374] sm:$0xff] %v372
  %s376 = scalar_lea.vmem %s0, 880
  %v377 = vld [vmem:[%s376] sm:$0xff]
  %378 = xla_tuple %v377
  %379 = xla_tuple %378
  %v380 = vxor.u32 %v377, 2147483648
  %381 = xla_tuple %v380
  %s382 = scalar_lea.vmem %s1, 880
  %383 = vst [vmem:[%s382] sm:$0xff] %v380
  %s384 = scalar_lea.vmem %s0, 384
  %v385 = vld [vmem:[%s384] sm:$0xff]
  %386 = xla_tuple %v385
  %387 = xla_tuple %386
  %v388 = vxor.u32 %v385, 2147483648
  %389 = xla_tuple %v388
  %s390 = scalar_lea.vmem %s1, 384
  %391 = vst [vmem:[%s390] sm:$0xff] %v388
  %s392 = scalar_lea.vmem %s0, 896
  %v393 = vld [vmem:[%s392] sm:$0xff]
  %394 = xla_tuple %v393
  %395 = xla_tuple %394
  %v396 = vxor.u32 %v393, 2147483648
  %397 = xla_tuple %v396
  %s398 = scalar_lea.vmem %s1, 896
  %399 = vst [vmem:[%s398] sm:$0xff] %v396
  %s400 = scalar_lea.vmem %s0, 400
  %v401 = vld [vmem:[%s400] sm:$0xff]
  %402 = xla_tuple %v401
  %403 = xla_tuple %402
  %v404 = vxor.u32 %v401, 2147483648
  %405 = xla_tuple %v404
  %s406 = scalar_lea.vmem %s1, 400
  %407 = vst [vmem:[%s406] sm:$0xff] %v404
  %s408 = scalar_lea.vmem %s0, 912
  %v409 = vld [vmem:[%s408] sm:$0xff]
  %410 = xla_tuple %v409
  %411 = xla_tuple %410
  %v412 = vxor.u32 %v409, 2147483648
  %413 = xla_tuple %v412
  %s414 = scalar_lea.vmem %s1, 912
  %415 = vst [vmem:[%s414] sm:$0xff] %v412
  %s416 = scalar_lea.vmem %s0, 416
  %v417 = vld [vmem:[%s416] sm:$0xff]
  %418 = xla_tuple %v417
  %419 = xla_tuple %418
  %v420 = vxor.u32 %v417, 2147483648
  %421 = xla_tuple %v420
  %s422 = scalar_lea.vmem %s1, 416
  %423 = vst [vmem:[%s422] sm:$0xff] %v420
  %s424 = scalar_lea.vmem %s0, 928
  %v425 = vld [vmem:[%s424] sm:$0xff]
  %426 = xla_tuple %v425
  %427 = xla_tuple %426
  %v428 = vxor.u32 %v425, 2147483648
  %429 = xla_tuple %v428
  %s430 = scalar_lea.vmem %s1, 928
  %431 = vst [vmem:[%s430] sm:$0xff] %v428
  %s432 = scalar_lea.vmem %s0, 432
  %v433 = vld [vmem:[%s432] sm:$0xff]
  %434 = xla_tuple %v433
  %435 = xla_tuple %434
  %v436 = vxor.u32 %v433, 2147483648
  %437 = xla_tuple %v436
  %s438 = scalar_lea.vmem %s1, 432
  %439 = vst [vmem:[%s438] sm:$0xff] %v436
  %s440 = scalar_lea.vmem %s0, 944
  %v441 = vld [vmem:[%s440] sm:$0xff]
  %442 = xla_tuple %v441
  %443 = xla_tuple %442
  %v444 = vxor.u32 %v441, 2147483648
  %445 = xla_tuple %v444
  %s446 = scalar_lea.vmem %s1, 944
  %447 = vst [vmem:[%s446] sm:$0xff] %v444
  %s448 = scalar_lea.vmem %s0, 448
  %v449 = vld [vmem:[%s448] sm:$0xff]
  %450 = xla_tuple %v449
  %451 = xla_tuple %450
  %v452 = vxor.u32 %v449, 2147483648
  %453 = xla_tuple %v452
  %s454 = scalar_lea.vmem %s1, 448
  %455 = vst [vmem:[%s454] sm:$0xff] %v452
  %s456 = scalar_lea.vmem %s0, 960
  %v457 = vld [vmem:[%s456] sm:$0xff]
  %458 = xla_tuple %v457
  %459 = xla_tuple %458
  %v460 = vxor.u32 %v457, 2147483648
  %461 = xla_tuple %v460
  %s462 = scalar_lea.vmem %s1, 960
  %463 = vst [vmem:[%s462] sm:$0xff] %v460
  %s464 = scalar_lea.vmem %s0, 464
  %v465 = vld [vmem:[%s464] sm:$0xff]
  %466 = xla_tuple %v465
  %467 = xla_tuple %466
  %v468 = vxor.u32 %v465, 2147483648
  %469 = xla_tuple %v468
  %s470 = scalar_lea.vmem %s1, 464
  %471 = vst [vmem:[%s470] sm:$0xff] %v468
  %s472 = scalar_lea.vmem %s0, 976
  %v473 = vld [vmem:[%s472] sm:$0xff]
  %474 = xla_tuple %v473
  %475 = xla_tuple %474
  %v476 = vxor.u32 %v473, 2147483648
  %477 = xla_tuple %v476
  %s478 = scalar_lea.vmem %s1, 976
  %479 = vst [vmem:[%s478] sm:$0xff] %v476
  %s480 = scalar_lea.vmem %s0, 480
  %v481 = vld [vmem:[%s480] sm:$0xff]
  %482 = xla_tuple %v481
  %483 = xla_tuple %482
  %v484 = vxor.u32 %v481, 2147483648
  %485 = xla_tuple %v484
  %s486 = scalar_lea.vmem %s1, 480
  %487 = vst [vmem:[%s486] sm:$0xff] %v484
  %s488 = scalar_lea.vmem %s0, 992
  %v489 = vld [vmem:[%s488] sm:$0xff]
  %490 = xla_tuple %v489
  %491 = xla_tuple %490
  %v492 = vxor.u32 %v489, 2147483648
  %493 = xla_tuple %v492
  %s494 = scalar_lea.vmem %s1, 992
  %495 = vst [vmem:[%s494] sm:$0xff] %v492
  %s496 = scalar_lea.vmem %s0, 496
  %v497 = vld [vmem:[%s496] sm:$0xff]
  %498 = xla_tuple %v497
  %499 = xla_tuple %498
  %v500 = vxor.u32 %v497, 2147483648
  %501 = xla_tuple %v500
  %s502 = scalar_lea.vmem %s1, 496
  %503 = vst [vmem:[%s502] sm:$0xff] %v500
  %s504 = scalar_lea.vmem %s0, 1008
  %v505 = vld [vmem:[%s504] sm:$0xff]
  %506 = xla_tuple %v505
  %507 = xla_tuple %506
  %v508 = vxor.u32 %v505, 2147483648
  %509 = xla_tuple %v508
  %s510 = scalar_lea.vmem %s1, 1008
  %511 = vst [vmem:[%s510] sm:$0xff] %v508
  %s512 = scalar_lea.vmem %s0, 8
  %v513 = vld [vmem:[%s512] sm:$0xff]
  %514 = xla_tuple %v513
  %515 = xla_tuple %514
  %v516 = vxor.u32 %v513, 2147483648
  %517 = xla_tuple %v516
  %s518 = scalar_lea.vmem %s1, 8
  %519 = vst [vmem:[%s518] sm:$0xff] %v516
  %s520 = scalar_lea.vmem %s0, 520
  %v521 = vld [vmem:[%s520] sm:$0xff]
  %522 = xla_tuple %v521
  %523 = xla_tuple %522
  %v524 = vxor.u32 %v521, 2147483648
  %525 = xla_tuple %v524
  %s526 = scalar_lea.vmem %s1, 520
  %527 = vst [vmem:[%s526] sm:$0xff] %v524
  %s528 = scalar_lea.vmem %s0, 24
  %v529 = vld [vmem:[%s528] sm:$0xff]
  %530 = xla_tuple %v529
  %531 = xla_tuple %530
  %v532 = vxor.u32 %v529, 2147483648
  %533 = xla_tuple %v532
  %s534 = scalar_lea.vmem %s1, 24
  %535 = vst [vmem:[%s534] sm:$0xff] %v532
  %s536 = scalar_lea.vmem %s0, 536
  %v537 = vld [vmem:[%s536] sm:$0xff]
  %538 = xla_tuple %v537
  %539 = xla_tuple %538
  %v540 = vxor.u32 %v537, 2147483648
  %541 = xla_tuple %v540
  %s542 = scalar_lea.vmem %s1, 536
  %543 = vst [vmem:[%s542] sm:$0xff] %v540
  %s544 = scalar_lea.vmem %s0, 40
  %v545 = vld [vmem:[%s544] sm:$0xff]
  %546 = xla_tuple %v545
  %547 = xla_tuple %546
  %v548 = vxor.u32 %v545, 2147483648
  %549 = xla_tuple %v548
  %s550 = scalar_lea.vmem %s1, 40
  %551 = vst [vmem:[%s550] sm:$0xff] %v548
  %s552 = scalar_lea.vmem %s0, 552
  %v553 = vld [vmem:[%s552] sm:$0xff]
  %554 = xla_tuple %v553
  %555 = xla_tuple %554
  %v556 = vxor.u32 %v553, 2147483648
  %557 = xla_tuple %v556
  %s558 = scalar_lea.vmem %s1, 552
  %559 = vst [vmem:[%s558] sm:$0xff] %v556
  %s560 = scalar_lea.vmem %s0, 56
  %v561 = vld [vmem:[%s560] sm:$0xff]
  %562 = xla_tuple %v561
  %563 = xla_tuple %562
  %v564 = vxor.u32 %v561, 2147483648
  %565 = xla_tuple %v564
  %s566 = scalar_lea.vmem %s1, 56
  %567 = vst [vmem:[%s566] sm:$0xff] %v564
  %s568 = scalar_lea.vmem %s0, 568
  %v569 = vld [vmem:[%s568] sm:$0xff]
  %570 = xla_tuple %v569
  %571 = xla_tuple %570
  %v572 = vxor.u32 %v569, 2147483648
  %573 = xla_tuple %v572
  %s574 = scalar_lea.vmem %s1, 568
  %575 = vst [vmem:[%s574] sm:$0xff] %v572
  %s576 = scalar_lea.vmem %s0, 72
  %v577 = vld [vmem:[%s576] sm:$0xff]
  %578 = xla_tuple %v577
  %579 = xla_tuple %578
  %v580 = vxor.u32 %v577, 2147483648
  %581 = xla_tuple %v580
  %s582 = scalar_lea.vmem %s1, 72
  %583 = vst [vmem:[%s582] sm:$0xff] %v580
  %s584 = scalar_lea.vmem %s0, 584
  %v585 = vld [vmem:[%s584] sm:$0xff]
  %586 = xla_tuple %v585
  %587 = xla_tuple %586
  %v588 = vxor.u32 %v585, 2147483648
  %589 = xla_tuple %v588
  %s590 = scalar_lea.vmem %s1, 584
  %591 = vst [vmem:[%s590] sm:$0xff] %v588
  %s592 = scalar_lea.vmem %s0, 88
  %v593 = vld [vmem:[%s592] sm:$0xff]
  %594 = xla_tuple %v593
  %595 = xla_tuple %594
  %v596 = vxor.u32 %v593, 2147483648
  %597 = xla_tuple %v596
  %s598 = scalar_lea.vmem %s1, 88
  %599 = vst [vmem:[%s598] sm:$0xff] %v596
  %s600 = scalar_lea.vmem %s0, 600
  %v601 = vld [vmem:[%s600] sm:$0xff]
  %602 = xla_tuple %v601
  %603 = xla_tuple %602
  %v604 = vxor.u32 %v601, 2147483648
  %605 = xla_tuple %v604
  %s606 = scalar_lea.vmem %s1, 600
  %607 = vst [vmem:[%s606] sm:$0xff] %v604
  %s608 = scalar_lea.vmem %s0, 104
  %v609 = vld [vmem:[%s608] sm:$0xff]
  %610 = xla_tuple %v609
  %611 = xla_tuple %610
  %v612 = vxor.u32 %v609, 2147483648
  %613 = xla_tuple %v612
  %s614 = scalar_lea.vmem %s1, 104
  %615 = vst [vmem:[%s614] sm:$0xff] %v612
  %s616 = scalar_lea.vmem %s0, 616
  %v617 = vld [vmem:[%s616] sm:$0xff]
  %618 = xla_tuple %v617
  %619 = xla_tuple %618
  %v620 = vxor.u32 %v617, 2147483648
  %621 = xla_tuple %v620
  %s622 = scalar_lea.vmem %s1, 616
  %623 = vst [vmem:[%s622] sm:$0xff] %v620
  %s624 = scalar_lea.vmem %s0, 120
  %v625 = vld [vmem:[%s624] sm:$0xff]
  %626 = xla_tuple %v625
  %627 = xla_tuple %626
  %v628 = vxor.u32 %v625, 2147483648
  %629 = xla_tuple %v628
  %s630 = scalar_lea.vmem %s1, 120
  %631 = vst [vmem:[%s630] sm:$0xff] %v628
  %s632 = scalar_lea.vmem %s0, 632
  %v633 = vld [vmem:[%s632] sm:$0xff]
  %634 = xla_tuple %v633
  %635 = xla_tuple %634
  %v636 = vxor.u32 %v633, 2147483648
  %637 = xla_tuple %v636
  %s638 = scalar_lea.vmem %s1, 632
  %639 = vst [vmem:[%s638] sm:$0xff] %v636
  %s640 = scalar_lea.vmem %s0, 136
  %v641 = vld [vmem:[%s640] sm:$0xff]
  %642 = xla_tuple %v641
  %643 = xla_tuple %642
  %v644 = vxor.u32 %v641, 2147483648
  %645 = xla_tuple %v644
  %s646 = scalar_lea.vmem %s1, 136
  %647 = vst [vmem:[%s646] sm:$0xff] %v644
  %s648 = scalar_lea.vmem %s0, 648
  %v649 = vld [vmem:[%s648] sm:$0xff]
  %650 = xla_tuple %v649
  %651 = xla_tuple %650
  %v652 = vxor.u32 %v649, 2147483648
  %653 = xla_tuple %v652
  %s654 = scalar_lea.vmem %s1, 648
  %655 = vst [vmem:[%s654] sm:$0xff] %v652
  %s656 = scalar_lea.vmem %s0, 152
  %v657 = vld [vmem:[%s656] sm:$0xff]
  %658 = xla_tuple %v657
  %659 = xla_tuple %658
  %v660 = vxor.u32 %v657, 2147483648
  %661 = xla_tuple %v660
  %s662 = scalar_lea.vmem %s1, 152
  %663 = vst [vmem:[%s662] sm:$0xff] %v660
  %s664 = scalar_lea.vmem %s0, 664
  %v665 = vld [vmem:[%s664] sm:$0xff]
  %666 = xla_tuple %v665
  %667 = xla_tuple %666
  %v668 = vxor.u32 %v665, 2147483648
  %669 = xla_tuple %v668
  %s670 = scalar_lea.vmem %s1, 664
  %671 = vst [vmem:[%s670] sm:$0xff] %v668
  %s672 = scalar_lea.vmem %s0, 168
  %v673 = vld [vmem:[%s672] sm:$0xff]
  %674 = xla_tuple %v673
  %675 = xla_tuple %674
  %v676 = vxor.u32 %v673, 2147483648
  %677 = xla_tuple %v676
  %s678 = scalar_lea.vmem %s1, 168
  %679 = vst [vmem:[%s678] sm:$0xff] %v676
  %s680 = scalar_lea.vmem %s0, 680
  %v681 = vld [vmem:[%s680] sm:$0xff]
  %682 = xla_tuple %v681
  %683 = xla_tuple %682
  %v684 = vxor.u32 %v681, 2147483648
  %685 = xla_tuple %v684
  %s686 = scalar_lea.vmem %s1, 680
  %687 = vst [vmem:[%s686] sm:$0xff] %v684
  %s688 = scalar_lea.vmem %s0, 184
  %v689 = vld [vmem:[%s688] sm:$0xff]
  %690 = xla_tuple %v689
  %691 = xla_tuple %690
  %v692 = vxor.u32 %v689, 2147483648
  %693 = xla_tuple %v692
  %s694 = scalar_lea.vmem %s1, 184
  %695 = vst [vmem:[%s694] sm:$0xff] %v692
  %s696 = scalar_lea.vmem %s0, 696
  %v697 = vld [vmem:[%s696] sm:$0xff]
  %698 = xla_tuple %v697
  %699 = xla_tuple %698
  %v700 = vxor.u32 %v697, 2147483648
  %701 = xla_tuple %v700
  %s702 = scalar_lea.vmem %s1, 696
  %703 = vst [vmem:[%s702] sm:$0xff] %v700
  %s704 = scalar_lea.vmem %s0, 200
  %v705 = vld [vmem:[%s704] sm:$0xff]
  %706 = xla_tuple %v705
  %707 = xla_tuple %706
  %v708 = vxor.u32 %v705, 2147483648
  %709 = xla_tuple %v708
  %s710 = scalar_lea.vmem %s1, 200
  %711 = vst [vmem:[%s710] sm:$0xff] %v708
  %s712 = scalar_lea.vmem %s0, 712
  %v713 = vld [vmem:[%s712] sm:$0xff]
  %714 = xla_tuple %v713
  %715 = xla_tuple %714
  %v716 = vxor.u32 %v713, 2147483648
  %717 = xla_tuple %v716
  %s718 = scalar_lea.vmem %s1, 712
  %719 = vst [vmem:[%s718] sm:$0xff] %v716
  %s720 = scalar_lea.vmem %s0, 216
  %v721 = vld [vmem:[%s720] sm:$0xff]
  %722 = xla_tuple %v721
  %723 = xla_tuple %722
  %v724 = vxor.u32 %v721, 2147483648
  %725 = xla_tuple %v724
  %s726 = scalar_lea.vmem %s1, 216
  %727 = vst [vmem:[%s726] sm:$0xff] %v724
  %s728 = scalar_lea.vmem %s0, 728
  %v729 = vld [vmem:[%s728] sm:$0xff]
  %730 = xla_tuple %v729
  %731 = xla_tuple %730
  %v732 = vxor.u32 %v729, 2147483648
  %733 = xla_tuple %v732
  %s734 = scalar_lea.vmem %s1, 728
  %735 = vst [vmem:[%s734] sm:$0xff] %v732
  %s736 = scalar_lea.vmem %s0, 232
  %v737 = vld [vmem:[%s736] sm:$0xff]
  %738 = xla_tuple %v737
  %739 = xla_tuple %738
  %v740 = vxor.u32 %v737, 2147483648
  %741 = xla_tuple %v740
  %s742 = scalar_lea.vmem %s1, 232
  %743 = vst [vmem:[%s742] sm:$0xff] %v740
  %s744 = scalar_lea.vmem %s0, 744
  %v745 = vld [vmem:[%s744] sm:$0xff]
  %746 = xla_tuple %v745
  %747 = xla_tuple %746
  %v748 = vxor.u32 %v745, 2147483648
  %749 = xla_tuple %v748
  %s750 = scalar_lea.vmem %s1, 744
  %751 = vst [vmem:[%s750] sm:$0xff] %v748
  %s752 = scalar_lea.vmem %s0, 248
  %v753 = vld [vmem:[%s752] sm:$0xff]
  %754 = xla_tuple %v753
  %755 = xla_tuple %754
  %v756 = vxor.u32 %v753, 2147483648
  %757 = xla_tuple %v756
  %s758 = scalar_lea.vmem %s1, 248
  %759 = vst [vmem:[%s758] sm:$0xff] %v756
  %s760 = scalar_lea.vmem %s0, 760
  %v761 = vld [vmem:[%s760] sm:$0xff]
  %762 = xla_tuple %v761
  %763 = xla_tuple %762
  %v764 = vxor.u32 %v761, 2147483648
  %765 = xla_tuple %v764
  %s766 = scalar_lea.vmem %s1, 760
  %767 = vst [vmem:[%s766] sm:$0xff] %v764
  %s768 = scalar_lea.vmem %s0, 264
  %v769 = vld [vmem:[%s768] sm:$0xff]
  %770 = xla_tuple %v769
  %771 = xla_tuple %770
  %v772 = vxor.u32 %v769, 2147483648
  %773 = xla_tuple %v772
  %s774 = scalar_lea.vmem %s1, 264
  %775 = vst [vmem:[%s774] sm:$0xff] %v772
  %s776 = scalar_lea.vmem %s0, 776
  %v777 = vld [vmem:[%s776] sm:$0xff]
  %778 = xla_tuple %v777
  %779 = xla_tuple %778
  %v780 = vxor.u32 %v777, 2147483648
  %781 = xla_tuple %v780
  %s782 = scalar_lea.vmem %s1, 776
  %783 = vst [vmem:[%s782] sm:$0xff] %v780
  %s784 = scalar_lea.vmem %s0, 280
  %v785 = vld [vmem:[%s784] sm:$0xff]
  %786 = xla_tuple %v785
  %787 = xla_tuple %786
  %v788 = vxor.u32 %v785, 2147483648
  %789 = xla_tuple %v788
  %s790 = scalar_lea.vmem %s1, 280
  %791 = vst [vmem:[%s790] sm:$0xff] %v788
  %s792 = scalar_lea.vmem %s0, 792
  %v793 = vld [vmem:[%s792] sm:$0xff]
  %794 = xla_tuple %v793
  %795 = xla_tuple %794
  %v796 = vxor.u32 %v793, 2147483648
  %797 = xla_tuple %v796
  %s798 = scalar_lea.vmem %s1, 792
  %799 = vst [vmem:[%s798] sm:$0xff] %v796
  %s800 = scalar_lea.vmem %s0, 296
  %v801 = vld [vmem:[%s800] sm:$0xff]
  %802 = xla_tuple %v801
  %803 = xla_tuple %802
  %v804 = vxor.u32 %v801, 2147483648
  %805 = xla_tuple %v804
  %s806 = scalar_lea.vmem %s1, 296
  %807 = vst [vmem:[%s806] sm:$0xff] %v804
  %s808 = scalar_lea.vmem %s0, 808
  %v809 = vld [vmem:[%s808] sm:$0xff]
  %810 = xla_tuple %v809
  %811 = xla_tuple %810
  %v812 = vxor.u32 %v809, 2147483648
  %813 = xla_tuple %v812
  %s814 = scalar_lea.vmem %s1, 808
  %815 = vst [vmem:[%s814] sm:$0xff] %v812
  %s816 = scalar_lea.vmem %s0, 312
  %v817 = vld [vmem:[%s816] sm:$0xff]
  %818 = xla_tuple %v817
  %819 = xla_tuple %818
  %v820 = vxor.u32 %v817, 2147483648
  %821 = xla_tuple %v820
  %s822 = scalar_lea.vmem %s1, 312
  %823 = vst [vmem:[%s822] sm:$0xff] %v820
  %s824 = scalar_lea.vmem %s0, 824
  %v825 = vld [vmem:[%s824] sm:$0xff]
  %826 = xla_tuple %v825
  %827 = xla_tuple %826
  %v828 = vxor.u32 %v825, 2147483648
  %829 = xla_tuple %v828
  %s830 = scalar_lea.vmem %s1, 824
  %831 = vst [vmem:[%s830] sm:$0xff] %v828
  %s832 = scalar_lea.vmem %s0, 328
  %v833 = vld [vmem:[%s832] sm:$0xff]
  %834 = xla_tuple %v833
  %835 = xla_tuple %834
  %v836 = vxor.u32 %v833, 2147483648
  %837 = xla_tuple %v836
  %s838 = scalar_lea.vmem %s1, 328
  %839 = vst [vmem:[%s838] sm:$0xff] %v836
  %s840 = scalar_lea.vmem %s0, 840
  %v841 = vld [vmem:[%s840] sm:$0xff]
  %842 = xla_tuple %v841
  %843 = xla_tuple %842
  %v844 = vxor.u32 %v841, 2147483648
  %845 = xla_tuple %v844
  %s846 = scalar_lea.vmem %s1, 840
  %847 = vst [vmem:[%s846] sm:$0xff] %v844
  %s848 = scalar_lea.vmem %s0, 344
  %v849 = vld [vmem:[%s848] sm:$0xff]
  %850 = xla_tuple %v849
  %851 = xla_tuple %850
  %v852 = vxor.u32 %v849, 2147483648
  %853 = xla_tuple %v852
  %s854 = scalar_lea.vmem %s1, 344
  %855 = vst [vmem:[%s854] sm:$0xff] %v852
  %s856 = scalar_lea.vmem %s0, 856
  %v857 = vld [vmem:[%s856] sm:$0xff]
  %858 = xla_tuple %v857
  %859 = xla_tuple %858
  %v860 = vxor.u32 %v857, 2147483648
  %861 = xla_tuple %v860
  %s862 = scalar_lea.vmem %s1, 856
  %863 = vst [vmem:[%s862] sm:$0xff] %v860
  %s864 = scalar_lea.vmem %s0, 360
  %v865 = vld [vmem:[%s864] sm:$0xff]
  %866 = xla_tuple %v865
  %867 = xla_tuple %866
  %v868 = vxor.u32 %v865, 2147483648
  %869 = xla_tuple %v868
  %s870 = scalar_lea.vmem %s1, 360
  %871 = vst [vmem:[%s870] sm:$0xff] %v868
  %s872 = scalar_lea.vmem %s0, 872
  %v873 = vld [vmem:[%s872] sm:$0xff]
  %874 = xla_tuple %v873
  %875 = xla_tuple %874
  %v876 = vxor.u32 %v873, 2147483648
  %877 = xla_tuple %v876
  %s878 = scalar_lea.vmem %s1, 872
  %879 = vst [vmem:[%s878] sm:$0xff] %v876
  %s880 = scalar_lea.vmem %s0, 376
  %v881 = vld [vmem:[%s880] sm:$0xff]
  %882 = xla_tuple %v881
  %883 = xla_tuple %882
  %v884 = vxor.u32 %v881, 2147483648
  %885 = xla_tuple %v884
  %s886 = scalar_lea.vmem %s1, 376
  %887 = vst [vmem:[%s886] sm:$0xff] %v884
  %s888 = scalar_lea.vmem %s0, 888
  %v889 = vld [vmem:[%s888] sm:$0xff]
  %890 = xla_tuple %v889
  %891 = xla_tuple %890
  %v892 = vxor.u32 %v889, 2147483648
  %893 = xla_tuple %v892
  %s894 = scalar_lea.vmem %s1, 888
  %895 = vst [vmem:[%s894] sm:$0xff] %v892
  %s896 = scalar_lea.vmem %s0, 392
  %v897 = vld [vmem:[%s896] sm:$0xff]
  %898 = xla_tuple %v897
  %899 = xla_tuple %898
  %v900 = vxor.u32 %v897, 2147483648
  %901 = xla_tuple %v900
  %s902 = scalar_lea.vmem %s1, 392
  %903 = vst [vmem:[%s902] sm:$0xff] %v900
  %s904 = scalar_lea.vmem %s0, 904
  %v905 = vld [vmem:[%s904] sm:$0xff]
  %906 = xla_tuple %v905
  %907 = xla_tuple %906
  %v908 = vxor.u32 %v905, 2147483648
  %909 = xla_tuple %v908
  %s910 = scalar_lea.vmem %s1, 904
  %911 = vst [vmem:[%s910] sm:$0xff] %v908
  %s912 = scalar_lea.vmem %s0, 408
  %v913 = vld [vmem:[%s912] sm:$0xff]
  %914 = xla_tuple %v913
  %915 = xla_tuple %914
  %v916 = vxor.u32 %v913, 2147483648
  %917 = xla_tuple %v916
  %s918 = scalar_lea.vmem %s1, 408
  %919 = vst [vmem:[%s918] sm:$0xff] %v916
  %s920 = scalar_lea.vmem %s0, 920
  %v921 = vld [vmem:[%s920] sm:$0xff]
  %922 = xla_tuple %v921
  %923 = xla_tuple %922
  %v924 = vxor.u32 %v921, 2147483648
  %925 = xla_tuple %v924
  %s926 = scalar_lea.vmem %s1, 920
  %927 = vst [vmem:[%s926] sm:$0xff] %v924
  %s928 = scalar_lea.vmem %s0, 424
  %v929 = vld [vmem:[%s928] sm:$0xff]
  %930 = xla_tuple %v929
  %931 = xla_tuple %930
  %v932 = vxor.u32 %v929, 2147483648
  %933 = xla_tuple %v932
  %s934 = scalar_lea.vmem %s1, 424
  %935 = vst [vmem:[%s934] sm:$0xff] %v932
  %s936 = scalar_lea.vmem %s0, 936
  %v937 = vld [vmem:[%s936] sm:$0xff]
  %938 = xla_tuple %v937
  %939 = xla_tuple %938
  %v940 = vxor.u32 %v937, 2147483648
  %941 = xla_tuple %v940
  %s942 = scalar_lea.vmem %s1, 936
  %943 = vst [vmem:[%s942] sm:$0xff] %v940
  %s944 = scalar_lea.vmem %s0, 440
  %v945 = vld [vmem:[%s944] sm:$0xff]
  %946 = xla_tuple %v945
  %947 = xla_tuple %946
  %v948 = vxor.u32 %v945, 2147483648
  %949 = xla_tuple %v948
  %s950 = scalar_lea.vmem %s1, 440
  %951 = vst [vmem:[%s950] sm:$0xff] %v948
  %s952 = scalar_lea.vmem %s0, 952
  %v953 = vld [vmem:[%s952] sm:$0xff]
  %954 = xla_tuple %v953
  %955 = xla_tuple %954
  %v956 = vxor.u32 %v953, 2147483648
  %957 = xla_tuple %v956
  %s958 = scalar_lea.vmem %s1, 952
  %959 = vst [vmem:[%s958] sm:$0xff] %v956
  %s960 = scalar_lea.vmem %s0, 456
  %v961 = vld [vmem:[%s960] sm:$0xff]
  %962 = xla_tuple %v961
  %963 = xla_tuple %962
  %v964 = vxor.u32 %v961, 2147483648
  %965 = xla_tuple %v964
  %s966 = scalar_lea.vmem %s1, 456
  %967 = vst [vmem:[%s966] sm:$0xff] %v964
  %s968 = scalar_lea.vmem %s0, 968
  %v969 = vld [vmem:[%s968] sm:$0xff]
  %970 = xla_tuple %v969
  %971 = xla_tuple %970
  %v972 = vxor.u32 %v969, 2147483648
  %973 = xla_tuple %v972
  %s974 = scalar_lea.vmem %s1, 968
  %975 = vst [vmem:[%s974] sm:$0xff] %v972
  %s976 = scalar_lea.vmem %s0, 472
  %v977 = vld [vmem:[%s976] sm:$0xff]
  %978 = xla_tuple %v977
  %979 = xla_tuple %978
  %v980 = vxor.u32 %v977, 2147483648
  %981 = xla_tuple %v980
  %s982 = scalar_lea.vmem %s1, 472
  %983 = vst [vmem:[%s982] sm:$0xff] %v980
  %s984 = scalar_lea.vmem %s0, 984
  %v985 = vld [vmem:[%s984] sm:$0xff]
  %986 = xla_tuple %v985
  %987 = xla_tuple %986
  %v988 = vxor.u32 %v985, 2147483648
  %989 = xla_tuple %v988
  %s990 = scalar_lea.vmem %s1, 984
  %991 = vst [vmem:[%s990] sm:$0xff] %v988
  %s992 = scalar_lea.vmem %s0, 488
  %v993 = vld [vmem:[%s992] sm:$0xff]
  %994 = xla_tuple %v993
  %995 = xla_tuple %994
  %v996 = vxor.u32 %v993, 2147483648
  %997 = xla_tuple %v996
  %s998 = scalar_lea.vmem %s1, 488
  %999 = vst [vmem:[%s998] sm:$0xff] %v996
  %s1000 = scalar_lea.vmem %s0, 1000
  %v1001 = vld [vmem:[%s1000] sm:$0xff]
  %1002 = xla_tuple %v1001
  %1003 = xla_tuple %1002
  %v1004 = vxor.u32 %v1001, 2147483648
  %1005 = xla_tuple %v1004
  %s1006 = scalar_lea.vmem %s1, 1000
  %1007 = vst [vmem:[%s1006] sm:$0xff] %v1004
  %s1008 = scalar_lea.vmem %s0, 504
  %v1009 = vld [vmem:[%s1008] sm:$0xff]
  %1010 = xla_tuple %v1009
  %1011 = xla_tuple %1010
  %v1012 = vxor.u32 %v1009, 2147483648
  %1013 = xla_tuple %v1012
  %s1014 = scalar_lea.vmem %s1, 504
  %1015 = vst [vmem:[%s1014] sm:$0xff] %v1012
  %s1016 = scalar_lea.vmem %s0, 1016
  %v1017 = vld [vmem:[%s1016] sm:$0xff]
  %1018 = xla_tuple %v1017
  %1019 = xla_tuple %1018
  %v1020 = vxor.u32 %v1017, 2147483648
  %1021 = xla_tuple %v1020
  %s1022 = scalar_lea.vmem %s1, 1016
  %1023 = vst [vmem:[%s1022] sm:$0xff] %v1020

// kernel: re_forward.3
$region0: #{re_forward.3}
  #allocation0 [shape = 'u32[]', space=smem, size = 0x4, offset = 0x4, fixed_abs, tag = 'smem constant byte address 0x4 - core index']
  #allocation1 [shape = 'u32[72,128]{1,0:T(1,128)}', space=vmem, size = 0x9000, scoped, tag = 'internal scratch']
  %s0 = inlined_call_operand.vmem [shape: f32[2,256,3], index: 0, kind: input, shape index: {}]
  %s1 = inlined_call_operand.vmem [shape: f32[2,3,256], index: 1, kind: input, shape index: {}]
  %s2 = inlined_call_operand.vmem [shape: f32[2,256,256], index: 2, kind: output, shape index: {}]
  %s3 = sld [smem:[#allocation0]]
  $region41: #{re_forward.3} parent=0
    _
  %s5 = ssub.s32 1, %s3
  %s6 = scalar_select 0, %s5, %s3
  loop: start=0, step=1, limit=6
  $region2: #{re_forward.3} parent=0 // loop_pre_header
    _
  $region3: #{re_forward.3} parent=0 // loop_header
    %s8 = sphi 0, %s12
    %p9 = scmp.ge.s32.totalorder %s8, 6
    %s15 = sphi 0, %s27
    %s16 = sphi 0, %s23
    %s17 = sphi 0, %s15
    %s18 = sphi 0, %s16
    %s19 = sphi 0, %s17
    %s20 = sphi 0, %s18
    %s32 = sphi 0, %s34
    %s35 = sphi 0, %s32
    %s36 = sphi 0, %s35
    %s52 = sphi 0, %s36
    %s58 = sphi 0, %s60
    %s61 = sphi 0, %s58
    %s62 = sphi 0, %s61
    %s78 = sphi 0, %s62
    %s86 = sphi 0, %s88
    %s89 = sphi 0, %s86
    %s90 = sphi 0, %s89
    %s106 = sphi 0, %s90
  $region4: #{re_forward.3} parent=0 // loop_header_branch
    %11 = sbr.rel (%p9) target = $region8
  $region5: #{re_forward.3} parent=0 // loop_body
    %s13 = ssub.s32 %s8, 1
    %s14 = ssub.s32 %s8, 2
    %s21 = sadd.s32 1, %s16
    %p22 = scmp.ge.s32.totalorder %s21, 2
    %s23 = scalar_select %p22, 0, %s21
    %s24 = sadd.s32 1, %s15
    %s25 = scalar_select %p22, %s24, %s15
    %p26 = scmp.ge.s32.totalorder %s25, 2
    %s27 = scalar_select %p26, 0, %s25
    %s28 = ssub.s32 %s15, %s27
    %s29 = ssub.s32 %s16, %s23
    %s30 = sor.u32 %s28, %s29
    %p31 = scmp.eq.s32.totalorder %s30, 0
    %s33 = sadd.s32 %s32, 1
    %s34 = scalar_select %p31, %s32, %s33
    %p37 = pneg %p31
    %p38 = scmp.eq.s32.totalorder %s8, 3
    %p39 = por %p37, %p38
    %p40 = scmp.ne.s32.totalorder %s32, %s35
    %p41 = scmp.eq.s32.totalorder %s8, 0
    %p42 = por %p40, %p41
    %p43 = scmp.ne.s32.totalorder %s32, %s35
    %p44 = scmp.eq.s32.totalorder %s13, 3
    %p45 = por %p43, %p44
    %p46 = scmp.ne.s32.totalorder %s35, %s36
    %p47 = scmp.eq.s32.totalorder %s13, 0
    %p48 = por %p46, %p47
    %p49 = scmp.ne.s32.totalorder %s35, %s36
    %p50 = scmp.eq.s32.totalorder %s14, 3
    %p51 = por %p49, %p50
    %p53 = scmp.ne.s32.totalorder %s36, %s52
    %p54 = scmp.eq.s32.totalorder %s14, 0
    %p55 = por %p53, %p54
    %s56 = ssub.s32 %s15, %s27
    %p57 = scmp.eq.s32.totalorder %s56, 0
    %s59 = sadd.s32 %s58, 1
    %s60 = scalar_select %p57, %s58, %s59
    %p63 = pneg %p57
    %p64 = scmp.eq.s32.totalorder %s8, 3
    %p65 = por %p63, %p64
    %p66 = scmp.ne.s32.totalorder %s58, %s61
    %p67 = scmp.eq.s32.totalorder %s8, 0
    %p68 = por %p66, %p67
    %p69 = scmp.ne.s32.totalorder %s58, %s61
    %p70 = scmp.eq.s32.totalorder %s13, 3
    %p71 = por %p69, %p70
    %p72 = scmp.ne.s32.totalorder %s61, %s62
    %p73 = scmp.eq.s32.totalorder %s13, 0
    %p74 = por %p72, %p73
    %p75 = scmp.ne.s32.totalorder %s61, %s62
    %p76 = scmp.eq.s32.totalorder %s14, 3
    %p77 = por %p75, %p76
    %p79 = scmp.ne.s32.totalorder %s62, %s78
    %p80 = scmp.eq.s32.totalorder %s14, 0
    %p81 = por %p79, %p80
    %s82 = ssub.s32 %s15, %s27
    %s83 = ssub.s32 %s16, %s23
    %s84 = sor.u32 %s82, %s83
    %p85 = scmp.eq.s32.totalorder %s84, 0
    %s87 = sadd.s32 %s86, 1
    %s88 = scalar_select %p85, %s86, %s87
    %p91 = pneg %p85
    %p92 = scmp.eq.s32.totalorder %s8, 3
    %p93 = por %p91, %p92
    %p94 = scmp.ne.s32.totalorder %s86, %s89
    %p95 = scmp.eq.s32.totalorder %s8, 0
    %p96 = por %p94, %p95
    %p97 = scmp.ne.s32.totalorder %s86, %s89
    %p98 = scmp.eq.s32.totalorder %s13, 3
    %p99 = por %p97, %p98
    %p100 = scmp.ne.s32.totalorder %s89, %s90
    %p101 = scmp.eq.s32.totalorder %s13, 0
    %p102 = por %p100, %p101
    %p103 = scmp.ne.s32.totalorder %s89, %s90
    %p104 = scmp.eq.s32.totalorder %s14, 3
    %p105 = por %p103, %p104
    %p107 = scmp.ne.s32.totalorder %s90, %s106
    %p108 = scmp.eq.s32.totalorder %s14, 0
    %p109 = por %p107, %p108
    %p110 = scmp.le.s32.totalorder 1, %s8
    %p111 = scmp.lt.s32.totalorder %s8, 5
    %p112 = pnand %p110, %p111
    %p113 = pneg %p112
    // Predicated region
    $region9: #{re_forward.3} parent=5 // pred_check
      _
    $region10: #{re_forward.3} parent=5 // pred_check_branch
      %115 = sbr.rel (%p112) target = $region12
    $region11: #{re_forward.3} parent=5 // pred_region
      %s116 = ssub.s32 %s8, 1
    $region12: #{re_forward.3} parent=5 // pred_fallthru
      _
    %p117 = scmp.lt.s32.totalorder %s8, 4
    // Predicated region
    $region13: #{re_forward.3} parent=5 // pred_check
      %p118 = pneg %p117
    $region14: #{re_forward.3} parent=5 // pred_check_branch
      %120 = sbr.rel (%p118) target = $region16
    $region15: #{re_forward.3} parent=5 // pred_region
      // Predicated region
      $region17: #{re_forward.3} parent=15 // pred_check
        %p121 = pneg %p42
      $region18: #{re_forward.3} parent=15 // pred_check_branch
        %123 = sbr.rel (%p121) target = $region20
      $region19: #{re_forward.3} parent=15 // pred_region
        %s124 = smul.u32 16, %s16
        %p125 = scmp.lt.s32.totalorder %s15, 1
        %s126 = scalar_select %p125, %s15, 1
        %p127 = scmp.lt.s32.totalorder %s124, 31
        %s128 = scalar_select %p127, %s124, 31
        %s129 = smul.addr %s126, 32
        %s130 = sadd.s32 %s128, %s129
        %s131 = smul.addr %s130, 8
        %s132 = scalar_lea.vmem %s0, %s131
        %s133 = smul.u32 16, %s16
      $region20: #{re_forward.3} parent=15 // pred_fallthru
        _
      // Predicated region
      $region21: #{re_forward.3} parent=15 // pred_check
        %p134 = pneg %p68
      $region22: #{re_forward.3} parent=15 // pred_check_branch
        %136 = sbr.rel (%p134) target = $region24
      $region23: #{re_forward.3} parent=15 // pred_region
        %p137 = scmp.lt.s32.totalorder %s15, 1
        %s138 = scalar_select %p137, %s15, 1
        %s139 = smul.addr %s138, 2
        %s140 = smul.addr %s139, 4
        %s141 = scalar_lea.vmem %s1, %s140
      $region24: #{re_forward.3} parent=15 // pred_fallthru
        _
    $region16: #{re_forward.3} parent=5 // pred_fallthru
      _
    %p142 = scmp.le.s32.totalorder 1, %s8
    %p143 = scmp.lt.s32.totalorder %s8, 5
    %p144 = pnand %p142, %p143
    %p145 = pneg %p144
    // Predicated region
    $region25: #{re_forward.3} parent=5 // pred_check
      _
    $region26: #{re_forward.3} parent=5 // pred_check_branch
      %147 = sbr.rel (%p144) target = $region28
    $region27: #{re_forward.3} parent=5 // pred_region
      %s148 = ssub.s32 %s8, 1
      %s149 = smul.u32 16, %s18
      %p150 = scmp.lt.s32.totalorder %s17, 1
      %s151 = scalar_select %p150, %s17, 1
      %p152 = scmp.lt.s32.totalorder %s149, 31
      %s153 = scalar_select %p152, %s149, 31
      %s154 = smul.addr %s151, 32
      %s155 = sadd.s32 %s153, %s154
      %s156 = smul.addr %s155, 8
      %s157 = scalar_lea.vmem %s0, %s156
      %p158 = pneg %p48
      %p159 = pneg %p45
      %p160 = scmp.lt.s32.totalorder %s17, 1
      %s161 = scalar_select %p160, %s17, 1
      %s162 = smul.addr %s161, 2
      %s163 = smul.addr %s162, 4
      %s164 = scalar_lea.vmem %s1, %s163
      %p165 = pneg %p74
      %p166 = pneg %p71
      %p167 = pneg %p102
      %p168 = pneg %p99
      %s169 = smul.u32 16, %s18
      %p170 = scmp.lt.s32.totalorder %s17, 1
      %s171 = scalar_select %p170, %s17, 1
      %p172 = scmp.lt.s32.totalorder %s169, 31
      %s173 = scalar_select %p172, %s169, 31
      %s174 = smul.addr %s173, 2
      %s175 = smul.addr %s171, 64
      %s176 = sadd.s32 %s174, %s175
      %s177 = smul.addr %s176, 8
      %s178 = scalar_lea.vmem %s2, %s177
      %s179 = smul.u32 16, %s18
      %p180 = scmp.lt.s32.totalorder %s17, 1
      %s181 = scalar_select %p180, %s17, 1
      %p182 = scmp.lt.s32.totalorder %s179, 31
      %s183 = scalar_select %p182, %s179, 31
      %s184 = smul.addr %s181, 32
      %s185 = sadd.s32 %s183, %s184
      %s186 = smul.addr %s185, 8
      %s187 = scalar_lea.vmem %s0, %s186
      %s188 = smul.u32 16, %s18
      %p189 = scmp.lt.s32.totalorder %s17, 1
      %s190 = scalar_select %p189, %s17, 1
      %s191 = smul.addr %s190, 2
      %s192 = smul.addr %s191, 4
      %s193 = scalar_lea.vmem %s1, %s192
      %s194 = smul.u32 16, %s18
      %p195 = scmp.lt.s32.totalorder %s17, 1
      %s196 = scalar_select %p195, %s17, 1
      %p197 = scmp.lt.s32.totalorder %s194, 31
      %s198 = scalar_select %p197, %s194, 31
      %s199 = smul.addr %s198, 2
      %s200 = smul.addr %s196, 64
      %s201 = sadd.s32 %s199, %s200
      %s202 = smul.addr %s201, 8
      %s203 = scalar_lea.vmem %s2, %s202
      %s204 = smul.u32 16, %s18
      %v205 = vld [vmem:[%s187] sm:$0xff]
      %v206 = vld [vmem:[%s187 + $0x8] sm:$0xff]
      %v207 = vld [vmem:[%s187 + $0x10] sm:$0xff]
      %v208 = vld [vmem:[%s187 + $0x18] sm:$0xff]
      %v209 = vld [vmem:[%s187 + $0x20] sm:$0xff]
      %v210 = vld [vmem:[%s187 + $0x28] sm:$0xff]
      %v211 = vld [vmem:[%s187 + $0x30] sm:$0xff]
      %v212 = vld [vmem:[%s187 + $0x38] sm:$0xff]
      %v213 = vld [vmem:[%s187 + $0x40] sm:$0xff]
      %v214 = vld [vmem:[%s187 + $0x48] sm:$0xff]
      %v215 = vld [vmem:[%s187 + $0x50] sm:$0xff]
      %v216 = vld [vmem:[%s187 + $0x58] sm:$0xff]
      %v217 = vld [vmem:[%s187 + $0x60] sm:$0xff]
      %v218 = vld [vmem:[%s187 + $0x68] sm:$0xff]
      %v219 = vld [vmem:[%s187 + $0x70] sm:$0xff]
      %v220 = vld [vmem:[%s187 + $0x78] sm:$0xff]
      %v221 = vld [vmem:[%s193] sm:$0x77]
      %223 = vset.pattern.permute.xlu0 0
      %224 = vperm.xlu0 %223, %v205
      %v225 = vpop.permute.xlu0 %224
      %228 = vset.pattern.permute.xlu0 0
      %229 = vperm.xlu0 %228, %v206
      %v230 = vpop.permute.xlu0 %229
      %233 = vset.pattern.permute.xlu0 0
      %234 = vperm.xlu0 %233, %v207
      %v235 = vpop.permute.xlu0 %234
      %238 = vset.pattern.permute.xlu0 0
      %239 = vperm.xlu0 %238, %v208
      %v240 = vpop.permute.xlu0 %239
      %243 = vset.pattern.permute.xlu0 0
      %244 = vperm.xlu0 %243, %v209
      %v245 = vpop.permute.xlu0 %244
      %248 = vset.pattern.permute.xlu0 0
      %249 = vperm.xlu0 %248, %v210
      %v250 = vpop.permute.xlu0 %249
      %253 = vset.pattern.permute.xlu0 0
      %254 = vperm.xlu0 %253, %v211
      %v255 = vpop.permute.xlu0 %254
      %258 = vset.pattern.permute.xlu0 0
      %259 = vperm.xlu0 %258, %v212
      %v260 = vpop.permute.xlu0 %259
      %263 = vset.pattern.permute.xlu0 0
      %264 = vperm.xlu0 %263, %v213
      %v265 = vpop.permute.xlu0 %264
      %268 = vset.pattern.permute.xlu0 0
      %269 = vperm.xlu0 %268, %v214
      %v270 = vpop.permute.xlu0 %269
      %273 = vset.pattern.permute.xlu0 0
      %274 = vperm.xlu0 %273, %v215
      %v275 = vpop.permute.xlu0 %274
      %278 = vset.pattern.permute.xlu0 0
      %279 = vperm.xlu0 %278, %v216
      %v280 = vpop.permute.xlu0 %279
      %283 = vset.pattern.permute.xlu0 0
      %284 = vperm.xlu0 %283, %v217
      %v285 = vpop.permute.xlu0 %284
      %288 = vset.pattern.permute.xlu0 0
      %289 = vperm.xlu0 %288, %v218
      %v290 = vpop.permute.xlu0 %289
      %293 = vset.pattern.permute.xlu0 0
      %294 = vperm.xlu0 %293, %v219
      %v295 = vpop.permute.xlu0 %294
      %298 = vset.pattern.permute.xlu0 0
      %299 = vperm.xlu0 %298, %v220
      %v300 = vpop.permute.xlu0 %299
      %v303 = vperm.slane %v221, 0
      %v304 = vperm.slane %v221, 4
      %v307 = vperm.slane %v303, 0
      %v308 = vperm.slane %v304, 0
      %v309 = vsub.f32 %v225, %v307
      %v310 = vsub.f32 %v225, %v308
      %v311 = vsub.f32 %v230, %v307
      %v312 = vsub.f32 %v230, %v308
      %v313 = vsub.f32 %v235, %v307
      %v314 = vsub.f32 %v235, %v308
      %v315 = vsub.f32 %v240, %v307
      %v316 = vsub.f32 %v240, %v308
      %v317 = vsub.f32 %v245, %v307
      %v318 = vsub.f32 %v245, %v308
      %v319 = vsub.f32 %v250, %v307
      %v320 = vsub.f32 %v250, %v308
      %v321 = vsub.f32 %v255, %v307
      %v322 = vsub.f32 %v255, %v308
      %v323 = vsub.f32 %v260, %v307
      %v324 = vsub.f32 %v260, %v308
      %v325 = vsub.f32 %v265, %v307
      %v326 = vsub.f32 %v265, %v308
      %v327 = vsub.f32 %v270, %v307
      %v328 = vsub.f32 %v270, %v308
      %v329 = vsub.f32 %v275, %v307
      %v330 = vsub.f32 %v275, %v308
      %v331 = vsub.f32 %v280, %v307
      %v332 = vsub.f32 %v280, %v308
      %v333 = vsub.f32 %v285, %v307
      %v334 = vsub.f32 %v285, %v308
      %v335 = vsub.f32 %v290, %v307
      %v336 = vsub.f32 %v290, %v308
      %v337 = vsub.f32 %v295, %v307
      %v338 = vsub.f32 %v295, %v308
      %v339 = vsub.f32 %v300, %v307
      %v340 = vsub.f32 %v300, %v308
      %341 = vset.pattern.permute.xlu0 1
      %342 = vperm.xlu0 %341, %v205
      %v343 = vpop.permute.xlu0 %342
      %345 = vset.pattern.permute.xlu0 1
      %346 = vperm.xlu0 %345, %v206
      %v347 = vpop.permute.xlu0 %346
      %349 = vset.pattern.permute.xlu0 1
      %350 = vperm.xlu0 %349, %v207
      %v351 = vpop.permute.xlu0 %350
      %353 = vset.pattern.permute.xlu0 1
      %354 = vperm.xlu0 %353, %v208
      %v355 = vpop.permute.xlu0 %354
      %357 = vset.pattern.permute.xlu0 1
      %358 = vperm.xlu0 %357, %v209
      %v359 = vpop.permute.xlu0 %358
      %361 = vset.pattern.permute.xlu0 1
      %362 = vperm.xlu0 %361, %v210
      %v363 = vpop.permute.xlu0 %362
      %365 = vset.pattern.permute.xlu0 1
      %366 = vperm.xlu0 %365, %v211
      %v367 = vpop.permute.xlu0 %366
      %369 = vset.pattern.permute.xlu0 1
      %370 = vperm.xlu0 %369, %v212
      %v371 = vpop.permute.xlu0 %370
      %373 = vset.pattern.permute.xlu0 1
      %374 = vperm.xlu0 %373, %v213
      %v375 = vpop.permute.xlu0 %374
      %377 = vset.pattern.permute.xlu0 1
      %378 = vperm.xlu0 %377, %v214
      %v379 = vpop.permute.xlu0 %378
      %381 = vset.pattern.permute.xlu0 1
      %382 = vperm.xlu0 %381, %v215
      %v383 = vpop.permute.xlu0 %382
      %385 = vset.pattern.permute.xlu0 1
      %386 = vperm.xlu0 %385, %v216
      %v387 = vpop.permute.xlu0 %386
      %389 = vset.pattern.permute.xlu0 1
      %390 = vperm.xlu0 %389, %v217
      %v391 = vpop.permute.xlu0 %390
      %393 = vset.pattern.permute.xlu0 1
      %394 = vperm.xlu0 %393, %v218
      %v395 = vpop.permute.xlu0 %394
      %397 = vset.pattern.permute.xlu0 1
      %398 = vperm.xlu0 %397, %v219
      %v399 = vpop.permute.xlu0 %398
      %401 = vset.pattern.permute.xlu0 1
      %402 = vperm.xlu0 %401, %v220
      %v403 = vpop.permute.xlu0 %402
      %v405 = vperm.slane %v221, 1
      %v406 = vperm.slane %v221, 5
      %v409 = vperm.slane %v405, 1
      %v410 = vperm.slane %v406, 1
      %v411 = vsub.f32 %v343, %v409
      %v412 = vsub.f32 %v343, %v410
      %v413 = vsub.f32 %v347, %v409
      %v414 = vsub.f32 %v347, %v410
      %v415 = vsub.f32 %v351, %v409
      %v416 = vsub.f32 %v351, %v410
      %v417 = vsub.f32 %v355, %v409
      %v418 = vsub.f32 %v355, %v410
      %v419 = vsub.f32 %v359, %v409
      %v420 = vsub.f32 %v359, %v410
      %v421 = vsub.f32 %v363, %v409
      %v422 = vsub.f32 %v363, %v410
      %v423 = vsub.f32 %v367, %v409
      %v424 = vsub.f32 %v367, %v410
      %v425 = vsub.f32 %v371, %v409
      %v426 = vsub.f32 %v371, %v410
      %v427 = vsub.f32 %v375, %v409
      %v428 = vsub.f32 %v375, %v410
      %v429 = vsub.f32 %v379, %v409
      %v430 = vsub.f32 %v379, %v410
      %v431 = vsub.f32 %v383, %v409
      %v432 = vsub.f32 %v383, %v410
      %v433 = vsub.f32 %v387, %v409
      %v434 = vsub.f32 %v387, %v410
      %v435 = vsub.f32 %v391, %v409
      %v436 = vsub.f32 %v391, %v410
      %v437 = vsub.f32 %v395, %v409
      %v438 = vsub.f32 %v395, %v410
      %v439 = vsub.f32 %v399, %v409
      %v440 = vsub.f32 %v399, %v410
      %v441 = vsub.f32 %v403, %v409
      %v442 = vsub.f32 %v403, %v410
      %443 = vset.pattern.permute.xlu0 2
      %444 = vperm.xlu0 %443, %v205
      %v445 = vpop.permute.xlu0 %444
      %447 = vset.pattern.permute.xlu0 2
      %448 = vperm.xlu0 %447, %v206
      %v449 = vpop.permute.xlu0 %448
      %451 = vset.pattern.permute.xlu0 2
      %452 = vperm.xlu0 %451, %v207
      %v453 = vpop.permute.xlu0 %452
      %455 = vset.pattern.permute.xlu0 2
      %456 = vperm.xlu0 %455, %v208
      %v457 = vpop.permute.xlu0 %456
      %459 = vset.pattern.permute.xlu0 2
      %460 = vperm.xlu0 %459, %v209
      %v461 = vpop.permute.xlu0 %460
      %463 = vset.pattern.permute.xlu0 2
      %464 = vperm.xlu0 %463, %v210
      %v465 = vpop.permute.xlu0 %464
      %467 = vset.pattern.permute.xlu0 2
      %468 = vperm.xlu0 %467, %v211
      %v469 = vpop.permute.xlu0 %468
      %471 = vset.pattern.permute.xlu0 2
      %472 = vperm.xlu0 %471, %v212
      %v473 = vpop.permute.xlu0 %472
      %475 = vset.pattern.permute.xlu0 2
      %476 = vperm.xlu0 %475, %v213
      %v477 = vpop.permute.xlu0 %476
      %479 = vset.pattern.permute.xlu0 2
      %480 = vperm.xlu0 %479, %v214
      %v481 = vpop.permute.xlu0 %480
      %483 = vset.pattern.permute.xlu0 2
      %484 = vperm.xlu0 %483, %v215
      %v485 = vpop.permute.xlu0 %484
      %487 = vset.pattern.permute.xlu0 2
      %488 = vperm.xlu0 %487, %v216
      %v489 = vpop.permute.xlu0 %488
      %491 = vset.pattern.permute.xlu0 2
      %492 = vperm.xlu0 %491, %v217
      %v493 = vpop.permute.xlu0 %492
      %495 = vset.pattern.permute.xlu0 2
      %496 = vperm.xlu0 %495, %v218
      %v497 = vpop.permute.xlu0 %496
      %499 = vset.pattern.permute.xlu0 2
      %500 = vperm.xlu0 %499, %v219
      %v501 = vpop.permute.xlu0 %500
      %503 = vset.pattern.permute.xlu0 2
      %504 = vperm.xlu0 %503, %v220
      %v505 = vpop.permute.xlu0 %504
      %v507 = vperm.slane %v221, 2
      %v508 = vperm.slane %v221, 6
      %v511 = vperm.slane %v507, 2
      %v512 = vperm.slane %v508, 2
      %v513 = vsub.f32 %v445, %v511
      %v514 = vsub.f32 %v445, %v512
      %v515 = vsub.f32 %v449, %v511
      %v516 = vsub.f32 %v449, %v512
      %v517 = vsub.f32 %v453, %v511
      %v518 = vsub.f32 %v453, %v512
      %v519 = vsub.f32 %v457, %v511
      %v520 = vsub.f32 %v457, %v512
      %v521 = vsub.f32 %v461, %v511
      %v522 = vsub.f32 %v461, %v512
      %v523 = vsub.f32 %v465, %v511
      %v524 = vsub.f32 %v465, %v512
      %v525 = vsub.f32 %v469, %v511
      %v526 = vsub.f32 %v469, %v512
      %v527 = vsub.f32 %v473, %v511
      %v528 = vsub.f32 %v473, %v512
      %v529 = vsub.f32 %v477, %v511
      %v530 = vsub.f32 %v477, %v512
      %v531 = vsub.f32 %v481, %v511
      %v532 = vsub.f32 %v481, %v512
      %v533 = vsub.f32 %v485, %v511
      %v534 = vsub.f32 %v485, %v512
      %v535 = vsub.f32 %v489, %v511
      %v536 = vsub.f32 %v489, %v512
      %v537 = vsub.f32 %v493, %v511
      %v538 = vsub.f32 %v493, %v512
      %v539 = vsub.f32 %v497, %v511
      %v540 = vsub.f32 %v497, %v512
      %v541 = vsub.f32 %v501, %v511
      %v542 = vsub.f32 %v501, %v512
      %v543 = vsub.f32 %v505, %v511
      %v544 = vsub.f32 %v505, %v512
      %v545 = vmul.f32 %v309, %v309
      %v546 = vmul.f32 %v310, %v310
      %v547 = vmul.f32 %v311, %v311
      %v548 = vmul.f32 %v312, %v312
      %v549 = vmul.f32 %v313, %v313
      %v550 = vmul.f32 %v314, %v314
      %v551 = vmul.f32 %v315, %v315
      %v552 = vmul.f32 %v316, %v316
      %v553 = vmul.f32 %v317, %v317
      %v554 = vmul.f32 %v318, %v318
      %v555 = vmul.f32 %v319, %v319
      %v556 = vmul.f32 %v320, %v320
      %v557 = vmul.f32 %v321, %v321
      %v558 = vmul.f32 %v322, %v322
      %v559 = vmul.f32 %v323, %v323
      %v560 = vmul.f32 %v324, %v324
      %v561 = vmul.f32 %v325, %v325
      %v562 = vmul.f32 %v326, %v326
      %v563 = vmul.f32 %v327, %v327
      %v564 = vmul.f32 %v328, %v328
      %v565 = vmul.f32 %v329, %v329
      %v566 = vmul.f32 %v330, %v330
      %v567 = vmul.f32 %v331, %v331
      %v568 = vmul.f32 %v332, %v332
      %v569 = vmul.f32 %v333, %v333
      %v570 = vmul.f32 %v334, %v334
      %v571 = vmul.f32 %v335, %v335
      %v572 = vmul.f32 %v336, %v336
      %v573 = vmul.f32 %v337, %v337
      %v574 = vmul.f32 %v338, %v338
      %v575 = vmul.f32 %v339, %v339
      %v576 = vmul.f32 %v340, %v340
      %v577 = vmul.f32 %v411, %v411
      %v578 = vmul.f32 %v412, %v412
      %v579 = vmul.f32 %v413, %v413
      %v580 = vmul.f32 %v414, %v414
      %v581 = vmul.f32 %v415, %v415
      %v582 = vmul.f32 %v416, %v416
      %v583 = vmul.f32 %v417, %v417
      %v584 = vmul.f32 %v418, %v418
      %v585 = vmul.f32 %v419, %v419
      %v586 = vmul.f32 %v420, %v420
      %v587 = vmul.f32 %v421, %v421
      %v588 = vmul.f32 %v422, %v422
      %v589 = vmul.f32 %v423, %v423
      %v590 = vmul.f32 %v424, %v424
      %v591 = vmul.f32 %v425, %v425
      %v592 = vmul.f32 %v426, %v426
      %v593 = vmul.f32 %v427, %v427
      %v594 = vmul.f32 %v428, %v428
      %v595 = vmul.f32 %v429, %v429
      %v596 = vmul.f32 %v430, %v430
      %v597 = vmul.f32 %v431, %v431
      %v598 = vmul.f32 %v432, %v432
      %v599 = vmul.f32 %v433, %v433
      %v600 = vmul.f32 %v434, %v434
      %v601 = vmul.f32 %v435, %v435
      %v602 = vmul.f32 %v436, %v436
      %v603 = vmul.f32 %v437, %v437
      %v604 = vmul.f32 %v438, %v438
      %v605 = vmul.f32 %v439, %v439
      %v606 = vmul.f32 %v440, %v440
      %v607 = vmul.f32 %v441, %v441
      %v608 = vmul.f32 %v442, %v442
      %v609 = vadd.f32 %v545, %v577
      %v610 = vadd.f32 %v546, %v578
      %v611 = vadd.f32 %v547, %v579
      %v612 = vadd.f32 %v548, %v580
      %v613 = vadd.f32 %v549, %v581
      %v614 = vadd.f32 %v550, %v582
      %v615 = vadd.f32 %v551, %v583
      %v616 = vadd.f32 %v552, %v584
      %v617 = vadd.f32 %v553, %v585
      %v618 = vadd.f32 %v554, %v586
      %v619 = vadd.f32 %v555, %v587
      %v620 = vadd.f32 %v556, %v588
      %v621 = vadd.f32 %v557, %v589
      %v622 = vadd.f32 %v558, %v590
      %v623 = vadd.f32 %v559, %v591
      %v624 = vadd.f32 %v560, %v592
      %v625 = vadd.f32 %v561, %v593
      %v626 = vadd.f32 %v562, %v594
      %v627 = vadd.f32 %v563, %v595
      %v628 = vadd.f32 %v564, %v596
      %v629 = vadd.f32 %v565, %v597
      %v630 = vadd.f32 %v566, %v598
      %v631 = vadd.f32 %v567, %v599
      %v632 = vadd.f32 %v568, %v600
      %v633 = vadd.f32 %v569, %v601
      %v634 = vadd.f32 %v570, %v602
      %v635 = vadd.f32 %v571, %v603
      %v636 = vadd.f32 %v572, %v604
      %v637 = vadd.f32 %v573, %v605
      %v638 = vadd.f32 %v574, %v606
      %v639 = vadd.f32 %v575, %v607
      %v640 = vadd.f32 %v576, %v608
      %v641 = vmul.f32 %v513, %v513
      %v642 = vmul.f32 %v514, %v514
      %v643 = vmul.f32 %v515, %v515
      %v644 = vmul.f32 %v516, %v516
      %v645 = vmul.f32 %v517, %v517
      %v646 = vmul.f32 %v518, %v518
      %v647 = vmul.f32 %v519, %v519
      %v648 = vmul.f32 %v520, %v520
      %v649 = vmul.f32 %v521, %v521
      %v650 = vmul.f32 %v522, %v522
      %v651 = vmul.f32 %v523, %v523
      %v652 = vmul.f32 %v524, %v524
      %v653 = vmul.f32 %v525, %v525
      %v654 = vmul.f32 %v526, %v526
      %v655 = vmul.f32 %v527, %v527
      %v656 = vmul.f32 %v528, %v528
      %v657 = vmul.f32 %v529, %v529
      %v658 = vmul.f32 %v530, %v530
      %v659 = vmul.f32 %v531, %v531
      %v660 = vmul.f32 %v532, %v532
      %v661 = vmul.f32 %v533, %v533
      %v662 = vmul.f32 %v534, %v534
      %v663 = vmul.f32 %v535, %v535
      %v664 = vmul.f32 %v536, %v536
      %v665 = vmul.f32 %v537, %v537
      %v666 = vmul.f32 %v538, %v538
      %v667 = vmul.f32 %v539, %v539
      %v668 = vmul.f32 %v540, %v540
      %v669 = vmul.f32 %v541, %v541
      %v670 = vmul.f32 %v542, %v542
      %v671 = vmul.f32 %v543, %v543
      %v672 = vmul.f32 %v544, %v544
      %v673 = vadd.f32 %v609, %v641
      %v674 = vadd.f32 %v610, %v642
      %v675 = vadd.f32 %v611, %v643
      %v676 = vadd.f32 %v612, %v644
      %v677 = vadd.f32 %v613, %v645
      %v678 = vadd.f32 %v614, %v646
      %v679 = vadd.f32 %v615, %v647
      %v680 = vadd.f32 %v616, %v648
      %v681 = vadd.f32 %v617, %v649
      %v682 = vadd.f32 %v618, %v650
      %v683 = vadd.f32 %v619, %v651
      %v684 = vadd.f32 %v620, %v652
      %v685 = vadd.f32 %v621, %v653
      %v686 = vadd.f32 %v622, %v654
      %v687 = vadd.f32 %v623, %v655
      %v688 = vadd.f32 %v624, %v656
      %v689 = vadd.f32 %v625, %v657
      %v690 = vadd.f32 %v626, %v658
      %v691 = vadd.f32 %v627, %v659
      %v692 = vadd.f32 %v628, %v660
      %v693 = vadd.f32 %v629, %v661
      %v694 = vadd.f32 %v630, %v662
      %v695 = vadd.f32 %v631, %v663
      %v696 = vadd.f32 %v632, %v664
      %v697 = vadd.f32 %v633, %v665
      %v698 = vadd.f32 %v634, %v666
      %v699 = vadd.f32 %v635, %v667
      %v700 = vadd.f32 %v636, %v668
      %v701 = vadd.f32 %v637, %v669
      %v702 = vadd.f32 %v638, %v670
      %v703 = vadd.f32 %v639, %v671
      %v704 = vadd.f32 %v640, %v672
      %705 = vst [vmem:[%s203] sm:$0xff] %v673
      %706 = vst [vmem:[%s203 + $0x8] sm:$0xff] %v674
      %707 = vst [vmem:[%s203 + $0x10] sm:$0xff] %v675
      %708 = vst [vmem:[%s203 + $0x18] sm:$0xff] %v676
      %709 = vst [vmem:[%s203 + $0x20] sm:$0xff] %v677
      %710 = vst [vmem:[%s203 + $0x28] sm:$0xff] %v678
      %711 = vst [vmem:[%s203 + $0x30] sm:$0xff] %v679
      %712 = vst [vmem:[%s203 + $0x38] sm:$0xff] %v680
      %713 = vst [vmem:[%s203 + $0x40] sm:$0xff] %v681
      %714 = vst [vmem:[%s203 + $0x48] sm:$0xff] %v682
      %715 = vst [vmem:[%s203 + $0x50] sm:$0xff] %v683
      %716 = vst [vmem:[%s203 + $0x58] sm:$0xff] %v684
      %717 = vst [vmem:[%s203 + $0x60] sm:$0xff] %v685
      %718 = vst [vmem:[%s203 + $0x68] sm:$0xff] %v686
      %719 = vst [vmem:[%s203 + $0x70] sm:$0xff] %v687
      %720 = vst [vmem:[%s203 + $0x78] sm:$0xff] %v688
      %721 = vst [vmem:[%s203 + $0x80] sm:$0xff] %v689
      %722 = vst [vmem:[%s203 + $0x88] sm:$0xff] %v690
      %723 = vst [vmem:[%s203 + $0x90] sm:$0xff] %v691
      %724 = vst [vmem:[%s203 + $0x98] sm:$0xff] %v692
      %725 = vst [vmem:[%s203 + $0xa0] sm:$0xff] %v693
      %726 = vst [vmem:[%s203 + $0xa8] sm:$0xff] %v694
      %727 = vst [vmem:[%s203 + $0xb0] sm:$0xff] %v695
      %728 = vst [vmem:[%s203 + $0xb8] sm:$0xff] %v696
      %729 = vst [vmem:[%s203 + $0xc0] sm:$0xff] %v697
      %730 = vst [vmem:[%s203 + $0xc8] sm:$0xff] %v698
      %731 = vst [vmem:[%s203 + $0xd0] sm:$0xff] %v699
      %732 = vst [vmem:[%s203 + $0xd8] sm:$0xff] %v700
      %733 = vst [vmem:[%s203 + $0xe0] sm:$0xff] %v701
      %734 = vst [vmem:[%s203 + $0xe8] sm:$0xff] %v702
      %735 = vst [vmem:[%s203 + $0xf0] sm:$0xff] %v703
      %736 = vst [vmem:[%s203 + $0xf8] sm:$0xff] %v704
      %s737 = smul.u32 16, %s18
      %p738 = scmp.lt.s32.totalorder %s17, 1
      %s739 = scalar_select %p738, %s17, 1
      %p740 = scmp.lt.s32.totalorder %s737, 31
      %s741 = scalar_select %p740, %s737, 31
      %s742 = smul.addr %s741, 2
      %s743 = smul.addr %s739, 64
      %s744 = sadd.s32 %s742, %s743
      %s745 = smul.addr %s744, 8
      %s746 = scalar_lea.vmem %s2, %s745
      // Predicated region
      $region29: #{re_forward.3} parent=27 // pred_check
        %p747 = pneg %p99
      $region30: #{re_forward.3} parent=27 // pred_check_branch
        %749 = sbr.rel (%p747) target = $region32
      $region31: #{re_forward.3} parent=27 // pred_region
        %s750 = smul.u32 16, %s18
      $region32: #{re_forward.3} parent=27 // pred_fallthru
        _
    $region28: #{re_forward.3} parent=5 // pred_fallthru
      _
    %p751 = scmp.le.s32.totalorder 2, %s8
    // Predicated region
    $region33: #{re_forward.3} parent=5 // pred_check
      %p752 = pneg %p751
    $region34: #{re_forward.3} parent=5 // pred_check_branch
      %754 = sbr.rel (%p752) target = $region36
    $region35: #{re_forward.3} parent=5 // pred_region
      %s755 = ssub.s32 %s8, 2
      // Predicated region
      $region37: #{re_forward.3} parent=35 // pred_check
        %p756 = pneg %p105
      $region38: #{re_forward.3} parent=35 // pred_check_branch
        %758 = sbr.rel (%p756) target = $region40
      $region39: #{re_forward.3} parent=35 // pred_region
        %s759 = smul.u32 16, %s20
        %p760 = scmp.lt.s32.totalorder %s19, 1
        %s761 = scalar_select %p760, %s19, 1
        %p762 = scmp.lt.s32.totalorder %s759, 31
        %s763 = scalar_select %p762, %s759, 31
        %s764 = smul.addr %s763, 2
        %s765 = smul.addr %s761, 64
        %s766 = sadd.s32 %s764, %s765
        %s767 = smul.addr %s766, 8
        %s768 = scalar_lea.vmem %s2, %s767
      $region40: #{re_forward.3} parent=35 // pred_fallthru
        _
    $region36: #{re_forward.3} parent=5 // pred_fallthru
      _
  $region6: #{re_forward.3} parent=0 // loop_footer
    %s12 = sadd.s32 1, %s8
  $region7: #{re_forward.3} parent=0 // loop_footer_branch
    %7 = sbr.rel target = $region3
  $region8: #{re_forward.3} parent=0 // loop_exit
    _

// kernel: re_forward.4
$region0: #{re_forward.4}
  #allocation0 [shape = 'u32[]', space=smem, size = 0x4, offset = 0x4, fixed_abs, tag = 'smem constant byte address 0x4 - core index']
  #allocation1 [shape = 'u32[72,128]{1,0:T(1,128)}', space=vmem, size = 0x9000, scoped, tag = 'internal scratch']
  %s0 = inlined_call_operand.vmem [shape: f32[2,3,256], index: 0, kind: input, shape index: {}]
  %s1 = inlined_call_operand.vmem [shape: f32[32,3], index: 1, kind: input, shape index: {}]
  %s2 = inlined_call_operand.vmem [shape: f32[32,1], index: 2, kind: input, shape index: {}]
  %s3 = inlined_call_operand.vmem [shape: bf16[64,32], index: 3, kind: input, shape index: {}]
  %s4 = inlined_call_operand.vmem [shape: f32[64,1], index: 4, kind: input, shape index: {}]
  %s5 = inlined_call_operand.vmem [shape: bf16[2,64,256], index: 5, kind: output, shape index: {}]
  %s6 = sld [smem:[#allocation0]]
  $region90: #{re_forward.4} parent=0
    _
  %s8 = ssub.s32 1, %s6
  %s9 = scalar_select 0, %s8, %s6
  $region1: #{re_forward.4} parent=0
    #allocation2 [shape = 'u8[32768]{0}', space=vmem, size = 0x8000, scoped, tag = 'output window, operand 0']
    loop: start=0, step=1, limit=6
    $region2: #{re_forward.4} parent=1 // loop_pre_header
      _
    $region3: #{re_forward.4} parent=1 // loop_header
      %s11 = sphi 0, %s15
      %p12 = scmp.ge.s32.totalorder %s11, 6
      %s18 = sphi 0, %s30
      %s19 = sphi 0, %s26
      %s20 = sphi 0, %s18
      %s21 = sphi 0, %s19
      %s22 = sphi 0, %s20
      %s23 = sphi 0, %s21
      %s35 = sphi 0, %s37
      %s38 = sphi 0, %s35
      %s39 = sphi 0, %s38
      %s55 = sphi 0, %s39
      %s59 = sphi 0, %s59
      %s61 = sphi 0, %s59
      %s62 = sphi 0, %s61
      %s76 = sphi 0, %s62
      %s80 = sphi 0, %s80
      %s82 = sphi 0, %s80
      %s83 = sphi 0, %s82
      %s97 = sphi 0, %s83
      %s101 = sphi 0, %s101
      %s103 = sphi 0, %s101
      %s104 = sphi 0, %s103
      %s118 = sphi 0, %s104
      %s122 = sphi 0, %s122
      %s124 = sphi 0, %s122
      %s125 = sphi 0, %s124
      %s139 = sphi 0, %s125
      %s147 = sphi 0, %s149
      %s150 = sphi 0, %s147
      %s151 = sphi 0, %s150
      %s167 = sphi 0, %s151
    $region4: #{re_forward.4} parent=1 // loop_header_branch
      %14 = sbr.rel (%p12) target = $region8
    $region5: #{re_forward.4} parent=1 // loop_body
      %s16 = ssub.s32 %s11, 1
      %s17 = ssub.s32 %s11, 2
      %s24 = sadd.s32 1, %s19
      %p25 = scmp.ge.s32.totalorder %s24, 2
      %s26 = scalar_select %p25, 0, %s24
      %s27 = sadd.s32 1, %s18
      %s28 = scalar_select %p25, %s27, %s18
      %p29 = scmp.ge.s32.totalorder %s28, 2
      %s30 = scalar_select %p29, 0, %s28
      %s31 = ssub.s32 %s18, %s30
      %s32 = ssub.s32 %s19, %s26
      %s33 = sor.u32 %s31, %s32
      %p34 = scmp.eq.s32.totalorder %s33, 0
      %s36 = sadd.s32 %s35, 1
      %s37 = scalar_select %p34, %s35, %s36
      %p40 = pneg %p34
      %p41 = scmp.eq.s32.totalorder %s11, 3
      %p42 = por %p40, %p41
      %p43 = scmp.ne.s32.totalorder %s35, %s38
      %p44 = scmp.eq.s32.totalorder %s11, 0
      %p45 = por %p43, %p44
      %p46 = scmp.ne.s32.totalorder %s35, %s38
      %p47 = scmp.eq.s32.totalorder %s16, 3
      %p48 = por %p46, %p47
      %p49 = scmp.ne.s32.totalorder %s38, %s39
      %p50 = scmp.eq.s32.totalorder %s16, 0
      %p51 = por %p49, %p50
      %p52 = scmp.ne.s32.totalorder %s38, %s39
      %p53 = scmp.eq.s32.totalorder %s17, 3
      %p54 = por %p52, %p53
      %p56 = scmp.ne.s32.totalorder %s39, %s55
      %p57 = scmp.eq.s32.totalorder %s17, 0
      %p58 = por %p56, %p57
      %s60 = sadd.s32 %s59, 1
      %p63 = scmp.eq.s32.totalorder %s11, 3
      %p64 = scmp.ne.s32.totalorder %s59, %s61
      %p65 = scmp.eq.s32.totalorder %s11, 0
      %p66 = por %p64, %p65
      %p67 = scmp.ne.s32.totalorder %s59, %s61
      %p68 = scmp.eq.s32.totalorder %s16, 3
      %p69 = por %p67, %p68
      %p70 = scmp.ne.s32.totalorder %s61, %s62
      %p71 = scmp.eq.s32.totalorder %s16, 0
      %p72 = por %p70, %p71
      %p73 = scmp.ne.s32.totalorder %s61, %s62
      %p74 = scmp.eq.s32.totalorder %s17, 3
      %p75 = por %p73, %p74
      %p77 = scmp.ne.s32.totalorder %s62, %s76
      %p78 = scmp.eq.s32.totalorder %s17, 0
      %p79 = por %p77, %p78
      %s81 = sadd.s32 %s80, 1
      %p84 = scmp.eq.s32.totalorder %s11, 3
      %p85 = scmp.ne.s32.totalorder %s80, %s82
      %p86 = scmp.eq.s32.totalorder %s11, 0
      %p87 = por %p85, %p86
      %p88 = scmp.ne.s32.totalorder %s80, %s82
      %p89 = scmp.eq.s32.totalorder %s16, 3
      %p90 = por %p88, %p89
      %p91 = scmp.ne.s32.totalorder %s82, %s83
      %p92 = scmp.eq.s32.totalorder %s16, 0
      %p93 = por %p91, %p92
      %p94 = scmp.ne.s32.totalorder %s82, %s83
      %p95 = scmp.eq.s32.totalorder %s17, 3
      %p96 = por %p94, %p95
      %p98 = scmp.ne.s32.totalorder %s83, %s97
      %p99 = scmp.eq.s32.totalorder %s17, 0
      %p100 = por %p98, %p99
      %s102 = sadd.s32 %s101, 1
      %p105 = scmp.eq.s32.totalorder %s11, 3
      %p106 = scmp.ne.s32.totalorder %s101, %s103
      %p107 = scmp.eq.s32.totalorder %s11, 0
      %p108 = por %p106, %p107
      %p109 = scmp.ne.s32.totalorder %s101, %s103
      %p110 = scmp.eq.s32.totalorder %s16, 3
      %p111 = por %p109, %p110
      %p112 = scmp.ne.s32.totalorder %s103, %s104
      %p113 = scmp.eq.s32.totalorder %s16, 0
      %p114 = por %p112, %p113
      %p115 = scmp.ne.s32.totalorder %s103, %s104
      %p116 = scmp.eq.s32.totalorder %s17, 3
      %p117 = por %p115, %p116
      %p119 = scmp.ne.s32.totalorder %s104, %s118
      %p120 = scmp.eq.s32.totalorder %s17, 0
      %p121 = por %p119, %p120
      %s123 = sadd.s32 %s122, 1
      %p126 = scmp.eq.s32.totalorder %s11, 3
      %p127 = scmp.ne.s32.totalorder %s122, %s124
      %p128 = scmp.eq.s32.totalorder %s11, 0
      %p129 = por %p127, %p128
      %p130 = scmp.ne.s32.totalorder %s122, %s124
      %p131 = scmp.eq.s32.totalorder %s16, 3
      %p132 = por %p130, %p131
      %p133 = scmp.ne.s32.totalorder %s124, %s125
      %p134 = scmp.eq.s32.totalorder %s16, 0
      %p135 = por %p133, %p134
      %p136 = scmp.ne.s32.totalorder %s124, %s125
      %p137 = scmp.eq.s32.totalorder %s17, 3
      %p138 = por %p136, %p137
      %p140 = scmp.ne.s32.totalorder %s125, %s139
      %p141 = scmp.eq.s32.totalorder %s17, 0
      %p142 = por %p140, %p141
      %s143 = ssub.s32 %s18, %s30
      %s144 = ssub.s32 %s19, %s26
      %s145 = sor.u32 %s143, %s144
      %p146 = scmp.eq.s32.totalorder %s145, 0
      %s148 = sadd.s32 %s147, 1
      %s149 = scalar_select %p146, %s147, %s148
      %p152 = pneg %p146
      %p153 = scmp.eq.s32.totalorder %s11, 3
      %p154 = por %p152, %p153
      %p155 = scmp.ne.s32.totalorder %s147, %s150
      %p156 = scmp.eq.s32.totalorder %s11, 0
      %p157 = por %p155, %p156
      %p158 = scmp.ne.s32.totalorder %s147, %s150
      %p159 = scmp.eq.s32.totalorder %s16, 3
      %p160 = por %p158, %p159
      %p161 = scmp.ne.s32.totalorder %s150, %s151
      %p162 = scmp.eq.s32.totalorder %s16, 0
      %p163 = por %p161, %p162
      %p164 = scmp.ne.s32.totalorder %s150, %s151
      %p165 = scmp.eq.s32.totalorder %s17, 3
      %p166 = por %p164, %p165
      %p168 = scmp.ne.s32.totalorder %s151, %s167
      %p169 = scmp.eq.s32.totalorder %s17, 0
      %p170 = por %p168, %p169
      %p171 = scmp.le.s32.totalorder 1, %s11
      %p172 = scmp.lt.s32.totalorder %s11, 5
      %p173 = pnand %p171, %p172
      %p174 = pneg %p173
      // Predicated region
      $region9: #{re_forward.4} parent=5 // pred_check
        _
      $region10: #{re_forward.4} parent=5 // pred_check_branch
        %176 = sbr.rel (%p173) target = $region12
      $region11: #{re_forward.4} parent=5 // pred_region
        %s177 = ssub.s32 %s11, 1
        // Predicated region
        $region13: #{re_forward.4} parent=11 // pred_check
          %p178 = pneg %p72
        $region14: #{re_forward.4} parent=11 // pred_check_branch
          %180 = sbr.rel (%p178) target = $region16
        $region15: #{re_forward.4} parent=11 // pred_region
          _
        $region16: #{re_forward.4} parent=11 // pred_fallthru
          _
        // Predicated region
        $region17: #{re_forward.4} parent=11 // pred_check
          %p181 = pneg %p93
        $region18: #{re_forward.4} parent=11 // pred_check_branch
          %183 = sbr.rel (%p181) target = $region20
        $region19: #{re_forward.4} parent=11 // pred_region
          _
        $region20: #{re_forward.4} parent=11 // pred_fallthru
          _
        // Predicated region
        $region21: #{re_forward.4} parent=11 // pred_check
          %p184 = pneg %p114
        $region22: #{re_forward.4} parent=11 // pred_check_branch
          %186 = sbr.rel (%p184) target = $region24
        $region23: #{re_forward.4} parent=11 // pred_region
          _
        $region24: #{re_forward.4} parent=11 // pred_fallthru
          _
        // Predicated region
        $region25: #{re_forward.4} parent=11 // pred_check
          %p187 = pneg %p135
        $region26: #{re_forward.4} parent=11 // pred_check_branch
          %189 = sbr.rel (%p187) target = $region28
        $region27: #{re_forward.4} parent=11 // pred_region
          _
        $region28: #{re_forward.4} parent=11 // pred_fallthru
          _
      $region12: #{re_forward.4} parent=5 // pred_fallthru
        _
      %p190 = scmp.lt.s32.totalorder %s11, 4
      // Predicated region
      $region29: #{re_forward.4} parent=5 // pred_check
        %p191 = pneg %p190
      $region30: #{re_forward.4} parent=5 // pred_check_branch
        %193 = sbr.rel (%p191) target = $region32
      $region31: #{re_forward.4} parent=5 // pred_region
        // Predicated region
        $region33: #{re_forward.4} parent=31 // pred_check
          %p194 = pneg %p45
        $region34: #{re_forward.4} parent=31 // pred_check_branch
          %196 = sbr.rel (%p194) target = $region36
        $region35: #{re_forward.4} parent=31 // pred_region
          %p197 = scmp.lt.s32.totalorder %s18, 1
          %s198 = scalar_select %p197, %s18, 1
          %p199 = scmp.lt.s32.totalorder %s19, 1
          %s200 = scalar_select %p199, %s19, 1
          %s201 = smul.addr %s198, 2
          %s202 = sadd.s32 %s200, %s201
          %s203 = smul.addr %s202, 4
          %s204 = scalar_lea.vmem %s0, %s203
        $region36: #{re_forward.4} parent=31 // pred_fallthru
          _
      $region32: #{re_forward.4} parent=5 // pred_fallthru
        _
      %p205 = scmp.le.s32.totalorder 1, %s11
      %p206 = scmp.lt.s32.totalorder %s11, 5
      %p207 = pnand %p205, %p206
      %p208 = pneg %p207
      // Predicated region
      $region37: #{re_forward.4} parent=5 // pred_check
        _
      $region38: #{re_forward.4} parent=5 // pred_check_branch
        %210 = sbr.rel (%p207) target = $region40
      $region39: #{re_forward.4} parent=5 // pred_region
        %s211 = ssub.s32 %s11, 1
        %p212 = scmp.lt.s32.totalorder %s20, 1
        %s213 = scalar_select %p212, %s20, 1
        %p214 = scmp.lt.s32.totalorder %s21, 1
        %s215 = scalar_select %p214, %s21, 1
        %s216 = smul.addr %s213, 2
        %s217 = sadd.s32 %s215, %s216
        %s218 = smul.addr %s217, 4
        %s219 = scalar_lea.vmem %s0, %s218
        %p220 = pneg %p51
        %p221 = pneg %p48
        %p222 = pneg %p72
        %p223 = pneg %p69
        %p224 = pneg %p93
        %p225 = pneg %p90
        %p226 = pneg %p114
        %p227 = pneg %p111
        %p228 = pneg %p135
        %p229 = pneg %p132
        %p230 = pneg %p163
        %p231 = pneg %p160
        %s232 = sand.u32 %s150, 1
        %s233 = sand.u32 %s150, 1
        %s234 = smul.addr %s233, 32
        %s235 = scalar_lea.vmem [#allocation2], %s234
        %p236 = scmp.lt.s32.totalorder %s20, 1
        %s237 = scalar_select %p236, %s20, 1
        %p238 = scmp.lt.s32.totalorder %s21, 1
        %s239 = scalar_select %p238, %s21, 1
        %s240 = smul.addr %s237, 2
        %s241 = sadd.s32 %s239, %s240
        %s242 = smul.addr %s241, 4
        %s243 = scalar_lea.vmem %s0, %s242
        %v245 = vld [vmem:[%s243] sm:$0x7]
        %v246 = vld [vmem:[%s1] sm:$0xff]
        %v247 = vld [vmem:[%s1 + $0x8] sm:$0xff]
        %v248 = vld [vmem:[%s1 + $0x10] sm:$0xff]
        %v249 = vld [vmem:[%s1 + $0x18] sm:$0xff]
        %251 = vset.pattern.permute.xlu0 0
        %252 = vperm.xlu0 %251, %v246
        %v253 = vpop.permute.xlu0 %252
        %256 = vset.pattern.permute.xlu0 0
        %257 = vperm.xlu0 %256, %v247
        %v258 = vpop.permute.xlu0 %257
        %261 = vset.pattern.permute.xlu0 0
        %262 = vperm.xlu0 %261, %v248
        %v263 = vpop.permute.xlu0 %262
        %266 = vset.pattern.permute.xlu0 0
        %267 = vperm.xlu0 %266, %v249
        %v268 = vpop.permute.xlu0 %267
        %v270 = vperm.slane %v245, 0
        %v271 = vmul.f32 %v253, %v270
        %v272 = vmul.f32 %v258, %v270
        %v273 = vmul.f32 %v263, %v270
        %v274 = vmul.f32 %v268, %v270
        %275 = vset.pattern.permute.xlu0 1
        %276 = vperm.xlu0 %275, %v246
        %v277 = vpop.permute.xlu0 %276
        %279 = vset.pattern.permute.xlu0 1
        %280 = vperm.xlu0 %279, %v247
        %v281 = vpop.permute.xlu0 %280
        %283 = vset.pattern.permute.xlu0 1
        %284 = vperm.xlu0 %283, %v248
        %v285 = vpop.permute.xlu0 %284
        %287 = vset.pattern.permute.xlu0 1
        %288 = vperm.xlu0 %287, %v249
        %v289 = vpop.permute.xlu0 %288
        %v291 = vperm.slane %v245, 1
        %v292 = vmul.f32 %v277, %v291
        %v293 = vmul.f32 %v281, %v291
        %v294 = vmul.f32 %v285, %v291
        %v295 = vmul.f32 %v289, %v291
        %v296 = vadd.f32 %v271, %v292
        %v297 = vadd.f32 %v272, %v293
        %v298 = vadd.f32 %v273, %v294
        %v299 = vadd.f32 %v274, %v295
        %300 = vset.pattern.permute.xlu0 2
        %301 = vperm.xlu0 %300, %v246
        %v302 = vpop.permute.xlu0 %301
        %304 = vset.pattern.permute.xlu0 2
        %305 = vperm.xlu0 %304, %v247
        %v306 = vpop.permute.xlu0 %305
        %308 = vset.pattern.permute.xlu0 2
        %309 = vperm.xlu0 %308, %v248
        %v310 = vpop.permute.xlu0 %309
        %312 = vset.pattern.permute.xlu0 2
        %313 = vperm.xlu0 %312, %v249
        %v314 = vpop.permute.xlu0 %313
        %v316 = vperm.slane %v245, 2
        %v317 = vmul.f32 %v302, %v316
        %v318 = vmul.f32 %v306, %v316
        %v319 = vmul.f32 %v310, %v316
        %v320 = vmul.f32 %v314, %v316
        %v321 = vadd.f32 %v296, %v317
        %v322 = vadd.f32 %v297, %v318
        %v323 = vadd.f32 %v298, %v319
        %v324 = vadd.f32 %v299, %v320
        %v325 = vld [vmem:[%s2] sm:$0xff]
        %v326 = vld [vmem:[%s2 + $0x8] sm:$0xff]
        %v327 = vld [vmem:[%s2 + $0x10] sm:$0xff]
        %v328 = vld [vmem:[%s2 + $0x18] sm:$0xff]
        %330 = vset.pattern.permute.xlu0 0
        %331 = vperm.xlu0 %330, %v325
        %v332 = vpop.permute.xlu0 %331
        %335 = vset.pattern.permute.xlu0 0
        %336 = vperm.xlu0 %335, %v326
        %v337 = vpop.permute.xlu0 %336
        %340 = vset.pattern.permute.xlu0 0
        %341 = vperm.xlu0 %340, %v327
        %v342 = vpop.permute.xlu0 %341
        %345 = vset.pattern.permute.xlu0 0
        %346 = vperm.xlu0 %345, %v328
        %v347 = vpop.permute.xlu0 %346
        %v349 = vadd.f32 %v321, %v332
        %v350 = vadd.f32 %v322, %v337
        %v351 = vadd.f32 %v323, %v342
        %v352 = vadd.f32 %v324, %v347
        %v353 = vmax.f32 %v349, 0.0
        %v354 = vmax.f32 %v350, 0.0
        %v355 = vmax.f32 %v351, 0.0
        %v356 = vmax.f32 %v352, 0.0
        %v357 = vld [vmem:[%s3] sm:$0xf]
        %v358 = vld [vmem:[%s3 + $0x4] sm:$0xf]
        %v359 = vld [vmem:[%s3 + $0x8] sm:$0xf]
        %v360 = vld [vmem:[%s3 + $0xc] sm:$0xf]
        %v361 = vld [vmem:[%s3 + $0x10] sm:$0xf]
        %v362 = vld [vmem:[%s3 + $0x14] sm:$0xf]
        %v363 = vld [vmem:[%s3 + $0x18] sm:$0xf]
        %v364 = vld [vmem:[%s3 + $0x1c] sm:$0xf]
        %v365 = vpack.c.bf16 %v354, %v353
        %v366 = vpack.c.bf16 %v356, %v355
        %v367 = vld [vmem:[%s4] sm:$0xff]
        %v368 = vld [vmem:[%s4 + $0x8] sm:$0xff]
        %v369 = vld [vmem:[%s4 + $0x10] sm:$0xff]
        %v370 = vld [vmem:[%s4 + $0x18] sm:$0xff]
        %v371 = vld [vmem:[%s4 + $0x20] sm:$0xff]
        %v372 = vld [vmem:[%s4 + $0x28] sm:$0xff]
        %v373 = vld [vmem:[%s4 + $0x30] sm:$0xff]
        %v374 = vld [vmem:[%s4 + $0x38] sm:$0xff]
        %376 = vset.pattern.permute.xlu0 0
        %377 = vperm.xlu0 %376, %v367
        %v378 = vpop.permute.xlu0 %377
        %381 = vset.pattern.permute.xlu0 0
        %382 = vperm.xlu0 %381, %v368
        %v383 = vpop.permute.xlu0 %382
        %386 = vset.pattern.permute.xlu0 0
        %387 = vperm.xlu0 %386, %v369
        %v388 = vpop.permute.xlu0 %387
        %391 = vset.pattern.permute.xlu0 0
        %392 = vperm.xlu0 %391, %v370
        %v393 = vpop.permute.xlu0 %392
        %396 = vset.pattern.permute.xlu0 0
        %397 = vperm.xlu0 %396, %v371
        %v398 = vpop.permute.xlu0 %397
        %401 = vset.pattern.permute.xlu0 0
        %402 = vperm.xlu0 %401, %v372
        %v403 = vpop.permute.xlu0 %402
        %406 = vset.pattern.permute.xlu0 0
        %407 = vperm.xlu0 %406, %v373
        %v408 = vpop.permute.xlu0 %407
        %411 = vset.pattern.permute.xlu0 0
        %412 = vperm.xlu0 %411, %v374
        %v413 = vpop.permute.xlu0 %412
        %v423 = vunpack.c.l.b16 %v357
        %v424 = vunpack.c.l.b16 %v358
        %v425 = vunpack.c.l.b16 %v359
        %v426 = vunpack.c.l.b16 %v360
        %v427 = vunpack.c.l.b16 %v361
        %v428 = vunpack.c.l.b16 %v362
        %v429 = vunpack.c.l.b16 %v363
        %v430 = vunpack.c.l.b16 %v364
        %v431 = vpack.c.b16 %v424, %v423
        %v432 = vpack.c.b16 %v426, %v425
        %v433 = vpack.c.b16 %v428, %v427
        %v434 = vpack.c.b16 %v430, %v429
        %vm435 = vcmask 261120
        %v437 = vsel %vm435, %v431, 0
        %v440 = vsel %vm435, %v432, 0
        %v443 = vsel %vm435, %v433, 0
        %v446 = vsel %vm435, %v434, 0
        %448 = vmatpush.bf16.msra.mxu0 0
        %449 = vmatpush.bf16.msra.mxu0 0
        %450 = vmatpush.bf16.msra.mxu0 0
        %451 = vmatpush.bf16.msra.mxu0 0
        %452 = vmatpush.bf16.msra.mxu0 0
        %453 = vmatpush.bf16.msra.mxu0 0
        %454 = vmatpush.bf16.msra.mxu0 %v366
        %455 = vmatpush.bf16.msra.mxu0 %v365
        %456 = vmatmul.bf16.gmra.mxu0 %v437
        %v457 = vpop.f32.mrf.mxu0
        %v458 = vadd.f32 %v378, %v457
        %v459 = vpop.f32.mrf.mxu0
        %v460 = vadd.f32 %v383, %v459
        %461 = vmatmul.bf16.gmra.mxu0 %v440
        %v462 = vpop.f32.mrf.mxu0
        %v463 = vadd.f32 %v388, %v462
        %v464 = vpop.f32.mrf.mxu0
        %v465 = vadd.f32 %v393, %v464
        %466 = vmatmul.bf16.gmra.mxu0 %v443
        %v467 = vpop.f32.mrf.mxu0
        %v468 = vadd.f32 %v398, %v467
        %v469 = vpop.f32.mrf.mxu0
        %v470 = vadd.f32 %v403, %v469
        %471 = vmatmul.bf16.gmra.mxu0 %v446
        %v472 = vpop.f32.mrf.mxu0
        %v473 = vadd.f32 %v408, %v472
        %v474 = vpop.f32.mrf.mxu0
        %v475 = vadd.f32 %v413, %v474
        %476 = vdwg.mxu0
        %v477 = vmax.f32 %v458, 0.0
        %v478 = vmax.f32 %v460, 0.0
        %v479 = vmax.f32 %v463, 0.0
        %v480 = vmax.f32 %v465, 0.0
        %v481 = vmax.f32 %v468, 0.0
        %v482 = vmax.f32 %v470, 0.0
        %v483 = vmax.f32 %v473, 0.0
        %v484 = vmax.f32 %v475, 0.0
        %v485 = vpack.c.bf16 %v477, %v477
        %v486 = vpack.c.bf16 %v478, %v478
        %v487 = vpack.c.bf16 %v479, %v479
        %v488 = vpack.c.bf16 %v480, %v480
        %v489 = vpack.c.bf16 %v481, %v481
        %v490 = vpack.c.bf16 %v482, %v482
        %v491 = vpack.c.bf16 %v483, %v483
        %v492 = vpack.c.bf16 %v484, %v484
        %493 = vst [vmem:[%s235] sm:$0xf] %v485
        %494 = vst [vmem:[%s235 + $0x4] sm:$0xf] %v486
        %495 = vst [vmem:[%s235 + $0x8] sm:$0xf] %v487
        %496 = vst [vmem:[%s235 + $0xc] sm:$0xf] %v488
        %497 = vst [vmem:[%s235 + $0x10] sm:$0xf] %v489
        %498 = vst [vmem:[%s235 + $0x14] sm:$0xf] %v490
        %499 = vst [vmem:[%s235 + $0x18] sm:$0xf] %v491
        %500 = vst [vmem:[%s235 + $0x1c] sm:$0xf] %v492
        %s501 = sand.u32 %s150, 1
        %s502 = sand.u32 %s150, 1
        %s503 = smul.addr %s502, 32
        %s504 = scalar_lea.vmem [#allocation2], %s503
        // Predicated region
        $region41: #{re_forward.4} parent=39 // pred_check
          %p505 = pneg %p160
        $region42: #{re_forward.4} parent=39 // pred_check_branch
          %507 = sbr.rel (%p505) target = $region44
        $region43: #{re_forward.4} parent=39 // pred_region
          %s508 = smul.addr %s20, 16
          %s509 = sadd.s32 %s21, %s508
          %s510 = smul.addr %s509, 4
          %s511 = scalar_lea.vmem %s5, %s510
          // Predicated region
          $region45: #{re_forward.4} parent=43 // pred_check
            _
          $region46: #{re_forward.4} parent=43 // pred_check_branch
            %513 = sbr.rel (0) target = $region48
          $region47: #{re_forward.4} parent=43 // pred_region
            // Predicated region
            $region49: #{re_forward.4} parent=47 // pred_check
              _
            $region50: #{re_forward.4} parent=47 // pred_check_branch
              %515 = sbr.rel target = $region52
            $region51: #{re_forward.4} parent=47 // pred_region
              // Predicated region
              $region64: #{re_forward.4} parent=51 // pred_check
                _
              $region65: #{re_forward.4} parent=51 // pred_check_branch
                %545 = sbr.rel (0) target = $region67
              $region66: #{re_forward.4} parent=51 // pred_region
                loop: start=0, step=1, limit=1
                $region68: #{re_forward.4} parent=66 // loop_pre_header
                  _
                $region69: #{re_forward.4} parent=66 // loop_header
                  %s547 = sphi 0, %s551
                  %p548 = scmp.ge.s32.totalorder %s547, 1
                  %s552 = sphi %s504, %s504
                  %s553 = sphi %s511, %s511
                $region70: #{re_forward.4} parent=66 // loop_header_branch
                  %550 = sbr.rel (%p548) target = $region74
                $region71: #{re_forward.4} parent=66 // loop_body
                  _
                $region72: #{re_forward.4} parent=66 // loop_footer
                  %s551 = sadd.s32 1, %s547
                $region73: #{re_forward.4} parent=66 // loop_footer_branch
                  %546 = sbr.rel target = $region69
                $region74: #{re_forward.4} parent=66 // loop_exit
                  _
                %s555 = ssub.s32 16, 1
                loop: start=0, step=1, limit=1
                $region75: #{re_forward.4} parent=66 // loop_pre_header
                  _
                $region76: #{re_forward.4} parent=66 // loop_header
                  %s557 = sphi 0, %s561
                  %p558 = scmp.ge.s32.totalorder %s557, 1
                  %s562 = sphi %s504, %s504
                  %s563 = sphi %s511, %s511
                $region77: #{re_forward.4} parent=66 // loop_header_branch
                  %560 = sbr.rel (%p558) target = $region81
                $region78: #{re_forward.4} parent=66 // loop_body
                  %v564 = vld [vmem:[%s562] sm:%s555]
                  %565 = vst [vmem:[%s563] sm:%s555] %v564
                  %v566 = vld [vmem:[%s562 + $0x4] sm:%s555]
                  %567 = vst [vmem:[%s563 + $0x8] sm:%s555] %v566
                  %v568 = vld [vmem:[%s562 + $0x8] sm:%s555]
                  %569 = vst [vmem:[%s563 + $0x10] sm:%s555] %v568
                  %v570 = vld [vmem:[%s562 + $0xc] sm:%s555]
                  %571 = vst [vmem:[%s563 + $0x18] sm:%s555] %v570
                  %v572 = vld [vmem:[%s562 + $0x10] sm:%s555]
                  %573 = vst [vmem:[%s563 + $0x20] sm:%s555] %v572
                  %v574 = vld [vmem:[%s562 + $0x14] sm:%s555]
                  %575 = vst [vmem:[%s563 + $0x28] sm:%s555] %v574
                  %v576 = vld [vmem:[%s562 + $0x18] sm:%s555]
                  %577 = vst [vmem:[%s563 + $0x30] sm:%s555] %v576
                  %v578 = vld [vmem:[%s562 + $0x1c] sm:%s555]
                  %579 = vst [vmem:[%s563 + $0x38] sm:%s555] %v578
                $region79: #{re_forward.4} parent=66 // loop_footer
                  %s561 = sadd.s32 1, %s557
                $region80: #{re_forward.4} parent=66 // loop_footer_branch
                  %556 = sbr.rel target = $region76
                $region81: #{re_forward.4} parent=66 // loop_exit
                  _
              $region67: #{re_forward.4} parent=51 // pred_fallthru
                _
            $region52: #{re_forward.4} parent=47 // pred_fallthru
              _
            // Predicated region
            $region53: #{re_forward.4} parent=47 // pred_check
              _
            $region54: #{re_forward.4} parent=47 // pred_check_branch
              %517 = sbr.rel (0) target = $region56
            $region55: #{re_forward.4} parent=47 // pred_region
              %s519 = ssub.s32 16, 1
              loop: start=0, step=1, limit=1
              $region57: #{re_forward.4} parent=55 // loop_pre_header
                _
              $region58: #{re_forward.4} parent=55 // loop_header
                %s521 = sphi 0, %s525
                %p522 = scmp.ge.s32.totalorder %s521, 1
                %s526 = sphi %s504, %s504
                %s527 = sphi %s511, %s511
              $region59: #{re_forward.4} parent=55 // loop_header_branch
                %524 = sbr.rel (%p522) target = $region63
              $region60: #{re_forward.4} parent=55 // loop_body
                %v528 = vld [vmem:[%s526] sm:%s519]
                %529 = vst [vmem:[%s527] sm:%s519] %v528
                %v530 = vld [vmem:[%s526 + $0x4] sm:%s519]
                %531 = vst [vmem:[%s527 + $0x8] sm:%s519] %v530
                %v532 = vld [vmem:[%s526 + $0x8] sm:%s519]
                %533 = vst [vmem:[%s527 + $0x10] sm:%s519] %v532
                %v534 = vld [vmem:[%s526 + $0xc] sm:%s519]
                %535 = vst [vmem:[%s527 + $0x18] sm:%s519] %v534
                %v536 = vld [vmem:[%s526 + $0x10] sm:%s519]
                %537 = vst [vmem:[%s527 + $0x20] sm:%s519] %v536
                %v538 = vld [vmem:[%s526 + $0x14] sm:%s519]
                %539 = vst [vmem:[%s527 + $0x28] sm:%s519] %v538
                %v540 = vld [vmem:[%s526 + $0x18] sm:%s519]
                %541 = vst [vmem:[%s527 + $0x30] sm:%s519] %v540
                %v542 = vld [vmem:[%s526 + $0x1c] sm:%s519]
                %543 = vst [vmem:[%s527 + $0x38] sm:%s519] %v542
              $region61: #{re_forward.4} parent=55 // loop_footer
                %s525 = sadd.s32 1, %s521
              $region62: #{re_forward.4} parent=55 // loop_footer_branch
                %520 = sbr.rel target = $region58
              $region63: #{re_forward.4} parent=55 // loop_exit
                _
            $region56: #{re_forward.4} parent=47 // pred_fallthru
              _
          $region48: #{re_forward.4} parent=43 // pred_fallthru
            _
          %580 = vnop
        $region44: #{re_forward.4} parent=39 // pred_fallthru
          _
      $region40: #{re_forward.4} parent=5 // pred_fallthru
        _
      %p581 = scmp.le.s32.totalorder 2, %s11
      // Predicated region
      $region82: #{re_forward.4} parent=5 // pred_check
        %p582 = pneg %p581
      $region83: #{re_forward.4} parent=5 // pred_check_branch
        %584 = sbr.rel (%p582) target = $region85
      $region84: #{re_forward.4} parent=5 // pred_region
        %s585 = ssub.s32 %s11, 2
        // Predicated region
        $region86: #{re_forward.4} parent=84 // pred_check
          %p586 = pneg %p166
        $region87: #{re_forward.4} parent=84 // pred_check_branch
          %588 = sbr.rel (%p586) target = $region89
        $region88: #{re_forward.4} parent=84 // pred_region
          %s589 = sand.u32 %s151, 1
          %s590 = sand.u32 %s151, 1
          %s591 = smul.addr %s590, 32
          %s592 = scalar_lea.vmem [#allocation2], %s591
        $region89: #{re_forward.4} parent=84 // pred_fallthru
          _
      $region85: #{re_forward.4} parent=5 // pred_fallthru
        _
    $region6: #{re_forward.4} parent=1 // loop_footer
      %s15 = sadd.s32 1, %s11
    $region7: #{re_forward.4} parent=1 // loop_footer_branch
      %10 = sbr.rel target = $region3
    $region8: #{re_forward.4} parent=1 // loop_exit
      _

// kernel: re_forward.5
$region0: #{re_forward.5}
  #allocation0 [shape = 'u32[]', space=smem, size = 0x4, offset = 0x4, fixed_abs, tag = 'smem constant byte address 0x4 - core index']
  #allocation1 [shape = 'u32[72,128]{1,0:T(1,128)}', space=vmem, size = 0x9000, scoped, tag = 'internal scratch']
  %s0 = inlined_call_operand.vmem [shape: f32[2,3,15,256], index: 0, kind: input, shape index: {}]
  %s1 = inlined_call_operand.vmem [shape: bf16[2,16,64,256], index: 1, kind: input, shape index: {}]
  %s2 = inlined_call_operand.vmem [shape: f32[64,3], index: 2, kind: input, shape index: {}]
  %s3 = inlined_call_operand.vmem [shape: bf16[64,64], index: 3, kind: input, shape index: {}]
  %s4 = inlined_call_operand.vmem [shape: f32[64,1], index: 4, kind: input, shape index: {}]
  %s5 = inlined_call_operand.vmem [shape: bf16[128,64], index: 5, kind: input, shape index: {}]
  %s6 = inlined_call_operand.vmem [shape: f32[128,1], index: 6, kind: input, shape index: {}]
  %s7 = inlined_call_operand.vmem [shape: bf16[64,128], index: 7, kind: input, shape index: {}]
  %s8 = inlined_call_operand.vmem [shape: f32[64,1], index: 8, kind: input, shape index: {}]
  %s9 = inlined_call_operand.vmem [shape: bf16[128,128], index: 9, kind: input, shape index: {}]
  %s10 = inlined_call_operand.vmem [shape: f32[128,1], index: 10, kind: input, shape index: {}]
  %s11 = inlined_call_operand.vmem [shape: bf16[6,128], index: 11, kind: input, shape index: {}]
  %s12 = inlined_call_operand.vmem [shape: f32[6,1], index: 12, kind: input, shape index: {}]
  %s13 = inlined_call_operand.vmem [shape: f32[2,6,256], index: 13, kind: output, shape index: {}]
  %s14 = sld [smem:[#allocation0]]
  $region164: #{re_forward.5} parent=0
    _
  %s16 = ssub.s32 1, %s14
  %s17 = scalar_select 0, %s16, %s14
  $region1: #{re_forward.5} parent=0
    #allocation2 [shape = 'u8[49152]{0}', space=vmem, size = 0xc000, scoped, tag = 'input window, operand 0']
    #allocation3 [shape = 'u8[524288]{0}', space=vmem, size = 0x80000, scoped, tag = 'input window, operand 1']
    loop: start=0, step=1, limit=6
    $region2: #{re_forward.5} parent=1 // loop_pre_header
      _
    $region3: #{re_forward.5} parent=1 // loop_header
      %s19 = sphi 0, %s23
      %p20 = scmp.ge.s32.totalorder %s19, 6
      %s26 = sphi 0, %s38
      %s27 = sphi 0, %s34
      %s28 = sphi 0, %s26
      %s29 = sphi 0, %s27
      %s30 = sphi 0, %s28
      %s31 = sphi 0, %s29
      %s43 = sphi 0, %s45
      %s46 = sphi 0, %s43
      %s47 = sphi 0, %s46
      %s63 = sphi 0, %s47
      %s71 = sphi 0, %s73
      %s74 = sphi 0, %s71
      %s75 = sphi 0, %s74
      %s91 = sphi 0, %s75
      %s95 = sphi 0, %s95
      %s97 = sphi 0, %s95
      %s98 = sphi 0, %s97
      %s112 = sphi 0, %s98
      %s116 = sphi 0, %s116
      %s118 = sphi 0, %s116
      %s119 = sphi 0, %s118
      %s133 = sphi 0, %s119
      %s137 = sphi 0, %s137
      %s139 = sphi 0, %s137
      %s140 = sphi 0, %s139
      %s154 = sphi 0, %s140
      %s158 = sphi 0, %s158
      %s160 = sphi 0, %s158
      %s161 = sphi 0, %s160
      %s175 = sphi 0, %s161
      %s179 = sphi 0, %s179
      %s181 = sphi 0, %s179
      %s182 = sphi 0, %s181
      %s196 = sphi 0, %s182
      %s200 = sphi 0, %s200
      %s202 = sphi 0, %s200
      %s203 = sphi 0, %s202
      %s217 = sphi 0, %s203
      %s221 = sphi 0, %s221
      %s223 = sphi 0, %s221
      %s224 = sphi 0, %s223
      %s238 = sphi 0, %s224
      %s242 = sphi 0, %s242
      %s244 = sphi 0, %s242
      %s245 = sphi 0, %s244
      %s259 = sphi 0, %s245
      %s263 = sphi 0, %s263
      %s265 = sphi 0, %s263
      %s266 = sphi 0, %s265
      %s280 = sphi 0, %s266
      %s284 = sphi 0, %s284
      %s286 = sphi 0, %s284
      %s287 = sphi 0, %s286
      %s301 = sphi 0, %s287
      %s305 = sphi 0, %s305
      %s307 = sphi 0, %s305
      %s308 = sphi 0, %s307
      %s322 = sphi 0, %s308
      %s330 = sphi 0, %s332
      %s333 = sphi 0, %s330
      %s334 = sphi 0, %s333
      %s350 = sphi 0, %s334
    $region4: #{re_forward.5} parent=1 // loop_header_branch
      %22 = sbr.rel (%p20) target = $region8
    $region5: #{re_forward.5} parent=1 // loop_body
      %s24 = ssub.s32 %s19, 1
      %s25 = ssub.s32 %s19, 2
      %s32 = sadd.s32 1, %s27
      %p33 = scmp.ge.s32.totalorder %s32, 2
      %s34 = scalar_select %p33, 0, %s32
      %s35 = sadd.s32 1, %s26
      %s36 = scalar_select %p33, %s35, %s26
      %p37 = scmp.ge.s32.totalorder %s36, 2
      %s38 = scalar_select %p37, 0, %s36
      %s39 = ssub.s32 %s26, %s38
      %s40 = ssub.s32 %s27, %s34
      %s41 = sor.u32 %s39, %s40
      %p42 = scmp.eq.s32.totalorder %s41, 0
      %s44 = sadd.s32 %s43, 1
      %s45 = scalar_select %p42, %s43, %s44
      %p48 = pneg %p42
      %p49 = scmp.eq.s32.totalorder %s19, 3
      %p50 = por %p48, %p49
      %p51 = scmp.ne.s32.totalorder %s43, %s46
      %p52 = scmp.eq.s32.totalorder %s19, 0
      %p53 = por %p51, %p52
      %p54 = scmp.ne.s32.totalorder %s43, %s46
      %p55 = scmp.eq.s32.totalorder %s24, 3
      %p56 = por %p54, %p55
      %p57 = scmp.ne.s32.totalorder %s46, %s47
      %p58 = scmp.eq.s32.totalorder %s24, 0
      %p59 = por %p57, %p58
      %p60 = scmp.ne.s32.totalorder %s46, %s47
      %p61 = scmp.eq.s32.totalorder %s25, 3
      %p62 = por %p60, %p61
      %p64 = scmp.ne.s32.totalorder %s47, %s63
      %p65 = scmp.eq.s32.totalorder %s25, 0
      %p66 = por %p64, %p65
      %s67 = ssub.s32 %s26, %s38
      %s68 = ssub.s32 %s27, %s34
      %s69 = sor.u32 %s67, %s68
      %p70 = scmp.eq.s32.totalorder %s69, 0
      %s72 = sadd.s32 %s71, 1
      %s73 = scalar_select %p70, %s71, %s72
      %p76 = pneg %p70
      %p77 = scmp.eq.s32.totalorder %s19, 3
      %p78 = por %p76, %p77
      %p79 = scmp.ne.s32.totalorder %s71, %s74
      %p80 = scmp.eq.s32.totalorder %s19, 0
      %p81 = por %p79, %p80
      %p82 = scmp.ne.s32.totalorder %s71, %s74
      %p83 = scmp.eq.s32.totalorder %s24, 3
      %p84 = por %p82, %p83
      %p85 = scmp.ne.s32.totalorder %s74, %s75
      %p86 = scmp.eq.s32.totalorder %s24, 0
      %p87 = por %p85, %p86
      %p88 = scmp.ne.s32.totalorder %s74, %s75
      %p89 = scmp.eq.s32.totalorder %s25, 3
      %p90 = por %p88, %p89
      %p92 = scmp.ne.s32.totalorder %s75, %s91
      %p93 = scmp.eq.s32.totalorder %s25, 0
      %p94 = por %p92, %p93
      %s96 = sadd.s32 %s95, 1
      %p99 = scmp.eq.s32.totalorder %s19, 3
      %p100 = scmp.ne.s32.totalorder %s95, %s97
      %p101 = scmp.eq.s32.totalorder %s19, 0
      %p102 = por %p100, %p101
      %p103 = scmp.ne.s32.totalorder %s95, %s97
      %p104 = scmp.eq.s32.totalorder %s24, 3
      %p105 = por %p103, %p104
      %p106 = scmp.ne.s32.totalorder %s97, %s98
      %p107 = scmp.eq.s32.totalorder %s24, 0
      %p108 = por %p106, %p107
      %p109 = scmp.ne.s32.totalorder %s97, %s98
      %p110 = scmp.eq.s32.totalorder %s25, 3
      %p111 = por %p109, %p110
      %p113 = scmp.ne.s32.totalorder %s98, %s112
      %p114 = scmp.eq.s32.totalorder %s25, 0
      %p115 = por %p113, %p114
      %s117 = sadd.s32 %s116, 1
      %p120 = scmp.eq.s32.totalorder %s19, 3
      %p121 = scmp.ne.s32.totalorder %s116, %s118
      %p122 = scmp.eq.s32.totalorder %s19, 0
      %p123 = por %p121, %p122
      %p124 = scmp.ne.s32.totalorder %s116, %s118
      %p125 = scmp.eq.s32.totalorder %s24, 3
      %p126 = por %p124, %p125
      %p127 = scmp.ne.s32.totalorder %s118, %s119
      %p128 = scmp.eq.s32.totalorder %s24, 0
      %p129 = por %p127, %p128
      %p130 = scmp.ne.s32.totalorder %s118, %s119
      %p131 = scmp.eq.s32.totalorder %s25, 3
      %p132 = por %p130, %p131
      %p134 = scmp.ne.s32.totalorder %s119, %s133
      %p135 = scmp.eq.s32.totalorder %s25, 0
      %p136 = por %p134, %p135
      %s138 = sadd.s32 %s137, 1
      %p141 = scmp.eq.s32.totalorder %s19, 3
      %p142 = scmp.ne.s32.totalorder %s137, %s139
      %p143 = scmp.eq.s32.totalorder %s19, 0
      %p144 = por %p142, %p143
      %p145 = scmp.ne.s32.totalorder %s137, %s139
      %p146 = scmp.eq.s32.totalorder %s24, 3
      %p147 = por %p145, %p146
      %p148 = scmp.ne.s32.totalorder %s139, %s140
      %p149 = scmp.eq.s32.totalorder %s24, 0
      %p150 = por %p148, %p149
      %p151 = scmp.ne.s32.totalorder %s139, %s140
      %p152 = scmp.eq.s32.totalorder %s25, 3
      %p153 = por %p151, %p152
      %p155 = scmp.ne.s32.totalorder %s140, %s154
      %p156 = scmp.eq.s32.totalorder %s25, 0
      %p157 = por %p155, %p156
      %s159 = sadd.s32 %s158, 1
      %p162 = scmp.eq.s32.totalorder %s19, 3
      %p163 = scmp.ne.s32.totalorder %s158, %s160
      %p164 = scmp.eq.s32.totalorder %s19, 0
      %p165 = por %p163, %p164
      %p166 = scmp.ne.s32.totalorder %s158, %s160
      %p167 = scmp.eq.s32.totalorder %s24, 3
      %p168 = por %p166, %p167
      %p169 = scmp.ne.s32.totalorder %s160, %s161
      %p170 = scmp.eq.s32.totalorder %s24, 0
      %p171 = por %p169, %p170
      %p172 = scmp.ne.s32.totalorder %s160, %s161
      %p173 = scmp.eq.s32.totalorder %s25, 3
      %p174 = por %p172, %p173
      %p176 = scmp.ne.s32.totalorder %s161, %s175
      %p177 = scmp.eq.s32.totalorder %s25, 0
      %p178 = por %p176, %p177
      %s180 = sadd.s32 %s179, 1
      %p183 = scmp.eq.s32.totalorder %s19, 3
      %p184 = scmp.ne.s32.totalorder %s179, %s181
      %p185 = scmp.eq.s32.totalorder %s19, 0
      %p186 = por %p184, %p185
      %p187 = scmp.ne.s32.totalorder %s179, %s181
      %p188 = scmp.eq.s32.totalorder %s24, 3
      %p189 = por %p187, %p188
      %p190 = scmp.ne.s32.totalorder %s181, %s182
      %p191 = scmp.eq.s32.totalorder %s24, 0
      %p192 = por %p190, %p191
      %p193 = scmp.ne.s32.totalorder %s181, %s182
      %p194 = scmp.eq.s32.totalorder %s25, 3
      %p195 = por %p193, %p194
      %p197 = scmp.ne.s32.totalorder %s182, %s196
      %p198 = scmp.eq.s32.totalorder %s25, 0
      %p199 = por %p197, %p198
      %s201 = sadd.s32 %s200, 1
      %p204 = scmp.eq.s32.totalorder %s19, 3
      %p205 = scmp.ne.s32.totalorder %s200, %s202
      %p206 = scmp.eq.s32.totalorder %s19, 0
      %p207 = por %p205, %p206
      %p208 = scmp.ne.s32.totalorder %s200, %s202
      %p209 = scmp.eq.s32.totalorder %s24, 3
      %p210 = por %p208, %p209
      %p211 = scmp.ne.s32.totalorder %s202, %s203
      %p212 = scmp.eq.s32.totalorder %s24, 0
      %p213 = por %p211, %p212
      %p214 = scmp.ne.s32.totalorder %s202, %s203
      %p215 = scmp.eq.s32.totalorder %s25, 3
      %p216 = por %p214, %p215
      %p218 = scmp.ne.s32.totalorder %s203, %s217
      %p219 = scmp.eq.s32.totalorder %s25, 0
      %p220 = por %p218, %p219
      %s222 = sadd.s32 %s221, 1
      %p225 = scmp.eq.s32.totalorder %s19, 3
      %p226 = scmp.ne.s32.totalorder %s221, %s223
      %p227 = scmp.eq.s32.totalorder %s19, 0
      %p228 = por %p226, %p227
      %p229 = scmp.ne.s32.totalorder %s221, %s223
      %p230 = scmp.eq.s32.totalorder %s24, 3
      %p231 = por %p229, %p230
      %p232 = scmp.ne.s32.totalorder %s223, %s224
      %p233 = scmp.eq.s32.totalorder %s24, 0
      %p234 = por %p232, %p233
      %p235 = scmp.ne.s32.totalorder %s223, %s224
      %p236 = scmp.eq.s32.totalorder %s25, 3
      %p237 = por %p235, %p236
      %p239 = scmp.ne.s32.totalorder %s224, %s238
      %p240 = scmp.eq.s32.totalorder %s25, 0
      %p241 = por %p239, %p240
      %s243 = sadd.s32 %s242, 1
      %p246 = scmp.eq.s32.totalorder %s19, 3
      %p247 = scmp.ne.s32.totalorder %s242, %s244
      %p248 = scmp.eq.s32.totalorder %s19, 0
      %p249 = por %p247, %p248
      %p250 = scmp.ne.s32.totalorder %s242, %s244
      %p251 = scmp.eq.s32.totalorder %s24, 3
      %p252 = por %p250, %p251
      %p253 = scmp.ne.s32.totalorder %s244, %s245
      %p254 = scmp.eq.s32.totalorder %s24, 0
      %p255 = por %p253, %p254
      %p256 = scmp.ne.s32.totalorder %s244, %s245
      %p257 = scmp.eq.s32.totalorder %s25, 3
      %p258 = por %p256, %p257
      %p260 = scmp.ne.s32.totalorder %s245, %s259
      %p261 = scmp.eq.s32.totalorder %s25, 0
      %p262 = por %p260, %p261
      %s264 = sadd.s32 %s263, 1
      %p267 = scmp.eq.s32.totalorder %s19, 3
      %p268 = scmp.ne.s32.totalorder %s263, %s265
      %p269 = scmp.eq.s32.totalorder %s19, 0
      %p270 = por %p268, %p269
      %p271 = scmp.ne.s32.totalorder %s263, %s265
      %p272 = scmp.eq.s32.totalorder %s24, 3
      %p273 = por %p271, %p272
      %p274 = scmp.ne.s32.totalorder %s265, %s266
      %p275 = scmp.eq.s32.totalorder %s24, 0
      %p276 = por %p274, %p275
      %p277 = scmp.ne.s32.totalorder %s265, %s266
      %p278 = scmp.eq.s32.totalorder %s25, 3
      %p279 = por %p277, %p278
      %p281 = scmp.ne.s32.totalorder %s266, %s280
      %p282 = scmp.eq.s32.totalorder %s25, 0
      %p283 = por %p281, %p282
      %s285 = sadd.s32 %s284, 1
      %p288 = scmp.eq.s32.totalorder %s19, 3
      %p289 = scmp.ne.s32.totalorder %s284, %s286
      %p290 = scmp.eq.s32.totalorder %s19, 0
      %p291 = por %p289, %p290
      %p292 = scmp.ne.s32.totalorder %s284, %s286
      %p293 = scmp.eq.s32.totalorder %s24, 3
      %p294 = por %p292, %p293
      %p295 = scmp.ne.s32.totalorder %s286, %s287
      %p296 = scmp.eq.s32.totalorder %s24, 0
      %p297 = por %p295, %p296
      %p298 = scmp.ne.s32.totalorder %s286, %s287
      %p299 = scmp.eq.s32.totalorder %s25, 3
      %p300 = por %p298, %p299
      %p302 = scmp.ne.s32.totalorder %s287, %s301
      %p303 = scmp.eq.s32.totalorder %s25, 0
      %p304 = por %p302, %p303
      %s306 = sadd.s32 %s305, 1
      %p309 = scmp.eq.s32.totalorder %s19, 3
      %p310 = scmp.ne.s32.totalorder %s305, %s307
      %p311 = scmp.eq.s32.totalorder %s19, 0
      %p312 = por %p310, %p311
      %p313 = scmp.ne.s32.totalorder %s305, %s307
      %p314 = scmp.eq.s32.totalorder %s24, 3
      %p315 = por %p313, %p314
      %p316 = scmp.ne.s32.totalorder %s307, %s308
      %p317 = scmp.eq.s32.totalorder %s24, 0
      %p318 = por %p316, %p317
      %p319 = scmp.ne.s32.totalorder %s307, %s308
      %p320 = scmp.eq.s32.totalorder %s25, 3
      %p321 = por %p319, %p320
      %p323 = scmp.ne.s32.totalorder %s308, %s322
      %p324 = scmp.eq.s32.totalorder %s25, 0
      %p325 = por %p323, %p324
      %s326 = ssub.s32 %s26, %s38
      %s327 = ssub.s32 %s27, %s34
      %s328 = sor.u32 %s326, %s327
      %p329 = scmp.eq.s32.totalorder %s328, 0
      %s331 = sadd.s32 %s330, 1
      %s332 = scalar_select %p329, %s330, %s331
      %p335 = pneg %p329
      %p336 = scmp.eq.s32.totalorder %s19, 3
      %p337 = por %p335, %p336
      %p338 = scmp.ne.s32.totalorder %s330, %s333
      %p339 = scmp.eq.s32.totalorder %s19, 0
      %p340 = por %p338, %p339
      %p341 = scmp.ne.s32.totalorder %s330, %s333
      %p342 = scmp.eq.s32.totalorder %s24, 3
      %p343 = por %p341, %p342
      %p344 = scmp.ne.s32.totalorder %s333, %s334
      %p345 = scmp.eq.s32.totalorder %s24, 0
      %p346 = por %p344, %p345
      %p347 = scmp.ne.s32.totalorder %s333, %s334
      %p348 = scmp.eq.s32.totalorder %s25, 3
      %p349 = por %p347, %p348
      %p351 = scmp.ne.s32.totalorder %s334, %s350
      %p352 = scmp.eq.s32.totalorder %s25, 0
      %p353 = por %p351, %p352
      %p354 = scmp.le.s32.totalorder 1, %s19
      %p355 = scmp.lt.s32.totalorder %s19, 5
      %p356 = pnand %p354, %p355
      %p357 = pneg %p356
      // Predicated region
      $region9: #{re_forward.5} parent=5 // pred_check
        _
      $region10: #{re_forward.5} parent=5 // pred_check_branch
        %359 = sbr.rel (%p356) target = $region12
      $region11: #{re_forward.5} parent=5 // pred_region
        %s360 = ssub.s32 %s19, 1
        // Predicated region
        $region13: #{re_forward.5} parent=11 // pred_check
          %p361 = pneg %p108
        $region14: #{re_forward.5} parent=11 // pred_check_branch
          %363 = sbr.rel (%p361) target = $region16
        $region15: #{re_forward.5} parent=11 // pred_region
          _
        $region16: #{re_forward.5} parent=11 // pred_fallthru
          _
        // Predicated region
        $region17: #{re_forward.5} parent=11 // pred_check
          %p364 = pneg %p129
        $region18: #{re_forward.5} parent=11 // pred_check_branch
          %366 = sbr.rel (%p364) target = $region20
        $region19: #{re_forward.5} parent=11 // pred_region
          _
        $region20: #{re_forward.5} parent=11 // pred_fallthru
          _
        // Predicated region
        $region21: #{re_forward.5} parent=11 // pred_check
          %p367 = pneg %p150
        $region22: #{re_forward.5} parent=11 // pred_check_branch
          %369 = sbr.rel (%p367) target = $region24
        $region23: #{re_forward.5} parent=11 // pred_region
          _
        $region24: #{re_forward.5} parent=11 // pred_fallthru
          _
        // Predicated region
        $region25: #{re_forward.5} parent=11 // pred_check
          %p370 = pneg %p171
        $region26: #{re_forward.5} parent=11 // pred_check_branch
          %372 = sbr.rel (%p370) target = $region28
        $region27: #{re_forward.5} parent=11 // pred_region
          _
        $region28: #{re_forward.5} parent=11 // pred_fallthru
          _
        // Predicated region
        $region29: #{re_forward.5} parent=11 // pred_check
          %p373 = pneg %p192
        $region30: #{re_forward.5} parent=11 // pred_check_branch
          %375 = sbr.rel (%p373) target = $region32
        $region31: #{re_forward.5} parent=11 // pred_region
          _
        $region32: #{re_forward.5} parent=11 // pred_fallthru
          _
        // Predicated region
        $region33: #{re_forward.5} parent=11 // pred_check
          %p376 = pneg %p213
        $region34: #{re_forward.5} parent=11 // pred_check_branch
          %378 = sbr.rel (%p376) target = $region36
        $region35: #{re_forward.5} parent=11 // pred_region
          _
        $region36: #{re_forward.5} parent=11 // pred_fallthru
          _
        // Predicated region
        $region37: #{re_forward.5} parent=11 // pred_check
          %p379 = pneg %p234
        $region38: #{re_forward.5} parent=11 // pred_check_branch
          %381 = sbr.rel (%p379) target = $region40
        $region39: #{re_forward.5} parent=11 // pred_region
          _
        $region40: #{re_forward.5} parent=11 // pred_fallthru
          _
        // Predicated region
        $region41: #{re_forward.5} parent=11 // pred_check
          %p382 = pneg %p255
        $region42: #{re_forward.5} parent=11 // pred_check_branch
          %384 = sbr.rel (%p382) target = $region44
        $region43: #{re_forward.5} parent=11 // pred_region
          _
        $region44: #{re_forward.5} parent=11 // pred_fallthru
          _
        // Predicated region
        $region45: #{re_forward.5} parent=11 // pred_check
          %p385 = pneg %p276
        $region46: #{re_forward.5} parent=11 // pred_check_branch
          %387 = sbr.rel (%p385) target = $region48
        $region47: #{re_forward.5} parent=11 // pred_region
          _
        $region48: #{re_forward.5} parent=11 // pred_fallthru
          _
        // Predicated region
        $region49: #{re_forward.5} parent=11 // pred_check
          %p388 = pneg %p297
        $region50: #{re_forward.5} parent=11 // pred_check_branch
          %390 = sbr.rel (%p388) target = $region52
        $region51: #{re_forward.5} parent=11 // pred_region
          _
        $region52: #{re_forward.5} parent=11 // pred_fallthru
          _
        // Predicated region
        $region53: #{re_forward.5} parent=11 // pred_check
          %p391 = pneg %p318
        $region54: #{re_forward.5} parent=11 // pred_check_branch
          %393 = sbr.rel (%p391) target = $region56
        $region55: #{re_forward.5} parent=11 // pred_region
          _
        $region56: #{re_forward.5} parent=11 // pred_fallthru
          _
      $region12: #{re_forward.5} parent=5 // pred_fallthru
        _
      %p394 = scmp.lt.s32.totalorder %s19, 4
      // Predicated region
      $region57: #{re_forward.5} parent=5 // pred_check
        %p395 = pneg %p394
      $region58: #{re_forward.5} parent=5 // pred_check_branch
        %397 = sbr.rel (%p395) target = $region60
      $region59: #{re_forward.5} parent=5 // pred_region
        // Predicated region
        $region61: #{re_forward.5} parent=59 // pred_check
          %p398 = pneg %p53
        $region62: #{re_forward.5} parent=59 // pred_check_branch
          %400 = sbr.rel (%p398) target = $region64
        $region63: #{re_forward.5} parent=59 // pred_region
          %s401 = sand.u32 %s43, 1
          %s402 = sand.u32 %s43, 1
          %s403 = smul.addr %s402, 48
          %s404 = scalar_lea.vmem [#allocation2], %s403
          %s405 = smul.addr %s26, 12
          %s406 = sadd.s32 %s27, %s405
          %s407 = smul.addr %s406, 8
          %s408 = scalar_lea.vmem %s0, %s407
          // Predicated region
          $region65: #{re_forward.5} parent=63 // pred_check
            _
          $region66: #{re_forward.5} parent=63 // pred_check_branch
            %410 = sbr.rel (0) target = $region68
          $region67: #{re_forward.5} parent=63 // pred_region
            // Predicated region
            $region69: #{re_forward.5} parent=67 // pred_check
              _
            $region70: #{re_forward.5} parent=67 // pred_check_branch
              %412 = sbr.rel (0) target = $region72
            $region71: #{re_forward.5} parent=67 // pred_region
              // Predicated region
              $region84: #{re_forward.5} parent=71 // pred_check
                _
              $region85: #{re_forward.5} parent=71 // pred_check_branch
                %438 = sbr.rel (0) target = $region87
              $region86: #{re_forward.5} parent=71 // pred_region
                loop: start=0, step=1, limit=1
                $region88: #{re_forward.5} parent=86 // loop_pre_header
                  _
                $region89: #{re_forward.5} parent=86 // loop_header
                  %s440 = sphi 0, %s444
                  %p441 = scmp.ge.s32.totalorder %s440, 1
                  %s445 = sphi %s408, %s408
                  %s446 = sphi %s404, %s404
                $region90: #{re_forward.5} parent=86 // loop_header_branch
                  %443 = sbr.rel (%p441) target = $region94
                $region91: #{re_forward.5} parent=86 // loop_body
                  %v447 = vld [vmem:[%s445] sm:$0xff]
                  %448 = vst [vmem:[%s446] sm:$0xff] %v447
                  %v449 = vld [vmem:[%s445 + $0x10] sm:$0xff]
                  %450 = vst [vmem:[%s446 + $0x8] sm:$0xff] %v449
                  %v451 = vld [vmem:[%s445 + $0x20] sm:$0xff]
                  %452 = vst [vmem:[%s446 + $0x10] sm:$0xff] %v451
                  %v453 = vld [vmem:[%s445 + $0x30] sm:$0xff]
                  %454 = vst [vmem:[%s446 + $0x18] sm:$0xff] %v453
                  %v455 = vld [vmem:[%s445 + $0x40] sm:$0xff]
                  %456 = vst [vmem:[%s446 + $0x20] sm:$0xff] %v455
                  %v457 = vld [vmem:[%s445 + $0x50] sm:$0xff]
                  %458 = vst [vmem:[%s446 + $0x28] sm:$0xff] %v457
                $region92: #{re_forward.5} parent=86 // loop_footer
                  %s444 = sadd.s32 1, %s440
                $region93: #{re_forward.5} parent=86 // loop_footer_branch
                  %439 = sbr.rel target = $region89
                $region94: #{re_forward.5} parent=86 // loop_exit
                  _
              $region87: #{re_forward.5} parent=71 // pred_fallthru
                _
              // Predicated region
              $region95: #{re_forward.5} parent=71 // pred_check
                _
              $region96: #{re_forward.5} parent=71 // pred_check_branch
                %460 = sbr.rel target = $region98
              $region97: #{re_forward.5} parent=71 // pred_region
                _
              $region98: #{re_forward.5} parent=71 // pred_fallthru
                _
            $region72: #{re_forward.5} parent=67 // pred_fallthru
              _
            // Predicated region
            $region73: #{re_forward.5} parent=67 // pred_check
              _
            $region74: #{re_forward.5} parent=67 // pred_check_branch
              %414 = sbr.rel target = $region76
            $region75: #{re_forward.5} parent=67 // pred_region
              %s416 = ssub.s32 256, 1
              loop: start=0, step=1, limit=1
              $region77: #{re_forward.5} parent=75 // loop_pre_header
                _
              $region78: #{re_forward.5} parent=75 // loop_header
                %s418 = sphi 0, %s422
                %p419 = scmp.ge.s32.totalorder %s418, 1
                %s423 = sphi %s408, %s408
                %s424 = sphi %s404, %s404
              $region79: #{re_forward.5} parent=75 // loop_header_branch
                %421 = sbr.rel (%p419) target = $region83
              $region80: #{re_forward.5} parent=75 // loop_body
                %v425 = vld [vmem:[%s423] sm:%s416]
                %426 = vst [vmem:[%s424] sm:%s416] %v425
                %v427 = vld [vmem:[%s423 + $0x10] sm:%s416]
                %428 = vst [vmem:[%s424 + $0x8] sm:%s416] %v427
                %v429 = vld [vmem:[%s423 + $0x20] sm:%s416]
                %430 = vst [vmem:[%s424 + $0x10] sm:%s416] %v429
                %v431 = vld [vmem:[%s423 + $0x30] sm:%s416]
                %432 = vst [vmem:[%s424 + $0x18] sm:%s416] %v431
                %v433 = vld [vmem:[%s423 + $0x40] sm:%s416]
                %434 = vst [vmem:[%s424 + $0x20] sm:%s416] %v433
                %v435 = vld [vmem:[%s423 + $0x50] sm:%s416]
                %436 = vst [vmem:[%s424 + $0x28] sm:%s416] %v435
              $region81: #{re_forward.5} parent=75 // loop_footer
                %s422 = sadd.s32 1, %s418
              $region82: #{re_forward.5} parent=75 // loop_footer_branch
                %417 = sbr.rel target = $region78
              $region83: #{re_forward.5} parent=75 // loop_exit
                _
            $region76: #{re_forward.5} parent=67 // pred_fallthru
              _
          $region68: #{re_forward.5} parent=63 // pred_fallthru
            _
          %461 = vnop
        $region64: #{re_forward.5} parent=59 // pred_fallthru
          _
        // Predicated region
        $region99: #{re_forward.5} parent=59 // pred_check
          %p462 = pneg %p81
        $region100: #{re_forward.5} parent=59 // pred_check_branch
          %464 = sbr.rel (%p462) target = $region102
        $region101: #{re_forward.5} parent=59 // pred_region
          %s465 = sand.u32 %s71, 1
          %s466 = sand.u32 %s71, 1
          %s467 = smul.addr %s466, 512
          %s468 = scalar_lea.vmem [#allocation3], %s467
          %s469 = smul.addr %s26, 256
          %s470 = sadd.s32 %s27, %s469
          %s471 = smul.addr %s470, 4
          %s472 = scalar_lea.vmem %s1, %s471
          // Predicated region
          $region103: #{re_forward.5} parent=101 // pred_check
            _
          $region104: #{re_forward.5} parent=101 // pred_check_branch
            %474 = sbr.rel (0) target = $region106
          $region105: #{re_forward.5} parent=101 // pred_region
            // Predicated region
            $region107: #{re_forward.5} parent=105 // pred_check
              _
            $region108: #{re_forward.5} parent=105 // pred_check_branch
              %476 = sbr.rel target = $region110
            $region109: #{re_forward.5} parent=105 // pred_region
              // Predicated region
              $region122: #{re_forward.5} parent=109 // pred_check
                _
              $region123: #{re_forward.5} parent=109 // pred_check_branch
                %746 = sbr.rel (0) target = $region125
              $region124: #{re_forward.5} parent=109 // pred_region
                loop: start=0, step=1, limit=1
                $region126: #{re_forward.5} parent=124 // loop_pre_header
                  _
                $region127: #{re_forward.5} parent=124 // loop_header
                  %s748 = sphi 0, %s752
                  %p749 = scmp.ge.s32.totalorder %s748, 1
                  %s753 = sphi %s472, %s472
                  %s754 = sphi %s468, %s468
                $region128: #{re_forward.5} parent=124 // loop_header_branch
                  %751 = sbr.rel (%p749) target = $region132
                $region129: #{re_forward.5} parent=124 // loop_body
                  _
                $region130: #{re_forward.5} parent=124 // loop_footer
                  %s752 = sadd.s32 1, %s748
                $region131: #{re_forward.5} parent=124 // loop_footer_branch
                  %747 = sbr.rel target = $region127
                $region132: #{re_forward.5} parent=124 // loop_exit
                  _
                %s756 = ssub.s32 16, 1
                loop: start=0, step=1, limit=1
                $region133: #{re_forward.5} parent=124 // loop_pre_header
                  _
                $region134: #{re_forward.5} parent=124 // loop_header
                  %s758 = sphi 0, %s762
                  %p759 = scmp.ge.s32.totalorder %s758, 1
                  %s763 = sphi %s472, %s472
                  %s764 = sphi %s468, %s468
                $region135: #{re_forward.5} parent=124 // loop_header_branch
                  %761 = sbr.rel (%p759) target = $region139
                $region136: #{re_forward.5} parent=124 // loop_body
                  %v765 = vld [vmem:[%s763] sm:%s756]
                  %766 = vst [vmem:[%s764] sm:%s756] %v765
                  %v767 = vld [vmem:[%s763 + $0x8] sm:%s756]
                  %768 = vst [vmem:[%s764 + $0x4] sm:%s756] %v767
                  %v769 = vld [vmem:[%s763 + $0x10] sm:%s756]
                  %770 = vst [vmem:[%s764 + $0x8] sm:%s756] %v769
                  %v771 = vld [vmem:[%s763 + $0x18] sm:%s756]
                  %772 = vst [vmem:[%s764 + $0xc] sm:%s756] %v771
                  %v773 = vld [vmem:[%s763 + $0x20] sm:%s756]
                  %774 = vst [vmem:[%s764 + $0x10] sm:%s756] %v773
                  %v775 = vld [vmem:[%s763 + $0x28] sm:%s756]
                  %776 = vst [vmem:[%s764 + $0x14] sm:%s756] %v775
                  %v777 = vld [vmem:[%s763 + $0x30] sm:%s756]
                  %778 = vst [vmem:[%s764 + $0x18] sm:%s756] %v777
                  %v779 = vld [vmem:[%s763 + $0x38] sm:%s756]
                  %780 = vst [vmem:[%s764 + $0x1c] sm:%s756] %v779
                  %v781 = vld [vmem:[%s763 + $0x40] sm:%s756]
                  %782 = vst [vmem:[%s764 + $0x20] sm:%s756] %v781
                  %v783 = vld [vmem:[%s763 + $0x48] sm:%s756]
                  %784 = vst [vmem:[%s764 + $0x24] sm:%s756] %v783
                  %v785 = vld [vmem:[%s763 + $0x50] sm:%s756]
                  %786 = vst [vmem:[%s764 + $0x28] sm:%s756] %v785
                  %v787 = vld [vmem:[%s763 + $0x58] sm:%s756]
                  %788 = vst [vmem:[%s764 + $0x2c] sm:%s756] %v787
                  %v789 = vld [vmem:[%s763 + $0x60] sm:%s756]
                  %790 = vst [vmem:[%s764 + $0x30] sm:%s756] %v789
                  %v791 = vld [vmem:[%s763 + $0x68] sm:%s756]
                  %792 = vst [vmem:[%s764 + $0x34] sm:%s756] %v791
                  %v793 = vld [vmem:[%s763 + $0x70] sm:%s756]
                  %794 = vst [vmem:[%s764 + $0x38] sm:%s756] %v793
                  %v795 = vld [vmem:[%s763 + $0x78] sm:%s756]
                  %796 = vst [vmem:[%s764 + $0x3c] sm:%s756] %v795
                  %v797 = vld [vmem:[%s763 + $0x80] sm:%s756]
                  %798 = vst [vmem:[%s764 + $0x40] sm:%s756] %v797
                  %v799 = vld [vmem:[%s763 + $0x88] sm:%s756]
                  %800 = vst [vmem:[%s764 + $0x44] sm:%s756] %v799
                  %v801 = vld [vmem:[%s763 + $0x90] sm:%s756]
                  %802 = vst [vmem:[%s764 + $0x48] sm:%s756] %v801
                  %v803 = vld [vmem:[%s763 + $0x98] sm:%s756]
                  %804 = vst [vmem:[%s764 + $0x4c] sm:%s756] %v803
                  %v805 = vld [vmem:[%s763 + $0xa0] sm:%s756]
                  %806 = vst [vmem:[%s764 + $0x50] sm:%s756] %v805
                  %v807 = vld [vmem:[%s763 + $0xa8] sm:%s756]
                  %808 = vst [vmem:[%s764 + $0x54] sm:%s756] %v807
                  %v809 = vld [vmem:[%s763 + $0xb0] sm:%s756]
                  %810 = vst [vmem:[%s764 + $0x58] sm:%s756] %v809
                  %v811 = vld [vmem:[%s763 + $0xb8] sm:%s756]
                  %812 = vst [vmem:[%s764 + $0x5c] sm:%s756] %v811
                  %v813 = vld [vmem:[%s763 + $0xc0] sm:%s756]
                  %814 = vst [vmem:[%s764 + $0x60] sm:%s756] %v813
                  %v815 = vld [vmem:[%s763 + $0xc8] sm:%s756]
                  %816 = vst [vmem:[%s764 + $0x64] sm:%s756] %v815
                  %v817 = vld [vmem:[%s763 + $0xd0] sm:%s756]
                  %818 = vst [vmem:[%s764 + $0x68] sm:%s756] %v817
                  %v819 = vld [vmem:[%s763 + $0xd8] sm:%s756]
                  %820 = vst [vmem:[%s764 + $0x6c] sm:%s756] %v819
                  %v821 = vld [vmem:[%s763 + $0xe0] sm:%s756]
                  %822 = vst [vmem:[%s764 + $0x70] sm:%s756] %v821
                  %v823 = vld [vmem:[%s763 + $0xe8] sm:%s756]
                  %824 = vst [vmem:[%s764 + $0x74] sm:%s756] %v823
                  %v825 = vld [vmem:[%s763 + $0xf0] sm:%s756]
                  %826 = vst [vmem:[%s764 + $0x78] sm:%s756] %v825
                  %v827 = vld [vmem:[%s763 + $0xf8] sm:%s756]
                  %828 = vst [vmem:[%s764 + $0x7c] sm:%s756] %v827
                  %v829 = vld [vmem:[%s763 + $0x100] sm:%s756]
                  %830 = vst [vmem:[%s764 + $0x80] sm:%s756] %v829
                  %v831 = vld [vmem:[%s763 + $0x108] sm:%s756]
                  %832 = vst [vmem:[%s764 + $0x84] sm:%s756] %v831
                  %v833 = vld [vmem:[%s763 + $0x110] sm:%s756]
                  %834 = vst [vmem:[%s764 + $0x88] sm:%s756] %v833
                  %v835 = vld [vmem:[%s763 + $0x118] sm:%s756]
                  %836 = vst [vmem:[%s764 + $0x8c] sm:%s756] %v835
                  %v837 = vld [vmem:[%s763 + $0x120] sm:%s756]
                  %838 = vst [vmem:[%s764 + $0x90] sm:%s756] %v837
                  %v839 = vld [vmem:[%s763 + $0x128] sm:%s756]
                  %840 = vst [vmem:[%s764 + $0x94] sm:%s756] %v839
                  %v841 = vld [vmem:[%s763 + $0x130] sm:%s756]
                  %842 = vst [vmem:[%s764 + $0x98] sm:%s756] %v841
                  %v843 = vld [vmem:[%s763 + $0x138] sm:%s756]
                  %844 = vst [vmem:[%s764 + $0x9c] sm:%s756] %v843
                  %v845 = vld [vmem:[%s763 + $0x140] sm:%s756]
                  %846 = vst [vmem:[%s764 + $0xa0] sm:%s756] %v845
                  %v847 = vld [vmem:[%s763 + $0x148] sm:%s756]
                  %848 = vst [vmem:[%s764 + $0xa4] sm:%s756] %v847
                  %v849 = vld [vmem:[%s763 + $0x150] sm:%s756]
                  %850 = vst [vmem:[%s764 + $0xa8] sm:%s756] %v849
                  %v851 = vld [vmem:[%s763 + $0x158] sm:%s756]
                  %852 = vst [vmem:[%s764 + $0xac] sm:%s756] %v851
                  %v853 = vld [vmem:[%s763 + $0x160] sm:%s756]
                  %854 = vst [vmem:[%s764 + $0xb0] sm:%s756] %v853
                  %v855 = vld [vmem:[%s763 + $0x168] sm:%s756]
                  %856 = vst [vmem:[%s764 + $0xb4] sm:%s756] %v855
                  %v857 = vld [vmem:[%s763 + $0x170] sm:%s756]
                  %858 = vst [vmem:[%s764 + $0xb8] sm:%s756] %v857
                  %v859 = vld [vmem:[%s763 + $0x178] sm:%s756]
                  %860 = vst [vmem:[%s764 + $0xbc] sm:%s756] %v859
                  %v861 = vld [vmem:[%s763 + $0x180] sm:%s756]
                  %862 = vst [vmem:[%s764 + $0xc0] sm:%s756] %v861
                  %v863 = vld [vmem:[%s763 + $0x188] sm:%s756]
                  %864 = vst [vmem:[%s764 + $0xc4] sm:%s756] %v863
                  %v865 = vld [vmem:[%s763 + $0x190] sm:%s756]
                  %866 = vst [vmem:[%s764 + $0xc8] sm:%s756] %v865
                  %v867 = vld [vmem:[%s763 + $0x198] sm:%s756]
                  %868 = vst [vmem:[%s764 + $0xcc] sm:%s756] %v867
                  %v869 = vld [vmem:[%s763 + $0x1a0] sm:%s756]
                  %870 = vst [vmem:[%s764 + $0xd0] sm:%s756] %v869
                  %v871 = vld [vmem:[%s763 + $0x1a8] sm:%s756]
                  %872 = vst [vmem:[%s764 + $0xd4] sm:%s756] %v871
                  %v873 = vld [vmem:[%s763 + $0x1b0] sm:%s756]
                  %874 = vst [vmem:[%s764 + $0xd8] sm:%s756] %v873
                  %v875 = vld [vmem:[%s763 + $0x1b8] sm:%s756]
                  %876 = vst [vmem:[%s764 + $0xdc] sm:%s756] %v875
                  %v877 = vld [vmem:[%s763 + $0x1c0] sm:%s756]
                  %878 = vst [vmem:[%s764 + $0xe0] sm:%s756] %v877
                  %v879 = vld [vmem:[%s763 + $0x1c8] sm:%s756]
                  %880 = vst [vmem:[%s764 + $0xe4] sm:%s756] %v879
                  %v881 = vld [vmem:[%s763 + $0x1d0] sm:%s756]
                  %882 = vst [vmem:[%s764 + $0xe8] sm:%s756] %v881
                  %v883 = vld [vmem:[%s763 + $0x1d8] sm:%s756]
                  %884 = vst [vmem:[%s764 + $0xec] sm:%s756] %v883
                  %v885 = vld [vmem:[%s763 + $0x1e0] sm:%s756]
                  %886 = vst [vmem:[%s764 + $0xf0] sm:%s756] %v885
                  %v887 = vld [vmem:[%s763 + $0x1e8] sm:%s756]
                  %888 = vst [vmem:[%s764 + $0xf4] sm:%s756] %v887
                  %v889 = vld [vmem:[%s763 + $0x1f0] sm:%s756]
                  %890 = vst [vmem:[%s764 + $0xf8] sm:%s756] %v889
                  %v891 = vld [vmem:[%s763 + $0x1f8] sm:%s756]
                  %892 = vst [vmem:[%s764 + $0xfc] sm:%s756] %v891
                  %v893 = vld [vmem:[%s763 + $0x200] sm:%s756]
                  %894 = vst [vmem:[%s764 + $0x100] sm:%s756] %v893
                  %v895 = vld [vmem:[%s763 + $0x208] sm:%s756]
                  %896 = vst [vmem:[%s764 + $0x104] sm:%s756] %v895
                  %v897 = vld [vmem:[%s763 + $0x210] sm:%s756]
                  %898 = vst [vmem:[%s764 + $0x108] sm:%s756] %v897
                  %v899 = vld [vmem:[%s763 + $0x218] sm:%s756]
                  %900 = vst [vmem:[%s764 + $0x10c] sm:%s756] %v899
                  %v901 = vld [vmem:[%s763 + $0x220] sm:%s756]
                  %902 = vst [vmem:[%s764 + $0x110] sm:%s756] %v901
                  %v903 = vld [vmem:[%s763 + $0x228] sm:%s756]
                  %904 = vst [vmem:[%s764 + $0x114] sm:%s756] %v903
                  %v905 = vld [vmem:[%s763 + $0x230] sm:%s756]
                  %906 = vst [vmem:[%s764 + $0x118] sm:%s756] %v905
                  %v907 = vld [vmem:[%s763 + $0x238] sm:%s756]
                  %908 = vst [vmem:[%s764 + $0x11c] sm:%s756] %v907
                  %v909 = vld [vmem:[%s763 + $0x240] sm:%s756]
                  %910 = vst [vmem:[%s764 + $0x120] sm:%s756] %v909
                  %v911 = vld [vmem:[%s763 + $0x248] sm:%s756]
                  %912 = vst [vmem:[%s764 + $0x124] sm:%s756] %v911
                  %v913 = vld [vmem:[%s763 + $0x250] sm:%s756]
                  %914 = vst [vmem:[%s764 + $0x128] sm:%s756] %v913
                  %v915 = vld [vmem:[%s763 + $0x258] sm:%s756]
                  %916 = vst [vmem:[%s764 + $0x12c] sm:%s756] %v915
                  %v917 = vld [vmem:[%s763 + $0x260] sm:%s756]
                  %918 = vst [vmem:[%s764 + $0x130] sm:%s756] %v917
                  %v919 = vld [vmem:[%s763 + $0x268] sm:%s756]
                  %920 = vst [vmem:[%s764 + $0x134] sm:%s756] %v919
                  %v921 = vld [vmem:[%s763 + $0x270] sm:%s756]
                  %922 = vst [vmem:[%s764 + $0x138] sm:%s756] %v921
                  %v923 = vld [vmem:[%s763 + $0x278] sm:%s756]
                  %924 = vst [vmem:[%s764 + $0x13c] sm:%s756] %v923
                  %v925 = vld [vmem:[%s763 + $0x280] sm:%s756]
                  %926 = vst [vmem:[%s764 + $0x140] sm:%s756] %v925
                  %v927 = vld [vmem:[%s763 + $0x288] sm:%s756]
                  %928 = vst [vmem:[%s764 + $0x144] sm:%s756] %v927
                  %v929 = vld [vmem:[%s763 + $0x290] sm:%s756]
                  %930 = vst [vmem:[%s764 + $0x148] sm:%s756] %v929
                  %v931 = vld [vmem:[%s763 + $0x298] sm:%s756]
                  %932 = vst [vmem:[%s764 + $0x14c] sm:%s756] %v931
                  %v933 = vld [vmem:[%s763 + $0x2a0] sm:%s756]
                  %934 = vst [vmem:[%s764 + $0x150] sm:%s756] %v933
                  %v935 = vld [vmem:[%s763 + $0x2a8] sm:%s756]
                  %936 = vst [vmem:[%s764 + $0x154] sm:%s756] %v935
                  %v937 = vld [vmem:[%s763 + $0x2b0] sm:%s756]
                  %938 = vst [vmem:[%s764 + $0x158] sm:%s756] %v937
                  %v939 = vld [vmem:[%s763 + $0x2b8] sm:%s756]
                  %940 = vst [vmem:[%s764 + $0x15c] sm:%s756] %v939
                  %v941 = vld [vmem:[%s763 + $0x2c0] sm:%s756]
                  %942 = vst [vmem:[%s764 + $0x160] sm:%s756] %v941
                  %v943 = vld [vmem:[%s763 + $0x2c8] sm:%s756]
                  %944 = vst [vmem:[%s764 + $0x164] sm:%s756] %v943
                  %v945 = vld [vmem:[%s763 + $0x2d0] sm:%s756]
                  %946 = vst [vmem:[%s764 + $0x168] sm:%s756] %v945
                  %v947 = vld [vmem:[%s763 + $0x2d8] sm:%s756]
                  %948 = vst [vmem:[%s764 + $0x16c] sm:%s756] %v947
                  %v949 = vld [vmem:[%s763 + $0x2e0] sm:%s756]
                  %950 = vst [vmem:[%s764 + $0x170] sm:%s756] %v949
                  %v951 = vld [vmem:[%s763 + $0x2e8] sm:%s756]
                  %952 = vst [vmem:[%s764 + $0x174] sm:%s756] %v951
                  %v953 = vld [vmem:[%s763 + $0x2f0] sm:%s756]
                  %954 = vst [vmem:[%s764 + $0x178] sm:%s756] %v953
                  %v955 = vld [vmem:[%s763 + $0x2f8] sm:%s756]
                  %956 = vst [vmem:[%s764 + $0x17c] sm:%s756] %v955
                  %v957 = vld [vmem:[%s763 + $0x300] sm:%s756]
                  %958 = vst [vmem:[%s764 + $0x180] sm:%s756] %v957
                  %v959 = vld [vmem:[%s763 + $0x308] sm:%s756]
                  %960 = vst [vmem:[%s764 + $0x184] sm:%s756] %v959
                  %v961 = vld [vmem:[%s763 + $0x310] sm:%s756]
                  %962 = vst [vmem:[%s764 + $0x188] sm:%s756] %v961
                  %v963 = vld [vmem:[%s763 + $0x318] sm:%s756]
                  %964 = vst [vmem:[%s764 + $0x18c] sm:%s756] %v963
                  %v965 = vld [vmem:[%s763 + $0x320] sm:%s756]
                  %966 = vst [vmem:[%s764 + $0x190] sm:%s756] %v965
                  %v967 = vld [vmem:[%s763 + $0x328] sm:%s756]
                  %968 = vst [vmem:[%s764 + $0x194] sm:%s756] %v967
                  %v969 = vld [vmem:[%s763 + $0x330] sm:%s756]
                  %970 = vst [vmem:[%s764 + $0x198] sm:%s756] %v969
                  %v971 = vld [vmem:[%s763 + $0x338] sm:%s756]
                  %972 = vst [vmem:[%s764 + $0x19c] sm:%s756] %v971
                  %v973 = vld [vmem:[%s763 + $0x340] sm:%s756]
                  %974 = vst [vmem:[%s764 + $0x1a0] sm:%s756] %v973
                  %v975 = vld [vmem:[%s763 + $0x348] sm:%s756]
                  %976 = vst [vmem:[%s764 + $0x1a4] sm:%s756] %v975
                  %v977 = vld [vmem:[%s763 + $0x350] sm:%s756]
                  %978 = vst [vmem:[%s764 + $0x1a8] sm:%s756] %v977
                  %v979 = vld [vmem:[%s763 + $0x358] sm:%s756]
                  %980 = vst [vmem:[%s764 + $0x1ac] sm:%s756] %v979
                  %v981 = vld [vmem:[%s763 + $0x360] sm:%s756]
                  %982 = vst [vmem:[%s764 + $0x1b0] sm:%s756] %v981
                  %v983 = vld [vmem:[%s763 + $0x368] sm:%s756]
                  %984 = vst [vmem:[%s764 + $0x1b4] sm:%s756] %v983
                  %v985 = vld [vmem:[%s763 + $0x370] sm:%s756]
                  %986 = vst [vmem:[%s764 + $0x1b8] sm:%s756] %v985
                  %v987 = vld [vmem:[%s763 + $0x378] sm:%s756]
                  %988 = vst [vmem:[%s764 + $0x1bc] sm:%s756] %v987
                  %v989 = vld [vmem:[%s763 + $0x380] sm:%s756]
                  %990 = vst [vmem:[%s764 + $0x1c0] sm:%s756] %v989
                  %v991 = vld [vmem:[%s763 + $0x388] sm:%s756]
                  %992 = vst [vmem:[%s764 + $0x1c4] sm:%s756] %v991
                  %v993 = vld [vmem:[%s763 + $0x390] sm:%s756]
                  %994 = vst [vmem:[%s764 + $0x1c8] sm:%s756] %v993
                  %v995 = vld [vmem:[%s763 + $0x398] sm:%s756]
                  %996 = vst [vmem:[%s764 + $0x1cc] sm:%s756] %v995
                  %v997 = vld [vmem:[%s763 + $0x3a0] sm:%s756]
                  %998 = vst [vmem:[%s764 + $0x1d0] sm:%s756] %v997
                  %v999 = vld [vmem:[%s763 + $0x3a8] sm:%s756]
                  %1000 = vst [vmem:[%s764 + $0x1d4] sm:%s756] %v999
                  %v1001 = vld [vmem:[%s763 + $0x3b0] sm:%s756]
                  %1002 = vst [vmem:[%s764 + $0x1d8] sm:%s756] %v1001
                  %v1003 = vld [vmem:[%s763 + $0x3b8] sm:%s756]
                  %1004 = vst [vmem:[%s764 + $0x1dc] sm:%s756] %v1003
                  %v1005 = vld [vmem:[%s763 + $0x3c0] sm:%s756]
                  %1006 = vst [vmem:[%s764 + $0x1e0] sm:%s756] %v1005
                  %v1007 = vld [vmem:[%s763 + $0x3c8] sm:%s756]
                  %1008 = vst [vmem:[%s764 + $0x1e4] sm:%s756] %v1007
                  %v1009 = vld [vmem:[%s763 + $0x3d0] sm:%s756]
                  %1010 = vst [vmem:[%s764 + $0x1e8] sm:%s756] %v1009
                  %v1011 = vld [vmem:[%s763 + $0x3d8] sm:%s756]
                  %1012 = vst [vmem:[%s764 + $0x1ec] sm:%s756] %v1011
                  %v1013 = vld [vmem:[%s763 + $0x3e0] sm:%s756]
                  %1014 = vst [vmem:[%s764 + $0x1f0] sm:%s756] %v1013
                  %v1015 = vld [vmem:[%s763 + $0x3e8] sm:%s756]
                  %1016 = vst [vmem:[%s764 + $0x1f4] sm:%s756] %v1015
                  %v1017 = vld [vmem:[%s763 + $0x3f0] sm:%s756]
                  %1018 = vst [vmem:[%s764 + $0x1f8] sm:%s756] %v1017
                  %v1019 = vld [vmem:[%s763 + $0x3f8] sm:%s756]
                  %1020 = vst [vmem:[%s764 + $0x1fc] sm:%s756] %v1019
                $region137: #{re_forward.5} parent=124 // loop_footer
                  %s762 = sadd.s32 1, %s758
                $region138: #{re_forward.5} parent=124 // loop_footer_branch
                  %757 = sbr.rel target = $region134
                $region139: #{re_forward.5} parent=124 // loop_exit
                  _
              $region125: #{re_forward.5} parent=109 // pred_fallthru
                _
            $region110: #{re_forward.5} parent=105 // pred_fallthru
              _
            // Predicated region
            $region111: #{re_forward.5} parent=105 // pred_check
              _
            $region112: #{re_forward.5} parent=105 // pred_check_branch
              %478 = sbr.rel (0) target = $region114
            $region113: #{re_forward.5} parent=105 // pred_region
              %s480 = ssub.s32 16, 1
              loop: start=0, step=1, limit=1
              $region115: #{re_forward.5} parent=113 // loop_pre_header
                _
              $region116: #{re_forward.5} parent=113 // loop_header
                %s482 = sphi 0, %s486
                %p483 = scmp.ge.s32.totalorder %s482, 1
                %s487 = sphi %s472, %s472
                %s488 = sphi %s468, %s468
              $region117: #{re_forward.5} parent=113 // loop_header_branch
                %485 = sbr.rel (%p483) target = $region121
              $region118: #{re_forward.5} parent=113 // loop_body
                %v489 = vld [vmem:[%s487] sm:%s480]
                %490 = vst [vmem:[%s488] sm:%s480] %v489
                %v491 = vld [vmem:[%s487 + $0x8] sm:%s480]
                %492 = vst [vmem:[%s488 + $0x4] sm:%s480] %v491
                %v493 = vld [vmem:[%s487 + $0x10] sm:%s480]
                %494 = vst [vmem:[%s488 + $0x8] sm:%s480] %v493
                %v495 = vld [vmem:[%s487 + $0x18] sm:%s480]
                %496 = vst [vmem:[%s488 + $0xc] sm:%s480] %v495
                %v497 = vld [vmem:[%s487 + $0x20] sm:%s480]
                %498 = vst [vmem:[%s488 + $0x10] sm:%s480] %v497
                %v499 = vld [vmem:[%s487 + $0x28] sm:%s480]
                %500 = vst [vmem:[%s488 + $0x14] sm:%s480] %v499
                %v501 = vld [vmem:[%s487 + $0x30] sm:%s480]
                %502 = vst [vmem:[%s488 + $0x18] sm:%s480] %v501
                %v503 = vld [vmem:[%s487 + $0x38] sm:%s480]
                %504 = vst [vmem:[%s488 + $0x1c] sm:%s480] %v503
                %v505 = vld [vmem:[%s487 + $0x40] sm:%s480]
                %506 = vst [vmem:[%s488 + $0x20] sm:%s480] %v505
                %v507 = vld [vmem:[%s487 + $0x48] sm:%s480]
                %508 = vst [vmem:[%s488 + $0x24] sm:%s480] %v507
                %v509 = vld [vmem:[%s487 + $0x50] sm:%s480]
                %510 = vst [vmem:[%s488 + $0x28] sm:%s480] %v509
                %v511 = vld [vmem:[%s487 + $0x58] sm:%s480]
                %512 = vst [vmem:[%s488 + $0x2c] sm:%s480] %v511
                %v513 = vld [vmem:[%s487 + $0x60] sm:%s480]
                %514 = vst [vmem:[%s488 + $0x30] sm:%s480] %v513
                %v515 = vld [vmem:[%s487 + $0x68] sm:%s480]
                %516 = vst [vmem:[%s488 + $0x34] sm:%s480] %v515
                %v517 = vld [vmem:[%s487 + $0x70] sm:%s480]
                %518 = vst [vmem:[%s488 + $0x38] sm:%s480] %v517
                %v519 = vld [vmem:[%s487 + $0x78] sm:%s480]
                %520 = vst [vmem:[%s488 + $0x3c] sm:%s480] %v519
                %v521 = vld [vmem:[%s487 + $0x80] sm:%s480]
                %522 = vst [vmem:[%s488 + $0x40] sm:%s480] %v521
                %v523 = vld [vmem:[%s487 + $0x88] sm:%s480]
                %524 = vst [vmem:[%s488 + $0x44] sm:%s480] %v523
                %v525 = vld [vmem:[%s487 + $0x90] sm:%s480]
                %526 = vst [vmem:[%s488 + $0x48] sm:%s480] %v525
                %v527 = vld [vmem:[%s487 + $0x98] sm:%s480]
                %528 = vst [vmem:[%s488 + $0x4c] sm:%s480] %v527
                %v529 = vld [vmem:[%s487 + $0xa0] sm:%s480]
                %530 = vst [vmem:[%s488 + $0x50] sm:%s480] %v529
                %v531 = vld [vmem:[%s487 + $0xa8] sm:%s480]
                %532 = vst [vmem:[%s488 + $0x54] sm:%s480] %v531
                %v533 = vld [vmem:[%s487 + $0xb0] sm:%s480]
                %534 = vst [vmem:[%s488 + $0x58] sm:%s480] %v533
                %v535 = vld [vmem:[%s487 + $0xb8] sm:%s480]
                %536 = vst [vmem:[%s488 + $0x5c] sm:%s480] %v535
                %v537 = vld [vmem:[%s487 + $0xc0] sm:%s480]
                %538 = vst [vmem:[%s488 + $0x60] sm:%s480] %v537
                %v539 = vld [vmem:[%s487 + $0xc8] sm:%s480]
                %540 = vst [vmem:[%s488 + $0x64] sm:%s480] %v539
                %v541 = vld [vmem:[%s487 + $0xd0] sm:%s480]
                %542 = vst [vmem:[%s488 + $0x68] sm:%s480] %v541
                %v543 = vld [vmem:[%s487 + $0xd8] sm:%s480]
                %544 = vst [vmem:[%s488 + $0x6c] sm:%s480] %v543
                %v545 = vld [vmem:[%s487 + $0xe0] sm:%s480]
                %546 = vst [vmem:[%s488 + $0x70] sm:%s480] %v545
                %v547 = vld [vmem:[%s487 + $0xe8] sm:%s480]
                %548 = vst [vmem:[%s488 + $0x74] sm:%s480] %v547
                %v549 = vld [vmem:[%s487 + $0xf0] sm:%s480]
                %550 = vst [vmem:[%s488 + $0x78] sm:%s480] %v549
                %v551 = vld [vmem:[%s487 + $0xf8] sm:%s480]
                %552 = vst [vmem:[%s488 + $0x7c] sm:%s480] %v551
                %v553 = vld [vmem:[%s487 + $0x100] sm:%s480]
                %554 = vst [vmem:[%s488 + $0x80] sm:%s480] %v553
                %v555 = vld [vmem:[%s487 + $0x108] sm:%s480]
                %556 = vst [vmem:[%s488 + $0x84] sm:%s480] %v555
                %v557 = vld [vmem:[%s487 + $0x110] sm:%s480]
                %558 = vst [vmem:[%s488 + $0x88] sm:%s480] %v557
                %v559 = vld [vmem:[%s487 + $0x118] sm:%s480]
                %560 = vst [vmem:[%s488 + $0x8c] sm:%s480] %v559
                %v561 = vld [vmem:[%s487 + $0x120] sm:%s480]
                %562 = vst [vmem:[%s488 + $0x90] sm:%s480] %v561
                %v563 = vld [vmem:[%s487 + $0x128] sm:%s480]
                %564 = vst [vmem:[%s488 + $0x94] sm:%s480] %v563
                %v565 = vld [vmem:[%s487 + $0x130] sm:%s480]
                %566 = vst [vmem:[%s488 + $0x98] sm:%s480] %v565
                %v567 = vld [vmem:[%s487 + $0x138] sm:%s480]
                %568 = vst [vmem:[%s488 + $0x9c] sm:%s480] %v567
                %v569 = vld [vmem:[%s487 + $0x140] sm:%s480]
                %570 = vst [vmem:[%s488 + $0xa0] sm:%s480] %v569
                %v571 = vld [vmem:[%s487 + $0x148] sm:%s480]
                %572 = vst [vmem:[%s488 + $0xa4] sm:%s480] %v571
                %v573 = vld [vmem:[%s487 + $0x150] sm:%s480]
                %574 = vst [vmem:[%s488 + $0xa8] sm:%s480] %v573
                %v575 = vld [vmem:[%s487 + $0x158] sm:%s480]
                %576 = vst [vmem:[%s488 + $0xac] sm:%s480] %v575
                %v577 = vld [vmem:[%s487 + $0x160] sm:%s480]
                %578 = vst [vmem:[%s488 + $0xb0] sm:%s480] %v577
                %v579 = vld [vmem:[%s487 + $0x168] sm:%s480]
                %580 = vst [vmem:[%s488 + $0xb4] sm:%s480] %v579
                %v581 = vld [vmem:[%s487 + $0x170] sm:%s480]
                %582 = vst [vmem:[%s488 + $0xb8] sm:%s480] %v581
                %v583 = vld [vmem:[%s487 + $0x178] sm:%s480]
                %584 = vst [vmem:[%s488 + $0xbc] sm:%s480] %v583
                %v585 = vld [vmem:[%s487 + $0x180] sm:%s480]
                %586 = vst [vmem:[%s488 + $0xc0] sm:%s480] %v585
                %v587 = vld [vmem:[%s487 + $0x188] sm:%s480]
                %588 = vst [vmem:[%s488 + $0xc4] sm:%s480] %v587
                %v589 = vld [vmem:[%s487 + $0x190] sm:%s480]
                %590 = vst [vmem:[%s488 + $0xc8] sm:%s480] %v589
                %v591 = vld [vmem:[%s487 + $0x198] sm:%s480]
                %592 = vst [vmem:[%s488 + $0xcc] sm:%s480] %v591
                %v593 = vld [vmem:[%s487 + $0x1a0] sm:%s480]
                %594 = vst [vmem:[%s488 + $0xd0] sm:%s480] %v593
                %v595 = vld [vmem:[%s487 + $0x1a8] sm:%s480]
                %596 = vst [vmem:[%s488 + $0xd4] sm:%s480] %v595
                %v597 = vld [vmem:[%s487 + $0x1b0] sm:%s480]
                %598 = vst [vmem:[%s488 + $0xd8] sm:%s480] %v597
                %v599 = vld [vmem:[%s487 + $0x1b8] sm:%s480]
                %600 = vst [vmem:[%s488 + $0xdc] sm:%s480] %v599
                %v601 = vld [vmem:[%s487 + $0x1c0] sm:%s480]
                %602 = vst [vmem:[%s488 + $0xe0] sm:%s480] %v601
                %v603 = vld [vmem:[%s487 + $0x1c8] sm:%s480]
                %604 = vst [vmem:[%s488 + $0xe4] sm:%s480] %v603
                %v605 = vld [vmem:[%s487 + $0x1d0] sm:%s480]
                %606 = vst [vmem:[%s488 + $0xe8] sm:%s480] %v605
                %v607 = vld [vmem:[%s487 + $0x1d8] sm:%s480]
                %608 = vst [vmem:[%s488 + $0xec] sm:%s480] %v607
                %v609 = vld [vmem:[%s487 + $0x1e0] sm:%s480]
                %610 = vst [vmem:[%s488 + $0xf0] sm:%s480] %v609
                %v611 = vld [vmem:[%s487 + $0x1e8] sm:%s480]
                %612 = vst [vmem:[%s488 + $0xf4] sm:%s480] %v611
                %v613 = vld [vmem:[%s487 + $0x1f0] sm:%s480]
                %614 = vst [vmem:[%s488 + $0xf8] sm:%s480] %v613
                %v615 = vld [vmem:[%s487 + $0x1f8] sm:%s480]
                %616 = vst [vmem:[%s488 + $0xfc] sm:%s480] %v615
                %v617 = vld [vmem:[%s487 + $0x200] sm:%s480]
                %618 = vst [vmem:[%s488 + $0x100] sm:%s480] %v617
                %v619 = vld [vmem:[%s487 + $0x208] sm:%s480]
                %620 = vst [vmem:[%s488 + $0x104] sm:%s480] %v619
                %v621 = vld [vmem:[%s487 + $0x210] sm:%s480]
                %622 = vst [vmem:[%s488 + $0x108] sm:%s480] %v621
                %v623 = vld [vmem:[%s487 + $0x218] sm:%s480]
                %624 = vst [vmem:[%s488 + $0x10c] sm:%s480] %v623
                %v625 = vld [vmem:[%s487 + $0x220] sm:%s480]
                %626 = vst [vmem:[%s488 + $0x110] sm:%s480] %v625
                %v627 = vld [vmem:[%s487 + $0x228] sm:%s480]
                %628 = vst [vmem:[%s488 + $0x114] sm:%s480] %v627
                %v629 = vld [vmem:[%s487 + $0x230] sm:%s480]
                %630 = vst [vmem:[%s488 + $0x118] sm:%s480] %v629
                %v631 = vld [vmem:[%s487 + $0x238] sm:%s480]
                %632 = vst [vmem:[%s488 + $0x11c] sm:%s480] %v631
                %v633 = vld [vmem:[%s487 + $0x240] sm:%s480]
                %634 = vst [vmem:[%s488 + $0x120] sm:%s480] %v633
                %v635 = vld [vmem:[%s487 + $0x248] sm:%s480]
                %636 = vst [vmem:[%s488 + $0x124] sm:%s480] %v635
                %v637 = vld [vmem:[%s487 + $0x250] sm:%s480]
                %638 = vst [vmem:[%s488 + $0x128] sm:%s480] %v637
                %v639 = vld [vmem:[%s487 + $0x258] sm:%s480]
                %640 = vst [vmem:[%s488 + $0x12c] sm:%s480] %v639
                %v641 = vld [vmem:[%s487 + $0x260] sm:%s480]
                %642 = vst [vmem:[%s488 + $0x130] sm:%s480] %v641
                %v643 = vld [vmem:[%s487 + $0x268] sm:%s480]
                %644 = vst [vmem:[%s488 + $0x134] sm:%s480] %v643
                %v645 = vld [vmem:[%s487 + $0x270] sm:%s480]
                %646 = vst [vmem:[%s488 + $0x138] sm:%s480] %v645
                %v647 = vld [vmem:[%s487 + $0x278] sm:%s480]
                %648 = vst [vmem:[%s488 + $0x13c] sm:%s480] %v647
                %v649 = vld [vmem:[%s487 + $0x280] sm:%s480]
                %650 = vst [vmem:[%s488 + $0x140] sm:%s480] %v649
                %v651 = vld [vmem:[%s487 + $0x288] sm:%s480]
                %652 = vst [vmem:[%s488 + $0x144] sm:%s480] %v651
                %v653 = vld [vmem:[%s487 + $0x290] sm:%s480]
                %654 = vst [vmem:[%s488 + $0x148] sm:%s480] %v653
                %v655 = vld [vmem:[%s487 + $0x298] sm:%s480]
                %656 = vst [vmem:[%s488 + $0x14c] sm:%s480] %v655
                %v657 = vld [vmem:[%s487 + $0x2a0] sm:%s480]
                %658 = vst [vmem:[%s488 + $0x150] sm:%s480] %v657
                %v659 = vld [vmem:[%s487 + $0x2a8] sm:%s480]
                %660 = vst [vmem:[%s488 + $0x154] sm:%s480] %v659
                %v661 = vld [vmem:[%s487 + $0x2b0] sm:%s480]
                %662 = vst [vmem:[%s488 + $0x158] sm:%s480] %v661
                %v663 = vld [vmem:[%s487 + $0x2b8] sm:%s480]
                %664 = vst [vmem:[%s488 + $0x15c] sm:%s480] %v663
                %v665 = vld [vmem:[%s487 + $0x2c0] sm:%s480]
                %666 = vst [vmem:[%s488 + $0x160] sm:%s480] %v665
                %v667 = vld [vmem:[%s487 + $0x2c8] sm:%s480]
                %668 = vst [vmem:[%s488 + $0x164] sm:%s480] %v667
                %v669 = vld [vmem:[%s487 + $0x2d0] sm:%s480]
                %670 = vst [vmem:[%s488 + $0x168] sm:%s480] %v669
                %v671 = vld [vmem:[%s487 + $0x2d8] sm:%s480]
                %672 = vst [vmem:[%s488 + $0x16c] sm:%s480] %v671
                %v673 = vld [vmem:[%s487 + $0x2e0] sm:%s480]
                %674 = vst [vmem:[%s488 + $0x170] sm:%s480] %v673
                %v675 = vld [vmem:[%s487 + $0x2e8] sm:%s480]
                %676 = vst [vmem:[%s488 + $0x174] sm:%s480] %v675
                %v677 = vld [vmem:[%s487 + $0x2f0] sm:%s480]
                %678 = vst [vmem:[%s488 + $0x178] sm:%s480] %v677
                %v679 = vld [vmem:[%s487 + $0x2f8] sm:%s480]
                %680 = vst [vmem:[%s488 + $0x17c] sm:%s480] %v679
                %v681 = vld [vmem:[%s487 + $0x300] sm:%s480]
                %682 = vst [vmem:[%s488 + $0x180] sm:%s480] %v681
                %v683 = vld [vmem:[%s487 + $0x308] sm:%s480]
                %684 = vst [vmem:[%s488 + $0x184] sm:%s480] %v683
                %v685 = vld [vmem:[%s487 + $0x310] sm:%s480]
                %686 = vst [vmem:[%s488 + $0x188] sm:%s480] %v685
                %v687 = vld [vmem:[%s487 + $0x318] sm:%s480]
                %688 = vst [vmem:[%s488 + $0x18c] sm:%s480] %v687
                %v689 = vld [vmem:[%s487 + $0x320] sm:%s480]
                %690 = vst [vmem:[%s488 + $0x190] sm:%s480] %v689
                %v691 = vld [vmem:[%s487 + $0x328] sm:%s480]
                %692 = vst [vmem:[%s488 + $0x194] sm:%s480] %v691
                %v693 = vld [vmem:[%s487 + $0x330] sm:%s480]
                %694 = vst [vmem:[%s488 + $0x198] sm:%s480] %v693
                %v695 = vld [vmem:[%s487 + $0x338] sm:%s480]
                %696 = vst [vmem:[%s488 + $0x19c] sm:%s480] %v695
                %v697 = vld [vmem:[%s487 + $0x340] sm:%s480]
                %698 = vst [vmem:[%s488 + $0x1a0] sm:%s480] %v697
                %v699 = vld [vmem:[%s487 + $0x348] sm:%s480]
                %700 = vst [vmem:[%s488 + $0x1a4] sm:%s480] %v699
                %v701 = vld [vmem:[%s487 + $0x350] sm:%s480]
                %702 = vst [vmem:[%s488 + $0x1a8] sm:%s480] %v701
                %v703 = vld [vmem:[%s487 + $0x358] sm:%s480]
                %704 = vst [vmem:[%s488 + $0x1ac] sm:%s480] %v703
                %v705 = vld [vmem:[%s487 + $0x360] sm:%s480]
                %706 = vst [vmem:[%s488 + $0x1b0] sm:%s480] %v705
                %v707 = vld [vmem:[%s487 + $0x368] sm:%s480]
                %708 = vst [vmem:[%s488 + $0x1b4] sm:%s480] %v707
                %v709 = vld [vmem:[%s487 + $0x370] sm:%s480]
                %710 = vst [vmem:[%s488 + $0x1b8] sm:%s480] %v709
                %v711 = vld [vmem:[%s487 + $0x378] sm:%s480]
                %712 = vst [vmem:[%s488 + $0x1bc] sm:%s480] %v711
                %v713 = vld [vmem:[%s487 + $0x380] sm:%s480]
                %714 = vst [vmem:[%s488 + $0x1c0] sm:%s480] %v713
                %v715 = vld [vmem:[%s487 + $0x388] sm:%s480]
                %716 = vst [vmem:[%s488 + $0x1c4] sm:%s480] %v715
                %v717 = vld [vmem:[%s487 + $0x390] sm:%s480]
                %718 = vst [vmem:[%s488 + $0x1c8] sm:%s480] %v717
                %v719 = vld [vmem:[%s487 + $0x398] sm:%s480]
                %720 = vst [vmem:[%s488 + $0x1cc] sm:%s480] %v719
                %v721 = vld [vmem:[%s487 + $0x3a0] sm:%s480]
                %722 = vst [vmem:[%s488 + $0x1d0] sm:%s480] %v721
                %v723 = vld [vmem:[%s487 + $0x3a8] sm:%s480]
                %724 = vst [vmem:[%s488 + $0x1d4] sm:%s480] %v723
                %v725 = vld [vmem:[%s487 + $0x3b0] sm:%s480]
                %726 = vst [vmem:[%s488 + $0x1d8] sm:%s480] %v725
                %v727 = vld [vmem:[%s487 + $0x3b8] sm:%s480]
                %728 = vst [vmem:[%s488 + $0x1dc] sm:%s480] %v727
                %v729 = vld [vmem:[%s487 + $0x3c0] sm:%s480]
                %730 = vst [vmem:[%s488 + $0x1e0] sm:%s480] %v729
                %v731 = vld [vmem:[%s487 + $0x3c8] sm:%s480]
                %732 = vst [vmem:[%s488 + $0x1e4] sm:%s480] %v731
                %v733 = vld [vmem:[%s487 + $0x3d0] sm:%s480]
                %734 = vst [vmem:[%s488 + $0x1e8] sm:%s480] %v733
                %v735 = vld [vmem:[%s487 + $0x3d8] sm:%s480]
                %736 = vst [vmem:[%s488 + $0x1ec] sm:%s480] %v735
                %v737 = vld [vmem:[%s487 + $0x3e0] sm:%s480]
                %738 = vst [vmem:[%s488 + $0x1f0] sm:%s480] %v737
                %v739 = vld [vmem:[%s487 + $0x3e8] sm:%s480]
                %740 = vst [vmem:[%s488 + $0x1f4] sm:%s480] %v739
                %v741 = vld [vmem:[%s487 + $0x3f0] sm:%s480]
                %742 = vst [vmem:[%s488 + $0x1f8] sm:%s480] %v741
                %v743 = vld [vmem:[%s487 + $0x3f8] sm:%s480]
                %744 = vst [vmem:[%s488 + $0x1fc] sm:%s480] %v743
              $region119: #{re_forward.5} parent=113 // loop_footer
                %s486 = sadd.s32 1, %s482
              $region120: #{re_forward.5} parent=113 // loop_footer_branch
                %481 = sbr.rel target = $region116
              $region121: #{re_forward.5} parent=113 // loop_exit
                _
            $region114: #{re_forward.5} parent=105 // pred_fallthru
              _
          $region106: #{re_forward.5} parent=101 // pred_fallthru
            _
          %1021 = vnop
        $region102: #{re_forward.5} parent=59 // pred_fallthru
          _
      $region60: #{re_forward.5} parent=5 // pred_fallthru
        _
      %p1022 = scmp.le.s32.totalorder 1, %s19
      %p1023 = scmp.lt.s32.totalorder %s19, 5
      %p1024 = pnand %p1022, %p1023
      %p1025 = pneg %p1024
      // Predicated region
      $region140: #{re_forward.5} parent=5 // pred_check
        _
      $region141: #{re_forward.5} parent=5 // pred_check_branch
        %1027 = sbr.rel (%p1024) target = $region143
      $region142: #{re_forward.5} parent=5 // pred_region
        %s1028 = ssub.s32 %s19, 1
        %s1029 = sand.u32 %s46, 1
        %s1030 = sand.u32 %s46, 1
        %s1031 = smul.addr %s1030, 48
        %s1032 = scalar_lea.vmem [#allocation2], %s1031
        // Predicated region
        $region144: #{re_forward.5} parent=142 // pred_check
          %p1033 = pneg %p59
        $region145: #{re_forward.5} parent=142 // pred_check_branch
          %1035 = sbr.rel (%p1033) target = $region147
        $region146: #{re_forward.5} parent=142 // pred_region
          _
        $region147: #{re_forward.5} parent=142 // pred_fallthru
          _
        %s1036 = sand.u32 %s74, 1
        %s1037 = sand.u32 %s74, 1
        %s1038 = smul.addr %s1037, 512
        %s1039 = scalar_lea.vmem [#allocation3], %s1038
        // Predicated region
        $region148: #{re_forward.5} parent=142 // pred_check
          %p1040 = pneg %p87
        $region149: #{re_forward.5} parent=142 // pred_check_branch
          %1042 = sbr.rel (%p1040) target = $region151
        $region150: #{re_forward.5} parent=142 // pred_region
          _
        $region151: #{re_forward.5} parent=142 // pred_fallthru
          _
        %s1043 = sand.u32 %s46, 1
        %s1044 = sand.u32 %s46, 1
        %s1045 = smul.addr %s1044, 48
        %s1046 = scalar_lea.vmem [#allocation2], %s1045
        %p1047 = pneg %p59
        %p1048 = pneg %p56
        %s1049 = sand.u32 %s74, 1
        %s1050 = sand.u32 %s74, 1
        %s1051 = smul.addr %s1050, 512
        %s1052 = scalar_lea.vmem [#allocation3], %s1051
        %p1053 = pneg %p87
        %p1054 = pneg %p84
        %p1055 = pneg %p108
        %p1056 = pneg %p105
        %p1057 = pneg %p129
        %p1058 = pneg %p126
        %p1059 = pneg %p150
        %p1060 = pneg %p147
        %p1061 = pneg %p171
        %p1062 = pneg %p168
        %p1063 = pneg %p192
        %p1064 = pneg %p189
        %p1065 = pneg %p213
        %p1066 = pneg %p210
        %p1067 = pneg %p234
        %p1068 = pneg %p231
        %p1069 = pneg %p255
        %p1070 = pneg %p252
        %p1071 = pneg %p276
        %p1072 = pneg %p273
        %p1073 = pneg %p297
        %p1074 = pneg %p294
        %p1075 = pneg %p318
        %p1076 = pneg %p315
        %p1077 = pneg %p346
        %p1078 = pneg %p343
        %p1079 = scmp.lt.s32.totalorder %s28, 1
        %s1080 = scalar_select %p1079, %s28, 1
        %p1081 = scmp.lt.s32.totalorder %s29, 1
        %s1082 = scalar_select %p1081, %s29, 1
        %s1083 = smul.addr %s1080, 2
        %s1084 = sadd.s32 %s1082, %s1083
        %s1085 = smul.addr %s1084, 8
        %s1086 = scalar_lea.vmem %s13, %s1085
        %p1087 = scmp.lt.s32.totalorder %s28, 1
        %s1088 = scalar_select %p1087, %s28, 1
        %p1089 = scmp.lt.s32.totalorder %s29, 1
        %s1090 = scalar_select %p1089, %s29, 1
        %s1091 = smul.addr %s1088, 2
        %s1092 = sadd.s32 %s1090, %s1091
        %s1093 = smul.addr %s1092, 8
        %s1094 = scalar_lea.vmem %s13, %s1093
        %v1096 = vld [vmem:[%s1032] sm:$0xff]
        %v1097 = vld [vmem:[%s1032 + $0x8] sm:$0x7f]
        %s1098 = scalar_lea.vmem %s1032, 16 [#allocation2]
        %v1099 = vld [vmem:[%s1098] sm:$0xff]
        %v1100 = vld [vmem:[%s1098 + $0x8] sm:$0x7f]
        %s1101 = scalar_lea.vmem %s1032, 32 [#allocation2]
        %v1102 = vld [vmem:[%s1101] sm:$0xff]
        %v1103 = vld [vmem:[%s1101 + $0x8] sm:$0x7f]
        %v1104 = vld [vmem:[%s2] sm:$0xff]
        %v1105 = vld [vmem:[%s2 + $0x8] sm:$0xff]
        %v1106 = vld [vmem:[%s2 + $0x10] sm:$0xff]
        %v1107 = vld [vmem:[%s2 + $0x18] sm:$0xff]
        %v1108 = vld [vmem:[%s2 + $0x20] sm:$0xff]
        %v1109 = vld [vmem:[%s2 + $0x28] sm:$0xff]
        %v1110 = vld [vmem:[%s2 + $0x30] sm:$0xff]
        %v1111 = vld [vmem:[%s2 + $0x38] sm:$0xff]
        %v1112 = vmul.f32 %v1096, %v1096
        %v1113 = vmul.f32 %v1099, %v1099
        %v1114 = vadd.f32 %v1112, %v1113
        %v1115 = vmul.f32 %v1102, %v1102
        %v1116 = vadd.f32 %v1114, %v1115
        %v1117 = vrsqrt.pop %v1116
        %v1118 = vmul.f32 %v1117, %v1116
        %v1119 = vmul.f32 %v1118, %v1117
        %v1120 = vmul.f32 0.5, %v1119
        %v1121 = vsub.f32 1.5, %v1120
        %v1122 = vmul.f32 %v1117, %v1121
        %v1123 = vmul.f32 %v1116, %v1122
        %vm1124 = vcmp.eq.f32.partialorder %v1116, inf
        %v1125 = vsel %vm1124, %v1116, %v1123
        %vm1126 = vcmp.eq.f32.partialorder %v1116, 0.0
        %v1127 = vand.u32 %v1116, 2147483648
        %v1128 = vsel %vm1126, %v1127, %v1125
        %v1129 = vadd.f32 %v1128, 1e-08
        %v1130 = vrcp.pop %v1129
        %1132 = vset.pattern.permute.xlu0 0
        %1133 = vperm.xlu0 %1132, %v1104
        %v1134 = vpop.permute.xlu0 %1133
        %1137 = vset.pattern.permute.xlu0 0
        %1138 = vperm.xlu0 %1137, %v1105
        %v1139 = vpop.permute.xlu0 %1138
        %1142 = vset.pattern.permute.xlu0 0
        %1143 = vperm.xlu0 %1142, %v1106
        %v1144 = vpop.permute.xlu0 %1143
        %1147 = vset.pattern.permute.xlu0 0
        %1148 = vperm.xlu0 %1147, %v1107
        %v1149 = vpop.permute.xlu0 %1148
        %1152 = vset.pattern.permute.xlu0 0
        %1153 = vperm.xlu0 %1152, %v1108
        %v1154 = vpop.permute.xlu0 %1153
        %1157 = vset.pattern.permute.xlu0 0
        %1158 = vperm.xlu0 %1157, %v1109
        %v1159 = vpop.permute.xlu0 %1158
        %1162 = vset.pattern.permute.xlu0 0
        %1163 = vperm.xlu0 %1162, %v1110
        %v1164 = vpop.permute.xlu0 %1163
        %1167 = vset.pattern.permute.xlu0 0
        %1168 = vperm.xlu0 %1167, %v1111
        %v1169 = vpop.permute.xlu0 %1168
        %v1171 = vperm.slane %v1096, 0
        %v1172 = vmul.f32 %v1134, %v1171
        %v1173 = vmul.f32 %v1139, %v1171
        %v1174 = vmul.f32 %v1144, %v1171
        %v1175 = vmul.f32 %v1149, %v1171
        %v1176 = vmul.f32 %v1154, %v1171
        %v1177 = vmul.f32 %v1159, %v1171
        %v1178 = vmul.f32 %v1164, %v1171
        %v1179 = vmul.f32 %v1169, %v1171
        %1180 = vset.pattern.permute.xlu0 1
        %1181 = vperm.xlu0 %1180, %v1104
        %v1182 = vpop.permute.xlu0 %1181
        %1184 = vset.pattern.permute.xlu0 1
        %1185 = vperm.xlu0 %1184, %v1105
        %v1186 = vpop.permute.xlu0 %1185
        %1188 = vset.pattern.permute.xlu0 1
        %1189 = vperm.xlu0 %1188, %v1106
        %v1190 = vpop.permute.xlu0 %1189
        %1192 = vset.pattern.permute.xlu0 1
        %1193 = vperm.xlu0 %1192, %v1107
        %v1194 = vpop.permute.xlu0 %1193
        %1196 = vset.pattern.permute.xlu0 1
        %1197 = vperm.xlu0 %1196, %v1108
        %v1198 = vpop.permute.xlu0 %1197
        %1200 = vset.pattern.permute.xlu0 1
        %1201 = vperm.xlu0 %1200, %v1109
        %v1202 = vpop.permute.xlu0 %1201
        %1204 = vset.pattern.permute.xlu0 1
        %1205 = vperm.xlu0 %1204, %v1110
        %v1206 = vpop.permute.xlu0 %1205
        %1208 = vset.pattern.permute.xlu0 1
        %1209 = vperm.xlu0 %1208, %v1111
        %v1210 = vpop.permute.xlu0 %1209
        %v1212 = vperm.slane %v1099, 0
        %v1213 = vmul.f32 %v1182, %v1212
        %v1214 = vmul.f32 %v1186, %v1212
        %v1215 = vmul.f32 %v1190, %v1212
        %v1216 = vmul.f32 %v1194, %v1212
        %v1217 = vmul.f32 %v1198, %v1212
        %v1218 = vmul.f32 %v1202, %v1212
        %v1219 = vmul.f32 %v1206, %v1212
        %v1220 = vmul.f32 %v1210, %v1212
        %v1221 = vadd.f32 %v1172, %v1213
        %v1222 = vadd.f32 %v1173, %v1214
        %v1223 = vadd.f32 %v1174, %v1215
        %v1224 = vadd.f32 %v1175, %v1216
        %v1225 = vadd.f32 %v1176, %v1217
        %v1226 = vadd.f32 %v1177, %v1218
        %v1227 = vadd.f32 %v1178, %v1219
        %v1228 = vadd.f32 %v1179, %v1220
        %1229 = vset.pattern.permute.xlu0 2
        %1230 = vperm.xlu0 %1229, %v1104
        %v1231 = vpop.permute.xlu0 %1230
        %1233 = vset.pattern.permute.xlu0 2
        %1234 = vperm.xlu0 %1233, %v1105
        %v1235 = vpop.permute.xlu0 %1234
        %1237 = vset.pattern.permute.xlu0 2
        %1238 = vperm.xlu0 %1237, %v1106
        %v1239 = vpop.permute.xlu0 %1238
        %1241 = vset.pattern.permute.xlu0 2
        %1242 = vperm.xlu0 %1241, %v1107
        %v1243 = vpop.permute.xlu0 %1242
        %1245 = vset.pattern.permute.xlu0 2
        %1246 = vperm.xlu0 %1245, %v1108
        %v1247 = vpop.permute.xlu0 %1246
        %1249 = vset.pattern.permute.xlu0 2
        %1250 = vperm.xlu0 %1249, %v1109
        %v1251 = vpop.permute.xlu0 %1250
        %1253 = vset.pattern.permute.xlu0 2
        %1254 = vperm.xlu0 %1253, %v1110
        %v1255 = vpop.permute.xlu0 %1254
        %1257 = vset.pattern.permute.xlu0 2
        %1258 = vperm.xlu0 %1257, %v1111
        %v1259 = vpop.permute.xlu0 %1258
        %v1261 = vperm.slane %v1102, 0
        %v1262 = vmul.f32 %v1231, %v1261
        %v1263 = vmul.f32 %v1235, %v1261
        %v1264 = vmul.f32 %v1239, %v1261
        %v1265 = vmul.f32 %v1243, %v1261
        %v1266 = vmul.f32 %v1247, %v1261
        %v1267 = vmul.f32 %v1251, %v1261
        %v1268 = vmul.f32 %v1255, %v1261
        %v1269 = vmul.f32 %v1259, %v1261
        %v1270 = vadd.f32 %v1221, %v1262
        %v1271 = vadd.f32 %v1222, %v1263
        %v1272 = vadd.f32 %v1223, %v1264
        %v1273 = vadd.f32 %v1224, %v1265
        %v1274 = vadd.f32 %v1225, %v1266
        %v1275 = vadd.f32 %v1226, %v1267
        %v1276 = vadd.f32 %v1227, %v1268
        %v1277 = vadd.f32 %v1228, %v1269
        %v1278 = vand.u32 2147483647, %v1270
        %v1279 = vand.u32 2147483647, %v1271
        %v1280 = vand.u32 2147483647, %v1272
        %v1281 = vand.u32 2147483647, %v1273
        %v1282 = vand.u32 2147483647, %v1274
        %v1283 = vand.u32 2147483647, %v1275
        %v1284 = vand.u32 2147483647, %v1276
        %v1285 = vand.u32 2147483647, %v1277
        %v1286 = vmul.f32 %v1270, %v1278
        %v1287 = vmul.f32 %v1271, %v1279
        %v1288 = vmul.f32 %v1272, %v1280
        %v1289 = vmul.f32 %v1273, %v1281
        %v1290 = vmul.f32 %v1274, %v1282
        %v1291 = vmul.f32 %v1275, %v1283
        %v1292 = vmul.f32 %v1276, %v1284
        %v1293 = vmul.f32 %v1277, %v1285
        %v1294 = vperm.slane %v1130, 0
        %v1295 = vmul.f32 %v1286, %v1294
        %v1296 = vmul.f32 %v1287, %v1294
        %v1297 = vmul.f32 %v1288, %v1294
        %v1298 = vmul.f32 %v1289, %v1294
        %v1299 = vmul.f32 %v1290, %v1294
        %v1300 = vmul.f32 %v1291, %v1294
        %v1301 = vmul.f32 %v1292, %v1294
        %v1302 = vmul.f32 %v1293, %v1294
        %v1303 = vperm.slane %v1096, 1
        %v1304 = vmul.f32 %v1134, %v1303
        %v1305 = vmul.f32 %v1139, %v1303
        %v1306 = vmul.f32 %v1144, %v1303
        %v1307 = vmul.f32 %v1149, %v1303
        %v1308 = vmul.f32 %v1154, %v1303
        %v1309 = vmul.f32 %v1159, %v1303
        %v1310 = vmul.f32 %v1164, %v1303
        %v1311 = vmul.f32 %v1169, %v1303
        %v1312 = vperm.slane %v1099, 1
        %v1313 = vmul.f32 %v1182, %v1312
        %v1314 = vmul.f32 %v1186, %v1312
        %v1315 = vmul.f32 %v1190, %v1312
        %v1316 = vmul.f32 %v1194, %v1312
        %v1317 = vmul.f32 %v1198, %v1312
        %v1318 = vmul.f32 %v1202, %v1312
        %v1319 = vmul.f32 %v1206, %v1312
        %v1320 = vmul.f32 %v1210, %v1312
        %v1321 = vadd.f32 %v1304, %v1313
        %v1322 = vadd.f32 %v1305, %v1314
        %v1323 = vadd.f32 %v1306, %v1315
        %v1324 = vadd.f32 %v1307, %v1316
        %v1325 = vadd.f32 %v1308, %v1317
        %v1326 = vadd.f32 %v1309, %v1318
        %v1327 = vadd.f32 %v1310, %v1319
        %v1328 = vadd.f32 %v1311, %v1320
        %v1329 = vperm.slane %v1102, 1
        %v1330 = vmul.f32 %v1231, %v1329
        %v1331 = vmul.f32 %v1235, %v1329
        %v1332 = vmul.f32 %v1239, %v1329
        %v1333 = vmul.f32 %v1243, %v1329
        %v1334 = vmul.f32 %v1247, %v1329
        %v1335 = vmul.f32 %v1251, %v1329
        %v1336 = vmul.f32 %v1255, %v1329
        %v1337 = vmul.f32 %v1259, %v1329
        %v1338 = vadd.f32 %v1321, %v1330
        %v1339 = vadd.f32 %v1322, %v1331
        %v1340 = vadd.f32 %v1323, %v1332
        %v1341 = vadd.f32 %v1324, %v1333
        %v1342 = vadd.f32 %v1325, %v1334
        %v1343 = vadd.f32 %v1326, %v1335
        %v1344 = vadd.f32 %v1327, %v1336
        %v1345 = vadd.f32 %v1328, %v1337
        %v1346 = vand.u32 2147483647, %v1338
        %v1347 = vand.u32 2147483647, %v1339
        %v1348 = vand.u32 2147483647, %v1340
        %v1349 = vand.u32 2147483647, %v1341
        %v1350 = vand.u32 2147483647, %v1342
        %v1351 = vand.u32 2147483647, %v1343
        %v1352 = vand.u32 2147483647, %v1344
        %v1353 = vand.u32 2147483647, %v1345
        %v1354 = vmul.f32 %v1338, %v1346
        %v1355 = vmul.f32 %v1339, %v1347
        %v1356 = vmul.f32 %v1340, %v1348
        %v1357 = vmul.f32 %v1341, %v1349
        %v1358 = vmul.f32 %v1342, %v1350
        %v1359 = vmul.f32 %v1343, %v1351
        %v1360 = vmul.f32 %v1344, %v1352
        %v1361 = vmul.f32 %v1345, %v1353
        %v1362 = vperm.slane %v1130, 1
        %v1363 = vmul.f32 %v1354, %v1362
        %v1364 = vmul.f32 %v1355, %v1362
        %v1365 = vmul.f32 %v1356, %v1362
        %v1366 = vmul.f32 %v1357, %v1362
        %v1367 = vmul.f32 %v1358, %v1362
        %v1368 = vmul.f32 %v1359, %v1362
        %v1369 = vmul.f32 %v1360, %v1362
        %v1370 = vmul.f32 %v1361, %v1362
        %v1371 = vmax.f32 %v1295, %v1363
        %v1372 = vmax.f32 %v1296, %v1364
        %v1373 = vmax.f32 %v1297, %v1365
        %v1374 = vmax.f32 %v1298, %v1366
        %v1375 = vmax.f32 %v1299, %v1367
        %v1376 = vmax.f32 %v1300, %v1368
        %v1377 = vmax.f32 %v1301, %v1369
        %v1378 = vmax.f32 %v1302, %v1370
        %v1379 = vperm.slane %v1096, 2
        %v1380 = vmul.f32 %v1134, %v1379
        %v1381 = vmul.f32 %v1139, %v1379
        %v1382 = vmul.f32 %v1144, %v1379
        %v1383 = vmul.f32 %v1149, %v1379
        %v1384 = vmul.f32 %v1154, %v1379
        %v1385 = vmul.f32 %v1159, %v1379
        %v1386 = vmul.f32 %v1164, %v1379
        %v1387 = vmul.f32 %v1169, %v1379
        %v1388 = vperm.slane %v1099, 2
        %v1389 = vmul.f32 %v1182, %v1388
        %v1390 = vmul.f32 %v1186, %v1388
        %v1391 = vmul.f32 %v1190, %v1388
        %v1392 = vmul.f32 %v1194, %v1388
        %v1393 = vmul.f32 %v1198, %v1388
        %v1394 = vmul.f32 %v1202, %v1388
        %v1395 = vmul.f32 %v1206, %v1388
        %v1396 = vmul.f32 %v1210, %v1388
        %v1397 = vadd.f32 %v1380, %v1389
        %v1398 = vadd.f32 %v1381, %v1390
        %v1399 = vadd.f32 %v1382, %v1391
        %v1400 = vadd.f32 %v1383, %v1392
        %v1401 = vadd.f32 %v1384, %v1393
        %v1402 = vadd.f32 %v1385, %v1394
        %v1403 = vadd.f32 %v1386, %v1395
        %v1404 = vadd.f32 %v1387, %v1396
        %v1405 = vperm.slane %v1102, 2
        %v1406 = vmul.f32 %v1231, %v1405
        %v1407 = vmul.f32 %v1235, %v1405
        %v1408 = vmul.f32 %v1239, %v1405
        %v1409 = vmul.f32 %v1243, %v1405
        %v1410 = vmul.f32 %v1247, %v1405
        %v1411 = vmul.f32 %v1251, %v1405
        %v1412 = vmul.f32 %v1255, %v1405
        %v1413 = vmul.f32 %v1259, %v1405
        %v1414 = vadd.f32 %v1397, %v1406
        %v1415 = vadd.f32 %v1398, %v1407
        %v1416 = vadd.f32 %v1399, %v1408
        %v1417 = vadd.f32 %v1400, %v1409
        %v1418 = vadd.f32 %v1401, %v1410
        %v1419 = vadd.f32 %v1402, %v1411
        %v1420 = vadd.f32 %v1403, %v1412
        %v1421 = vadd.f32 %v1404, %v1413
        %v1422 = vand.u32 2147483647, %v1414
        %v1423 = vand.u32 2147483647, %v1415
        %v1424 = vand.u32 2147483647, %v1416
        %v1425 = vand.u32 2147483647, %v1417
        %v1426 = vand.u32 2147483647, %v1418
        %v1427 = vand.u32 2147483647, %v1419
        %v1428 = vand.u32 2147483647, %v1420
        %v1429 = vand.u32 2147483647, %v1421
        %v1430 = vmul.f32 %v1414, %v1422
        %v1431 = vmul.f32 %v1415, %v1423
        %v1432 = vmul.f32 %v1416, %v1424
        %v1433 = vmul.f32 %v1417, %v1425
        %v1434 = vmul.f32 %v1418, %v1426
        %v1435 = vmul.f32 %v1419, %v1427
        %v1436 = vmul.f32 %v1420, %v1428
        %v1437 = vmul.f32 %v1421, %v1429
        %v1438 = vperm.slane %v1130, 2
        %v1439 = vmul.f32 %v1430, %v1438
        %v1440 = vmul.f32 %v1431, %v1438
        %v1441 = vmul.f32 %v1432, %v1438
        %v1442 = vmul.f32 %v1433, %v1438
        %v1443 = vmul.f32 %v1434, %v1438
        %v1444 = vmul.f32 %v1435, %v1438
        %v1445 = vmul.f32 %v1436, %v1438
        %v1446 = vmul.f32 %v1437, %v1438
        %v1447 = vmax.f32 %v1371, %v1439
        %v1448 = vmax.f32 %v1372, %v1440
        %v1449 = vmax.f32 %v1373, %v1441
        %v1450 = vmax.f32 %v1374, %v1442
        %v1451 = vmax.f32 %v1375, %v1443
        %v1452 = vmax.f32 %v1376, %v1444
        %v1453 = vmax.f32 %v1377, %v1445
        %v1454 = vmax.f32 %v1378, %v1446
        %v1455 = vperm.slane %v1096, 3
        %v1456 = vmul.f32 %v1134, %v1455
        %v1457 = vmul.f32 %v1139, %v1455
        %v1458 = vmul.f32 %v1144, %v1455
        %v1459 = vmul.f32 %v1149, %v1455
        %v1460 = vmul.f32 %v1154, %v1455
        %v1461 = vmul.f32 %v1159, %v1455
        %v1462 = vmul.f32 %v1164, %v1455
        %v1463 = vmul.f32 %v1169, %v1455
        %v1464 = vperm.slane %v1099, 3
        %v1465 = vmul.f32 %v1182, %v1464
        %v1466 = vmul.f32 %v1186, %v1464
        %v1467 = vmul.f32 %v1190, %v1464
        %v1468 = vmul.f32 %v1194, %v1464
        %v1469 = vmul.f32 %v1198, %v1464
        %v1470 = vmul.f32 %v1202, %v1464
        %v1471 = vmul.f32 %v1206, %v1464
        %v1472 = vmul.f32 %v1210, %v1464
        %v1473 = vadd.f32 %v1456, %v1465
        %v1474 = vadd.f32 %v1457, %v1466
        %v1475 = vadd.f32 %v1458, %v1467
        %v1476 = vadd.f32 %v1459, %v1468
        %v1477 = vadd.f32 %v1460, %v1469
        %v1478 = vadd.f32 %v1461, %v1470
        %v1479 = vadd.f32 %v1462, %v1471
        %v1480 = vadd.f32 %v1463, %v1472
        %v1481 = vperm.slane %v1102, 3
        %v1482 = vmul.f32 %v1231, %v1481
        %v1483 = vmul.f32 %v1235, %v1481
        %v1484 = vmul.f32 %v1239, %v1481
        %v1485 = vmul.f32 %v1243, %v1481
        %v1486 = vmul.f32 %v1247, %v1481
        %v1487 = vmul.f32 %v1251, %v1481
        %v1488 = vmul.f32 %v1255, %v1481
        %v1489 = vmul.f32 %v1259, %v1481
        %v1490 = vadd.f32 %v1473, %v1482
        %v1491 = vadd.f32 %v1474, %v1483
        %v1492 = vadd.f32 %v1475, %v1484
        %v1493 = vadd.f32 %v1476, %v1485
        %v1494 = vadd.f32 %v1477, %v1486
        %v1495 = vadd.f32 %v1478, %v1487
        %v1496 = vadd.f32 %v1479, %v1488
        %v1497 = vadd.f32 %v1480, %v1489
        %v1498 = vand.u32 2147483647, %v1490
        %v1499 = vand.u32 2147483647, %v1491
        %v1500 = vand.u32 2147483647, %v1492
        %v1501 = vand.u32 2147483647, %v1493
        %v1502 = vand.u32 2147483647, %v1494
        %v1503 = vand.u32 2147483647, %v1495
        %v1504 = vand.u32 2147483647, %v1496
        %v1505 = vand.u32 2147483647, %v1497
        %v1506 = vmul.f32 %v1490, %v1498
        %v1507 = vmul.f32 %v1491, %v1499
        %v1508 = vmul.f32 %v1492, %v1500
        %v1509 = vmul.f32 %v1493, %v1501
        %v1510 = vmul.f32 %v1494, %v1502
        %v1511 = vmul.f32 %v1495, %v1503
        %v1512 = vmul.f32 %v1496, %v1504
        %v1513 = vmul.f32 %v1497, %v1505
        %v1514 = vperm.slane %v1130, 3
        %v1515 = vmul.f32 %v1506, %v1514
        %v1516 = vmul.f32 %v1507, %v1514
        %v1517 = vmul.f32 %v1508, %v1514
        %v1518 = vmul.f32 %v1509, %v1514
        %v1519 = vmul.f32 %v1510, %v1514
        %v1520 = vmul.f32 %v1511, %v1514
        %v1521 = vmul.f32 %v1512, %v1514
        %v1522 = vmul.f32 %v1513, %v1514
        %v1523 = vmax.f32 %v1447, %v1515
        %v1524 = vmax.f32 %v1448, %v1516
        %v1525 = vmax.f32 %v1449, %v1517
        %v1526 = vmax.f32 %v1450, %v1518
        %v1527 = vmax.f32 %v1451, %v1519
        %v1528 = vmax.f32 %v1452, %v1520
        %v1529 = vmax.f32 %v1453, %v1521
        %v1530 = vmax.f32 %v1454, %v1522
        %v1531 = vperm.slane %v1096, 4
        %v1532 = vmul.f32 %v1134, %v1531
        %v1533 = vmul.f32 %v1139, %v1531
        %v1534 = vmul.f32 %v1144, %v1531
        %v1535 = vmul.f32 %v1149, %v1531
        %v1536 = vmul.f32 %v1154, %v1531
        %v1537 = vmul.f32 %v1159, %v1531
        %v1538 = vmul.f32 %v1164, %v1531
        %v1539 = vmul.f32 %v1169, %v1531
        %v1540 = vperm.slane %v1099, 4
        %v1541 = vmul.f32 %v1182, %v1540
        %v1542 = vmul.f32 %v1186, %v1540
        %v1543 = vmul.f32 %v1190, %v1540
        %v1544 = vmul.f32 %v1194, %v1540
        %v1545 = vmul.f32 %v1198, %v1540
        %v1546 = vmul.f32 %v1202, %v1540
        %v1547 = vmul.f32 %v1206, %v1540
        %v1548 = vmul.f32 %v1210, %v1540
        %v1549 = vadd.f32 %v1532, %v1541
        %v1550 = vadd.f32 %v1533, %v1542
        %v1551 = vadd.f32 %v1534, %v1543
        %v1552 = vadd.f32 %v1535, %v1544
        %v1553 = vadd.f32 %v1536, %v1545
        %v1554 = vadd.f32 %v1537, %v1546
        %v1555 = vadd.f32 %v1538, %v1547
        %v1556 = vadd.f32 %v1539, %v1548
        %v1557 = vperm.slane %v1102, 4
        %v1558 = vmul.f32 %v1231, %v1557
        %v1559 = vmul.f32 %v1235, %v1557
        %v1560 = vmul.f32 %v1239, %v1557
        %v1561 = vmul.f32 %v1243, %v1557
        %v1562 = vmul.f32 %v1247, %v1557
        %v1563 = vmul.f32 %v1251, %v1557
        %v1564 = vmul.f32 %v1255, %v1557
        %v1565 = vmul.f32 %v1259, %v1557
        %v1566 = vadd.f32 %v1549, %v1558
        %v1567 = vadd.f32 %v1550, %v1559
        %v1568 = vadd.f32 %v1551, %v1560
        %v1569 = vadd.f32 %v1552, %v1561
        %v1570 = vadd.f32 %v1553, %v1562
        %v1571 = vadd.f32 %v1554, %v1563
        %v1572 = vadd.f32 %v1555, %v1564
        %v1573 = vadd.f32 %v1556, %v1565
        %v1574 = vand.u32 2147483647, %v1566
        %v1575 = vand.u32 2147483647, %v1567
        %v1576 = vand.u32 2147483647, %v1568
        %v1577 = vand.u32 2147483647, %v1569
        %v1578 = vand.u32 2147483647, %v1570
        %v1579 = vand.u32 2147483647, %v1571
        %v1580 = vand.u32 2147483647, %v1572
        %v1581 = vand.u32 2147483647, %v1573
        %v1582 = vmul.f32 %v1566, %v1574
        %v1583 = vmul.f32 %v1567, %v1575
        %v1584 = vmul.f32 %v1568, %v1576
        %v1585 = vmul.f32 %v1569, %v1577
        %v1586 = vmul.f32 %v1570, %v1578
        %v1587 = vmul.f32 %v1571, %v1579
        %v1588 = vmul.f32 %v1572, %v1580
        %v1589 = vmul.f32 %v1573, %v1581
        %v1590 = vperm.slane %v1130, 4
        %v1591 = vmul.f32 %v1582, %v1590
        %v1592 = vmul.f32 %v1583, %v1590
        %v1593 = vmul.f32 %v1584, %v1590
        %v1594 = vmul.f32 %v1585, %v1590
        %v1595 = vmul.f32 %v1586, %v1590
        %v1596 = vmul.f32 %v1587, %v1590
        %v1597 = vmul.f32 %v1588, %v1590
        %v1598 = vmul.f32 %v1589, %v1590
        %v1599 = vmax.f32 %v1523, %v1591
        %v1600 = vmax.f32 %v1524, %v1592
        %v1601 = vmax.f32 %v1525, %v1593
        %v1602 = vmax.f32 %v1526, %v1594
        %v1603 = vmax.f32 %v1527, %v1595
        %v1604 = vmax.f32 %v1528, %v1596
        %v1605 = vmax.f32 %v1529, %v1597
        %v1606 = vmax.f32 %v1530, %v1598
        %v1607 = vperm.slane %v1096, 5
        %v1608 = vmul.f32 %v1134, %v1607
        %v1609 = vmul.f32 %v1139, %v1607
        %v1610 = vmul.f32 %v1144, %v1607
        %v1611 = vmul.f32 %v1149, %v1607
        %v1612 = vmul.f32 %v1154, %v1607
        %v1613 = vmul.f32 %v1159, %v1607
        %v1614 = vmul.f32 %v1164, %v1607
        %v1615 = vmul.f32 %v1169, %v1607
        %v1616 = vperm.slane %v1099, 5
        %v1617 = vmul.f32 %v1182, %v1616
        %v1618 = vmul.f32 %v1186, %v1616
        %v1619 = vmul.f32 %v1190, %v1616
        %v1620 = vmul.f32 %v1194, %v1616
        %v1621 = vmul.f32 %v1198, %v1616
        %v1622 = vmul.f32 %v1202, %v1616
        %v1623 = vmul.f32 %v1206, %v1616
        %v1624 = vmul.f32 %v1210, %v1616
        %v1625 = vadd.f32 %v1608, %v1617
        %v1626 = vadd.f32 %v1609, %v1618
        %v1627 = vadd.f32 %v1610, %v1619
        %v1628 = vadd.f32 %v1611, %v1620
        %v1629 = vadd.f32 %v1612, %v1621
        %v1630 = vadd.f32 %v1613, %v1622
        %v1631 = vadd.f32 %v1614, %v1623
        %v1632 = vadd.f32 %v1615, %v1624
        %v1633 = vperm.slane %v1102, 5
        %v1634 = vmul.f32 %v1231, %v1633
        %v1635 = vmul.f32 %v1235, %v1633
        %v1636 = vmul.f32 %v1239, %v1633
        %v1637 = vmul.f32 %v1243, %v1633
        %v1638 = vmul.f32 %v1247, %v1633
        %v1639 = vmul.f32 %v1251, %v1633
        %v1640 = vmul.f32 %v1255, %v1633
        %v1641 = vmul.f32 %v1259, %v1633
        %v1642 = vadd.f32 %v1625, %v1634
        %v1643 = vadd.f32 %v1626, %v1635
        %v1644 = vadd.f32 %v1627, %v1636
        %v1645 = vadd.f32 %v1628, %v1637
        %v1646 = vadd.f32 %v1629, %v1638
        %v1647 = vadd.f32 %v1630, %v1639
        %v1648 = vadd.f32 %v1631, %v1640
        %v1649 = vadd.f32 %v1632, %v1641
        %v1650 = vand.u32 2147483647, %v1642
        %v1651 = vand.u32 2147483647, %v1643
        %v1652 = vand.u32 2147483647, %v1644
        %v1653 = vand.u32 2147483647, %v1645
        %v1654 = vand.u32 2147483647, %v1646
        %v1655 = vand.u32 2147483647, %v1647
        %v1656 = vand.u32 2147483647, %v1648
        %v1657 = vand.u32 2147483647, %v1649
        %v1658 = vmul.f32 %v1642, %v1650
        %v1659 = vmul.f32 %v1643, %v1651
        %v1660 = vmul.f32 %v1644, %v1652
        %v1661 = vmul.f32 %v1645, %v1653
        %v1662 = vmul.f32 %v1646, %v1654
        %v1663 = vmul.f32 %v1647, %v1655
        %v1664 = vmul.f32 %v1648, %v1656
        %v1665 = vmul.f32 %v1649, %v1657
        %v1666 = vperm.slane %v1130, 5
        %v1667 = vmul.f32 %v1658, %v1666
        %v1668 = vmul.f32 %v1659, %v1666
        %v1669 = vmul.f32 %v1660, %v1666
        %v1670 = vmul.f32 %v1661, %v1666
        %v1671 = vmul.f32 %v1662, %v1666
        %v1672 = vmul.f32 %v1663, %v1666
        %v1673 = vmul.f32 %v1664, %v1666
        %v1674 = vmul.f32 %v1665, %v1666
        %v1675 = vmax.f32 %v1599, %v1667
        %v1676 = vmax.f32 %v1600, %v1668
        %v1677 = vmax.f32 %v1601, %v1669
        %v1678 = vmax.f32 %v1602, %v1670
        %v1679 = vmax.f32 %v1603, %v1671
        %v1680 = vmax.f32 %v1604, %v1672
        %v1681 = vmax.f32 %v1605, %v1673
        %v1682 = vmax.f32 %v1606, %v1674
        %v1683 = vperm.slane %v1096, 6
        %v1684 = vmul.f32 %v1134, %v1683
        %v1685 = vmul.f32 %v1139, %v1683
        %v1686 = vmul.f32 %v1144, %v1683
        %v1687 = vmul.f32 %v1149, %v1683
        %v1688 = vmul.f32 %v1154, %v1683
        %v1689 = vmul.f32 %v1159, %v1683
        %v1690 = vmul.f32 %v1164, %v1683
        %v1691 = vmul.f32 %v1169, %v1683
        %v1692 = vperm.slane %v1099, 6
        %v1693 = vmul.f32 %v1182, %v1692
        %v1694 = vmul.f32 %v1186, %v1692
        %v1695 = vmul.f32 %v1190, %v1692
        %v1696 = vmul.f32 %v1194, %v1692
        %v1697 = vmul.f32 %v1198, %v1692
        %v1698 = vmul.f32 %v1202, %v1692
        %v1699 = vmul.f32 %v1206, %v1692
        %v1700 = vmul.f32 %v1210, %v1692
        %v1701 = vadd.f32 %v1684, %v1693
        %v1702 = vadd.f32 %v1685, %v1694
        %v1703 = vadd.f32 %v1686, %v1695
        %v1704 = vadd.f32 %v1687, %v1696
        %v1705 = vadd.f32 %v1688, %v1697
        %v1706 = vadd.f32 %v1689, %v1698
        %v1707 = vadd.f32 %v1690, %v1699
        %v1708 = vadd.f32 %v1691, %v1700
        %v1709 = vperm.slane %v1102, 6
        %v1710 = vmul.f32 %v1231, %v1709
        %v1711 = vmul.f32 %v1235, %v1709
        %v1712 = vmul.f32 %v1239, %v1709
        %v1713 = vmul.f32 %v1243, %v1709
        %v1714 = vmul.f32 %v1247, %v1709
        %v1715 = vmul.f32 %v1251, %v1709
        %v1716 = vmul.f32 %v1255, %v1709
        %v1717 = vmul.f32 %v1259, %v1709
        %v1718 = vadd.f32 %v1701, %v1710
        %v1719 = vadd.f32 %v1702, %v1711
        %v1720 = vadd.f32 %v1703, %v1712
        %v1721 = vadd.f32 %v1704, %v1713
        %v1722 = vadd.f32 %v1705, %v1714
        %v1723 = vadd.f32 %v1706, %v1715
        %v1724 = vadd.f32 %v1707, %v1716
        %v1725 = vadd.f32 %v1708, %v1717
        %v1726 = vand.u32 2147483647, %v1718
        %v1727 = vand.u32 2147483647, %v1719
        %v1728 = vand.u32 2147483647, %v1720
        %v1729 = vand.u32 2147483647, %v1721
        %v1730 = vand.u32 2147483647, %v1722
        %v1731 = vand.u32 2147483647, %v1723
        %v1732 = vand.u32 2147483647, %v1724
        %v1733 = vand.u32 2147483647, %v1725
        %v1734 = vmul.f32 %v1718, %v1726
        %v1735 = vmul.f32 %v1719, %v1727
        %v1736 = vmul.f32 %v1720, %v1728
        %v1737 = vmul.f32 %v1721, %v1729
        %v1738 = vmul.f32 %v1722, %v1730
        %v1739 = vmul.f32 %v1723, %v1731
        %v1740 = vmul.f32 %v1724, %v1732
        %v1741 = vmul.f32 %v1725, %v1733
        %v1742 = vperm.slane %v1130, 6
        %v1743 = vmul.f32 %v1734, %v1742
        %v1744 = vmul.f32 %v1735, %v1742
        %v1745 = vmul.f32 %v1736, %v1742
        %v1746 = vmul.f32 %v1737, %v1742
        %v1747 = vmul.f32 %v1738, %v1742
        %v1748 = vmul.f32 %v1739, %v1742
        %v1749 = vmul.f32 %v1740, %v1742
        %v1750 = vmul.f32 %v1741, %v1742
        %v1751 = vmax.f32 %v1675, %v1743
        %v1752 = vmax.f32 %v1676, %v1744
        %v1753 = vmax.f32 %v1677, %v1745
        %v1754 = vmax.f32 %v1678, %v1746
        %v1755 = vmax.f32 %v1679, %v1747
        %v1756 = vmax.f32 %v1680, %v1748
        %v1757 = vmax.f32 %v1681, %v1749
        %v1758 = vmax.f32 %v1682, %v1750
        %v1759 = vperm.slane %v1096, 7
        %v1760 = vmul.f32 %v1134, %v1759
        %v1761 = vmul.f32 %v1139, %v1759
        %v1762 = vmul.f32 %v1144, %v1759
        %v1763 = vmul.f32 %v1149, %v1759
        %v1764 = vmul.f32 %v1154, %v1759
        %v1765 = vmul.f32 %v1159, %v1759
        %v1766 = vmul.f32 %v1164, %v1759
        %v1767 = vmul.f32 %v1169, %v1759
        %v1768 = vperm.slane %v1099, 7
        %v1769 = vmul.f32 %v1182, %v1768
        %v1770 = vmul.f32 %v1186, %v1768
        %v1771 = vmul.f32 %v1190, %v1768
        %v1772 = vmul.f32 %v1194, %v1768
        %v1773 = vmul.f32 %v1198, %v1768
        %v1774 = vmul.f32 %v1202, %v1768
        %v1775 = vmul.f32 %v1206, %v1768
        %v1776 = vmul.f32 %v1210, %v1768
        %v1777 = vadd.f32 %v1760, %v1769
        %v1778 = vadd.f32 %v1761, %v1770
        %v1779 = vadd.f32 %v1762, %v1771
        %v1780 = vadd.f32 %v1763, %v1772
        %v1781 = vadd.f32 %v1764, %v1773
        %v1782 = vadd.f32 %v1765, %v1774
        %v1783 = vadd.f32 %v1766, %v1775
        %v1784 = vadd.f32 %v1767, %v1776
        %v1785 = vperm.slane %v1102, 7
        %v1786 = vmul.f32 %v1231, %v1785
        %v1787 = vmul.f32 %v1235, %v1785
        %v1788 = vmul.f32 %v1239, %v1785
        %v1789 = vmul.f32 %v1243, %v1785
        %v1790 = vmul.f32 %v1247, %v1785
        %v1791 = vmul.f32 %v1251, %v1785
        %v1792 = vmul.f32 %v1255, %v1785
        %v1793 = vmul.f32 %v1259, %v1785
        %v1794 = vadd.f32 %v1777, %v1786
        %v1795 = vadd.f32 %v1778, %v1787
        %v1796 = vadd.f32 %v1779, %v1788
        %v1797 = vadd.f32 %v1780, %v1789
        %v1798 = vadd.f32 %v1781, %v1790
        %v1799 = vadd.f32 %v1782, %v1791
        %v1800 = vadd.f32 %v1783, %v1792
        %v1801 = vadd.f32 %v1784, %v1793
        %v1802 = vand.u32 2147483647, %v1794
        %v1803 = vand.u32 2147483647, %v1795
        %v1804 = vand.u32 2147483647, %v1796
        %v1805 = vand.u32 2147483647, %v1797
        %v1806 = vand.u32 2147483647, %v1798
        %v1807 = vand.u32 2147483647, %v1799
        %v1808 = vand.u32 2147483647, %v1800
        %v1809 = vand.u32 2147483647, %v1801
        %v1810 = vmul.f32 %v1794, %v1802
        %v1811 = vmul.f32 %v1795, %v1803
        %v1812 = vmul.f32 %v1796, %v1804
        %v1813 = vmul.f32 %v1797, %v1805
        %v1814 = vmul.f32 %v1798, %v1806
        %v1815 = vmul.f32 %v1799, %v1807
        %v1816 = vmul.f32 %v1800, %v1808
        %v1817 = vmul.f32 %v1801, %v1809
        %v1818 = vperm.slane %v1130, 7
        %v1819 = vmul.f32 %v1810, %v1818
        %v1820 = vmul.f32 %v1811, %v1818
        %v1821 = vmul.f32 %v1812, %v1818
        %v1822 = vmul.f32 %v1813, %v1818
        %v1823 = vmul.f32 %v1814, %v1818
        %v1824 = vmul.f32 %v1815, %v1818
        %v1825 = vmul.f32 %v1816, %v1818
        %v1826 = vmul.f32 %v1817, %v1818
        %v1827 = vmax.f32 %v1751, %v1819
        %v1828 = vmax.f32 %v1752, %v1820
        %v1829 = vmax.f32 %v1753, %v1821
        %v1830 = vmax.f32 %v1754, %v1822
        %v1831 = vmax.f32 %v1755, %v1823
        %v1832 = vmax.f32 %v1756, %v1824
        %v1833 = vmax.f32 %v1757, %v1825
        %v1834 = vmax.f32 %v1758, %v1826
        %v1835 = vmul.f32 %v1097, %v1097
        %v1836 = vmul.f32 %v1100, %v1100
        %v1837 = vadd.f32 %v1835, %v1836
        %v1838 = vmul.f32 %v1103, %v1103
        %v1839 = vadd.f32 %v1837, %v1838
        %v1840 = vrsqrt.pop %v1839
        %v1841 = vmul.f32 %v1840, %v1839
        %v1842 = vmul.f32 %v1841, %v1840
        %v1843 = vmul.f32 0.5, %v1842
        %v1844 = vsub.f32 1.5, %v1843
        %v1845 = vmul.f32 %v1840, %v1844
        %v1846 = vmul.f32 %v1839, %v1845
        %vm1847 = vcmp.eq.f32.partialorder %v1839, inf
        %v1848 = vsel %vm1847, %v1839, %v1846
        %vm1849 = vcmp.eq.f32.partialorder %v1839, 0.0
        %v1850 = vand.u32 %v1839, 2147483648
        %v1851 = vsel %vm1849, %v1850, %v1848
        %v1852 = vadd.f32 %v1851, 1e-08
        %v1853 = vrcp.pop %v1852
        %v1854 = vperm.slane %v1097, 0
        %v1855 = vmul.f32 %v1134, %v1854
        %v1856 = vmul.f32 %v1139, %v1854
        %v1857 = vmul.f32 %v1144, %v1854
        %v1858 = vmul.f32 %v1149, %v1854
        %v1859 = vmul.f32 %v1154, %v1854
        %v1860 = vmul.f32 %v1159, %v1854
        %v1861 = vmul.f32 %v1164, %v1854
        %v1862 = vmul.f32 %v1169, %v1854
        %v1863 = vperm.slane %v1100, 0
        %v1864 = vmul.f32 %v1182, %v1863
        %v1865 = vmul.f32 %v1186, %v1863
        %v1866 = vmul.f32 %v1190, %v1863
        %v1867 = vmul.f32 %v1194, %v1863
        %v1868 = vmul.f32 %v1198, %v1863
        %v1869 = vmul.f32 %v1202, %v1863
        %v1870 = vmul.f32 %v1206, %v1863
        %v1871 = vmul.f32 %v1210, %v1863
        %v1872 = vadd.f32 %v1855, %v1864
        %v1873 = vadd.f32 %v1856, %v1865
        %v1874 = vadd.f32 %v1857, %v1866
        %v1875 = vadd.f32 %v1858, %v1867
        %v1876 = vadd.f32 %v1859, %v1868
        %v1877 = vadd.f32 %v1860, %v1869
        %v1878 = vadd.f32 %v1861, %v1870
        %v1879 = vadd.f32 %v1862, %v1871
        %v1880 = vperm.slane %v1103, 0
        %v1881 = vmul.f32 %v1231, %v1880
        %v1882 = vmul.f32 %v1235, %v1880
        %v1883 = vmul.f32 %v1239, %v1880
        %v1884 = vmul.f32 %v1243, %v1880
        %v1885 = vmul.f32 %v1247, %v1880
        %v1886 = vmul.f32 %v1251, %v1880
        %v1887 = vmul.f32 %v1255, %v1880
        %v1888 = vmul.f32 %v1259, %v1880
        %v1889 = vadd.f32 %v1872, %v1881
        %v1890 = vadd.f32 %v1873, %v1882
        %v1891 = vadd.f32 %v1874, %v1883
        %v1892 = vadd.f32 %v1875, %v1884
        %v1893 = vadd.f32 %v1876, %v1885
        %v1894 = vadd.f32 %v1877, %v1886
        %v1895 = vadd.f32 %v1878, %v1887
        %v1896 = vadd.f32 %v1879, %v1888
        %v1897 = vand.u32 2147483647, %v1889
        %v1898 = vand.u32 2147483647, %v1890
        %v1899 = vand.u32 2147483647, %v1891
        %v1900 = vand.u32 2147483647, %v1892
        %v1901 = vand.u32 2147483647, %v1893
        %v1902 = vand.u32 2147483647, %v1894
        %v1903 = vand.u32 2147483647, %v1895
        %v1904 = vand.u32 2147483647, %v1896
        %v1905 = vmul.f32 %v1889, %v1897
        %v1906 = vmul.f32 %v1890, %v1898
        %v1907 = vmul.f32 %v1891, %v1899
        %v1908 = vmul.f32 %v1892, %v1900
        %v1909 = vmul.f32 %v1893, %v1901
        %v1910 = vmul.f32 %v1894, %v1902
        %v1911 = vmul.f32 %v1895, %v1903
        %v1912 = vmul.f32 %v1896, %v1904
        %v1913 = vperm.slane %v1853, 0
        %v1914 = vmul.f32 %v1905, %v1913
        %v1915 = vmul.f32 %v1906, %v1913
        %v1916 = vmul.f32 %v1907, %v1913
        %v1917 = vmul.f32 %v1908, %v1913
        %v1918 = vmul.f32 %v1909, %v1913
        %v1919 = vmul.f32 %v1910, %v1913
        %v1920 = vmul.f32 %v1911, %v1913
        %v1921 = vmul.f32 %v1912, %v1913
        %v1922 = vmax.f32 %v1827, %v1914
        %v1923 = vmax.f32 %v1828, %v1915
        %v1924 = vmax.f32 %v1829, %v1916
        %v1925 = vmax.f32 %v1830, %v1917
        %v1926 = vmax.f32 %v1831, %v1918
        %v1927 = vmax.f32 %v1832, %v1919
        %v1928 = vmax.f32 %v1833, %v1920
        %v1929 = vmax.f32 %v1834, %v1921
        %v1930 = vperm.slane %v1097, 1
        %v1931 = vmul.f32 %v1134, %v1930
        %v1932 = vmul.f32 %v1139, %v1930
        %v1933 = vmul.f32 %v1144, %v1930
        %v1934 = vmul.f32 %v1149, %v1930
        %v1935 = vmul.f32 %v1154, %v1930
        %v1936 = vmul.f32 %v1159, %v1930
        %v1937 = vmul.f32 %v1164, %v1930
        %v1938 = vmul.f32 %v1169, %v1930
        %v1939 = vperm.slane %v1100, 1
        %v1940 = vmul.f32 %v1182, %v1939
        %v1941 = vmul.f32 %v1186, %v1939
        %v1942 = vmul.f32 %v1190, %v1939
        %v1943 = vmul.f32 %v1194, %v1939
        %v1944 = vmul.f32 %v1198, %v1939
        %v1945 = vmul.f32 %v1202, %v1939
        %v1946 = vmul.f32 %v1206, %v1939
        %v1947 = vmul.f32 %v1210, %v1939
        %v1948 = vadd.f32 %v1931, %v1940
        %v1949 = vadd.f32 %v1932, %v1941
        %v1950 = vadd.f32 %v1933, %v1942
        %v1951 = vadd.f32 %v1934, %v1943
        %v1952 = vadd.f32 %v1935, %v1944
        %v1953 = vadd.f32 %v1936, %v1945
        %v1954 = vadd.f32 %v1937, %v1946
        %v1955 = vadd.f32 %v1938, %v1947
        %v1956 = vperm.slane %v1103, 1
        %v1957 = vmul.f32 %v1231, %v1956
        %v1958 = vmul.f32 %v1235, %v1956
        %v1959 = vmul.f32 %v1239, %v1956
        %v1960 = vmul.f32 %v1243, %v1956
        %v1961 = vmul.f32 %v1247, %v1956
        %v1962 = vmul.f32 %v1251, %v1956
        %v1963 = vmul.f32 %v1255, %v1956
        %v1964 = vmul.f32 %v1259, %v1956
        %v1965 = vadd.f32 %v1948, %v1957
        %v1966 = vadd.f32 %v1949, %v1958
        %v1967 = vadd.f32 %v1950, %v1959
        %v1968 = vadd.f32 %v1951, %v1960
        %v1969 = vadd.f32 %v1952, %v1961
        %v1970 = vadd.f32 %v1953, %v1962
        %v1971 = vadd.f32 %v1954, %v1963
        %v1972 = vadd.f32 %v1955, %v1964
        %v1973 = vand.u32 2147483647, %v1965
        %v1974 = vand.u32 2147483647, %v1966
        %v1975 = vand.u32 2147483647, %v1967
        %v1976 = vand.u32 2147483647, %v1968
        %v1977 = vand.u32 2147483647, %v1969
        %v1978 = vand.u32 2147483647, %v1970
        %v1979 = vand.u32 2147483647, %v1971
        %v1980 = vand.u32 2147483647, %v1972
        %v1981 = vmul.f32 %v1965, %v1973
        %v1982 = vmul.f32 %v1966, %v1974
        %v1983 = vmul.f32 %v1967, %v1975
        %v1984 = vmul.f32 %v1968, %v1976
        %v1985 = vmul.f32 %v1969, %v1977
        %v1986 = vmul.f32 %v1970, %v1978
        %v1987 = vmul.f32 %v1971, %v1979
        %v1988 = vmul.f32 %v1972, %v1980
        %v1989 = vperm.slane %v1853, 1
        %v1990 = vmul.f32 %v1981, %v1989
        %v1991 = vmul.f32 %v1982, %v1989
        %v1992 = vmul.f32 %v1983, %v1989
        %v1993 = vmul.f32 %v1984, %v1989
        %v1994 = vmul.f32 %v1985, %v1989
        %v1995 = vmul.f32 %v1986, %v1989
        %v1996 = vmul.f32 %v1987, %v1989
        %v1997 = vmul.f32 %v1988, %v1989
        %v1998 = vmax.f32 %v1922, %v1990
        %v1999 = vmax.f32 %v1923, %v1991
        %v2000 = vmax.f32 %v1924, %v1992
        %v2001 = vmax.f32 %v1925, %v1993
        %v2002 = vmax.f32 %v1926, %v1994
        %v2003 = vmax.f32 %v1927, %v1995
        %v2004 = vmax.f32 %v1928, %v1996
        %v2005 = vmax.f32 %v1929, %v1997
        %v2006 = vperm.slane %v1097, 2
        %v2007 = vmul.f32 %v1134, %v2006
        %v2008 = vmul.f32 %v1139, %v2006
        %v2009 = vmul.f32 %v1144, %v2006
        %v2010 = vmul.f32 %v1149, %v2006
        %v2011 = vmul.f32 %v1154, %v2006
        %v2012 = vmul.f32 %v1159, %v2006
        %v2013 = vmul.f32 %v1164, %v2006
        %v2014 = vmul.f32 %v1169, %v2006
        %v2015 = vperm.slane %v1100, 2
        %v2016 = vmul.f32 %v1182, %v2015
        %v2017 = vmul.f32 %v1186, %v2015
        %v2018 = vmul.f32 %v1190, %v2015
        %v2019 = vmul.f32 %v1194, %v2015
        %v2020 = vmul.f32 %v1198, %v2015
        %v2021 = vmul.f32 %v1202, %v2015
        %v2022 = vmul.f32 %v1206, %v2015
        %v2023 = vmul.f32 %v1210, %v2015
        %v2024 = vadd.f32 %v2007, %v2016
        %v2025 = vadd.f32 %v2008, %v2017
        %v2026 = vadd.f32 %v2009, %v2018
        %v2027 = vadd.f32 %v2010, %v2019
        %v2028 = vadd.f32 %v2011, %v2020
        %v2029 = vadd.f32 %v2012, %v2021
        %v2030 = vadd.f32 %v2013, %v2022
        %v2031 = vadd.f32 %v2014, %v2023
        %v2032 = vperm.slane %v1103, 2
        %v2033 = vmul.f32 %v1231, %v2032
        %v2034 = vmul.f32 %v1235, %v2032
        %v2035 = vmul.f32 %v1239, %v2032
        %v2036 = vmul.f32 %v1243, %v2032
        %v2037 = vmul.f32 %v1247, %v2032
        %v2038 = vmul.f32 %v1251, %v2032
        %v2039 = vmul.f32 %v1255, %v2032
        %v2040 = vmul.f32 %v1259, %v2032
        %v2041 = vadd.f32 %v2024, %v2033
        %v2042 = vadd.f32 %v2025, %v2034
        %v2043 = vadd.f32 %v2026, %v2035
        %v2044 = vadd.f32 %v2027, %v2036
        %v2045 = vadd.f32 %v2028, %v2037
        %v2046 = vadd.f32 %v2029, %v2038
        %v2047 = vadd.f32 %v2030, %v2039
        %v2048 = vadd.f32 %v2031, %v2040
        %v2049 = vand.u32 2147483647, %v2041
        %v2050 = vand.u32 2147483647, %v2042
        %v2051 = vand.u32 2147483647, %v2043
        %v2052 = vand.u32 2147483647, %v2044
        %v2053 = vand.u32 2147483647, %v2045
        %v2054 = vand.u32 2147483647, %v2046
        %v2055 = vand.u32 2147483647, %v2047
        %v2056 = vand.u32 2147483647, %v2048
        %v2057 = vmul.f32 %v2041, %v2049
        %v2058 = vmul.f32 %v2042, %v2050
        %v2059 = vmul.f32 %v2043, %v2051
        %v2060 = vmul.f32 %v2044, %v2052
        %v2061 = vmul.f32 %v2045, %v2053
        %v2062 = vmul.f32 %v2046, %v2054
        %v2063 = vmul.f32 %v2047, %v2055
        %v2064 = vmul.f32 %v2048, %v2056
        %v2065 = vperm.slane %v1853, 2
        %v2066 = vmul.f32 %v2057, %v2065
        %v2067 = vmul.f32 %v2058, %v2065
        %v2068 = vmul.f32 %v2059, %v2065
        %v2069 = vmul.f32 %v2060, %v2065
        %v2070 = vmul.f32 %v2061, %v2065
        %v2071 = vmul.f32 %v2062, %v2065
        %v2072 = vmul.f32 %v2063, %v2065
        %v2073 = vmul.f32 %v2064, %v2065
        %v2074 = vmax.f32 %v1998, %v2066
        %v2075 = vmax.f32 %v1999, %v2067
        %v2076 = vmax.f32 %v2000, %v2068
        %v2077 = vmax.f32 %v2001, %v2069
        %v2078 = vmax.f32 %v2002, %v2070
        %v2079 = vmax.f32 %v2003, %v2071
        %v2080 = vmax.f32 %v2004, %v2072
        %v2081 = vmax.f32 %v2005, %v2073
        %v2082 = vperm.slane %v1097, 3
        %v2083 = vmul.f32 %v1134, %v2082
        %v2084 = vmul.f32 %v1139, %v2082
        %v2085 = vmul.f32 %v1144, %v2082
        %v2086 = vmul.f32 %v1149, %v2082
        %v2087 = vmul.f32 %v1154, %v2082
        %v2088 = vmul.f32 %v1159, %v2082
        %v2089 = vmul.f32 %v1164, %v2082
        %v2090 = vmul.f32 %v1169, %v2082
        %v2091 = vperm.slane %v1100, 3
        %v2092 = vmul.f32 %v1182, %v2091
        %v2093 = vmul.f32 %v1186, %v2091
        %v2094 = vmul.f32 %v1190, %v2091
        %v2095 = vmul.f32 %v1194, %v2091
        %v2096 = vmul.f32 %v1198, %v2091
        %v2097 = vmul.f32 %v1202, %v2091
        %v2098 = vmul.f32 %v1206, %v2091
        %v2099 = vmul.f32 %v1210, %v2091
        %v2100 = vadd.f32 %v2083, %v2092
        %v2101 = vadd.f32 %v2084, %v2093
        %v2102 = vadd.f32 %v2085, %v2094
        %v2103 = vadd.f32 %v2086, %v2095
        %v2104 = vadd.f32 %v2087, %v2096
        %v2105 = vadd.f32 %v2088, %v2097
        %v2106 = vadd.f32 %v2089, %v2098
        %v2107 = vadd.f32 %v2090, %v2099
        %v2108 = vperm.slane %v1103, 3
        %v2109 = vmul.f32 %v1231, %v2108
        %v2110 = vmul.f32 %v1235, %v2108
        %v2111 = vmul.f32 %v1239, %v2108
        %v2112 = vmul.f32 %v1243, %v2108
        %v2113 = vmul.f32 %v1247, %v2108
        %v2114 = vmul.f32 %v1251, %v2108
        %v2115 = vmul.f32 %v1255, %v2108
        %v2116 = vmul.f32 %v1259, %v2108
        %v2117 = vadd.f32 %v2100, %v2109
        %v2118 = vadd.f32 %v2101, %v2110
        %v2119 = vadd.f32 %v2102, %v2111
        %v2120 = vadd.f32 %v2103, %v2112
        %v2121 = vadd.f32 %v2104, %v2113
        %v2122 = vadd.f32 %v2105, %v2114
        %v2123 = vadd.f32 %v2106, %v2115
        %v2124 = vadd.f32 %v2107, %v2116
        %v2125 = vand.u32 2147483647, %v2117
        %v2126 = vand.u32 2147483647, %v2118
        %v2127 = vand.u32 2147483647, %v2119
        %v2128 = vand.u32 2147483647, %v2120
        %v2129 = vand.u32 2147483647, %v2121
        %v2130 = vand.u32 2147483647, %v2122
        %v2131 = vand.u32 2147483647, %v2123
        %v2132 = vand.u32 2147483647, %v2124
        %v2133 = vmul.f32 %v2117, %v2125
        %v2134 = vmul.f32 %v2118, %v2126
        %v2135 = vmul.f32 %v2119, %v2127
        %v2136 = vmul.f32 %v2120, %v2128
        %v2137 = vmul.f32 %v2121, %v2129
        %v2138 = vmul.f32 %v2122, %v2130
        %v2139 = vmul.f32 %v2123, %v2131
        %v2140 = vmul.f32 %v2124, %v2132
        %v2141 = vperm.slane %v1853, 3
        %v2142 = vmul.f32 %v2133, %v2141
        %v2143 = vmul.f32 %v2134, %v2141
        %v2144 = vmul.f32 %v2135, %v2141
        %v2145 = vmul.f32 %v2136, %v2141
        %v2146 = vmul.f32 %v2137, %v2141
        %v2147 = vmul.f32 %v2138, %v2141
        %v2148 = vmul.f32 %v2139, %v2141
        %v2149 = vmul.f32 %v2140, %v2141
        %v2150 = vmax.f32 %v2074, %v2142
        %v2151 = vmax.f32 %v2075, %v2143
        %v2152 = vmax.f32 %v2076, %v2144
        %v2153 = vmax.f32 %v2077, %v2145
        %v2154 = vmax.f32 %v2078, %v2146
        %v2155 = vmax.f32 %v2079, %v2147
        %v2156 = vmax.f32 %v2080, %v2148
        %v2157 = vmax.f32 %v2081, %v2149
        %v2158 = vperm.slane %v1097, 4
        %v2159 = vmul.f32 %v1134, %v2158
        %v2160 = vmul.f32 %v1139, %v2158
        %v2161 = vmul.f32 %v1144, %v2158
        %v2162 = vmul.f32 %v1149, %v2158
        %v2163 = vmul.f32 %v1154, %v2158
        %v2164 = vmul.f32 %v1159, %v2158
        %v2165 = vmul.f32 %v1164, %v2158
        %v2166 = vmul.f32 %v1169, %v2158
        %v2167 = vperm.slane %v1100, 4
        %v2168 = vmul.f32 %v1182, %v2167
        %v2169 = vmul.f32 %v1186, %v2167
        %v2170 = vmul.f32 %v1190, %v2167
        %v2171 = vmul.f32 %v1194, %v2167
        %v2172 = vmul.f32 %v1198, %v2167
        %v2173 = vmul.f32 %v1202, %v2167
        %v2174 = vmul.f32 %v1206, %v2167
        %v2175 = vmul.f32 %v1210, %v2167
        %v2176 = vadd.f32 %v2159, %v2168
        %v2177 = vadd.f32 %v2160, %v2169
        %v2178 = vadd.f32 %v2161, %v2170
        %v2179 = vadd.f32 %v2162, %v2171
        %v2180 = vadd.f32 %v2163, %v2172
        %v2181 = vadd.f32 %v2164, %v2173
        %v2182 = vadd.f32 %v2165, %v2174
        %v2183 = vadd.f32 %v2166, %v2175
        %v2184 = vperm.slane %v1103, 4
        %v2185 = vmul.f32 %v1231, %v2184
        %v2186 = vmul.f32 %v1235, %v2184
        %v2187 = vmul.f32 %v1239, %v2184
        %v2188 = vmul.f32 %v1243, %v2184
        %v2189 = vmul.f32 %v1247, %v2184
        %v2190 = vmul.f32 %v1251, %v2184
        %v2191 = vmul.f32 %v1255, %v2184
        %v2192 = vmul.f32 %v1259, %v2184
        %v2193 = vadd.f32 %v2176, %v2185
        %v2194 = vadd.f32 %v2177, %v2186
        %v2195 = vadd.f32 %v2178, %v2187
        %v2196 = vadd.f32 %v2179, %v2188
        %v2197 = vadd.f32 %v2180, %v2189
        %v2198 = vadd.f32 %v2181, %v2190
        %v2199 = vadd.f32 %v2182, %v2191
        %v2200 = vadd.f32 %v2183, %v2192
        %v2201 = vand.u32 2147483647, %v2193
        %v2202 = vand.u32 2147483647, %v2194
        %v2203 = vand.u32 2147483647, %v2195
        %v2204 = vand.u32 2147483647, %v2196
        %v2205 = vand.u32 2147483647, %v2197
        %v2206 = vand.u32 2147483647, %v2198
        %v2207 = vand.u32 2147483647, %v2199
        %v2208 = vand.u32 2147483647, %v2200
        %v2209 = vmul.f32 %v2193, %v2201
        %v2210 = vmul.f32 %v2194, %v2202
        %v2211 = vmul.f32 %v2195, %v2203
        %v2212 = vmul.f32 %v2196, %v2204
        %v2213 = vmul.f32 %v2197, %v2205
        %v2214 = vmul.f32 %v2198, %v2206
        %v2215 = vmul.f32 %v2199, %v2207
        %v2216 = vmul.f32 %v2200, %v2208
        %v2217 = vperm.slane %v1853, 4
        %v2218 = vmul.f32 %v2209, %v2217
        %v2219 = vmul.f32 %v2210, %v2217
        %v2220 = vmul.f32 %v2211, %v2217
        %v2221 = vmul.f32 %v2212, %v2217
        %v2222 = vmul.f32 %v2213, %v2217
        %v2223 = vmul.f32 %v2214, %v2217
        %v2224 = vmul.f32 %v2215, %v2217
        %v2225 = vmul.f32 %v2216, %v2217
        %v2226 = vmax.f32 %v2150, %v2218
        %v2227 = vmax.f32 %v2151, %v2219
        %v2228 = vmax.f32 %v2152, %v2220
        %v2229 = vmax.f32 %v2153, %v2221
        %v2230 = vmax.f32 %v2154, %v2222
        %v2231 = vmax.f32 %v2155, %v2223
        %v2232 = vmax.f32 %v2156, %v2224
        %v2233 = vmax.f32 %v2157, %v2225
        %v2234 = vperm.slane %v1097, 5
        %v2235 = vmul.f32 %v1134, %v2234
        %v2236 = vmul.f32 %v1139, %v2234
        %v2237 = vmul.f32 %v1144, %v2234
        %v2238 = vmul.f32 %v1149, %v2234
        %v2239 = vmul.f32 %v1154, %v2234
        %v2240 = vmul.f32 %v1159, %v2234
        %v2241 = vmul.f32 %v1164, %v2234
        %v2242 = vmul.f32 %v1169, %v2234
        %v2243 = vperm.slane %v1100, 5
        %v2244 = vmul.f32 %v1182, %v2243
        %v2245 = vmul.f32 %v1186, %v2243
        %v2246 = vmul.f32 %v1190, %v2243
        %v2247 = vmul.f32 %v1194, %v2243
        %v2248 = vmul.f32 %v1198, %v2243
        %v2249 = vmul.f32 %v1202, %v2243
        %v2250 = vmul.f32 %v1206, %v2243
        %v2251 = vmul.f32 %v1210, %v2243
        %v2252 = vadd.f32 %v2235, %v2244
        %v2253 = vadd.f32 %v2236, %v2245
        %v2254 = vadd.f32 %v2237, %v2246
        %v2255 = vadd.f32 %v2238, %v2247
        %v2256 = vadd.f32 %v2239, %v2248
        %v2257 = vadd.f32 %v2240, %v2249
        %v2258 = vadd.f32 %v2241, %v2250
        %v2259 = vadd.f32 %v2242, %v2251
        %v2260 = vperm.slane %v1103, 5
        %v2261 = vmul.f32 %v1231, %v2260
        %v2262 = vmul.f32 %v1235, %v2260
        %v2263 = vmul.f32 %v1239, %v2260
        %v2264 = vmul.f32 %v1243, %v2260
        %v2265 = vmul.f32 %v1247, %v2260
        %v2266 = vmul.f32 %v1251, %v2260
        %v2267 = vmul.f32 %v1255, %v2260
        %v2268 = vmul.f32 %v1259, %v2260
        %v2269 = vadd.f32 %v2252, %v2261
        %v2270 = vadd.f32 %v2253, %v2262
        %v2271 = vadd.f32 %v2254, %v2263
        %v2272 = vadd.f32 %v2255, %v2264
        %v2273 = vadd.f32 %v2256, %v2265
        %v2274 = vadd.f32 %v2257, %v2266
        %v2275 = vadd.f32 %v2258, %v2267
        %v2276 = vadd.f32 %v2259, %v2268
        %v2277 = vand.u32 2147483647, %v2269
        %v2278 = vand.u32 2147483647, %v2270
        %v2279 = vand.u32 2147483647, %v2271
        %v2280 = vand.u32 2147483647, %v2272
        %v2281 = vand.u32 2147483647, %v2273
        %v2282 = vand.u32 2147483647, %v2274
        %v2283 = vand.u32 2147483647, %v2275
        %v2284 = vand.u32 2147483647, %v2276
        %v2285 = vmul.f32 %v2269, %v2277
        %v2286 = vmul.f32 %v2270, %v2278
        %v2287 = vmul.f32 %v2271, %v2279
        %v2288 = vmul.f32 %v2272, %v2280
        %v2289 = vmul.f32 %v2273, %v2281
        %v2290 = vmul.f32 %v2274, %v2282
        %v2291 = vmul.f32 %v2275, %v2283
        %v2292 = vmul.f32 %v2276, %v2284
        %v2293 = vperm.slane %v1853, 5
        %v2294 = vmul.f32 %v2285, %v2293
        %v2295 = vmul.f32 %v2286, %v2293
        %v2296 = vmul.f32 %v2287, %v2293
        %v2297 = vmul.f32 %v2288, %v2293
        %v2298 = vmul.f32 %v2289, %v2293
        %v2299 = vmul.f32 %v2290, %v2293
        %v2300 = vmul.f32 %v2291, %v2293
        %v2301 = vmul.f32 %v2292, %v2293
        %v2302 = vmax.f32 %v2226, %v2294
        %v2303 = vmax.f32 %v2227, %v2295
        %v2304 = vmax.f32 %v2228, %v2296
        %v2305 = vmax.f32 %v2229, %v2297
        %v2306 = vmax.f32 %v2230, %v2298
        %v2307 = vmax.f32 %v2231, %v2299
        %v2308 = vmax.f32 %v2232, %v2300
        %v2309 = vmax.f32 %v2233, %v2301
        %v2310 = vperm.slane %v1097, 6
        %v2311 = vmul.f32 %v1134, %v2310
        %v2312 = vmul.f32 %v1139, %v2310
        %v2313 = vmul.f32 %v1144, %v2310
        %v2314 = vmul.f32 %v1149, %v2310
        %v2315 = vmul.f32 %v1154, %v2310
        %v2316 = vmul.f32 %v1159, %v2310
        %v2317 = vmul.f32 %v1164, %v2310
        %v2318 = vmul.f32 %v1169, %v2310
        %v2319 = vperm.slane %v1100, 6
        %v2320 = vmul.f32 %v1182, %v2319
        %v2321 = vmul.f32 %v1186, %v2319
        %v2322 = vmul.f32 %v1190, %v2319
        %v2323 = vmul.f32 %v1194, %v2319
        %v2324 = vmul.f32 %v1198, %v2319
        %v2325 = vmul.f32 %v1202, %v2319
        %v2326 = vmul.f32 %v1206, %v2319
        %v2327 = vmul.f32 %v1210, %v2319
        %v2328 = vadd.f32 %v2311, %v2320
        %v2329 = vadd.f32 %v2312, %v2321
        %v2330 = vadd.f32 %v2313, %v2322
        %v2331 = vadd.f32 %v2314, %v2323
        %v2332 = vadd.f32 %v2315, %v2324
        %v2333 = vadd.f32 %v2316, %v2325
        %v2334 = vadd.f32 %v2317, %v2326
        %v2335 = vadd.f32 %v2318, %v2327
        %v2336 = vperm.slane %v1103, 6
        %v2337 = vmul.f32 %v1231, %v2336
        %v2338 = vmul.f32 %v1235, %v2336
        %v2339 = vmul.f32 %v1239, %v2336
        %v2340 = vmul.f32 %v1243, %v2336
        %v2341 = vmul.f32 %v1247, %v2336
        %v2342 = vmul.f32 %v1251, %v2336
        %v2343 = vmul.f32 %v1255, %v2336
        %v2344 = vmul.f32 %v1259, %v2336
        %v2345 = vadd.f32 %v2328, %v2337
        %v2346 = vadd.f32 %v2329, %v2338
        %v2347 = vadd.f32 %v2330, %v2339
        %v2348 = vadd.f32 %v2331, %v2340
        %v2349 = vadd.f32 %v2332, %v2341
        %v2350 = vadd.f32 %v2333, %v2342
        %v2351 = vadd.f32 %v2334, %v2343
        %v2352 = vadd.f32 %v2335, %v2344
        %v2353 = vand.u32 2147483647, %v2345
        %v2354 = vand.u32 2147483647, %v2346
        %v2355 = vand.u32 2147483647, %v2347
        %v2356 = vand.u32 2147483647, %v2348
        %v2357 = vand.u32 2147483647, %v2349
        %v2358 = vand.u32 2147483647, %v2350
        %v2359 = vand.u32 2147483647, %v2351
        %v2360 = vand.u32 2147483647, %v2352
        %v2361 = vmul.f32 %v2345, %v2353
        %v2362 = vmul.f32 %v2346, %v2354
        %v2363 = vmul.f32 %v2347, %v2355
        %v2364 = vmul.f32 %v2348, %v2356
        %v2365 = vmul.f32 %v2349, %v2357
        %v2366 = vmul.f32 %v2350, %v2358
        %v2367 = vmul.f32 %v2351, %v2359
        %v2368 = vmul.f32 %v2352, %v2360
        %v2369 = vperm.slane %v1853, 6
        %v2370 = vmul.f32 %v2361, %v2369
        %v2371 = vmul.f32 %v2362, %v2369
        %v2372 = vmul.f32 %v2363, %v2369
        %v2373 = vmul.f32 %v2364, %v2369
        %v2374 = vmul.f32 %v2365, %v2369
        %v2375 = vmul.f32 %v2366, %v2369
        %v2376 = vmul.f32 %v2367, %v2369
        %v2377 = vmul.f32 %v2368, %v2369
        %v2378 = vmax.f32 %v2302, %v2370
        %v2379 = vmax.f32 %v2303, %v2371
        %v2380 = vmax.f32 %v2304, %v2372
        %v2381 = vmax.f32 %v2305, %v2373
        %v2382 = vmax.f32 %v2306, %v2374
        %v2383 = vmax.f32 %v2307, %v2375
        %v2384 = vmax.f32 %v2308, %v2376
        %v2385 = vmax.f32 %v2309, %v2377
        %v2386 = vld [vmem:[%s3] sm:$0xf]
        %v2387 = vld [vmem:[%s3 + $0x4] sm:$0xf]
        %v2388 = vld [vmem:[%s3 + $0x8] sm:$0xf]
        %v2389 = vld [vmem:[%s3 + $0xc] sm:$0xf]
        %v2390 = vld [vmem:[%s3 + $0x10] sm:$0xf]
        %v2391 = vld [vmem:[%s3 + $0x14] sm:$0xf]
        %v2392 = vld [vmem:[%s3 + $0x18] sm:$0xf]
        %v2393 = vld [vmem:[%s3 + $0x1c] sm:$0xf]
        %v2394 = vpack.c.bf16 %v2379, %v2378
        %v2395 = vpack.c.bf16 %v2381, %v2380
        %v2396 = vpack.c.bf16 %v2383, %v2382
        %v2397 = vpack.c.bf16 %v2385, %v2384
        %v2398 = vld [vmem:[%s4] sm:$0xff]
        %v2399 = vld [vmem:[%s4 + $0x8] sm:$0xff]
        %v2400 = vld [vmem:[%s4 + $0x10] sm:$0xff]
        %v2401 = vld [vmem:[%s4 + $0x18] sm:$0xff]
        %v2402 = vld [vmem:[%s4 + $0x20] sm:$0xff]
        %v2403 = vld [vmem:[%s4 + $0x28] sm:$0xff]
        %v2404 = vld [vmem:[%s4 + $0x30] sm:$0xff]
        %v2405 = vld [vmem:[%s4 + $0x38] sm:$0xff]
        %2407 = vset.pattern.permute.xlu0 0
        %2408 = vperm.xlu0 %2407, %v2398
        %v2409 = vpop.permute.xlu0 %2408
        %2412 = vset.pattern.permute.xlu0 0
        %2413 = vperm.xlu0 %2412, %v2399
        %v2414 = vpop.permute.xlu0 %2413
        %2417 = vset.pattern.permute.xlu0 0
        %2418 = vperm.xlu0 %2417, %v2400
        %v2419 = vpop.permute.xlu0 %2418
        %2422 = vset.pattern.permute.xlu0 0
        %2423 = vperm.xlu0 %2422, %v2401
        %v2424 = vpop.permute.xlu0 %2423
        %2427 = vset.pattern.permute.xlu0 0
        %2428 = vperm.xlu0 %2427, %v2402
        %v2429 = vpop.permute.xlu0 %2428
        %2432 = vset.pattern.permute.xlu0 0
        %2433 = vperm.xlu0 %2432, %v2403
        %v2434 = vpop.permute.xlu0 %2433
        %2437 = vset.pattern.permute.xlu0 0
        %2438 = vperm.xlu0 %2437, %v2404
        %v2439 = vpop.permute.xlu0 %2438
        %2442 = vset.pattern.permute.xlu0 0
        %2443 = vperm.xlu0 %2442, %v2405
        %v2444 = vpop.permute.xlu0 %2443
        %v2454 = vunpack.c.l.b16 %v2386
        %v2455 = vunpack.c.l.b16 %v2387
        %v2456 = vunpack.c.l.b16 %v2388
        %v2457 = vunpack.c.l.b16 %v2389
        %v2458 = vunpack.c.l.b16 %v2390
        %v2459 = vunpack.c.l.b16 %v2391
        %v2460 = vunpack.c.l.b16 %v2392
        %v2461 = vunpack.c.l.b16 %v2393
        %v2462 = vpack.c.b16 %v2455, %v2454
        %v2463 = vpack.c.b16 %v2457, %v2456
        %v2464 = vpack.c.b16 %v2459, %v2458
        %v2465 = vpack.c.b16 %v2461, %v2460
        %vm2466 = vcmask 523264
        %v2468 = vsel %vm2466, %v2462, 0
        %v2471 = vsel %vm2466, %v2463, 0
        %v2474 = vsel %vm2466, %v2464, 0
        %v2477 = vsel %vm2466, %v2465, 0
        %2479 = vmatpush.bf16.msra.mxu0 0
        %2480 = vmatpush.bf16.msra.mxu0 0
        %2481 = vmatpush.bf16.msra.mxu0 0
        %2482 = vmatpush.bf16.msra.mxu0 0
        %2483 = vmatpush.bf16.msra.mxu0 %v2397
        %2484 = vmatpush.bf16.msra.mxu0 %v2396
        %2485 = vmatpush.bf16.msra.mxu0 %v2395
        %2486 = vmatpush.bf16.msra.mxu0 %v2394
        %2487 = vmatmul.bf16.gmra.mxu0 %v2468
        %v2488 = vpop.f32.mrf.mxu0
        %v2489 = vadd.f32 %v2409, %v2488
        %v2490 = vpop.f32.mrf.mxu0
        %v2491 = vadd.f32 %v2414, %v2490
        %2492 = vmatmul.bf16.gmra.mxu0 %v2471
        %v2493 = vpop.f32.mrf.mxu0
        %v2494 = vadd.f32 %v2419, %v2493
        %v2495 = vpop.f32.mrf.mxu0
        %v2496 = vadd.f32 %v2424, %v2495
        %2497 = vmatmul.bf16.gmra.mxu0 %v2474
        %v2498 = vpop.f32.mrf.mxu0
        %v2499 = vadd.f32 %v2429, %v2498
        %v2500 = vpop.f32.mrf.mxu0
        %v2501 = vadd.f32 %v2434, %v2500
        %2502 = vmatmul.bf16.gmra.mxu0 %v2477
        %v2503 = vpop.f32.mrf.mxu0
        %v2504 = vadd.f32 %v2439, %v2503
        %v2505 = vpop.f32.mrf.mxu0
        %v2506 = vadd.f32 %v2444, %v2505
        %2507 = vdwg.mxu0
        %v2508 = vmax.f32 %v2489, 0.0
        %v2509 = vmax.f32 %v2491, 0.0
        %v2510 = vmax.f32 %v2494, 0.0
        %v2511 = vmax.f32 %v2496, 0.0
        %v2512 = vmax.f32 %v2499, 0.0
        %v2513 = vmax.f32 %v2501, 0.0
        %v2514 = vmax.f32 %v2504, 0.0
        %v2515 = vmax.f32 %v2506, 0.0
        %v2516 = vld [vmem:[%s5] sm:$0xf]
        %v2517 = vld [vmem:[%s5 + $0x4] sm:$0xf]
        %v2518 = vld [vmem:[%s5 + $0x8] sm:$0xf]
        %v2519 = vld [vmem:[%s5 + $0xc] sm:$0xf]
        %v2520 = vld [vmem:[%s5 + $0x10] sm:$0xf]
        %v2521 = vld [vmem:[%s5 + $0x14] sm:$0xf]
        %v2522 = vld [vmem:[%s5 + $0x18] sm:$0xf]
        %v2523 = vld [vmem:[%s5 + $0x1c] sm:$0xf]
        %v2524 = vld [vmem:[%s5 + $0x20] sm:$0xf]
        %v2525 = vld [vmem:[%s5 + $0x24] sm:$0xf]
        %v2526 = vld [vmem:[%s5 + $0x28] sm:$0xf]
        %v2527 = vld [vmem:[%s5 + $0x2c] sm:$0xf]
        %v2528 = vld [vmem:[%s5 + $0x30] sm:$0xf]
        %v2529 = vld [vmem:[%s5 + $0x34] sm:$0xf]
        %v2530 = vld [vmem:[%s5 + $0x38] sm:$0xf]
        %v2531 = vld [vmem:[%s5 + $0x3c] sm:$0xf]
        %v2532 = vld [vmem:[%s7] sm:$0xf]
        %v2533 = vld [vmem:[%s7 + $0x4] sm:$0xf]
        %v2534 = vld [vmem:[%s7 + $0x8] sm:$0xf]
        %v2535 = vld [vmem:[%s7 + $0xc] sm:$0xf]
        %v2536 = vld [vmem:[%s7 + $0x10] sm:$0xf]
        %v2537 = vld [vmem:[%s7 + $0x14] sm:$0xf]
        %v2538 = vld [vmem:[%s7 + $0x18] sm:$0xf]
        %v2539 = vld [vmem:[%s7 + $0x1c] sm:$0xf]
        %v2540 = vld [vmem:[%s6] sm:$0xff]
        %v2541 = vld [vmem:[%s6 + $0x8] sm:$0xff]
        %v2542 = vld [vmem:[%s6 + $0x10] sm:$0xff]
        %v2543 = vld [vmem:[%s6 + $0x18] sm:$0xff]
        %v2544 = vld [vmem:[%s6 + $0x20] sm:$0xff]
        %v2545 = vld [vmem:[%s6 + $0x28] sm:$0xff]
        %v2546 = vld [vmem:[%s6 + $0x30] sm:$0xff]
        %v2547 = vld [vmem:[%s6 + $0x38] sm:$0xff]
        %v2548 = vld [vmem:[%s6 + $0x40] sm:$0xff]
        %v2549 = vld [vmem:[%s6 + $0x48] sm:$0xff]
        %v2550 = vld [vmem:[%s6 + $0x50] sm:$0xff]
        %v2551 = vld [vmem:[%s6 + $0x58] sm:$0xff]
        %v2552 = vld [vmem:[%s6 + $0x60] sm:$0xff]
        %v2553 = vld [vmem:[%s6 + $0x68] sm:$0xff]
        %v2554 = vld [vmem:[%s6 + $0x70] sm:$0xff]
        %v2555 = vld [vmem:[%s6 + $0x78] sm:$0xff]
        %v2556 = vld [vmem:[%s8] sm:$0xff]
        %v2557 = vld [vmem:[%s8 + $0x8] sm:$0xff]
        %v2558 = vld [vmem:[%s8 + $0x10] sm:$0xff]
        %v2559 = vld [vmem:[%s8 + $0x18] sm:$0xff]
        %v2560 = vld [vmem:[%s8 + $0x20] sm:$0xff]
        %v2561 = vld [vmem:[%s8 + $0x28] sm:$0xff]
        %v2562 = vld [vmem:[%s8 + $0x30] sm:$0xff]
        %v2563 = vld [vmem:[%s8 + $0x38] sm:$0xff]
        %v2564 = vld [vmem:[%s1039] sm:$0xf]
        %v2565 = vld [vmem:[%s1039 + $0x4] sm:$0xf]
        %v2566 = vld [vmem:[%s1039 + $0x8] sm:$0xf]
        %v2567 = vld [vmem:[%s1039 + $0xc] sm:$0xf]
        %v2568 = vld [vmem:[%s1039 + $0x10] sm:$0xf]
        %v2569 = vld [vmem:[%s1039 + $0x14] sm:$0xf]
        %v2570 = vld [vmem:[%s1039 + $0x18] sm:$0xf]
        %v2571 = vld [vmem:[%s1039 + $0x1c] sm:$0xf]
        %2573 = vset.pattern.permute.xlu0 0
        %2574 = vperm.xlu0 %2573, %v2540
        %v2575 = vpop.permute.xlu0 %2574
        %2578 = vset.pattern.permute.xlu0 0
        %2579 = vperm.xlu0 %2578, %v2541
        %v2580 = vpop.permute.xlu0 %2579
        %2583 = vset.pattern.permute.xlu0 0
        %2584 = vperm.xlu0 %2583, %v2542
        %v2585 = vpop.permute.xlu0 %2584
        %2588 = vset.pattern.permute.xlu0 0
        %2589 = vperm.xlu0 %2588, %v2543
        %v2590 = vpop.permute.xlu0 %2589
        %2593 = vset.pattern.permute.xlu0 0
        %2594 = vperm.xlu0 %2593, %v2544
        %v2595 = vpop.permute.xlu0 %2594
        %2598 = vset.pattern.permute.xlu0 0
        %2599 = vperm.xlu0 %2598, %v2545
        %v2600 = vpop.permute.xlu0 %2599
        %2603 = vset.pattern.permute.xlu0 0
        %2604 = vperm.xlu0 %2603, %v2546
        %v2605 = vpop.permute.xlu0 %2604
        %2608 = vset.pattern.permute.xlu0 0
        %2609 = vperm.xlu0 %2608, %v2547
        %v2610 = vpop.permute.xlu0 %2609
        %2613 = vset.pattern.permute.xlu0 0
        %2614 = vperm.xlu0 %2613, %v2548
        %v2615 = vpop.permute.xlu0 %2614
        %2618 = vset.pattern.permute.xlu0 0
        %2619 = vperm.xlu0 %2618, %v2549
        %v2620 = vpop.permute.xlu0 %2619
        %2623 = vset.pattern.permute.xlu0 0
        %2624 = vperm.xlu0 %2623, %v2550
        %v2625 = vpop.permute.xlu0 %2624
        %2628 = vset.pattern.permute.xlu0 0
        %2629 = vperm.xlu0 %2628, %v2551
        %v2630 = vpop.permute.xlu0 %2629
        %2633 = vset.pattern.permute.xlu0 0
        %2634 = vperm.xlu0 %2633, %v2552
        %v2635 = vpop.permute.xlu0 %2634
        %2638 = vset.pattern.permute.xlu0 0
        %2639 = vperm.xlu0 %2638, %v2553
        %v2640 = vpop.permute.xlu0 %2639
        %2643 = vset.pattern.permute.xlu0 0
        %2644 = vperm.xlu0 %2643, %v2554
        %v2645 = vpop.permute.xlu0 %2644
        %2648 = vset.pattern.permute.xlu0 0
        %2649 = vperm.xlu0 %2648, %v2555
        %v2650 = vpop.permute.xlu0 %2649
        %v2668 = vunpack.c.l.b16 %v2516
        %v2669 = vunpack.c.l.b16 %v2517
        %v2670 = vunpack.c.l.b16 %v2518
        %v2671 = vunpack.c.l.b16 %v2519
        %v2672 = vunpack.c.l.b16 %v2520
        %v2673 = vunpack.c.l.b16 %v2521
        %v2674 = vunpack.c.l.b16 %v2522
        %v2675 = vunpack.c.l.b16 %v2523
        %v2676 = vunpack.c.l.b16 %v2524
        %v2677 = vunpack.c.l.b16 %v2525
        %v2678 = vunpack.c.l.b16 %v2526
        %v2679 = vunpack.c.l.b16 %v2527
        %v2680 = vunpack.c.l.b16 %v2528
        %v2681 = vunpack.c.l.b16 %v2529
        %v2682 = vunpack.c.l.b16 %v2530
        %v2683 = vunpack.c.l.b16 %v2531
        %v2684 = vpack.c.b16 %v2669, %v2668
        %v2685 = vpack.c.b16 %v2671, %v2670
        %v2686 = vpack.c.b16 %v2673, %v2672
        %v2687 = vpack.c.b16 %v2675, %v2674
        %v2688 = vpack.c.b16 %v2677, %v2676
        %v2689 = vpack.c.b16 %v2679, %v2678
        %v2690 = vpack.c.b16 %v2681, %v2680
        %v2691 = vpack.c.b16 %v2683, %v2682
        %v2700 = vunpack.c.l.b16 %v2564
        %v2701 = vunpack.c.l.b16 %v2565
        %v2702 = vunpack.c.l.b16 %v2566
        %v2703 = vunpack.c.l.b16 %v2567
        %v2704 = vunpack.c.l.b16 %v2568
        %v2705 = vunpack.c.l.b16 %v2569
        %v2706 = vunpack.c.l.b16 %v2570
        %v2707 = vunpack.c.l.b16 %v2571
        %v2708 = vpack.c.b16 %v2701, %v2700
        %v2709 = vpack.c.b16 %v2703, %v2702
        %v2710 = vpack.c.b16 %v2705, %v2704
        %v2711 = vpack.c.b16 %v2707, %v2706
        %v2717 = vsel %vm2466, %v2684, 0
        %v2720 = vsel %vm2466, %v2685, 0
        %v2723 = vsel %vm2466, %v2686, 0
        %v2726 = vsel %vm2466, %v2687, 0
        %v2729 = vsel %vm2466, %v2688, 0
        %v2732 = vsel %vm2466, %v2689, 0
        %v2735 = vsel %vm2466, %v2690, 0
        %v2738 = vsel %vm2466, %v2691, 0
        %2740 = vmatpush.bf16.msra.mxu0 0
        %2741 = vmatpush.bf16.msra.mxu0 0
        %2742 = vmatpush.bf16.msra.mxu0 0
        %2743 = vmatpush.bf16.msra.mxu0 0
        %2744 = vmatpush.bf16.msra.mxu0 %v2711
        %2745 = vmatpush.bf16.msra.mxu0 %v2710
        %2746 = vmatpush.bf16.msra.mxu0 %v2709
        %2747 = vmatpush.bf16.msra.mxu0 %v2708
        %2748 = vmatmul.bf16.gmra.mxu0 %v2717
        %v2749 = vpop.f32.mrf.mxu0
        %v2750 = vadd.f32 %v2575, %v2749
        %v2751 = vpop.f32.mrf.mxu0
        %v2752 = vadd.f32 %v2580, %v2751
        %2753 = vmatmul.bf16.gmra.mxu0 %v2720
        %v2754 = vpop.f32.mrf.mxu0
        %v2755 = vadd.f32 %v2585, %v2754
        %v2756 = vpop.f32.mrf.mxu0
        %v2757 = vadd.f32 %v2590, %v2756
        %2758 = vmatmul.bf16.gmra.mxu0 %v2723
        %v2759 = vpop.f32.mrf.mxu0
        %v2760 = vadd.f32 %v2595, %v2759
        %v2761 = vpop.f32.mrf.mxu0
        %v2762 = vadd.f32 %v2600, %v2761
        %2763 = vmatmul.bf16.gmra.mxu0 %v2726
        %v2764 = vpop.f32.mrf.mxu0
        %v2765 = vadd.f32 %v2605, %v2764
        %v2766 = vpop.f32.mrf.mxu0
        %v2767 = vadd.f32 %v2610, %v2766
        %2768 = vmatmul.bf16.gmra.mxu0 %v2729
        %v2769 = vpop.f32.mrf.mxu0
        %v2770 = vadd.f32 %v2615, %v2769
        %v2771 = vpop.f32.mrf.mxu0
        %v2772 = vadd.f32 %v2620, %v2771
        %2773 = vmatmul.bf16.gmra.mxu0 %v2732
        %v2774 = vpop.f32.mrf.mxu0
        %v2775 = vadd.f32 %v2625, %v2774
        %v2776 = vpop.f32.mrf.mxu0
        %v2777 = vadd.f32 %v2630, %v2776
        %2778 = vmatmul.bf16.gmra.mxu0 %v2735
        %v2779 = vpop.f32.mrf.mxu0
        %v2780 = vadd.f32 %v2635, %v2779
        %v2781 = vpop.f32.mrf.mxu0
        %v2782 = vadd.f32 %v2640, %v2781
        %2783 = vmatmul.bf16.gmra.mxu0 %v2738
        %v2784 = vpop.f32.mrf.mxu0
        %v2785 = vadd.f32 %v2645, %v2784
        %v2786 = vpop.f32.mrf.mxu0
        %v2787 = vadd.f32 %v2650, %v2786
        %2788 = vdwg.mxu0
        %v2789 = vmax.f32 %v2750, 0.0
        %v2790 = vmax.f32 %v2752, 0.0
        %v2791 = vmax.f32 %v2755, 0.0
        %v2792 = vmax.f32 %v2757, 0.0
        %v2793 = vmax.f32 %v2760, 0.0
        %v2794 = vmax.f32 %v2762, 0.0
        %v2795 = vmax.f32 %v2765, 0.0
        %v2796 = vmax.f32 %v2767, 0.0
        %v2797 = vmax.f32 %v2770, 0.0
        %v2798 = vmax.f32 %v2772, 0.0
        %v2799 = vmax.f32 %v2775, 0.0
        %v2800 = vmax.f32 %v2777, 0.0
        %v2801 = vmax.f32 %v2780, 0.0
        %v2802 = vmax.f32 %v2782, 0.0
        %v2803 = vmax.f32 %v2785, 0.0
        %v2804 = vmax.f32 %v2787, 0.0
        %v2805 = vpack.c.bf16 %v2790, %v2789
        %v2806 = vpack.c.bf16 %v2792, %v2791
        %v2807 = vpack.c.bf16 %v2794, %v2793
        %v2808 = vpack.c.bf16 %v2796, %v2795
        %v2809 = vpack.c.bf16 %v2798, %v2797
        %v2810 = vpack.c.bf16 %v2800, %v2799
        %v2811 = vpack.c.bf16 %v2802, %v2801
        %v2812 = vpack.c.bf16 %v2804, %v2803
        %2814 = vset.pattern.permute.xlu0 0
        %2815 = vperm.xlu0 %2814, %v2556
        %v2816 = vpop.permute.xlu0 %2815
        %2819 = vset.pattern.permute.xlu0 0
        %2820 = vperm.xlu0 %2819, %v2557
        %v2821 = vpop.permute.xlu0 %2820
        %2824 = vset.pattern.permute.xlu0 0
        %2825 = vperm.xlu0 %2824, %v2558
        %v2826 = vpop.permute.xlu0 %2825
        %2829 = vset.pattern.permute.xlu0 0
        %2830 = vperm.xlu0 %2829, %v2559
        %v2831 = vpop.permute.xlu0 %2830
        %2834 = vset.pattern.permute.xlu0 0
        %2835 = vperm.xlu0 %2834, %v2560
        %v2836 = vpop.permute.xlu0 %2835
        %2839 = vset.pattern.permute.xlu0 0
        %2840 = vperm.xlu0 %2839, %v2561
        %v2841 = vpop.permute.xlu0 %2840
        %2844 = vset.pattern.permute.xlu0 0
        %2845 = vperm.xlu0 %2844, %v2562
        %v2846 = vpop.permute.xlu0 %2845
        %2849 = vset.pattern.permute.xlu0 0
        %2850 = vperm.xlu0 %2849, %v2563
        %v2851 = vpop.permute.xlu0 %2850
        %v2861 = vunpack.c.l.b16 %v2532
        %v2862 = vunpack.c.l.b16 %v2533
        %v2863 = vunpack.c.l.b16 %v2534
        %v2864 = vunpack.c.l.b16 %v2535
        %v2865 = vunpack.c.l.b16 %v2536
        %v2866 = vunpack.c.l.b16 %v2537
        %v2867 = vunpack.c.l.b16 %v2538
        %v2868 = vunpack.c.l.b16 %v2539
        %v2869 = vpack.c.b16 %v2862, %v2861
        %v2870 = vpack.c.b16 %v2864, %v2863
        %v2871 = vpack.c.b16 %v2866, %v2865
        %v2872 = vpack.c.b16 %v2868, %v2867
        %2877 = vmatpush.bf16.msra.mxu0 %v2812
        %2878 = vmatpush.bf16.msra.mxu0 %v2811
        %2879 = vmatpush.bf16.msra.mxu0 %v2810
        %2880 = vmatpush.bf16.msra.mxu0 %v2809
        %2881 = vmatpush.bf16.msra.mxu0 %v2808
        %2882 = vmatpush.bf16.msra.mxu0 %v2807
        %2883 = vmatpush.bf16.msra.mxu0 %v2806
        %2884 = vmatpush.bf16.msra.mxu0 %v2805
        %2885 = vmatmul.bf16.gmra.mxu0 %v2869
        %v2886 = vpop.f32.mrf.mxu0
        %v2887 = vadd.f32 %v2816, %v2886
        %v2888 = vpop.f32.mrf.mxu0
        %v2889 = vadd.f32 %v2821, %v2888
        %2890 = vmatmul.bf16.gmra.mxu0 %v2870
        %v2891 = vpop.f32.mrf.mxu0
        %v2892 = vadd.f32 %v2826, %v2891
        %v2893 = vpop.f32.mrf.mxu0
        %v2894 = vadd.f32 %v2831, %v2893
        %2895 = vmatmul.bf16.gmra.mxu0 %v2871
        %v2896 = vpop.f32.mrf.mxu0
        %v2897 = vadd.f32 %v2836, %v2896
        %v2898 = vpop.f32.mrf.mxu0
        %v2899 = vadd.f32 %v2841, %v2898
        %2900 = vmatmul.bf16.gmra.mxu0 %v2872
        %v2901 = vpop.f32.mrf.mxu0
        %v2902 = vadd.f32 %v2846, %v2901
        %v2903 = vpop.f32.mrf.mxu0
        %v2904 = vadd.f32 %v2851, %v2903
        %2905 = vdwg.mxu0
        %s2906 = scalar_lea.vmem %s1039, 32 [#allocation3]
        %v2907 = vld [vmem:[%s2906] sm:$0xf]
        %v2908 = vld [vmem:[%s2906 + $0x4] sm:$0xf]
        %v2909 = vld [vmem:[%s2906 + $0x8] sm:$0xf]
        %v2910 = vld [vmem:[%s2906 + $0xc] sm:$0xf]
        %v2911 = vld [vmem:[%s2906 + $0x10] sm:$0xf]
        %v2912 = vld [vmem:[%s2906 + $0x14] sm:$0xf]
        %v2913 = vld [vmem:[%s2906 + $0x18] sm:$0xf]
        %v2914 = vld [vmem:[%s2906 + $0x1c] sm:$0xf]
        %v2923 = vunpack.c.l.b16 %v2907
        %v2924 = vunpack.c.l.b16 %v2908
        %v2925 = vunpack.c.l.b16 %v2909
        %v2926 = vunpack.c.l.b16 %v2910
        %v2927 = vunpack.c.l.b16 %v2911
        %v2928 = vunpack.c.l.b16 %v2912
        %v2929 = vunpack.c.l.b16 %v2913
        %v2930 = vunpack.c.l.b16 %v2914
        %v2931 = vpack.c.b16 %v2924, %v2923
        %v2932 = vpack.c.b16 %v2926, %v2925
        %v2933 = vpack.c.b16 %v2928, %v2927
        %v2934 = vpack.c.b16 %v2930, %v2929
        %2939 = vmatpush.bf16.msra.mxu0 0
        %2940 = vmatpush.bf16.msra.mxu0 0
        %2941 = vmatpush.bf16.msra.mxu0 0
        %2942 = vmatpush.bf16.msra.mxu0 0
        %2943 = vmatpush.bf16.msra.mxu0 %v2934
        %2944 = vmatpush.bf16.msra.mxu0 %v2933
        %2945 = vmatpush.bf16.msra.mxu0 %v2932
        %2946 = vmatpush.bf16.msra.mxu0 %v2931
        %2947 = vmatmul.bf16.gmra.mxu0 %v2717
        %v2948 = vpop.f32.mrf.mxu0
        %v2949 = vadd.f32 %v2575, %v2948
        %v2950 = vpop.f32.mrf.mxu0
        %v2951 = vadd.f32 %v2580, %v2950
        %2952 = vmatmul.bf16.gmra.mxu0 %v2720
        %v2953 = vpop.f32.mrf.mxu0
        %v2954 = vadd.f32 %v2585, %v2953
        %v2955 = vpop.f32.mrf.mxu0
        %v2956 = vadd.f32 %v2590, %v2955
        %2957 = vmatmul.bf16.gmra.mxu0 %v2723
        %v2958 = vpop.f32.mrf.mxu0
        %v2959 = vadd.f32 %v2595, %v2958
        %v2960 = vpop.f32.mrf.mxu0
        %v2961 = vadd.f32 %v2600, %v2960
        %2962 = vmatmul.bf16.gmra.mxu0 %v2726
        %v2963 = vpop.f32.mrf.mxu0
        %v2964 = vadd.f32 %v2605, %v2963
        %v2965 = vpop.f32.mrf.mxu0
        %v2966 = vadd.f32 %v2610, %v2965
        %2967 = vmatmul.bf16.gmra.mxu0 %v2729
        %v2968 = vpop.f32.mrf.mxu0
        %v2969 = vadd.f32 %v2615, %v2968
        %v2970 = vpop.f32.mrf.mxu0
        %v2971 = vadd.f32 %v2620, %v2970
        %2972 = vmatmul.bf16.gmra.mxu0 %v2732
        %v2973 = vpop.f32.mrf.mxu0
        %v2974 = vadd.f32 %v2625, %v2973
        %v2975 = vpop.f32.mrf.mxu0
        %v2976 = vadd.f32 %v2630, %v2975
        %2977 = vmatmul.bf16.gmra.mxu0 %v2735
        %v2978 = vpop.f32.mrf.mxu0
        %v2979 = vadd.f32 %v2635, %v2978
        %v2980 = vpop.f32.mrf.mxu0
        %v2981 = vadd.f32 %v2640, %v2980
        %2982 = vmatmul.bf16.gmra.mxu0 %v2738
        %v2983 = vpop.f32.mrf.mxu0
        %v2984 = vadd.f32 %v2645, %v2983
        %v2985 = vpop.f32.mrf.mxu0
        %v2986 = vadd.f32 %v2650, %v2985
        %2987 = vdwg.mxu0
        %v2988 = vmax.f32 %v2949, 0.0
        %v2989 = vmax.f32 %v2951, 0.0
        %v2990 = vmax.f32 %v2954, 0.0
        %v2991 = vmax.f32 %v2956, 0.0
        %v2992 = vmax.f32 %v2959, 0.0
        %v2993 = vmax.f32 %v2961, 0.0
        %v2994 = vmax.f32 %v2964, 0.0
        %v2995 = vmax.f32 %v2966, 0.0
        %v2996 = vmax.f32 %v2969, 0.0
        %v2997 = vmax.f32 %v2971, 0.0
        %v2998 = vmax.f32 %v2974, 0.0
        %v2999 = vmax.f32 %v2976, 0.0
        %v3000 = vmax.f32 %v2979, 0.0
        %v3001 = vmax.f32 %v2981, 0.0
        %v3002 = vmax.f32 %v2984, 0.0
        %v3003 = vmax.f32 %v2986, 0.0
        %v3004 = vpack.c.bf16 %v2989, %v2988
        %v3005 = vpack.c.bf16 %v2991, %v2990
        %v3006 = vpack.c.bf16 %v2993, %v2992
        %v3007 = vpack.c.bf16 %v2995, %v2994
        %v3008 = vpack.c.bf16 %v2997, %v2996
        %v3009 = vpack.c.bf16 %v2999, %v2998
        %v3010 = vpack.c.bf16 %v3001, %v3000
        %v3011 = vpack.c.bf16 %v3003, %v3002
        %3012 = vmatpush.bf16.msra.mxu0 %v3011
        %3013 = vmatpush.bf16.msra.mxu0 %v3010
        %3014 = vmatpush.bf16.msra.mxu0 %v3009
        %3015 = vmatpush.bf16.msra.mxu0 %v3008
        %3016 = vmatpush.bf16.msra.mxu0 %v3007
        %3017 = vmatpush.bf16.msra.mxu0 %v3006
        %3018 = vmatpush.bf16.msra.mxu0 %v3005
        %3019 = vmatpush.bf16.msra.mxu0 %v3004
        %3020 = vmatmul.bf16.gmra.mxu0 %v2869
        %v3021 = vpop.f32.mrf.mxu0
        %v3022 = vadd.f32 %v2816, %v3021
        %v3023 = vpop.f32.mrf.mxu0
        %v3024 = vadd.f32 %v2821, %v3023
        %3025 = vmatmul.bf16.gmra.mxu0 %v2870
        %v3026 = vpop.f32.mrf.mxu0
        %v3027 = vadd.f32 %v2826, %v3026
        %v3028 = vpop.f32.mrf.mxu0
        %v3029 = vadd.f32 %v2831, %v3028
        %3030 = vmatmul.bf16.gmra.mxu0 %v2871
        %v3031 = vpop.f32.mrf.mxu0
        %v3032 = vadd.f32 %v2836, %v3031
        %v3033 = vpop.f32.mrf.mxu0
        %v3034 = vadd.f32 %v2841, %v3033
        %3035 = vmatmul.bf16.gmra.mxu0 %v2872
        %v3036 = vpop.f32.mrf.mxu0
        %v3037 = vadd.f32 %v2846, %v3036
        %v3038 = vpop.f32.mrf.mxu0
        %v3039 = vadd.f32 %v2851, %v3038
        %3040 = vdwg.mxu0
        %v3041 = vmax.f32 %v2887, %v3022
        %v3042 = vmax.f32 %v2889, %v3024
        %v3043 = vmax.f32 %v2892, %v3027
        %v3044 = vmax.f32 %v2894, %v3029
        %v3045 = vmax.f32 %v2897, %v3032
        %v3046 = vmax.f32 %v2899, %v3034
        %v3047 = vmax.f32 %v2902, %v3037
        %v3048 = vmax.f32 %v2904, %v3039
        %s3049 = scalar_lea.vmem %s1039, 64 [#allocation3]
        %v3050 = vld [vmem:[%s3049] sm:$0xf]
        %v3051 = vld [vmem:[%s3049 + $0x4] sm:$0xf]
        %v3052 = vld [vmem:[%s3049 + $0x8] sm:$0xf]
        %v3053 = vld [vmem:[%s3049 + $0xc] sm:$0xf]
        %v3054 = vld [vmem:[%s3049 + $0x10] sm:$0xf]
        %v3055 = vld [vmem:[%s3049 + $0x14] sm:$0xf]
        %v3056 = vld [vmem:[%s3049 + $0x18] sm:$0xf]
        %v3057 = vld [vmem:[%s3049 + $0x1c] sm:$0xf]
        %v3066 = vunpack.c.l.b16 %v3050
        %v3067 = vunpack.c.l.b16 %v3051
        %v3068 = vunpack.c.l.b16 %v3052
        %v3069 = vunpack.c.l.b16 %v3053
        %v3070 = vunpack.c.l.b16 %v3054
        %v3071 = vunpack.c.l.b16 %v3055
        %v3072 = vunpack.c.l.b16 %v3056
        %v3073 = vunpack.c.l.b16 %v3057
        %v3074 = vpack.c.b16 %v3067, %v3066
        %v3075 = vpack.c.b16 %v3069, %v3068
        %v3076 = vpack.c.b16 %v3071, %v3070
        %v3077 = vpack.c.b16 %v3073, %v3072
        %3082 = vmatpush.bf16.msra.mxu0 0
        %3083 = vmatpush.bf16.msra.mxu0 0
        %3084 = vmatpush.bf16.msra.mxu0 0
        %3085 = vmatpush.bf16.msra.mxu0 0
        %3086 = vmatpush.bf16.msra.mxu0 %v3077
        %3087 = vmatpush.bf16.msra.mxu0 %v3076
        %3088 = vmatpush.bf16.msra.mxu0 %v3075
        %3089 = vmatpush.bf16.msra.mxu0 %v3074
        %3090 = vmatmul.bf16.gmra.mxu0 %v2717
        %v3091 = vpop.f32.mrf.mxu0
        %v3092 = vadd.f32 %v2575, %v3091
        %v3093 = vpop.f32.mrf.mxu0
        %v3094 = vadd.f32 %v2580, %v3093
        %3095 = vmatmul.bf16.gmra.mxu0 %v2720
        %v3096 = vpop.f32.mrf.mxu0
        %v3097 = vadd.f32 %v2585, %v3096
        %v3098 = vpop.f32.mrf.mxu0
        %v3099 = vadd.f32 %v2590, %v3098
        %3100 = vmatmul.bf16.gmra.mxu0 %v2723
        %v3101 = vpop.f32.mrf.mxu0
        %v3102 = vadd.f32 %v2595, %v3101
        %v3103 = vpop.f32.mrf.mxu0
        %v3104 = vadd.f32 %v2600, %v3103
        %3105 = vmatmul.bf16.gmra.mxu0 %v2726
        %v3106 = vpop.f32.mrf.mxu0
        %v3107 = vadd.f32 %v2605, %v3106
        %v3108 = vpop.f32.mrf.mxu0
        %v3109 = vadd.f32 %v2610, %v3108
        %3110 = vmatmul.bf16.gmra.mxu0 %v2729
        %v3111 = vpop.f32.mrf.mxu0
        %v3112 = vadd.f32 %v2615, %v3111
        %v3113 = vpop.f32.mrf.mxu0
        %v3114 = vadd.f32 %v2620, %v3113
        %3115 = vmatmul.bf16.gmra.mxu0 %v2732
        %v3116 = vpop.f32.mrf.mxu0
        %v3117 = vadd.f32 %v2625, %v3116
        %v3118 = vpop.f32.mrf.mxu0
        %v3119 = vadd.f32 %v2630, %v3118
        %3120 = vmatmul.bf16.gmra.mxu0 %v2735
        %v3121 = vpop.f32.mrf.mxu0
        %v3122 = vadd.f32 %v2635, %v3121
        %v3123 = vpop.f32.mrf.mxu0
        %v3124 = vadd.f32 %v2640, %v3123
        %3125 = vmatmul.bf16.gmra.mxu0 %v2738
        %v3126 = vpop.f32.mrf.mxu0
        %v3127 = vadd.f32 %v2645, %v3126
        %v3128 = vpop.f32.mrf.mxu0
        %v3129 = vadd.f32 %v2650, %v3128
        %3130 = vdwg.mxu0
        %v3131 = vmax.f32 %v3092, 0.0
        %v3132 = vmax.f32 %v3094, 0.0
        %v3133 = vmax.f32 %v3097, 0.0
        %v3134 = vmax.f32 %v3099, 0.0
        %v3135 = vmax.f32 %v3102, 0.0
        %v3136 = vmax.f32 %v3104, 0.0
        %v3137 = vmax.f32 %v3107, 0.0
        %v3138 = vmax.f32 %v3109, 0.0
        %v3139 = vmax.f32 %v3112, 0.0
        %v3140 = vmax.f32 %v3114, 0.0
        %v3141 = vmax.f32 %v3117, 0.0
        %v3142 = vmax.f32 %v3119, 0.0
        %v3143 = vmax.f32 %v3122, 0.0
        %v3144 = vmax.f32 %v3124, 0.0
        %v3145 = vmax.f32 %v3127, 0.0
        %v3146 = vmax.f32 %v3129, 0.0
        %v3147 = vpack.c.bf16 %v3132, %v3131
        %v3148 = vpack.c.bf16 %v3134, %v3133
        %v3149 = vpack.c.bf16 %v3136, %v3135
        %v3150 = vpack.c.bf16 %v3138, %v3137
        %v3151 = vpack.c.bf16 %v3140, %v3139
        %v3152 = vpack.c.bf16 %v3142, %v3141
        %v3153 = vpack.c.bf16 %v3144, %v3143
        %v3154 = vpack.c.bf16 %v3146, %v3145
        %3155 = vmatpush.bf16.msra.mxu0 %v3154
        %3156 = vmatpush.bf16.msra.mxu0 %v3153
        %3157 = vmatpush.bf16.msra.mxu0 %v3152
        %3158 = vmatpush.bf16.msra.mxu0 %v3151
        %3159 = vmatpush.bf16.msra.mxu0 %v3150
        %3160 = vmatpush.bf16.msra.mxu0 %v3149
        %3161 = vmatpush.bf16.msra.mxu0 %v3148
        %3162 = vmatpush.bf16.msra.mxu0 %v3147
        %3163 = vmatmul.bf16.gmra.mxu0 %v2869
        %v3164 = vpop.f32.mrf.mxu0
        %v3165 = vadd.f32 %v2816, %v3164
        %v3166 = vpop.f32.mrf.mxu0
        %v3167 = vadd.f32 %v2821, %v3166
        %3168 = vmatmul.bf16.gmra.mxu0 %v2870
        %v3169 = vpop.f32.mrf.mxu0
        %v3170 = vadd.f32 %v2826, %v3169
        %v3171 = vpop.f32.mrf.mxu0
        %v3172 = vadd.f32 %v2831, %v3171
        %3173 = vmatmul.bf16.gmra.mxu0 %v2871
        %v3174 = vpop.f32.mrf.mxu0
        %v3175 = vadd.f32 %v2836, %v3174
        %v3176 = vpop.f32.mrf.mxu0
        %v3177 = vadd.f32 %v2841, %v3176
        %3178 = vmatmul.bf16.gmra.mxu0 %v2872
        %v3179 = vpop.f32.mrf.mxu0
        %v3180 = vadd.f32 %v2846, %v3179
        %v3181 = vpop.f32.mrf.mxu0
        %v3182 = vadd.f32 %v2851, %v3181
        %3183 = vdwg.mxu0
        %v3184 = vmax.f32 %v3041, %v3165
        %v3185 = vmax.f32 %v3042, %v3167
        %v3186 = vmax.f32 %v3043, %v3170
        %v3187 = vmax.f32 %v3044, %v3172
        %v3188 = vmax.f32 %v3045, %v3175
        %v3189 = vmax.f32 %v3046, %v3177
        %v3190 = vmax.f32 %v3047, %v3180
        %v3191 = vmax.f32 %v3048, %v3182
        %s3192 = scalar_lea.vmem %s1039, 96 [#allocation3]
        %v3193 = vld [vmem:[%s3192] sm:$0xf]
        %v3194 = vld [vmem:[%s3192 + $0x4] sm:$0xf]
        %v3195 = vld [vmem:[%s3192 + $0x8] sm:$0xf]
        %v3196 = vld [vmem:[%s3192 + $0xc] sm:$0xf]
        %v3197 = vld [vmem:[%s3192 + $0x10] sm:$0xf]
        %v3198 = vld [vmem:[%s3192 + $0x14] sm:$0xf]
        %v3199 = vld [vmem:[%s3192 + $0x18] sm:$0xf]
        %v3200 = vld [vmem:[%s3192 + $0x1c] sm:$0xf]
        %v3209 = vunpack.c.l.b16 %v3193
        %v3210 = vunpack.c.l.b16 %v3194
        %v3211 = vunpack.c.l.b16 %v3195
        %v3212 = vunpack.c.l.b16 %v3196
        %v3213 = vunpack.c.l.b16 %v3197
        %v3214 = vunpack.c.l.b16 %v3198
        %v3215 = vunpack.c.l.b16 %v3199
        %v3216 = vunpack.c.l.b16 %v3200
        %v3217 = vpack.c.b16 %v3210, %v3209
        %v3218 = vpack.c.b16 %v3212, %v3211
        %v3219 = vpack.c.b16 %v3214, %v3213
        %v3220 = vpack.c.b16 %v3216, %v3215
        %3225 = vmatpush.bf16.msra.mxu0 0
        %3226 = vmatpush.bf16.msra.mxu0 0
        %3227 = vmatpush.bf16.msra.mxu0 0
        %3228 = vmatpush.bf16.msra.mxu0 0
        %3229 = vmatpush.bf16.msra.mxu0 %v3220
        %3230 = vmatpush.bf16.msra.mxu0 %v3219
        %3231 = vmatpush.bf16.msra.mxu0 %v3218
        %3232 = vmatpush.bf16.msra.mxu0 %v3217
        %3233 = vmatmul.bf16.gmra.mxu0 %v2717
        %v3234 = vpop.f32.mrf.mxu0
        %v3235 = vadd.f32 %v2575, %v3234
        %v3236 = vpop.f32.mrf.mxu0
        %v3237 = vadd.f32 %v2580, %v3236
        %3238 = vmatmul.bf16.gmra.mxu0 %v2720
        %v3239 = vpop.f32.mrf.mxu0
        %v3240 = vadd.f32 %v2585, %v3239
        %v3241 = vpop.f32.mrf.mxu0
        %v3242 = vadd.f32 %v2590, %v3241
        %3243 = vmatmul.bf16.gmra.mxu0 %v2723
        %v3244 = vpop.f32.mrf.mxu0
        %v3245 = vadd.f32 %v2595, %v3244
        %v3246 = vpop.f32.mrf.mxu0
        %v3247 = vadd.f32 %v2600, %v3246
        %3248 = vmatmul.bf16.gmra.mxu0 %v2726
        %v3249 = vpop.f32.mrf.mxu0
        %v3250 = vadd.f32 %v2605, %v3249
        %v3251 = vpop.f32.mrf.mxu0
        %v3252 = vadd.f32 %v2610, %v3251
        %3253 = vmatmul.bf16.gmra.mxu0 %v2729
        %v3254 = vpop.f32.mrf.mxu0
        %v3255 = vadd.f32 %v2615, %v3254
        %v3256 = vpop.f32.mrf.mxu0
        %v3257 = vadd.f32 %v2620, %v3256
        %3258 = vmatmul.bf16.gmra.mxu0 %v2732
        %v3259 = vpop.f32.mrf.mxu0
        %v3260 = vadd.f32 %v2625, %v3259
        %v3261 = vpop.f32.mrf.mxu0
        %v3262 = vadd.f32 %v2630, %v3261
        %3263 = vmatmul.bf16.gmra.mxu0 %v2735
        %v3264 = vpop.f32.mrf.mxu0
        %v3265 = vadd.f32 %v2635, %v3264
        %v3266 = vpop.f32.mrf.mxu0
        %v3267 = vadd.f32 %v2640, %v3266
        %3268 = vmatmul.bf16.gmra.mxu0 %v2738
        %v3269 = vpop.f32.mrf.mxu0
        %v3270 = vadd.f32 %v2645, %v3269
        %v3271 = vpop.f32.mrf.mxu0
        %v3272 = vadd.f32 %v2650, %v3271
        %3273 = vdwg.mxu0
        %v3274 = vmax.f32 %v3235, 0.0
        %v3275 = vmax.f32 %v3237, 0.0
        %v3276 = vmax.f32 %v3240, 0.0
        %v3277 = vmax.f32 %v3242, 0.0
        %v3278 = vmax.f32 %v3245, 0.0
        %v3279 = vmax.f32 %v3247, 0.0
        %v3280 = vmax.f32 %v3250, 0.0
        %v3281 = vmax.f32 %v3252, 0.0
        %v3282 = vmax.f32 %v3255, 0.0
        %v3283 = vmax.f32 %v3257, 0.0
        %v3284 = vmax.f32 %v3260, 0.0
        %v3285 = vmax.f32 %v3262, 0.0
        %v3286 = vmax.f32 %v3265, 0.0
        %v3287 = vmax.f32 %v3267, 0.0
        %v3288 = vmax.f32 %v3270, 0.0
        %v3289 = vmax.f32 %v3272, 0.0
        %v3290 = vpack.c.bf16 %v3275, %v3274
        %v3291 = vpack.c.bf16 %v3277, %v3276
        %v3292 = vpack.c.bf16 %v3279, %v3278
        %v3293 = vpack.c.bf16 %v3281, %v3280
        %v3294 = vpack.c.bf16 %v3283, %v3282
        %v3295 = vpack.c.bf16 %v3285, %v3284
        %v3296 = vpack.c.bf16 %v3287, %v3286
        %v3297 = vpack.c.bf16 %v3289, %v3288
        %3298 = vmatpush.bf16.msra.mxu0 %v3297
        %3299 = vmatpush.bf16.msra.mxu0 %v3296
        %3300 = vmatpush.bf16.msra.mxu0 %v3295
        %3301 = vmatpush.bf16.msra.mxu0 %v3294
        %3302 = vmatpush.bf16.msra.mxu0 %v3293
        %3303 = vmatpush.bf16.msra.mxu0 %v3292
        %3304 = vmatpush.bf16.msra.mxu0 %v3291
        %3305 = vmatpush.bf16.msra.mxu0 %v3290
        %3306 = vmatmul.bf16.gmra.mxu0 %v2869
        %v3307 = vpop.f32.mrf.mxu0
        %v3308 = vadd.f32 %v2816, %v3307
        %v3309 = vpop.f32.mrf.mxu0
        %v3310 = vadd.f32 %v2821, %v3309
        %3311 = vmatmul.bf16.gmra.mxu0 %v2870
        %v3312 = vpop.f32.mrf.mxu0
        %v3313 = vadd.f32 %v2826, %v3312
        %v3314 = vpop.f32.mrf.mxu0
        %v3315 = vadd.f32 %v2831, %v3314
        %3316 = vmatmul.bf16.gmra.mxu0 %v2871
        %v3317 = vpop.f32.mrf.mxu0
        %v3318 = vadd.f32 %v2836, %v3317
        %v3319 = vpop.f32.mrf.mxu0
        %v3320 = vadd.f32 %v2841, %v3319
        %3321 = vmatmul.bf16.gmra.mxu0 %v2872
        %v3322 = vpop.f32.mrf.mxu0
        %v3323 = vadd.f32 %v2846, %v3322
        %v3324 = vpop.f32.mrf.mxu0
        %v3325 = vadd.f32 %v2851, %v3324
        %3326 = vdwg.mxu0
        %v3327 = vmax.f32 %v3184, %v3308
        %v3328 = vmax.f32 %v3185, %v3310
        %v3329 = vmax.f32 %v3186, %v3313
        %v3330 = vmax.f32 %v3187, %v3315
        %v3331 = vmax.f32 %v3188, %v3318
        %v3332 = vmax.f32 %v3189, %v3320
        %v3333 = vmax.f32 %v3190, %v3323
        %v3334 = vmax.f32 %v3191, %v3325
        %s3335 = scalar_lea.vmem %s1039, 128 [#allocation3]
        %v3336 = vld [vmem:[%s3335] sm:$0xf]
        %v3337 = vld [vmem:[%s3335 + $0x4] sm:$0xf]
        %v3338 = vld [vmem:[%s3335 + $0x8] sm:$0xf]
        %v3339 = vld [vmem:[%s3335 + $0xc] sm:$0xf]
        %v3340 = vld [vmem:[%s3335 + $0x10] sm:$0xf]
        %v3341 = vld [vmem:[%s3335 + $0x14] sm:$0xf]
        %v3342 = vld [vmem:[%s3335 + $0x18] sm:$0xf]
        %v3343 = vld [vmem:[%s3335 + $0x1c] sm:$0xf]
        %v3352 = vunpack.c.l.b16 %v3336
        %v3353 = vunpack.c.l.b16 %v3337
        %v3354 = vunpack.c.l.b16 %v3338
        %v3355 = vunpack.c.l.b16 %v3339
        %v3356 = vunpack.c.l.b16 %v3340
        %v3357 = vunpack.c.l.b16 %v3341
        %v3358 = vunpack.c.l.b16 %v3342
        %v3359 = vunpack.c.l.b16 %v3343
        %v3360 = vpack.c.b16 %v3353, %v3352
        %v3361 = vpack.c.b16 %v3355, %v3354
        %v3362 = vpack.c.b16 %v3357, %v3356
        %v3363 = vpack.c.b16 %v3359, %v3358
        %3368 = vmatpush.bf16.msra.mxu0 0
        %3369 = vmatpush.bf16.msra.mxu0 0
        %3370 = vmatpush.bf16.msra.mxu0 0
        %3371 = vmatpush.bf16.msra.mxu0 0
        %3372 = vmatpush.bf16.msra.mxu0 %v3363
        %3373 = vmatpush.bf16.msra.mxu0 %v3362
        %3374 = vmatpush.bf16.msra.mxu0 %v3361
        %3375 = vmatpush.bf16.msra.mxu0 %v3360
        %3376 = vmatmul.bf16.gmra.mxu0 %v2717
        %v3377 = vpop.f32.mrf.mxu0
        %v3378 = vadd.f32 %v2575, %v3377
        %v3379 = vpop.f32.mrf.mxu0
        %v3380 = vadd.f32 %v2580, %v3379
        %3381 = vmatmul.bf16.gmra.mxu0 %v2720
        %v3382 = vpop.f32.mrf.mxu0
        %v3383 = vadd.f32 %v2585, %v3382
        %v3384 = vpop.f32.mrf.mxu0
        %v3385 = vadd.f32 %v2590, %v3384
        %3386 = vmatmul.bf16.gmra.mxu0 %v2723
        %v3387 = vpop.f32.mrf.mxu0
        %v3388 = vadd.f32 %v2595, %v3387
        %v3389 = vpop.f32.mrf.mxu0
        %v3390 = vadd.f32 %v2600, %v3389
        %3391 = vmatmul.bf16.gmra.mxu0 %v2726
        %v3392 = vpop.f32.mrf.mxu0
        %v3393 = vadd.f32 %v2605, %v3392
        %v3394 = vpop.f32.mrf.mxu0
        %v3395 = vadd.f32 %v2610, %v3394
        %3396 = vmatmul.bf16.gmra.mxu0 %v2729
        %v3397 = vpop.f32.mrf.mxu0
        %v3398 = vadd.f32 %v2615, %v3397
        %v3399 = vpop.f32.mrf.mxu0
        %v3400 = vadd.f32 %v2620, %v3399
        %3401 = vmatmul.bf16.gmra.mxu0 %v2732
        %v3402 = vpop.f32.mrf.mxu0
        %v3403 = vadd.f32 %v2625, %v3402
        %v3404 = vpop.f32.mrf.mxu0
        %v3405 = vadd.f32 %v2630, %v3404
        %3406 = vmatmul.bf16.gmra.mxu0 %v2735
        %v3407 = vpop.f32.mrf.mxu0
        %v3408 = vadd.f32 %v2635, %v3407
        %v3409 = vpop.f32.mrf.mxu0
        %v3410 = vadd.f32 %v2640, %v3409
        %3411 = vmatmul.bf16.gmra.mxu0 %v2738
        %v3412 = vpop.f32.mrf.mxu0
        %v3413 = vadd.f32 %v2645, %v3412
        %v3414 = vpop.f32.mrf.mxu0
        %v3415 = vadd.f32 %v2650, %v3414
        %3416 = vdwg.mxu0
        %v3417 = vmax.f32 %v3378, 0.0
        %v3418 = vmax.f32 %v3380, 0.0
        %v3419 = vmax.f32 %v3383, 0.0
        %v3420 = vmax.f32 %v3385, 0.0
        %v3421 = vmax.f32 %v3388, 0.0
        %v3422 = vmax.f32 %v3390, 0.0
        %v3423 = vmax.f32 %v3393, 0.0
        %v3424 = vmax.f32 %v3395, 0.0
        %v3425 = vmax.f32 %v3398, 0.0
        %v3426 = vmax.f32 %v3400, 0.0
        %v3427 = vmax.f32 %v3403, 0.0
        %v3428 = vmax.f32 %v3405, 0.0
        %v3429 = vmax.f32 %v3408, 0.0
        %v3430 = vmax.f32 %v3410, 0.0
        %v3431 = vmax.f32 %v3413, 0.0
        %v3432 = vmax.f32 %v3415, 0.0
        %v3433 = vpack.c.bf16 %v3418, %v3417
        %v3434 = vpack.c.bf16 %v3420, %v3419
        %v3435 = vpack.c.bf16 %v3422, %v3421
        %v3436 = vpack.c.bf16 %v3424, %v3423
        %v3437 = vpack.c.bf16 %v3426, %v3425
        %v3438 = vpack.c.bf16 %v3428, %v3427
        %v3439 = vpack.c.bf16 %v3430, %v3429
        %v3440 = vpack.c.bf16 %v3432, %v3431
        %3441 = vmatpush.bf16.msra.mxu0 %v3440
        %3442 = vmatpush.bf16.msra.mxu0 %v3439
        %3443 = vmatpush.bf16.msra.mxu0 %v3438
        %3444 = vmatpush.bf16.msra.mxu0 %v3437
        %3445 = vmatpush.bf16.msra.mxu0 %v3436
        %3446 = vmatpush.bf16.msra.mxu0 %v3435
        %3447 = vmatpush.bf16.msra.mxu0 %v3434
        %3448 = vmatpush.bf16.msra.mxu0 %v3433
        %3449 = vmatmul.bf16.gmra.mxu0 %v2869
        %v3450 = vpop.f32.mrf.mxu0
        %v3451 = vadd.f32 %v2816, %v3450
        %v3452 = vpop.f32.mrf.mxu0
        %v3453 = vadd.f32 %v2821, %v3452
        %3454 = vmatmul.bf16.gmra.mxu0 %v2870
        %v3455 = vpop.f32.mrf.mxu0
        %v3456 = vadd.f32 %v2826, %v3455
        %v3457 = vpop.f32.mrf.mxu0
        %v3458 = vadd.f32 %v2831, %v3457
        %3459 = vmatmul.bf16.gmra.mxu0 %v2871
        %v3460 = vpop.f32.mrf.mxu0
        %v3461 = vadd.f32 %v2836, %v3460
        %v3462 = vpop.f32.mrf.mxu0
        %v3463 = vadd.f32 %v2841, %v3462
        %3464 = vmatmul.bf16.gmra.mxu0 %v2872
        %v3465 = vpop.f32.mrf.mxu0
        %v3466 = vadd.f32 %v2846, %v3465
        %v3467 = vpop.f32.mrf.mxu0
        %v3468 = vadd.f32 %v2851, %v3467
        %3469 = vdwg.mxu0
        %v3470 = vmax.f32 %v3327, %v3451
        %v3471 = vmax.f32 %v3328, %v3453
        %v3472 = vmax.f32 %v3329, %v3456
        %v3473 = vmax.f32 %v3330, %v3458
        %v3474 = vmax.f32 %v3331, %v3461
        %v3475 = vmax.f32 %v3332, %v3463
        %v3476 = vmax.f32 %v3333, %v3466
        %v3477 = vmax.f32 %v3334, %v3468
        %s3478 = scalar_lea.vmem %s1039, 160 [#allocation3]
        %v3479 = vld [vmem:[%s3478] sm:$0xf]
        %v3480 = vld [vmem:[%s3478 + $0x4] sm:$0xf]
        %v3481 = vld [vmem:[%s3478 + $0x8] sm:$0xf]
        %v3482 = vld [vmem:[%s3478 + $0xc] sm:$0xf]
        %v3483 = vld [vmem:[%s3478 + $0x10] sm:$0xf]
        %v3484 = vld [vmem:[%s3478 + $0x14] sm:$0xf]
        %v3485 = vld [vmem:[%s3478 + $0x18] sm:$0xf]
        %v3486 = vld [vmem:[%s3478 + $0x1c] sm:$0xf]
        %v3495 = vunpack.c.l.b16 %v3479
        %v3496 = vunpack.c.l.b16 %v3480
        %v3497 = vunpack.c.l.b16 %v3481
        %v3498 = vunpack.c.l.b16 %v3482
        %v3499 = vunpack.c.l.b16 %v3483
        %v3500 = vunpack.c.l.b16 %v3484
        %v3501 = vunpack.c.l.b16 %v3485
        %v3502 = vunpack.c.l.b16 %v3486
        %v3503 = vpack.c.b16 %v3496, %v3495
        %v3504 = vpack.c.b16 %v3498, %v3497
        %v3505 = vpack.c.b16 %v3500, %v3499
        %v3506 = vpack.c.b16 %v3502, %v3501
        %3511 = vmatpush.bf16.msra.mxu0 0
        %3512 = vmatpush.bf16.msra.mxu0 0
        %3513 = vmatpush.bf16.msra.mxu0 0
        %3514 = vmatpush.bf16.msra.mxu0 0
        %3515 = vmatpush.bf16.msra.mxu0 %v3506
        %3516 = vmatpush.bf16.msra.mxu0 %v3505
        %3517 = vmatpush.bf16.msra.mxu0 %v3504
        %3518 = vmatpush.bf16.msra.mxu0 %v3503
        %3519 = vmatmul.bf16.gmra.mxu0 %v2717
        %v3520 = vpop.f32.mrf.mxu0
        %v3521 = vadd.f32 %v2575, %v3520
        %v3522 = vpop.f32.mrf.mxu0
        %v3523 = vadd.f32 %v2580, %v3522
        %3524 = vmatmul.bf16.gmra.mxu0 %v2720
        %v3525 = vpop.f32.mrf.mxu0
        %v3526 = vadd.f32 %v2585, %v3525
        %v3527 = vpop.f32.mrf.mxu0
        %v3528 = vadd.f32 %v2590, %v3527
        %3529 = vmatmul.bf16.gmra.mxu0 %v2723
        %v3530 = vpop.f32.mrf.mxu0
        %v3531 = vadd.f32 %v2595, %v3530
        %v3532 = vpop.f32.mrf.mxu0
        %v3533 = vadd.f32 %v2600, %v3532
        %3534 = vmatmul.bf16.gmra.mxu0 %v2726
        %v3535 = vpop.f32.mrf.mxu0
        %v3536 = vadd.f32 %v2605, %v3535
        %v3537 = vpop.f32.mrf.mxu0
        %v3538 = vadd.f32 %v2610, %v3537
        %3539 = vmatmul.bf16.gmra.mxu0 %v2729
        %v3540 = vpop.f32.mrf.mxu0
        %v3541 = vadd.f32 %v2615, %v3540
        %v3542 = vpop.f32.mrf.mxu0
        %v3543 = vadd.f32 %v2620, %v3542
        %3544 = vmatmul.bf16.gmra.mxu0 %v2732
        %v3545 = vpop.f32.mrf.mxu0
        %v3546 = vadd.f32 %v2625, %v3545
        %v3547 = vpop.f32.mrf.mxu0
        %v3548 = vadd.f32 %v2630, %v3547
        %3549 = vmatmul.bf16.gmra.mxu0 %v2735
        %v3550 = vpop.f32.mrf.mxu0
        %v3551 = vadd.f32 %v2635, %v3550
        %v3552 = vpop.f32.mrf.mxu0
        %v3553 = vadd.f32 %v2640, %v3552
        %3554 = vmatmul.bf16.gmra.mxu0 %v2738
        %v3555 = vpop.f32.mrf.mxu0
        %v3556 = vadd.f32 %v2645, %v3555
        %v3557 = vpop.f32.mrf.mxu0
        %v3558 = vadd.f32 %v2650, %v3557
        %3559 = vdwg.mxu0
        %v3560 = vmax.f32 %v3521, 0.0
        %v3561 = vmax.f32 %v3523, 0.0
        %v3562 = vmax.f32 %v3526, 0.0
        %v3563 = vmax.f32 %v3528, 0.0
        %v3564 = vmax.f32 %v3531, 0.0
        %v3565 = vmax.f32 %v3533, 0.0
        %v3566 = vmax.f32 %v3536, 0.0
        %v3567 = vmax.f32 %v3538, 0.0
        %v3568 = vmax.f32 %v3541, 0.0
        %v3569 = vmax.f32 %v3543, 0.0
        %v3570 = vmax.f32 %v3546, 0.0
        %v3571 = vmax.f32 %v3548, 0.0
        %v3572 = vmax.f32 %v3551, 0.0
        %v3573 = vmax.f32 %v3553, 0.0
        %v3574 = vmax.f32 %v3556, 0.0
        %v3575 = vmax.f32 %v3558, 0.0
        %v3576 = vpack.c.bf16 %v3561, %v3560
        %v3577 = vpack.c.bf16 %v3563, %v3562
        %v3578 = vpack.c.bf16 %v3565, %v3564
        %v3579 = vpack.c.bf16 %v3567, %v3566
        %v3580 = vpack.c.bf16 %v3569, %v3568
        %v3581 = vpack.c.bf16 %v3571, %v3570
        %v3582 = vpack.c.bf16 %v3573, %v3572
        %v3583 = vpack.c.bf16 %v3575, %v3574
        %3584 = vmatpush.bf16.msra.mxu0 %v3583
        %3585 = vmatpush.bf16.msra.mxu0 %v3582
        %3586 = vmatpush.bf16.msra.mxu0 %v3581
        %3587 = vmatpush.bf16.msra.mxu0 %v3580
        %3588 = vmatpush.bf16.msra.mxu0 %v3579
        %3589 = vmatpush.bf16.msra.mxu0 %v3578
        %3590 = vmatpush.bf16.msra.mxu0 %v3577
        %3591 = vmatpush.bf16.msra.mxu0 %v3576
        %3592 = vmatmul.bf16.gmra.mxu0 %v2869
        %v3593 = vpop.f32.mrf.mxu0
        %v3594 = vadd.f32 %v2816, %v3593
        %v3595 = vpop.f32.mrf.mxu0
        %v3596 = vadd.f32 %v2821, %v3595
        %3597 = vmatmul.bf16.gmra.mxu0 %v2870
        %v3598 = vpop.f32.mrf.mxu0
        %v3599 = vadd.f32 %v2826, %v3598
        %v3600 = vpop.f32.mrf.mxu0
        %v3601 = vadd.f32 %v2831, %v3600
        %3602 = vmatmul.bf16.gmra.mxu0 %v2871
        %v3603 = vpop.f32.mrf.mxu0
        %v3604 = vadd.f32 %v2836, %v3603
        %v3605 = vpop.f32.mrf.mxu0
        %v3606 = vadd.f32 %v2841, %v3605
        %3607 = vmatmul.bf16.gmra.mxu0 %v2872
        %v3608 = vpop.f32.mrf.mxu0
        %v3609 = vadd.f32 %v2846, %v3608
        %v3610 = vpop.f32.mrf.mxu0
        %v3611 = vadd.f32 %v2851, %v3610
        %3612 = vdwg.mxu0
        %v3613 = vmax.f32 %v3470, %v3594
        %v3614 = vmax.f32 %v3471, %v3596
        %v3615 = vmax.f32 %v3472, %v3599
        %v3616 = vmax.f32 %v3473, %v3601
        %v3617 = vmax.f32 %v3474, %v3604
        %v3618 = vmax.f32 %v3475, %v3606
        %v3619 = vmax.f32 %v3476, %v3609
        %v3620 = vmax.f32 %v3477, %v3611
        %s3621 = scalar_lea.vmem %s1039, 192 [#allocation3]
        %v3622 = vld [vmem:[%s3621] sm:$0xf]
        %v3623 = vld [vmem:[%s3621 + $0x4] sm:$0xf]
        %v3624 = vld [vmem:[%s3621 + $0x8] sm:$0xf]
        %v3625 = vld [vmem:[%s3621 + $0xc] sm:$0xf]
        %v3626 = vld [vmem:[%s3621 + $0x10] sm:$0xf]
        %v3627 = vld [vmem:[%s3621 + $0x14] sm:$0xf]
        %v3628 = vld [vmem:[%s3621 + $0x18] sm:$0xf]
        %v3629 = vld [vmem:[%s3621 + $0x1c] sm:$0xf]
        %v3638 = vunpack.c.l.b16 %v3622
        %v3639 = vunpack.c.l.b16 %v3623
        %v3640 = vunpack.c.l.b16 %v3624
        %v3641 = vunpack.c.l.b16 %v3625
        %v3642 = vunpack.c.l.b16 %v3626
        %v3643 = vunpack.c.l.b16 %v3627
        %v3644 = vunpack.c.l.b16 %v3628
        %v3645 = vunpack.c.l.b16 %v3629
        %v3646 = vpack.c.b16 %v3639, %v3638
        %v3647 = vpack.c.b16 %v3641, %v3640
        %v3648 = vpack.c.b16 %v3643, %v3642
        %v3649 = vpack.c.b16 %v3645, %v3644
        %3654 = vmatpush.bf16.msra.mxu0 0
        %3655 = vmatpush.bf16.msra.mxu0 0
        %3656 = vmatpush.bf16.msra.mxu0 0
        %3657 = vmatpush.bf16.msra.mxu0 0
        %3658 = vmatpush.bf16.msra.mxu0 %v3649
        %3659 = vmatpush.bf16.msra.mxu0 %v3648
        %3660 = vmatpush.bf16.msra.mxu0 %v3647
        %3661 = vmatpush.bf16.msra.mxu0 %v3646
        %3662 = vmatmul.bf16.gmra.mxu0 %v2717
        %v3663 = vpop.f32.mrf.mxu0
        %v3664 = vadd.f32 %v2575, %v3663
        %v3665 = vpop.f32.mrf.mxu0
        %v3666 = vadd.f32 %v2580, %v3665
        %3667 = vmatmul.bf16.gmra.mxu0 %v2720
        %v3668 = vpop.f32.mrf.mxu0
        %v3669 = vadd.f32 %v2585, %v3668
        %v3670 = vpop.f32.mrf.mxu0
        %v3671 = vadd.f32 %v2590, %v3670
        %3672 = vmatmul.bf16.gmra.mxu0 %v2723
        %v3673 = vpop.f32.mrf.mxu0
        %v3674 = vadd.f32 %v2595, %v3673
        %v3675 = vpop.f32.mrf.mxu0
        %v3676 = vadd.f32 %v2600, %v3675
        %3677 = vmatmul.bf16.gmra.mxu0 %v2726
        %v3678 = vpop.f32.mrf.mxu0
        %v3679 = vadd.f32 %v2605, %v3678
        %v3680 = vpop.f32.mrf.mxu0
        %v3681 = vadd.f32 %v2610, %v3680
        %3682 = vmatmul.bf16.gmra.mxu0 %v2729
        %v3683 = vpop.f32.mrf.mxu0
        %v3684 = vadd.f32 %v2615, %v3683
        %v3685 = vpop.f32.mrf.mxu0
        %v3686 = vadd.f32 %v2620, %v3685
        %3687 = vmatmul.bf16.gmra.mxu0 %v2732
        %v3688 = vpop.f32.mrf.mxu0
        %v3689 = vadd.f32 %v2625, %v3688
        %v3690 = vpop.f32.mrf.mxu0
        %v3691 = vadd.f32 %v2630, %v3690
        %3692 = vmatmul.bf16.gmra.mxu0 %v2735
        %v3693 = vpop.f32.mrf.mxu0
        %v3694 = vadd.f32 %v2635, %v3693
        %v3695 = vpop.f32.mrf.mxu0
        %v3696 = vadd.f32 %v2640, %v3695
        %3697 = vmatmul.bf16.gmra.mxu0 %v2738
        %v3698 = vpop.f32.mrf.mxu0
        %v3699 = vadd.f32 %v2645, %v3698
        %v3700 = vpop.f32.mrf.mxu0
        %v3701 = vadd.f32 %v2650, %v3700
        %3702 = vdwg.mxu0
        %v3703 = vmax.f32 %v3664, 0.0
        %v3704 = vmax.f32 %v3666, 0.0
        %v3705 = vmax.f32 %v3669, 0.0
        %v3706 = vmax.f32 %v3671, 0.0
        %v3707 = vmax.f32 %v3674, 0.0
        %v3708 = vmax.f32 %v3676, 0.0
        %v3709 = vmax.f32 %v3679, 0.0
        %v3710 = vmax.f32 %v3681, 0.0
        %v3711 = vmax.f32 %v3684, 0.0
        %v3712 = vmax.f32 %v3686, 0.0
        %v3713 = vmax.f32 %v3689, 0.0
        %v3714 = vmax.f32 %v3691, 0.0
        %v3715 = vmax.f32 %v3694, 0.0
        %v3716 = vmax.f32 %v3696, 0.0
        %v3717 = vmax.f32 %v3699, 0.0
        %v3718 = vmax.f32 %v3701, 0.0
        %v3719 = vpack.c.bf16 %v3704, %v3703
        %v3720 = vpack.c.bf16 %v3706, %v3705
        %v3721 = vpack.c.bf16 %v3708, %v3707
        %v3722 = vpack.c.bf16 %v3710, %v3709
        %v3723 = vpack.c.bf16 %v3712, %v3711
        %v3724 = vpack.c.bf16 %v3714, %v3713
        %v3725 = vpack.c.bf16 %v3716, %v3715
        %v3726 = vpack.c.bf16 %v3718, %v3717
        %3727 = vmatpush.bf16.msra.mxu0 %v3726
        %3728 = vmatpush.bf16.msra.mxu0 %v3725
        %3729 = vmatpush.bf16.msra.mxu0 %v3724
        %3730 = vmatpush.bf16.msra.mxu0 %v3723
        %3731 = vmatpush.bf16.msra.mxu0 %v3722
        %3732 = vmatpush.bf16.msra.mxu0 %v3721
        %3733 = vmatpush.bf16.msra.mxu0 %v3720
        %3734 = vmatpush.bf16.msra.mxu0 %v3719
        %3735 = vmatmul.bf16.gmra.mxu0 %v2869
        %v3736 = vpop.f32.mrf.mxu0
        %v3737 = vadd.f32 %v2816, %v3736
        %v3738 = vpop.f32.mrf.mxu0
        %v3739 = vadd.f32 %v2821, %v3738
        %3740 = vmatmul.bf16.gmra.mxu0 %v2870
        %v3741 = vpop.f32.mrf.mxu0
        %v3742 = vadd.f32 %v2826, %v3741
        %v3743 = vpop.f32.mrf.mxu0
        %v3744 = vadd.f32 %v2831, %v3743
        %3745 = vmatmul.bf16.gmra.mxu0 %v2871
        %v3746 = vpop.f32.mrf.mxu0
        %v3747 = vadd.f32 %v2836, %v3746
        %v3748 = vpop.f32.mrf.mxu0
        %v3749 = vadd.f32 %v2841, %v3748
        %3750 = vmatmul.bf16.gmra.mxu0 %v2872
        %v3751 = vpop.f32.mrf.mxu0
        %v3752 = vadd.f32 %v2846, %v3751
        %v3753 = vpop.f32.mrf.mxu0
        %v3754 = vadd.f32 %v2851, %v3753
        %3755 = vdwg.mxu0
        %v3756 = vmax.f32 %v3613, %v3737
        %v3757 = vmax.f32 %v3614, %v3739
        %v3758 = vmax.f32 %v3615, %v3742
        %v3759 = vmax.f32 %v3616, %v3744
        %v3760 = vmax.f32 %v3617, %v3747
        %v3761 = vmax.f32 %v3618, %v3749
        %v3762 = vmax.f32 %v3619, %v3752
        %v3763 = vmax.f32 %v3620, %v3754
        %s3764 = scalar_lea.vmem %s1039, 224 [#allocation3]
        %v3765 = vld [vmem:[%s3764] sm:$0xf]
        %v3766 = vld [vmem:[%s3764 + $0x4] sm:$0xf]
        %v3767 = vld [vmem:[%s3764 + $0x8] sm:$0xf]
        %v3768 = vld [vmem:[%s3764 + $0xc] sm:$0xf]
        %v3769 = vld [vmem:[%s3764 + $0x10] sm:$0xf]
        %v3770 = vld [vmem:[%s3764 + $0x14] sm:$0xf]
        %v3771 = vld [vmem:[%s3764 + $0x18] sm:$0xf]
        %v3772 = vld [vmem:[%s3764 + $0x1c] sm:$0xf]
        %v3781 = vunpack.c.l.b16 %v3765
        %v3782 = vunpack.c.l.b16 %v3766
        %v3783 = vunpack.c.l.b16 %v3767
        %v3784 = vunpack.c.l.b16 %v3768
        %v3785 = vunpack.c.l.b16 %v3769
        %v3786 = vunpack.c.l.b16 %v3770
        %v3787 = vunpack.c.l.b16 %v3771
        %v3788 = vunpack.c.l.b16 %v3772
        %v3789 = vpack.c.b16 %v3782, %v3781
        %v3790 = vpack.c.b16 %v3784, %v3783
        %v3791 = vpack.c.b16 %v3786, %v3785
        %v3792 = vpack.c.b16 %v3788, %v3787
        %3797 = vmatpush.bf16.msra.mxu0 0
        %3798 = vmatpush.bf16.msra.mxu0 0
        %3799 = vmatpush.bf16.msra.mxu0 0
        %3800 = vmatpush.bf16.msra.mxu0 0
        %3801 = vmatpush.bf16.msra.mxu0 %v3792
        %3802 = vmatpush.bf16.msra.mxu0 %v3791
        %3803 = vmatpush.bf16.msra.mxu0 %v3790
        %3804 = vmatpush.bf16.msra.mxu0 %v3789
        %3805 = vmatmul.bf16.gmra.mxu0 %v2717
        %v3806 = vpop.f32.mrf.mxu0
        %v3807 = vadd.f32 %v2575, %v3806
        %v3808 = vpop.f32.mrf.mxu0
        %v3809 = vadd.f32 %v2580, %v3808
        %3810 = vmatmul.bf16.gmra.mxu0 %v2720
        %v3811 = vpop.f32.mrf.mxu0
        %v3812 = vadd.f32 %v2585, %v3811
        %v3813 = vpop.f32.mrf.mxu0
        %v3814 = vadd.f32 %v2590, %v3813
        %3815 = vmatmul.bf16.gmra.mxu0 %v2723
        %v3816 = vpop.f32.mrf.mxu0
        %v3817 = vadd.f32 %v2595, %v3816
        %v3818 = vpop.f32.mrf.mxu0
        %v3819 = vadd.f32 %v2600, %v3818
        %3820 = vmatmul.bf16.gmra.mxu0 %v2726
        %v3821 = vpop.f32.mrf.mxu0
        %v3822 = vadd.f32 %v2605, %v3821
        %v3823 = vpop.f32.mrf.mxu0
        %v3824 = vadd.f32 %v2610, %v3823
        %3825 = vmatmul.bf16.gmra.mxu0 %v2729
        %v3826 = vpop.f32.mrf.mxu0
        %v3827 = vadd.f32 %v2615, %v3826
        %v3828 = vpop.f32.mrf.mxu0
        %v3829 = vadd.f32 %v2620, %v3828
        %3830 = vmatmul.bf16.gmra.mxu0 %v2732
        %v3831 = vpop.f32.mrf.mxu0
        %v3832 = vadd.f32 %v2625, %v3831
        %v3833 = vpop.f32.mrf.mxu0
        %v3834 = vadd.f32 %v2630, %v3833
        %3835 = vmatmul.bf16.gmra.mxu0 %v2735
        %v3836 = vpop.f32.mrf.mxu0
        %v3837 = vadd.f32 %v2635, %v3836
        %v3838 = vpop.f32.mrf.mxu0
        %v3839 = vadd.f32 %v2640, %v3838
        %3840 = vmatmul.bf16.gmra.mxu0 %v2738
        %v3841 = vpop.f32.mrf.mxu0
        %v3842 = vadd.f32 %v2645, %v3841
        %v3843 = vpop.f32.mrf.mxu0
        %v3844 = vadd.f32 %v2650, %v3843
        %3845 = vdwg.mxu0
        %v3846 = vmax.f32 %v3807, 0.0
        %v3847 = vmax.f32 %v3809, 0.0
        %v3848 = vmax.f32 %v3812, 0.0
        %v3849 = vmax.f32 %v3814, 0.0
        %v3850 = vmax.f32 %v3817, 0.0
        %v3851 = vmax.f32 %v3819, 0.0
        %v3852 = vmax.f32 %v3822, 0.0
        %v3853 = vmax.f32 %v3824, 0.0
        %v3854 = vmax.f32 %v3827, 0.0
        %v3855 = vmax.f32 %v3829, 0.0
        %v3856 = vmax.f32 %v3832, 0.0
        %v3857 = vmax.f32 %v3834, 0.0
        %v3858 = vmax.f32 %v3837, 0.0
        %v3859 = vmax.f32 %v3839, 0.0
        %v3860 = vmax.f32 %v3842, 0.0
        %v3861 = vmax.f32 %v3844, 0.0
        %v3862 = vpack.c.bf16 %v3847, %v3846
        %v3863 = vpack.c.bf16 %v3849, %v3848
        %v3864 = vpack.c.bf16 %v3851, %v3850
        %v3865 = vpack.c.bf16 %v3853, %v3852
        %v3866 = vpack.c.bf16 %v3855, %v3854
        %v3867 = vpack.c.bf16 %v3857, %v3856
        %v3868 = vpack.c.bf16 %v3859, %v3858
        %v3869 = vpack.c.bf16 %v3861, %v3860
        %3870 = vmatpush.bf16.msra.mxu0 %v3869
        %3871 = vmatpush.bf16.msra.mxu0 %v3868
        %3872 = vmatpush.bf16.msra.mxu0 %v3867
        %3873 = vmatpush.bf16.msra.mxu0 %v3866
        %3874 = vmatpush.bf16.msra.mxu0 %v3865
        %3875 = vmatpush.bf16.msra.mxu0 %v3864
        %3876 = vmatpush.bf16.msra.mxu0 %v3863
        %3877 = vmatpush.bf16.msra.mxu0 %v3862
        %3878 = vmatmul.bf16.gmra.mxu0 %v2869
        %v3879 = vpop.f32.mrf.mxu0
        %v3880 = vadd.f32 %v2816, %v3879
        %v3881 = vpop.f32.mrf.mxu0
        %v3882 = vadd.f32 %v2821, %v3881
        %3883 = vmatmul.bf16.gmra.mxu0 %v2870
        %v3884 = vpop.f32.mrf.mxu0
        %v3885 = vadd.f32 %v2826, %v3884
        %v3886 = vpop.f32.mrf.mxu0
        %v3887 = vadd.f32 %v2831, %v3886
        %3888 = vmatmul.bf16.gmra.mxu0 %v2871
        %v3889 = vpop.f32.mrf.mxu0
        %v3890 = vadd.f32 %v2836, %v3889
        %v3891 = vpop.f32.mrf.mxu0
        %v3892 = vadd.f32 %v2841, %v3891
        %3893 = vmatmul.bf16.gmra.mxu0 %v2872
        %v3894 = vpop.f32.mrf.mxu0
        %v3895 = vadd.f32 %v2846, %v3894
        %v3896 = vpop.f32.mrf.mxu0
        %v3897 = vadd.f32 %v2851, %v3896
        %3898 = vdwg.mxu0
        %v3899 = vmax.f32 %v3756, %v3880
        %v3900 = vmax.f32 %v3757, %v3882
        %v3901 = vmax.f32 %v3758, %v3885
        %v3902 = vmax.f32 %v3759, %v3887
        %v3903 = vmax.f32 %v3760, %v3890
        %v3904 = vmax.f32 %v3761, %v3892
        %v3905 = vmax.f32 %v3762, %v3895
        %v3906 = vmax.f32 %v3763, %v3897
        %s3907 = scalar_lea.vmem %s1039, 256 [#allocation3]
        %v3908 = vld [vmem:[%s3907] sm:$0xf]
        %v3909 = vld [vmem:[%s3907 + $0x4] sm:$0xf]
        %v3910 = vld [vmem:[%s3907 + $0x8] sm:$0xf]
        %v3911 = vld [vmem:[%s3907 + $0xc] sm:$0xf]
        %v3912 = vld [vmem:[%s3907 + $0x10] sm:$0xf]
        %v3913 = vld [vmem:[%s3907 + $0x14] sm:$0xf]
        %v3914 = vld [vmem:[%s3907 + $0x18] sm:$0xf]
        %v3915 = vld [vmem:[%s3907 + $0x1c] sm:$0xf]
        %v3924 = vunpack.c.l.b16 %v3908
        %v3925 = vunpack.c.l.b16 %v3909
        %v3926 = vunpack.c.l.b16 %v3910
        %v3927 = vunpack.c.l.b16 %v3911
        %v3928 = vunpack.c.l.b16 %v3912
        %v3929 = vunpack.c.l.b16 %v3913
        %v3930 = vunpack.c.l.b16 %v3914
        %v3931 = vunpack.c.l.b16 %v3915
        %v3932 = vpack.c.b16 %v3925, %v3924
        %v3933 = vpack.c.b16 %v3927, %v3926
        %v3934 = vpack.c.b16 %v3929, %v3928
        %v3935 = vpack.c.b16 %v3931, %v3930
        %3940 = vmatpush.bf16.msra.mxu0 0
        %3941 = vmatpush.bf16.msra.mxu0 0
        %3942 = vmatpush.bf16.msra.mxu0 0
        %3943 = vmatpush.bf16.msra.mxu0 0
        %3944 = vmatpush.bf16.msra.mxu0 %v3935
        %3945 = vmatpush.bf16.msra.mxu0 %v3934
        %3946 = vmatpush.bf16.msra.mxu0 %v3933
        %3947 = vmatpush.bf16.msra.mxu0 %v3932
        %3948 = vmatmul.bf16.gmra.mxu0 %v2717
        %v3949 = vpop.f32.mrf.mxu0
        %v3950 = vadd.f32 %v2575, %v3949
        %v3951 = vpop.f32.mrf.mxu0
        %v3952 = vadd.f32 %v2580, %v3951
        %3953 = vmatmul.bf16.gmra.mxu0 %v2720
        %v3954 = vpop.f32.mrf.mxu0
        %v3955 = vadd.f32 %v2585, %v3954
        %v3956 = vpop.f32.mrf.mxu0
        %v3957 = vadd.f32 %v2590, %v3956
        %3958 = vmatmul.bf16.gmra.mxu0 %v2723
        %v3959 = vpop.f32.mrf.mxu0
        %v3960 = vadd.f32 %v2595, %v3959
        %v3961 = vpop.f32.mrf.mxu0
        %v3962 = vadd.f32 %v2600, %v3961
        %3963 = vmatmul.bf16.gmra.mxu0 %v2726
        %v3964 = vpop.f32.mrf.mxu0
        %v3965 = vadd.f32 %v2605, %v3964
        %v3966 = vpop.f32.mrf.mxu0
        %v3967 = vadd.f32 %v2610, %v3966
        %3968 = vmatmul.bf16.gmra.mxu0 %v2729
        %v3969 = vpop.f32.mrf.mxu0
        %v3970 = vadd.f32 %v2615, %v3969
        %v3971 = vpop.f32.mrf.mxu0
        %v3972 = vadd.f32 %v2620, %v3971
        %3973 = vmatmul.bf16.gmra.mxu0 %v2732
        %v3974 = vpop.f32.mrf.mxu0
        %v3975 = vadd.f32 %v2625, %v3974
        %v3976 = vpop.f32.mrf.mxu0
        %v3977 = vadd.f32 %v2630, %v3976
        %3978 = vmatmul.bf16.gmra.mxu0 %v2735
        %v3979 = vpop.f32.mrf.mxu0
        %v3980 = vadd.f32 %v2635, %v3979
        %v3981 = vpop.f32.mrf.mxu0
        %v3982 = vadd.f32 %v2640, %v3981
        %3983 = vmatmul.bf16.gmra.mxu0 %v2738
        %v3984 = vpop.f32.mrf.mxu0
        %v3985 = vadd.f32 %v2645, %v3984
        %v3986 = vpop.f32.mrf.mxu0
        %v3987 = vadd.f32 %v2650, %v3986
        %3988 = vdwg.mxu0
        %v3989 = vmax.f32 %v3950, 0.0
        %v3990 = vmax.f32 %v3952, 0.0
        %v3991 = vmax.f32 %v3955, 0.0
        %v3992 = vmax.f32 %v3957, 0.0
        %v3993 = vmax.f32 %v3960, 0.0
        %v3994 = vmax.f32 %v3962, 0.0
        %v3995 = vmax.f32 %v3965, 0.0
        %v3996 = vmax.f32 %v3967, 0.0
        %v3997 = vmax.f32 %v3970, 0.0
        %v3998 = vmax.f32 %v3972, 0.0
        %v3999 = vmax.f32 %v3975, 0.0
        %v4000 = vmax.f32 %v3977, 0.0
        %v4001 = vmax.f32 %v3980, 0.0
        %v4002 = vmax.f32 %v3982, 0.0
        %v4003 = vmax.f32 %v3985, 0.0
        %v4004 = vmax.f32 %v3987, 0.0
        %v4005 = vpack.c.bf16 %v3990, %v3989
        %v4006 = vpack.c.bf16 %v3992, %v3991
        %v4007 = vpack.c.bf16 %v3994, %v3993
        %v4008 = vpack.c.bf16 %v3996, %v3995
        %v4009 = vpack.c.bf16 %v3998, %v3997
        %v4010 = vpack.c.bf16 %v4000, %v3999
        %v4011 = vpack.c.bf16 %v4002, %v4001
        %v4012 = vpack.c.bf16 %v4004, %v4003
        %4013 = vmatpush.bf16.msra.mxu0 %v4012
        %4014 = vmatpush.bf16.msra.mxu0 %v4011
        %4015 = vmatpush.bf16.msra.mxu0 %v4010
        %4016 = vmatpush.bf16.msra.mxu0 %v4009
        %4017 = vmatpush.bf16.msra.mxu0 %v4008
        %4018 = vmatpush.bf16.msra.mxu0 %v4007
        %4019 = vmatpush.bf16.msra.mxu0 %v4006
        %4020 = vmatpush.bf16.msra.mxu0 %v4005
        %4021 = vmatmul.bf16.gmra.mxu0 %v2869
        %v4022 = vpop.f32.mrf.mxu0
        %v4023 = vadd.f32 %v2816, %v4022
        %v4024 = vpop.f32.mrf.mxu0
        %v4025 = vadd.f32 %v2821, %v4024
        %4026 = vmatmul.bf16.gmra.mxu0 %v2870
        %v4027 = vpop.f32.mrf.mxu0
        %v4028 = vadd.f32 %v2826, %v4027
        %v4029 = vpop.f32.mrf.mxu0
        %v4030 = vadd.f32 %v2831, %v4029
        %4031 = vmatmul.bf16.gmra.mxu0 %v2871
        %v4032 = vpop.f32.mrf.mxu0
        %v4033 = vadd.f32 %v2836, %v4032
        %v4034 = vpop.f32.mrf.mxu0
        %v4035 = vadd.f32 %v2841, %v4034
        %4036 = vmatmul.bf16.gmra.mxu0 %v2872
        %v4037 = vpop.f32.mrf.mxu0
        %v4038 = vadd.f32 %v2846, %v4037
        %v4039 = vpop.f32.mrf.mxu0
        %v4040 = vadd.f32 %v2851, %v4039
        %4041 = vdwg.mxu0
        %v4042 = vmax.f32 %v3899, %v4023
        %v4043 = vmax.f32 %v3900, %v4025
        %v4044 = vmax.f32 %v3901, %v4028
        %v4045 = vmax.f32 %v3902, %v4030
        %v4046 = vmax.f32 %v3903, %v4033
        %v4047 = vmax.f32 %v3904, %v4035
        %v4048 = vmax.f32 %v3905, %v4038
        %v4049 = vmax.f32 %v3906, %v4040
        %s4050 = scalar_lea.vmem %s1039, 288 [#allocation3]
        %v4051 = vld [vmem:[%s4050] sm:$0xf]
        %v4052 = vld [vmem:[%s4050 + $0x4] sm:$0xf]
        %v4053 = vld [vmem:[%s4050 + $0x8] sm:$0xf]
        %v4054 = vld [vmem:[%s4050 + $0xc] sm:$0xf]
        %v4055 = vld [vmem:[%s4050 + $0x10] sm:$0xf]
        %v4056 = vld [vmem:[%s4050 + $0x14] sm:$0xf]
        %v4057 = vld [vmem:[%s4050 + $0x18] sm:$0xf]
        %v4058 = vld [vmem:[%s4050 + $0x1c] sm:$0xf]
        %v4067 = vunpack.c.l.b16 %v4051
        %v4068 = vunpack.c.l.b16 %v4052
        %v4069 = vunpack.c.l.b16 %v4053
        %v4070 = vunpack.c.l.b16 %v4054
        %v4071 = vunpack.c.l.b16 %v4055
        %v4072 = vunpack.c.l.b16 %v4056
        %v4073 = vunpack.c.l.b16 %v4057
        %v4074 = vunpack.c.l.b16 %v4058
        %v4075 = vpack.c.b16 %v4068, %v4067
        %v4076 = vpack.c.b16 %v4070, %v4069
        %v4077 = vpack.c.b16 %v4072, %v4071
        %v4078 = vpack.c.b16 %v4074, %v4073
        %4083 = vmatpush.bf16.msra.mxu0 0
        %4084 = vmatpush.bf16.msra.mxu0 0
        %4085 = vmatpush.bf16.msra.mxu0 0
        %4086 = vmatpush.bf16.msra.mxu0 0
        %4087 = vmatpush.bf16.msra.mxu0 %v4078
        %4088 = vmatpush.bf16.msra.mxu0 %v4077
        %4089 = vmatpush.bf16.msra.mxu0 %v4076
        %4090 = vmatpush.bf16.msra.mxu0 %v4075
        %4091 = vmatmul.bf16.gmra.mxu0 %v2717
        %v4092 = vpop.f32.mrf.mxu0
        %v4093 = vadd.f32 %v2575, %v4092
        %v4094 = vpop.f32.mrf.mxu0
        %v4095 = vadd.f32 %v2580, %v4094
        %4096 = vmatmul.bf16.gmra.mxu0 %v2720
        %v4097 = vpop.f32.mrf.mxu0
        %v4098 = vadd.f32 %v2585, %v4097
        %v4099 = vpop.f32.mrf.mxu0
        %v4100 = vadd.f32 %v2590, %v4099
        %4101 = vmatmul.bf16.gmra.mxu0 %v2723
        %v4102 = vpop.f32.mrf.mxu0
        %v4103 = vadd.f32 %v2595, %v4102
        %v4104 = vpop.f32.mrf.mxu0
        %v4105 = vadd.f32 %v2600, %v4104
        %4106 = vmatmul.bf16.gmra.mxu0 %v2726
        %v4107 = vpop.f32.mrf.mxu0
        %v4108 = vadd.f32 %v2605, %v4107
        %v4109 = vpop.f32.mrf.mxu0
        %v4110 = vadd.f32 %v2610, %v4109
        %4111 = vmatmul.bf16.gmra.mxu0 %v2729
        %v4112 = vpop.f32.mrf.mxu0
        %v4113 = vadd.f32 %v2615, %v4112
        %v4114 = vpop.f32.mrf.mxu0
        %v4115 = vadd.f32 %v2620, %v4114
        %4116 = vmatmul.bf16.gmra.mxu0 %v2732
        %v4117 = vpop.f32.mrf.mxu0
        %v4118 = vadd.f32 %v2625, %v4117
        %v4119 = vpop.f32.mrf.mxu0
        %v4120 = vadd.f32 %v2630, %v4119
        %4121 = vmatmul.bf16.gmra.mxu0 %v2735
        %v4122 = vpop.f32.mrf.mxu0
        %v4123 = vadd.f32 %v2635, %v4122
        %v4124 = vpop.f32.mrf.mxu0
        %v4125 = vadd.f32 %v2640, %v4124
        %4126 = vmatmul.bf16.gmra.mxu0 %v2738
        %v4127 = vpop.f32.mrf.mxu0
        %v4128 = vadd.f32 %v2645, %v4127
        %v4129 = vpop.f32.mrf.mxu0
        %v4130 = vadd.f32 %v2650, %v4129
        %4131 = vdwg.mxu0
        %v4132 = vmax.f32 %v4093, 0.0
        %v4133 = vmax.f32 %v4095, 0.0
        %v4134 = vmax.f32 %v4098, 0.0
        %v4135 = vmax.f32 %v4100, 0.0
        %v4136 = vmax.f32 %v4103, 0.0
        %v4137 = vmax.f32 %v4105, 0.0
        %v4138 = vmax.f32 %v4108, 0.0
        %v4139 = vmax.f32 %v4110, 0.0
        %v4140 = vmax.f32 %v4113, 0.0
        %v4141 = vmax.f32 %v4115, 0.0
        %v4142 = vmax.f32 %v4118, 0.0
        %v4143 = vmax.f32 %v4120, 0.0
        %v4144 = vmax.f32 %v4123, 0.0
        %v4145 = vmax.f32 %v4125, 0.0
        %v4146 = vmax.f32 %v4128, 0.0
        %v4147 = vmax.f32 %v4130, 0.0
        %v4148 = vpack.c.bf16 %v4133, %v4132
        %v4149 = vpack.c.bf16 %v4135, %v4134
        %v4150 = vpack.c.bf16 %v4137, %v4136
        %v4151 = vpack.c.bf16 %v4139, %v4138
        %v4152 = vpack.c.bf16 %v4141, %v4140
        %v4153 = vpack.c.bf16 %v4143, %v4142
        %v4154 = vpack.c.bf16 %v4145, %v4144
        %v4155 = vpack.c.bf16 %v4147, %v4146
        %4156 = vmatpush.bf16.msra.mxu0 %v4155
        %4157 = vmatpush.bf16.msra.mxu0 %v4154
        %4158 = vmatpush.bf16.msra.mxu0 %v4153
        %4159 = vmatpush.bf16.msra.mxu0 %v4152
        %4160 = vmatpush.bf16.msra.mxu0 %v4151
        %4161 = vmatpush.bf16.msra.mxu0 %v4150
        %4162 = vmatpush.bf16.msra.mxu0 %v4149
        %4163 = vmatpush.bf16.msra.mxu0 %v4148
        %4164 = vmatmul.bf16.gmra.mxu0 %v2869
        %v4165 = vpop.f32.mrf.mxu0
        %v4166 = vadd.f32 %v2816, %v4165
        %v4167 = vpop.f32.mrf.mxu0
        %v4168 = vadd.f32 %v2821, %v4167
        %4169 = vmatmul.bf16.gmra.mxu0 %v2870
        %v4170 = vpop.f32.mrf.mxu0
        %v4171 = vadd.f32 %v2826, %v4170
        %v4172 = vpop.f32.mrf.mxu0
        %v4173 = vadd.f32 %v2831, %v4172
        %4174 = vmatmul.bf16.gmra.mxu0 %v2871
        %v4175 = vpop.f32.mrf.mxu0
        %v4176 = vadd.f32 %v2836, %v4175
        %v4177 = vpop.f32.mrf.mxu0
        %v4178 = vadd.f32 %v2841, %v4177
        %4179 = vmatmul.bf16.gmra.mxu0 %v2872
        %v4180 = vpop.f32.mrf.mxu0
        %v4181 = vadd.f32 %v2846, %v4180
        %v4182 = vpop.f32.mrf.mxu0
        %v4183 = vadd.f32 %v2851, %v4182
        %4184 = vdwg.mxu0
        %v4185 = vmax.f32 %v4042, %v4166
        %v4186 = vmax.f32 %v4043, %v4168
        %v4187 = vmax.f32 %v4044, %v4171
        %v4188 = vmax.f32 %v4045, %v4173
        %v4189 = vmax.f32 %v4046, %v4176
        %v4190 = vmax.f32 %v4047, %v4178
        %v4191 = vmax.f32 %v4048, %v4181
        %v4192 = vmax.f32 %v4049, %v4183
        %s4193 = scalar_lea.vmem %s1039, 320 [#allocation3]
        %v4194 = vld [vmem:[%s4193] sm:$0xf]
        %v4195 = vld [vmem:[%s4193 + $0x4] sm:$0xf]
        %v4196 = vld [vmem:[%s4193 + $0x8] sm:$0xf]
        %v4197 = vld [vmem:[%s4193 + $0xc] sm:$0xf]
        %v4198 = vld [vmem:[%s4193 + $0x10] sm:$0xf]
        %v4199 = vld [vmem:[%s4193 + $0x14] sm:$0xf]
        %v4200 = vld [vmem:[%s4193 + $0x18] sm:$0xf]
        %v4201 = vld [vmem:[%s4193 + $0x1c] sm:$0xf]
        %v4210 = vunpack.c.l.b16 %v4194
        %v4211 = vunpack.c.l.b16 %v4195
        %v4212 = vunpack.c.l.b16 %v4196
        %v4213 = vunpack.c.l.b16 %v4197
        %v4214 = vunpack.c.l.b16 %v4198
        %v4215 = vunpack.c.l.b16 %v4199
        %v4216 = vunpack.c.l.b16 %v4200
        %v4217 = vunpack.c.l.b16 %v4201
        %v4218 = vpack.c.b16 %v4211, %v4210
        %v4219 = vpack.c.b16 %v4213, %v4212
        %v4220 = vpack.c.b16 %v4215, %v4214
        %v4221 = vpack.c.b16 %v4217, %v4216
        %4226 = vmatpush.bf16.msra.mxu0 0
        %4227 = vmatpush.bf16.msra.mxu0 0
        %4228 = vmatpush.bf16.msra.mxu0 0
        %4229 = vmatpush.bf16.msra.mxu0 0
        %4230 = vmatpush.bf16.msra.mxu0 %v4221
        %4231 = vmatpush.bf16.msra.mxu0 %v4220
        %4232 = vmatpush.bf16.msra.mxu0 %v4219
        %4233 = vmatpush.bf16.msra.mxu0 %v4218
        %4234 = vmatmul.bf16.gmra.mxu0 %v2717
        %v4235 = vpop.f32.mrf.mxu0
        %v4236 = vadd.f32 %v2575, %v4235
        %v4237 = vpop.f32.mrf.mxu0
        %v4238 = vadd.f32 %v2580, %v4237
        %4239 = vmatmul.bf16.gmra.mxu0 %v2720
        %v4240 = vpop.f32.mrf.mxu0
        %v4241 = vadd.f32 %v2585, %v4240
        %v4242 = vpop.f32.mrf.mxu0
        %v4243 = vadd.f32 %v2590, %v4242
        %4244 = vmatmul.bf16.gmra.mxu0 %v2723
        %v4245 = vpop.f32.mrf.mxu0
        %v4246 = vadd.f32 %v2595, %v4245
        %v4247 = vpop.f32.mrf.mxu0
        %v4248 = vadd.f32 %v2600, %v4247
        %4249 = vmatmul.bf16.gmra.mxu0 %v2726
        %v4250 = vpop.f32.mrf.mxu0
        %v4251 = vadd.f32 %v2605, %v4250
        %v4252 = vpop.f32.mrf.mxu0
        %v4253 = vadd.f32 %v2610, %v4252
        %4254 = vmatmul.bf16.gmra.mxu0 %v2729
        %v4255 = vpop.f32.mrf.mxu0
        %v4256 = vadd.f32 %v2615, %v4255
        %v4257 = vpop.f32.mrf.mxu0
        %v4258 = vadd.f32 %v2620, %v4257
        %4259 = vmatmul.bf16.gmra.mxu0 %v2732
        %v4260 = vpop.f32.mrf.mxu0
        %v4261 = vadd.f32 %v2625, %v4260
        %v4262 = vpop.f32.mrf.mxu0
        %v4263 = vadd.f32 %v2630, %v4262
        %4264 = vmatmul.bf16.gmra.mxu0 %v2735
        %v4265 = vpop.f32.mrf.mxu0
        %v4266 = vadd.f32 %v2635, %v4265
        %v4267 = vpop.f32.mrf.mxu0
        %v4268 = vadd.f32 %v2640, %v4267
        %4269 = vmatmul.bf16.gmra.mxu0 %v2738
        %v4270 = vpop.f32.mrf.mxu0
        %v4271 = vadd.f32 %v2645, %v4270
        %v4272 = vpop.f32.mrf.mxu0
        %v4273 = vadd.f32 %v2650, %v4272
        %4274 = vdwg.mxu0
        %v4275 = vmax.f32 %v4236, 0.0
        %v4276 = vmax.f32 %v4238, 0.0
        %v4277 = vmax.f32 %v4241, 0.0
        %v4278 = vmax.f32 %v4243, 0.0
        %v4279 = vmax.f32 %v4246, 0.0
        %v4280 = vmax.f32 %v4248, 0.0
        %v4281 = vmax.f32 %v4251, 0.0
        %v4282 = vmax.f32 %v4253, 0.0
        %v4283 = vmax.f32 %v4256, 0.0
        %v4284 = vmax.f32 %v4258, 0.0
        %v4285 = vmax.f32 %v4261, 0.0
        %v4286 = vmax.f32 %v4263, 0.0
        %v4287 = vmax.f32 %v4266, 0.0
        %v4288 = vmax.f32 %v4268, 0.0
        %v4289 = vmax.f32 %v4271, 0.0
        %v4290 = vmax.f32 %v4273, 0.0
        %v4291 = vpack.c.bf16 %v4276, %v4275
        %v4292 = vpack.c.bf16 %v4278, %v4277
        %v4293 = vpack.c.bf16 %v4280, %v4279
        %v4294 = vpack.c.bf16 %v4282, %v4281
        %v4295 = vpack.c.bf16 %v4284, %v4283
        %v4296 = vpack.c.bf16 %v4286, %v4285
        %v4297 = vpack.c.bf16 %v4288, %v4287
        %v4298 = vpack.c.bf16 %v4290, %v4289
        %4299 = vmatpush.bf16.msra.mxu0 %v4298
        %4300 = vmatpush.bf16.msra.mxu0 %v4297
        %4301 = vmatpush.bf16.msra.mxu0 %v4296
        %4302 = vmatpush.bf16.msra.mxu0 %v4295
        %4303 = vmatpush.bf16.msra.mxu0 %v4294
        %4304 = vmatpush.bf16.msra.mxu0 %v4293
        %4305 = vmatpush.bf16.msra.mxu0 %v4292
        %4306 = vmatpush.bf16.msra.mxu0 %v4291
        %4307 = vmatmul.bf16.gmra.mxu0 %v2869
        %v4308 = vpop.f32.mrf.mxu0
        %v4309 = vadd.f32 %v2816, %v4308
        %v4310 = vpop.f32.mrf.mxu0
        %v4311 = vadd.f32 %v2821, %v4310
        %4312 = vmatmul.bf16.gmra.mxu0 %v2870
        %v4313 = vpop.f32.mrf.mxu0
        %v4314 = vadd.f32 %v2826, %v4313
        %v4315 = vpop.f32.mrf.mxu0
        %v4316 = vadd.f32 %v2831, %v4315
        %4317 = vmatmul.bf16.gmra.mxu0 %v2871
        %v4318 = vpop.f32.mrf.mxu0
        %v4319 = vadd.f32 %v2836, %v4318
        %v4320 = vpop.f32.mrf.mxu0
        %v4321 = vadd.f32 %v2841, %v4320
        %4322 = vmatmul.bf16.gmra.mxu0 %v2872
        %v4323 = vpop.f32.mrf.mxu0
        %v4324 = vadd.f32 %v2846, %v4323
        %v4325 = vpop.f32.mrf.mxu0
        %v4326 = vadd.f32 %v2851, %v4325
        %4327 = vdwg.mxu0
        %v4328 = vmax.f32 %v4185, %v4309
        %v4329 = vmax.f32 %v4186, %v4311
        %v4330 = vmax.f32 %v4187, %v4314
        %v4331 = vmax.f32 %v4188, %v4316
        %v4332 = vmax.f32 %v4189, %v4319
        %v4333 = vmax.f32 %v4190, %v4321
        %v4334 = vmax.f32 %v4191, %v4324
        %v4335 = vmax.f32 %v4192, %v4326
        %s4336 = scalar_lea.vmem %s1039, 352 [#allocation3]
        %v4337 = vld [vmem:[%s4336] sm:$0xf]
        %v4338 = vld [vmem:[%s4336 + $0x4] sm:$0xf]
        %v4339 = vld [vmem:[%s4336 + $0x8] sm:$0xf]
        %v4340 = vld [vmem:[%s4336 + $0xc] sm:$0xf]
        %v4341 = vld [vmem:[%s4336 + $0x10] sm:$0xf]
        %v4342 = vld [vmem:[%s4336 + $0x14] sm:$0xf]
        %v4343 = vld [vmem:[%s4336 + $0x18] sm:$0xf]
        %v4344 = vld [vmem:[%s4336 + $0x1c] sm:$0xf]
        %v4353 = vunpack.c.l.b16 %v4337
        %v4354 = vunpack.c.l.b16 %v4338
        %v4355 = vunpack.c.l.b16 %v4339
        %v4356 = vunpack.c.l.b16 %v4340
        %v4357 = vunpack.c.l.b16 %v4341
        %v4358 = vunpack.c.l.b16 %v4342
        %v4359 = vunpack.c.l.b16 %v4343
        %v4360 = vunpack.c.l.b16 %v4344
        %v4361 = vpack.c.b16 %v4354, %v4353
        %v4362 = vpack.c.b16 %v4356, %v4355
        %v4363 = vpack.c.b16 %v4358, %v4357
        %v4364 = vpack.c.b16 %v4360, %v4359
        %4369 = vmatpush.bf16.msra.mxu0 0
        %4370 = vmatpush.bf16.msra.mxu0 0
        %4371 = vmatpush.bf16.msra.mxu0 0
        %4372 = vmatpush.bf16.msra.mxu0 0
        %4373 = vmatpush.bf16.msra.mxu0 %v4364
        %4374 = vmatpush.bf16.msra.mxu0 %v4363
        %4375 = vmatpush.bf16.msra.mxu0 %v4362
        %4376 = vmatpush.bf16.msra.mxu0 %v4361
        %4377 = vmatmul.bf16.gmra.mxu0 %v2717
        %v4378 = vpop.f32.mrf.mxu0
        %v4379 = vadd.f32 %v2575, %v4378
        %v4380 = vpop.f32.mrf.mxu0
        %v4381 = vadd.f32 %v2580, %v4380
        %4382 = vmatmul.bf16.gmra.mxu0 %v2720
        %v4383 = vpop.f32.mrf.mxu0
        %v4384 = vadd.f32 %v2585, %v4383
        %v4385 = vpop.f32.mrf.mxu0
        %v4386 = vadd.f32 %v2590, %v4385
        %4387 = vmatmul.bf16.gmra.mxu0 %v2723
        %v4388 = vpop.f32.mrf.mxu0
        %v4389 = vadd.f32 %v2595, %v4388
        %v4390 = vpop.f32.mrf.mxu0
        %v4391 = vadd.f32 %v2600, %v4390
        %4392 = vmatmul.bf16.gmra.mxu0 %v2726
        %v4393 = vpop.f32.mrf.mxu0
        %v4394 = vadd.f32 %v2605, %v4393
        %v4395 = vpop.f32.mrf.mxu0
        %v4396 = vadd.f32 %v2610, %v4395
        %4397 = vmatmul.bf16.gmra.mxu0 %v2729
        %v4398 = vpop.f32.mrf.mxu0
        %v4399 = vadd.f32 %v2615, %v4398
        %v4400 = vpop.f32.mrf.mxu0
        %v4401 = vadd.f32 %v2620, %v4400
        %4402 = vmatmul.bf16.gmra.mxu0 %v2732
        %v4403 = vpop.f32.mrf.mxu0
        %v4404 = vadd.f32 %v2625, %v4403
        %v4405 = vpop.f32.mrf.mxu0
        %v4406 = vadd.f32 %v2630, %v4405
        %4407 = vmatmul.bf16.gmra.mxu0 %v2735
        %v4408 = vpop.f32.mrf.mxu0
        %v4409 = vadd.f32 %v2635, %v4408
        %v4410 = vpop.f32.mrf.mxu0
        %v4411 = vadd.f32 %v2640, %v4410
        %4412 = vmatmul.bf16.gmra.mxu0 %v2738
        %v4413 = vpop.f32.mrf.mxu0
        %v4414 = vadd.f32 %v2645, %v4413
        %v4415 = vpop.f32.mrf.mxu0
        %v4416 = vadd.f32 %v2650, %v4415
        %4417 = vdwg.mxu0
        %v4418 = vmax.f32 %v4379, 0.0
        %v4419 = vmax.f32 %v4381, 0.0
        %v4420 = vmax.f32 %v4384, 0.0
        %v4421 = vmax.f32 %v4386, 0.0
        %v4422 = vmax.f32 %v4389, 0.0
        %v4423 = vmax.f32 %v4391, 0.0
        %v4424 = vmax.f32 %v4394, 0.0
        %v4425 = vmax.f32 %v4396, 0.0
        %v4426 = vmax.f32 %v4399, 0.0
        %v4427 = vmax.f32 %v4401, 0.0
        %v4428 = vmax.f32 %v4404, 0.0
        %v4429 = vmax.f32 %v4406, 0.0
        %v4430 = vmax.f32 %v4409, 0.0
        %v4431 = vmax.f32 %v4411, 0.0
        %v4432 = vmax.f32 %v4414, 0.0
        %v4433 = vmax.f32 %v4416, 0.0
        %v4434 = vpack.c.bf16 %v4419, %v4418
        %v4435 = vpack.c.bf16 %v4421, %v4420
        %v4436 = vpack.c.bf16 %v4423, %v4422
        %v4437 = vpack.c.bf16 %v4425, %v4424
        %v4438 = vpack.c.bf16 %v4427, %v4426
        %v4439 = vpack.c.bf16 %v4429, %v4428
        %v4440 = vpack.c.bf16 %v4431, %v4430
        %v4441 = vpack.c.bf16 %v4433, %v4432
        %4442 = vmatpush.bf16.msra.mxu0 %v4441
        %4443 = vmatpush.bf16.msra.mxu0 %v4440
        %4444 = vmatpush.bf16.msra.mxu0 %v4439
        %4445 = vmatpush.bf16.msra.mxu0 %v4438
        %4446 = vmatpush.bf16.msra.mxu0 %v4437
        %4447 = vmatpush.bf16.msra.mxu0 %v4436
        %4448 = vmatpush.bf16.msra.mxu0 %v4435
        %4449 = vmatpush.bf16.msra.mxu0 %v4434
        %4450 = vmatmul.bf16.gmra.mxu0 %v2869
        %v4451 = vpop.f32.mrf.mxu0
        %v4452 = vadd.f32 %v2816, %v4451
        %v4453 = vpop.f32.mrf.mxu0
        %v4454 = vadd.f32 %v2821, %v4453
        %4455 = vmatmul.bf16.gmra.mxu0 %v2870
        %v4456 = vpop.f32.mrf.mxu0
        %v4457 = vadd.f32 %v2826, %v4456
        %v4458 = vpop.f32.mrf.mxu0
        %v4459 = vadd.f32 %v2831, %v4458
        %4460 = vmatmul.bf16.gmra.mxu0 %v2871
        %v4461 = vpop.f32.mrf.mxu0
        %v4462 = vadd.f32 %v2836, %v4461
        %v4463 = vpop.f32.mrf.mxu0
        %v4464 = vadd.f32 %v2841, %v4463
        %4465 = vmatmul.bf16.gmra.mxu0 %v2872
        %v4466 = vpop.f32.mrf.mxu0
        %v4467 = vadd.f32 %v2846, %v4466
        %v4468 = vpop.f32.mrf.mxu0
        %v4469 = vadd.f32 %v2851, %v4468
        %4470 = vdwg.mxu0
        %v4471 = vmax.f32 %v4328, %v4452
        %v4472 = vmax.f32 %v4329, %v4454
        %v4473 = vmax.f32 %v4330, %v4457
        %v4474 = vmax.f32 %v4331, %v4459
        %v4475 = vmax.f32 %v4332, %v4462
        %v4476 = vmax.f32 %v4333, %v4464
        %v4477 = vmax.f32 %v4334, %v4467
        %v4478 = vmax.f32 %v4335, %v4469
        %s4479 = scalar_lea.vmem %s1039, 384 [#allocation3]
        %v4480 = vld [vmem:[%s4479] sm:$0xf]
        %v4481 = vld [vmem:[%s4479 + $0x4] sm:$0xf]
        %v4482 = vld [vmem:[%s4479 + $0x8] sm:$0xf]
        %v4483 = vld [vmem:[%s4479 + $0xc] sm:$0xf]
        %v4484 = vld [vmem:[%s4479 + $0x10] sm:$0xf]
        %v4485 = vld [vmem:[%s4479 + $0x14] sm:$0xf]
        %v4486 = vld [vmem:[%s4479 + $0x18] sm:$0xf]
        %v4487 = vld [vmem:[%s4479 + $0x1c] sm:$0xf]
        %v4496 = vunpack.c.l.b16 %v4480
        %v4497 = vunpack.c.l.b16 %v4481
        %v4498 = vunpack.c.l.b16 %v4482
        %v4499 = vunpack.c.l.b16 %v4483
        %v4500 = vunpack.c.l.b16 %v4484
        %v4501 = vunpack.c.l.b16 %v4485
        %v4502 = vunpack.c.l.b16 %v4486
        %v4503 = vunpack.c.l.b16 %v4487
        %v4504 = vpack.c.b16 %v4497, %v4496
        %v4505 = vpack.c.b16 %v4499, %v4498
        %v4506 = vpack.c.b16 %v4501, %v4500
        %v4507 = vpack.c.b16 %v4503, %v4502
        %4512 = vmatpush.bf16.msra.mxu0 0
        %4513 = vmatpush.bf16.msra.mxu0 0
        %4514 = vmatpush.bf16.msra.mxu0 0
        %4515 = vmatpush.bf16.msra.mxu0 0
        %4516 = vmatpush.bf16.msra.mxu0 %v4507
        %4517 = vmatpush.bf16.msra.mxu0 %v4506
        %4518 = vmatpush.bf16.msra.mxu0 %v4505
        %4519 = vmatpush.bf16.msra.mxu0 %v4504
        %4520 = vmatmul.bf16.gmra.mxu0 %v2717
        %v4521 = vpop.f32.mrf.mxu0
        %v4522 = vadd.f32 %v2575, %v4521
        %v4523 = vpop.f32.mrf.mxu0
        %v4524 = vadd.f32 %v2580, %v4523
        %4525 = vmatmul.bf16.gmra.mxu0 %v2720
        %v4526 = vpop.f32.mrf.mxu0
        %v4527 = vadd.f32 %v2585, %v4526
        %v4528 = vpop.f32.mrf.mxu0
        %v4529 = vadd.f32 %v2590, %v4528
        %4530 = vmatmul.bf16.gmra.mxu0 %v2723
        %v4531 = vpop.f32.mrf.mxu0
        %v4532 = vadd.f32 %v2595, %v4531
        %v4533 = vpop.f32.mrf.mxu0
        %v4534 = vadd.f32 %v2600, %v4533
        %4535 = vmatmul.bf16.gmra.mxu0 %v2726
        %v4536 = vpop.f32.mrf.mxu0
        %v4537 = vadd.f32 %v2605, %v4536
        %v4538 = vpop.f32.mrf.mxu0
        %v4539 = vadd.f32 %v2610, %v4538
        %4540 = vmatmul.bf16.gmra.mxu0 %v2729
        %v4541 = vpop.f32.mrf.mxu0
        %v4542 = vadd.f32 %v2615, %v4541
        %v4543 = vpop.f32.mrf.mxu0
        %v4544 = vadd.f32 %v2620, %v4543
        %4545 = vmatmul.bf16.gmra.mxu0 %v2732
        %v4546 = vpop.f32.mrf.mxu0
        %v4547 = vadd.f32 %v2625, %v4546
        %v4548 = vpop.f32.mrf.mxu0
        %v4549 = vadd.f32 %v2630, %v4548
        %4550 = vmatmul.bf16.gmra.mxu0 %v2735
        %v4551 = vpop.f32.mrf.mxu0
        %v4552 = vadd.f32 %v2635, %v4551
        %v4553 = vpop.f32.mrf.mxu0
        %v4554 = vadd.f32 %v2640, %v4553
        %4555 = vmatmul.bf16.gmra.mxu0 %v2738
        %v4556 = vpop.f32.mrf.mxu0
        %v4557 = vadd.f32 %v2645, %v4556
        %v4558 = vpop.f32.mrf.mxu0
        %v4559 = vadd.f32 %v2650, %v4558
        %4560 = vdwg.mxu0
        %v4561 = vmax.f32 %v4522, 0.0
        %v4562 = vmax.f32 %v4524, 0.0
        %v4563 = vmax.f32 %v4527, 0.0
        %v4564 = vmax.f32 %v4529, 0.0
        %v4565 = vmax.f32 %v4532, 0.0
        %v4566 = vmax.f32 %v4534, 0.0
        %v4567 = vmax.f32 %v4537, 0.0
        %v4568 = vmax.f32 %v4539, 0.0
        %v4569 = vmax.f32 %v4542, 0.0
        %v4570 = vmax.f32 %v4544, 0.0
        %v4571 = vmax.f32 %v4547, 0.0
        %v4572 = vmax.f32 %v4549, 0.0
        %v4573 = vmax.f32 %v4552, 0.0
        %v4574 = vmax.f32 %v4554, 0.0
        %v4575 = vmax.f32 %v4557, 0.0
        %v4576 = vmax.f32 %v4559, 0.0
        %v4577 = vpack.c.bf16 %v4562, %v4561
        %v4578 = vpack.c.bf16 %v4564, %v4563
        %v4579 = vpack.c.bf16 %v4566, %v4565
        %v4580 = vpack.c.bf16 %v4568, %v4567
        %v4581 = vpack.c.bf16 %v4570, %v4569
        %v4582 = vpack.c.bf16 %v4572, %v4571
        %v4583 = vpack.c.bf16 %v4574, %v4573
        %v4584 = vpack.c.bf16 %v4576, %v4575
        %4585 = vmatpush.bf16.msra.mxu0 %v4584
        %4586 = vmatpush.bf16.msra.mxu0 %v4583
        %4587 = vmatpush.bf16.msra.mxu0 %v4582
        %4588 = vmatpush.bf16.msra.mxu0 %v4581
        %4589 = vmatpush.bf16.msra.mxu0 %v4580
        %4590 = vmatpush.bf16.msra.mxu0 %v4579
        %4591 = vmatpush.bf16.msra.mxu0 %v4578
        %4592 = vmatpush.bf16.msra.mxu0 %v4577
        %4593 = vmatmul.bf16.gmra.mxu0 %v2869
        %v4594 = vpop.f32.mrf.mxu0
        %v4595 = vadd.f32 %v2816, %v4594
        %v4596 = vpop.f32.mrf.mxu0
        %v4597 = vadd.f32 %v2821, %v4596
        %4598 = vmatmul.bf16.gmra.mxu0 %v2870
        %v4599 = vpop.f32.mrf.mxu0
        %v4600 = vadd.f32 %v2826, %v4599
        %v4601 = vpop.f32.mrf.mxu0
        %v4602 = vadd.f32 %v2831, %v4601
        %4603 = vmatmul.bf16.gmra.mxu0 %v2871
        %v4604 = vpop.f32.mrf.mxu0
        %v4605 = vadd.f32 %v2836, %v4604
        %v4606 = vpop.f32.mrf.mxu0
        %v4607 = vadd.f32 %v2841, %v4606
        %4608 = vmatmul.bf16.gmra.mxu0 %v2872
        %v4609 = vpop.f32.mrf.mxu0
        %v4610 = vadd.f32 %v2846, %v4609
        %v4611 = vpop.f32.mrf.mxu0
        %v4612 = vadd.f32 %v2851, %v4611
        %4613 = vdwg.mxu0
        %v4614 = vmax.f32 %v4471, %v4595
        %v4615 = vmax.f32 %v4472, %v4597
        %v4616 = vmax.f32 %v4473, %v4600
        %v4617 = vmax.f32 %v4474, %v4602
        %v4618 = vmax.f32 %v4475, %v4605
        %v4619 = vmax.f32 %v4476, %v4607
        %v4620 = vmax.f32 %v4477, %v4610
        %v4621 = vmax.f32 %v4478, %v4612
        %s4622 = scalar_lea.vmem %s1039, 416 [#allocation3]
        %v4623 = vld [vmem:[%s4622] sm:$0xf]
        %v4624 = vld [vmem:[%s4622 + $0x4] sm:$0xf]
        %v4625 = vld [vmem:[%s4622 + $0x8] sm:$0xf]
        %v4626 = vld [vmem:[%s4622 + $0xc] sm:$0xf]
        %v4627 = vld [vmem:[%s4622 + $0x10] sm:$0xf]
        %v4628 = vld [vmem:[%s4622 + $0x14] sm:$0xf]
        %v4629 = vld [vmem:[%s4622 + $0x18] sm:$0xf]
        %v4630 = vld [vmem:[%s4622 + $0x1c] sm:$0xf]
        %v4639 = vunpack.c.l.b16 %v4623
        %v4640 = vunpack.c.l.b16 %v4624
        %v4641 = vunpack.c.l.b16 %v4625
        %v4642 = vunpack.c.l.b16 %v4626
        %v4643 = vunpack.c.l.b16 %v4627
        %v4644 = vunpack.c.l.b16 %v4628
        %v4645 = vunpack.c.l.b16 %v4629
        %v4646 = vunpack.c.l.b16 %v4630
        %v4647 = vpack.c.b16 %v4640, %v4639
        %v4648 = vpack.c.b16 %v4642, %v4641
        %v4649 = vpack.c.b16 %v4644, %v4643
        %v4650 = vpack.c.b16 %v4646, %v4645
        %4655 = vmatpush.bf16.msra.mxu0 0
        %4656 = vmatpush.bf16.msra.mxu0 0
        %4657 = vmatpush.bf16.msra.mxu0 0
        %4658 = vmatpush.bf16.msra.mxu0 0
        %4659 = vmatpush.bf16.msra.mxu0 %v4650
        %4660 = vmatpush.bf16.msra.mxu0 %v4649
        %4661 = vmatpush.bf16.msra.mxu0 %v4648
        %4662 = vmatpush.bf16.msra.mxu0 %v4647
        %4663 = vmatmul.bf16.gmra.mxu0 %v2717
        %v4664 = vpop.f32.mrf.mxu0
        %v4665 = vadd.f32 %v2575, %v4664
        %v4666 = vpop.f32.mrf.mxu0
        %v4667 = vadd.f32 %v2580, %v4666
        %4668 = vmatmul.bf16.gmra.mxu0 %v2720
        %v4669 = vpop.f32.mrf.mxu0
        %v4670 = vadd.f32 %v2585, %v4669
        %v4671 = vpop.f32.mrf.mxu0
        %v4672 = vadd.f32 %v2590, %v4671
        %4673 = vmatmul.bf16.gmra.mxu0 %v2723
        %v4674 = vpop.f32.mrf.mxu0
        %v4675 = vadd.f32 %v2595, %v4674
        %v4676 = vpop.f32.mrf.mxu0
        %v4677 = vadd.f32 %v2600, %v4676
        %4678 = vmatmul.bf16.gmra.mxu0 %v2726
        %v4679 = vpop.f32.mrf.mxu0
        %v4680 = vadd.f32 %v2605, %v4679
        %v4681 = vpop.f32.mrf.mxu0
        %v4682 = vadd.f32 %v2610, %v4681
        %4683 = vmatmul.bf16.gmra.mxu0 %v2729
        %v4684 = vpop.f32.mrf.mxu0
        %v4685 = vadd.f32 %v2615, %v4684
        %v4686 = vpop.f32.mrf.mxu0
        %v4687 = vadd.f32 %v2620, %v4686
        %4688 = vmatmul.bf16.gmra.mxu0 %v2732
        %v4689 = vpop.f32.mrf.mxu0
        %v4690 = vadd.f32 %v2625, %v4689
        %v4691 = vpop.f32.mrf.mxu0
        %v4692 = vadd.f32 %v2630, %v4691
        %4693 = vmatmul.bf16.gmra.mxu0 %v2735
        %v4694 = vpop.f32.mrf.mxu0
        %v4695 = vadd.f32 %v2635, %v4694
        %v4696 = vpop.f32.mrf.mxu0
        %v4697 = vadd.f32 %v2640, %v4696
        %4698 = vmatmul.bf16.gmra.mxu0 %v2738
        %v4699 = vpop.f32.mrf.mxu0
        %v4700 = vadd.f32 %v2645, %v4699
        %v4701 = vpop.f32.mrf.mxu0
        %v4702 = vadd.f32 %v2650, %v4701
        %4703 = vdwg.mxu0
        %v4704 = vmax.f32 %v4665, 0.0
        %v4705 = vmax.f32 %v4667, 0.0
        %v4706 = vmax.f32 %v4670, 0.0
        %v4707 = vmax.f32 %v4672, 0.0
        %v4708 = vmax.f32 %v4675, 0.0
        %v4709 = vmax.f32 %v4677, 0.0
        %v4710 = vmax.f32 %v4680, 0.0
        %v4711 = vmax.f32 %v4682, 0.0
        %v4712 = vmax.f32 %v4685, 0.0
        %v4713 = vmax.f32 %v4687, 0.0
        %v4714 = vmax.f32 %v4690, 0.0
        %v4715 = vmax.f32 %v4692, 0.0
        %v4716 = vmax.f32 %v4695, 0.0
        %v4717 = vmax.f32 %v4697, 0.0
        %v4718 = vmax.f32 %v4700, 0.0
        %v4719 = vmax.f32 %v4702, 0.0
        %v4720 = vpack.c.bf16 %v4705, %v4704
        %v4721 = vpack.c.bf16 %v4707, %v4706
        %v4722 = vpack.c.bf16 %v4709, %v4708
        %v4723 = vpack.c.bf16 %v4711, %v4710
        %v4724 = vpack.c.bf16 %v4713, %v4712
        %v4725 = vpack.c.bf16 %v4715, %v4714
        %v4726 = vpack.c.bf16 %v4717, %v4716
        %v4727 = vpack.c.bf16 %v4719, %v4718
        %4728 = vmatpush.bf16.msra.mxu0 %v4727
        %4729 = vmatpush.bf16.msra.mxu0 %v4726
        %4730 = vmatpush.bf16.msra.mxu0 %v4725
        %4731 = vmatpush.bf16.msra.mxu0 %v4724
        %4732 = vmatpush.bf16.msra.mxu0 %v4723
        %4733 = vmatpush.bf16.msra.mxu0 %v4722
        %4734 = vmatpush.bf16.msra.mxu0 %v4721
        %4735 = vmatpush.bf16.msra.mxu0 %v4720
        %4736 = vmatmul.bf16.gmra.mxu0 %v2869
        %v4737 = vpop.f32.mrf.mxu0
        %v4738 = vadd.f32 %v2816, %v4737
        %v4739 = vpop.f32.mrf.mxu0
        %v4740 = vadd.f32 %v2821, %v4739
        %4741 = vmatmul.bf16.gmra.mxu0 %v2870
        %v4742 = vpop.f32.mrf.mxu0
        %v4743 = vadd.f32 %v2826, %v4742
        %v4744 = vpop.f32.mrf.mxu0
        %v4745 = vadd.f32 %v2831, %v4744
        %4746 = vmatmul.bf16.gmra.mxu0 %v2871
        %v4747 = vpop.f32.mrf.mxu0
        %v4748 = vadd.f32 %v2836, %v4747
        %v4749 = vpop.f32.mrf.mxu0
        %v4750 = vadd.f32 %v2841, %v4749
        %4751 = vmatmul.bf16.gmra.mxu0 %v2872
        %v4752 = vpop.f32.mrf.mxu0
        %v4753 = vadd.f32 %v2846, %v4752
        %v4754 = vpop.f32.mrf.mxu0
        %v4755 = vadd.f32 %v2851, %v4754
        %4756 = vdwg.mxu0
        %v4757 = vmax.f32 %v4614, %v4738
        %v4758 = vmax.f32 %v4615, %v4740
        %v4759 = vmax.f32 %v4616, %v4743
        %v4760 = vmax.f32 %v4617, %v4745
        %v4761 = vmax.f32 %v4618, %v4748
        %v4762 = vmax.f32 %v4619, %v4750
        %v4763 = vmax.f32 %v4620, %v4753
        %v4764 = vmax.f32 %v4621, %v4755
        %s4765 = scalar_lea.vmem %s1039, 448 [#allocation3]
        %v4766 = vld [vmem:[%s4765] sm:$0xf]
        %v4767 = vld [vmem:[%s4765 + $0x4] sm:$0xf]
        %v4768 = vld [vmem:[%s4765 + $0x8] sm:$0xf]
        %v4769 = vld [vmem:[%s4765 + $0xc] sm:$0xf]
        %v4770 = vld [vmem:[%s4765 + $0x10] sm:$0xf]
        %v4771 = vld [vmem:[%s4765 + $0x14] sm:$0xf]
        %v4772 = vld [vmem:[%s4765 + $0x18] sm:$0xf]
        %v4773 = vld [vmem:[%s4765 + $0x1c] sm:$0xf]
        %v4782 = vunpack.c.l.b16 %v4766
        %v4783 = vunpack.c.l.b16 %v4767
        %v4784 = vunpack.c.l.b16 %v4768
        %v4785 = vunpack.c.l.b16 %v4769
        %v4786 = vunpack.c.l.b16 %v4770
        %v4787 = vunpack.c.l.b16 %v4771
        %v4788 = vunpack.c.l.b16 %v4772
        %v4789 = vunpack.c.l.b16 %v4773
        %v4790 = vpack.c.b16 %v4783, %v4782
        %v4791 = vpack.c.b16 %v4785, %v4784
        %v4792 = vpack.c.b16 %v4787, %v4786
        %v4793 = vpack.c.b16 %v4789, %v4788
        %4798 = vmatpush.bf16.msra.mxu0 0
        %4799 = vmatpush.bf16.msra.mxu0 0
        %4800 = vmatpush.bf16.msra.mxu0 0
        %4801 = vmatpush.bf16.msra.mxu0 0
        %4802 = vmatpush.bf16.msra.mxu0 %v4793
        %4803 = vmatpush.bf16.msra.mxu0 %v4792
        %4804 = vmatpush.bf16.msra.mxu0 %v4791
        %4805 = vmatpush.bf16.msra.mxu0 %v4790
        %4806 = vmatmul.bf16.gmra.mxu0 %v2717
        %v4807 = vpop.f32.mrf.mxu0
        %v4808 = vadd.f32 %v2575, %v4807
        %v4809 = vpop.f32.mrf.mxu0
        %v4810 = vadd.f32 %v2580, %v4809
        %4811 = vmatmul.bf16.gmra.mxu0 %v2720
        %v4812 = vpop.f32.mrf.mxu0
        %v4813 = vadd.f32 %v2585, %v4812
        %v4814 = vpop.f32.mrf.mxu0
        %v4815 = vadd.f32 %v2590, %v4814
        %4816 = vmatmul.bf16.gmra.mxu0 %v2723
        %v4817 = vpop.f32.mrf.mxu0
        %v4818 = vadd.f32 %v2595, %v4817
        %v4819 = vpop.f32.mrf.mxu0
        %v4820 = vadd.f32 %v2600, %v4819
        %4821 = vmatmul.bf16.gmra.mxu0 %v2726
        %v4822 = vpop.f32.mrf.mxu0
        %v4823 = vadd.f32 %v2605, %v4822
        %v4824 = vpop.f32.mrf.mxu0
        %v4825 = vadd.f32 %v2610, %v4824
        %4826 = vmatmul.bf16.gmra.mxu0 %v2729
        %v4827 = vpop.f32.mrf.mxu0
        %v4828 = vadd.f32 %v2615, %v4827
        %v4829 = vpop.f32.mrf.mxu0
        %v4830 = vadd.f32 %v2620, %v4829
        %4831 = vmatmul.bf16.gmra.mxu0 %v2732
        %v4832 = vpop.f32.mrf.mxu0
        %v4833 = vadd.f32 %v2625, %v4832
        %v4834 = vpop.f32.mrf.mxu0
        %v4835 = vadd.f32 %v2630, %v4834
        %4836 = vmatmul.bf16.gmra.mxu0 %v2735
        %v4837 = vpop.f32.mrf.mxu0
        %v4838 = vadd.f32 %v2635, %v4837
        %v4839 = vpop.f32.mrf.mxu0
        %v4840 = vadd.f32 %v2640, %v4839
        %4841 = vmatmul.bf16.gmra.mxu0 %v2738
        %v4842 = vpop.f32.mrf.mxu0
        %v4843 = vadd.f32 %v2645, %v4842
        %v4844 = vpop.f32.mrf.mxu0
        %v4845 = vadd.f32 %v2650, %v4844
        %4846 = vdwg.mxu0
        %v4847 = vmax.f32 %v4808, 0.0
        %v4848 = vmax.f32 %v4810, 0.0
        %v4849 = vmax.f32 %v4813, 0.0
        %v4850 = vmax.f32 %v4815, 0.0
        %v4851 = vmax.f32 %v4818, 0.0
        %v4852 = vmax.f32 %v4820, 0.0
        %v4853 = vmax.f32 %v4823, 0.0
        %v4854 = vmax.f32 %v4825, 0.0
        %v4855 = vmax.f32 %v4828, 0.0
        %v4856 = vmax.f32 %v4830, 0.0
        %v4857 = vmax.f32 %v4833, 0.0
        %v4858 = vmax.f32 %v4835, 0.0
        %v4859 = vmax.f32 %v4838, 0.0
        %v4860 = vmax.f32 %v4840, 0.0
        %v4861 = vmax.f32 %v4843, 0.0
        %v4862 = vmax.f32 %v4845, 0.0
        %v4863 = vpack.c.bf16 %v4848, %v4847
        %v4864 = vpack.c.bf16 %v4850, %v4849
        %v4865 = vpack.c.bf16 %v4852, %v4851
        %v4866 = vpack.c.bf16 %v4854, %v4853
        %v4867 = vpack.c.bf16 %v4856, %v4855
        %v4868 = vpack.c.bf16 %v4858, %v4857
        %v4869 = vpack.c.bf16 %v4860, %v4859
        %v4870 = vpack.c.bf16 %v4862, %v4861
        %4871 = vmatpush.bf16.msra.mxu0 %v4870
        %4872 = vmatpush.bf16.msra.mxu0 %v4869
        %4873 = vmatpush.bf16.msra.mxu0 %v4868
        %4874 = vmatpush.bf16.msra.mxu0 %v4867
        %4875 = vmatpush.bf16.msra.mxu0 %v4866
        %4876 = vmatpush.bf16.msra.mxu0 %v4865
        %4877 = vmatpush.bf16.msra.mxu0 %v4864
        %4878 = vmatpush.bf16.msra.mxu0 %v4863
        %4879 = vmatmul.bf16.gmra.mxu0 %v2869
        %v4880 = vpop.f32.mrf.mxu0
        %v4881 = vadd.f32 %v2816, %v4880
        %v4882 = vpop.f32.mrf.mxu0
        %v4883 = vadd.f32 %v2821, %v4882
        %4884 = vmatmul.bf16.gmra.mxu0 %v2870
        %v4885 = vpop.f32.mrf.mxu0
        %v4886 = vadd.f32 %v2826, %v4885
        %v4887 = vpop.f32.mrf.mxu0
        %v4888 = vadd.f32 %v2831, %v4887
        %4889 = vmatmul.bf16.gmra.mxu0 %v2871
        %v4890 = vpop.f32.mrf.mxu0
        %v4891 = vadd.f32 %v2836, %v4890
        %v4892 = vpop.f32.mrf.mxu0
        %v4893 = vadd.f32 %v2841, %v4892
        %4894 = vmatmul.bf16.gmra.mxu0 %v2872
        %v4895 = vpop.f32.mrf.mxu0
        %v4896 = vadd.f32 %v2846, %v4895
        %v4897 = vpop.f32.mrf.mxu0
        %v4898 = vadd.f32 %v2851, %v4897
        %4899 = vdwg.mxu0
        %v4900 = vmax.f32 %v4757, %v4881
        %v4901 = vmax.f32 %v4758, %v4883
        %v4902 = vmax.f32 %v4759, %v4886
        %v4903 = vmax.f32 %v4760, %v4888
        %v4904 = vmax.f32 %v4761, %v4891
        %v4905 = vmax.f32 %v4762, %v4893
        %v4906 = vmax.f32 %v4763, %v4896
        %v4907 = vmax.f32 %v4764, %v4898
        %s4908 = scalar_lea.vmem %s1039, 480 [#allocation3]
        %v4909 = vld [vmem:[%s4908] sm:$0xf]
        %v4910 = vld [vmem:[%s4908 + $0x4] sm:$0xf]
        %v4911 = vld [vmem:[%s4908 + $0x8] sm:$0xf]
        %v4912 = vld [vmem:[%s4908 + $0xc] sm:$0xf]
        %v4913 = vld [vmem:[%s4908 + $0x10] sm:$0xf]
        %v4914 = vld [vmem:[%s4908 + $0x14] sm:$0xf]
        %v4915 = vld [vmem:[%s4908 + $0x18] sm:$0xf]
        %v4916 = vld [vmem:[%s4908 + $0x1c] sm:$0xf]
        %v4925 = vunpack.c.l.b16 %v4909
        %v4926 = vunpack.c.l.b16 %v4910
        %v4927 = vunpack.c.l.b16 %v4911
        %v4928 = vunpack.c.l.b16 %v4912
        %v4929 = vunpack.c.l.b16 %v4913
        %v4930 = vunpack.c.l.b16 %v4914
        %v4931 = vunpack.c.l.b16 %v4915
        %v4932 = vunpack.c.l.b16 %v4916
        %v4933 = vpack.c.b16 %v4926, %v4925
        %v4934 = vpack.c.b16 %v4928, %v4927
        %v4935 = vpack.c.b16 %v4930, %v4929
        %v4936 = vpack.c.b16 %v4932, %v4931
        %4941 = vmatpush.bf16.msra.mxu0 0
        %4942 = vmatpush.bf16.msra.mxu0 0
        %4943 = vmatpush.bf16.msra.mxu0 0
        %4944 = vmatpush.bf16.msra.mxu0 0
        %4945 = vmatpush.bf16.msra.mxu0 %v4936
        %4946 = vmatpush.bf16.msra.mxu0 %v4935
        %4947 = vmatpush.bf16.msra.mxu0 %v4934
        %4948 = vmatpush.bf16.msra.mxu0 %v4933
        %4949 = vmatmul.bf16.gmra.mxu0 %v2717
        %v4950 = vpop.f32.mrf.mxu0
        %v4951 = vadd.f32 %v2575, %v4950
        %v4952 = vpop.f32.mrf.mxu0
        %v4953 = vadd.f32 %v2580, %v4952
        %4954 = vmatmul.bf16.gmra.mxu0 %v2720
        %v4955 = vpop.f32.mrf.mxu0
        %v4956 = vadd.f32 %v2585, %v4955
        %v4957 = vpop.f32.mrf.mxu0
        %v4958 = vadd.f32 %v2590, %v4957
        %4959 = vmatmul.bf16.gmra.mxu0 %v2723
        %v4960 = vpop.f32.mrf.mxu0
        %v4961 = vadd.f32 %v2595, %v4960
        %v4962 = vpop.f32.mrf.mxu0
        %v4963 = vadd.f32 %v2600, %v4962
        %4964 = vmatmul.bf16.gmra.mxu0 %v2726
        %v4965 = vpop.f32.mrf.mxu0
        %v4966 = vadd.f32 %v2605, %v4965
        %v4967 = vpop.f32.mrf.mxu0
        %v4968 = vadd.f32 %v2610, %v4967
        %4969 = vmatmul.bf16.gmra.mxu0 %v2729
        %v4970 = vpop.f32.mrf.mxu0
        %v4971 = vadd.f32 %v2615, %v4970
        %v4972 = vpop.f32.mrf.mxu0
        %v4973 = vadd.f32 %v2620, %v4972
        %4974 = vmatmul.bf16.gmra.mxu0 %v2732
        %v4975 = vpop.f32.mrf.mxu0
        %v4976 = vadd.f32 %v2625, %v4975
        %v4977 = vpop.f32.mrf.mxu0
        %v4978 = vadd.f32 %v2630, %v4977
        %4979 = vmatmul.bf16.gmra.mxu0 %v2735
        %v4980 = vpop.f32.mrf.mxu0
        %v4981 = vadd.f32 %v2635, %v4980
        %v4982 = vpop.f32.mrf.mxu0
        %v4983 = vadd.f32 %v2640, %v4982
        %4984 = vmatmul.bf16.gmra.mxu0 %v2738
        %v4985 = vpop.f32.mrf.mxu0
        %v4986 = vadd.f32 %v2645, %v4985
        %v4987 = vpop.f32.mrf.mxu0
        %v4988 = vadd.f32 %v2650, %v4987
        %4989 = vdwg.mxu0
        %v4990 = vmax.f32 %v4951, 0.0
        %v4991 = vmax.f32 %v4953, 0.0
        %v4992 = vmax.f32 %v4956, 0.0
        %v4993 = vmax.f32 %v4958, 0.0
        %v4994 = vmax.f32 %v4961, 0.0
        %v4995 = vmax.f32 %v4963, 0.0
        %v4996 = vmax.f32 %v4966, 0.0
        %v4997 = vmax.f32 %v4968, 0.0
        %v4998 = vmax.f32 %v4971, 0.0
        %v4999 = vmax.f32 %v4973, 0.0
        %v5000 = vmax.f32 %v4976, 0.0
        %v5001 = vmax.f32 %v4978, 0.0
        %v5002 = vmax.f32 %v4981, 0.0
        %v5003 = vmax.f32 %v4983, 0.0
        %v5004 = vmax.f32 %v4986, 0.0
        %v5005 = vmax.f32 %v4988, 0.0
        %v5006 = vpack.c.bf16 %v4991, %v4990
        %v5007 = vpack.c.bf16 %v4993, %v4992
        %v5008 = vpack.c.bf16 %v4995, %v4994
        %v5009 = vpack.c.bf16 %v4997, %v4996
        %v5010 = vpack.c.bf16 %v4999, %v4998
        %v5011 = vpack.c.bf16 %v5001, %v5000
        %v5012 = vpack.c.bf16 %v5003, %v5002
        %v5013 = vpack.c.bf16 %v5005, %v5004
        %5014 = vmatpush.bf16.msra.mxu0 %v5013
        %5015 = vmatpush.bf16.msra.mxu0 %v5012
        %5016 = vmatpush.bf16.msra.mxu0 %v5011
        %5017 = vmatpush.bf16.msra.mxu0 %v5010
        %5018 = vmatpush.bf16.msra.mxu0 %v5009
        %5019 = vmatpush.bf16.msra.mxu0 %v5008
        %5020 = vmatpush.bf16.msra.mxu0 %v5007
        %5021 = vmatpush.bf16.msra.mxu0 %v5006
        %5022 = vmatmul.bf16.gmra.mxu0 %v2869
        %v5023 = vpop.f32.mrf.mxu0
        %v5024 = vadd.f32 %v2816, %v5023
        %v5025 = vpop.f32.mrf.mxu0
        %v5026 = vadd.f32 %v2821, %v5025
        %5027 = vmatmul.bf16.gmra.mxu0 %v2870
        %v5028 = vpop.f32.mrf.mxu0
        %v5029 = vadd.f32 %v2826, %v5028
        %v5030 = vpop.f32.mrf.mxu0
        %v5031 = vadd.f32 %v2831, %v5030
        %5032 = vmatmul.bf16.gmra.mxu0 %v2871
        %v5033 = vpop.f32.mrf.mxu0
        %v5034 = vadd.f32 %v2836, %v5033
        %v5035 = vpop.f32.mrf.mxu0
        %v5036 = vadd.f32 %v2841, %v5035
        %5037 = vmatmul.bf16.gmra.mxu0 %v2872
        %v5038 = vpop.f32.mrf.mxu0
        %v5039 = vadd.f32 %v2846, %v5038
        %v5040 = vpop.f32.mrf.mxu0
        %v5041 = vadd.f32 %v2851, %v5040
        %5042 = vdwg.mxu0
        %v5043 = vmax.f32 %v4900, %v5024
        %v5044 = vmax.f32 %v4901, %v5026
        %v5045 = vmax.f32 %v4902, %v5029
        %v5046 = vmax.f32 %v4903, %v5031
        %v5047 = vmax.f32 %v4904, %v5034
        %v5048 = vmax.f32 %v4905, %v5036
        %v5049 = vmax.f32 %v4906, %v5039
        %v5050 = vmax.f32 %v4907, %v5041
        %v5051 = vsub.f32 %v2887, %v5043
        %v5052 = vsub.f32 %v2889, %v5044
        %v5053 = vsub.f32 %v2892, %v5045
        %v5054 = vsub.f32 %v2894, %v5046
        %v5055 = vsub.f32 %v2897, %v5047
        %v5056 = vsub.f32 %v2899, %v5048
        %v5057 = vsub.f32 %v2902, %v5049
        %v5058 = vsub.f32 %v2904, %v5050
        %v5059 = vmul.f32 %v5051, 1.442695
        %v5060 = vpow.pop %v5059
        %v5061 = vmul.f32 %v5052, 1.442695
        %v5062 = vpow.pop %v5061
        %v5063 = vmul.f32 %v5053, 1.442695
        %v5064 = vpow.pop %v5063
        %v5065 = vmul.f32 %v5054, 1.442695
        %v5066 = vpow.pop %v5065
        %v5067 = vmul.f32 %v5055, 1.442695
        %v5068 = vpow.pop %v5067
        %v5069 = vmul.f32 %v5056, 1.442695
        %v5070 = vpow.pop %v5069
        %v5071 = vmul.f32 %v5057, 1.442695
        %v5072 = vpow.pop %v5071
        %v5073 = vmul.f32 %v5058, 1.442695
        %v5074 = vpow.pop %v5073
        %v5075 = vadd.f32 %v5060, 0.0
        %v5076 = vadd.f32 %v5062, 0.0
        %v5077 = vadd.f32 %v5064, 0.0
        %v5078 = vadd.f32 %v5066, 0.0
        %v5079 = vadd.f32 %v5068, 0.0
        %v5080 = vadd.f32 %v5070, 0.0
        %v5081 = vadd.f32 %v5072, 0.0
        %v5082 = vadd.f32 %v5074, 0.0
        %v5083 = vunpack.c.l.bf16 %v2564
        %v5084 = vunpack.c.l.bf16 %v2565
        %v5085 = vunpack.c.l.bf16 %v2566
        %v5086 = vunpack.c.l.bf16 %v2567
        %v5087 = vunpack.c.l.bf16 %v2568
        %v5088 = vunpack.c.l.bf16 %v2569
        %v5089 = vunpack.c.l.bf16 %v2570
        %v5090 = vunpack.c.l.bf16 %v2571
        %v5091 = vmul.f32 %v5060, %v5083
        %v5092 = vmul.f32 %v5062, %v5084
        %v5093 = vmul.f32 %v5064, %v5085
        %v5094 = vmul.f32 %v5066, %v5086
        %v5095 = vmul.f32 %v5068, %v5087
        %v5096 = vmul.f32 %v5070, %v5088
        %v5097 = vmul.f32 %v5072, %v5089
        %v5098 = vmul.f32 %v5074, %v5090
        %v5099 = vadd.f32 %v5091, 0.0
        %v5100 = vadd.f32 %v5092, 0.0
        %v5101 = vadd.f32 %v5093, 0.0
        %v5102 = vadd.f32 %v5094, 0.0
        %v5103 = vadd.f32 %v5095, 0.0
        %v5104 = vadd.f32 %v5096, 0.0
        %v5105 = vadd.f32 %v5097, 0.0
        %v5106 = vadd.f32 %v5098, 0.0
        %v5107 = vsub.f32 %v3022, %v5043
        %v5108 = vsub.f32 %v3024, %v5044
        %v5109 = vsub.f32 %v3027, %v5045
        %v5110 = vsub.f32 %v3029, %v5046
        %v5111 = vsub.f32 %v3032, %v5047
        %v5112 = vsub.f32 %v3034, %v5048
        %v5113 = vsub.f32 %v3037, %v5049
        %v5114 = vsub.f32 %v3039, %v5050
        %v5115 = vmul.f32 %v5107, 1.442695
        %v5116 = vpow.pop %v5115
        %v5117 = vmul.f32 %v5108, 1.442695
        %v5118 = vpow.pop %v5117
        %v5119 = vmul.f32 %v5109, 1.442695
        %v5120 = vpow.pop %v5119
        %v5121 = vmul.f32 %v5110, 1.442695
        %v5122 = vpow.pop %v5121
        %v5123 = vmul.f32 %v5111, 1.442695
        %v5124 = vpow.pop %v5123
        %v5125 = vmul.f32 %v5112, 1.442695
        %v5126 = vpow.pop %v5125
        %v5127 = vmul.f32 %v5113, 1.442695
        %v5128 = vpow.pop %v5127
        %v5129 = vmul.f32 %v5114, 1.442695
        %v5130 = vpow.pop %v5129
        %v5131 = vadd.f32 %v5075, %v5116
        %v5132 = vadd.f32 %v5076, %v5118
        %v5133 = vadd.f32 %v5077, %v5120
        %v5134 = vadd.f32 %v5078, %v5122
        %v5135 = vadd.f32 %v5079, %v5124
        %v5136 = vadd.f32 %v5080, %v5126
        %v5137 = vadd.f32 %v5081, %v5128
        %v5138 = vadd.f32 %v5082, %v5130
        %v5139 = vunpack.c.l.bf16 %v2907
        %v5140 = vunpack.c.l.bf16 %v2908
        %v5141 = vunpack.c.l.bf16 %v2909
        %v5142 = vunpack.c.l.bf16 %v2910
        %v5143 = vunpack.c.l.bf16 %v2911
        %v5144 = vunpack.c.l.bf16 %v2912
        %v5145 = vunpack.c.l.bf16 %v2913
        %v5146 = vunpack.c.l.bf16 %v2914
        %v5147 = vmul.f32 %v5116, %v5139
        %v5148 = vmul.f32 %v5118, %v5140
        %v5149 = vmul.f32 %v5120, %v5141
        %v5150 = vmul.f32 %v5122, %v5142
        %v5151 = vmul.f32 %v5124, %v5143
        %v5152 = vmul.f32 %v5126, %v5144
        %v5153 = vmul.f32 %v5128, %v5145
        %v5154 = vmul.f32 %v5130, %v5146
        %v5155 = vadd.f32 %v5099, %v5147
        %v5156 = vadd.f32 %v5100, %v5148
        %v5157 = vadd.f32 %v5101, %v5149
        %v5158 = vadd.f32 %v5102, %v5150
        %v5159 = vadd.f32 %v5103, %v5151
        %v5160 = vadd.f32 %v5104, %v5152
        %v5161 = vadd.f32 %v5105, %v5153
        %v5162 = vadd.f32 %v5106, %v5154
        %v5163 = vsub.f32 %v3165, %v5043
        %v5164 = vsub.f32 %v3167, %v5044
        %v5165 = vsub.f32 %v3170, %v5045
        %v5166 = vsub.f32 %v3172, %v5046
        %v5167 = vsub.f32 %v3175, %v5047
        %v5168 = vsub.f32 %v3177, %v5048
        %v5169 = vsub.f32 %v3180, %v5049
        %v5170 = vsub.f32 %v3182, %v5050
        %v5171 = vmul.f32 %v5163, 1.442695
        %v5172 = vpow.pop %v5171
        %v5173 = vmul.f32 %v5164, 1.442695
        %v5174 = vpow.pop %v5173
        %v5175 = vmul.f32 %v5165, 1.442695
        %v5176 = vpow.pop %v5175
        %v5177 = vmul.f32 %v5166, 1.442695
        %v5178 = vpow.pop %v5177
        %v5179 = vmul.f32 %v5167, 1.442695
        %v5180 = vpow.pop %v5179
        %v5181 = vmul.f32 %v5168, 1.442695
        %v5182 = vpow.pop %v5181
        %v5183 = vmul.f32 %v5169, 1.442695
        %v5184 = vpow.pop %v5183
        %v5185 = vmul.f32 %v5170, 1.442695
        %v5186 = vpow.pop %v5185
        %v5187 = vadd.f32 %v5131, %v5172
        %v5188 = vadd.f32 %v5132, %v5174
        %v5189 = vadd.f32 %v5133, %v5176
        %v5190 = vadd.f32 %v5134, %v5178
        %v5191 = vadd.f32 %v5135, %v5180
        %v5192 = vadd.f32 %v5136, %v5182
        %v5193 = vadd.f32 %v5137, %v5184
        %v5194 = vadd.f32 %v5138, %v5186
        %v5195 = vunpack.c.l.bf16 %v3050
        %v5196 = vunpack.c.l.bf16 %v3051
        %v5197 = vunpack.c.l.bf16 %v3052
        %v5198 = vunpack.c.l.bf16 %v3053
        %v5199 = vunpack.c.l.bf16 %v3054
        %v5200 = vunpack.c.l.bf16 %v3055
        %v5201 = vunpack.c.l.bf16 %v3056
        %v5202 = vunpack.c.l.bf16 %v3057
        %v5203 = vmul.f32 %v5172, %v5195
        %v5204 = vmul.f32 %v5174, %v5196
        %v5205 = vmul.f32 %v5176, %v5197
        %v5206 = vmul.f32 %v5178, %v5198
        %v5207 = vmul.f32 %v5180, %v5199
        %v5208 = vmul.f32 %v5182, %v5200
        %v5209 = vmul.f32 %v5184, %v5201
        %v5210 = vmul.f32 %v5186, %v5202
        %v5211 = vadd.f32 %v5155, %v5203
        %v5212 = vadd.f32 %v5156, %v5204
        %v5213 = vadd.f32 %v5157, %v5205
        %v5214 = vadd.f32 %v5158, %v5206
        %v5215 = vadd.f32 %v5159, %v5207
        %v5216 = vadd.f32 %v5160, %v5208
        %v5217 = vadd.f32 %v5161, %v5209
        %v5218 = vadd.f32 %v5162, %v5210
        %v5219 = vsub.f32 %v3308, %v5043
        %v5220 = vsub.f32 %v3310, %v5044
        %v5221 = vsub.f32 %v3313, %v5045
        %v5222 = vsub.f32 %v3315, %v5046
        %v5223 = vsub.f32 %v3318, %v5047
        %v5224 = vsub.f32 %v3320, %v5048
        %v5225 = vsub.f32 %v3323, %v5049
        %v5226 = vsub.f32 %v3325, %v5050
        %v5227 = vmul.f32 %v5219, 1.442695
        %v5228 = vpow.pop %v5227
        %v5229 = vmul.f32 %v5220, 1.442695
        %v5230 = vpow.pop %v5229
        %v5231 = vmul.f32 %v5221, 1.442695
        %v5232 = vpow.pop %v5231
        %v5233 = vmul.f32 %v5222, 1.442695
        %v5234 = vpow.pop %v5233
        %v5235 = vmul.f32 %v5223, 1.442695
        %v5236 = vpow.pop %v5235
        %v5237 = vmul.f32 %v5224, 1.442695
        %v5238 = vpow.pop %v5237
        %v5239 = vmul.f32 %v5225, 1.442695
        %v5240 = vpow.pop %v5239
        %v5241 = vmul.f32 %v5226, 1.442695
        %v5242 = vpow.pop %v5241
        %v5243 = vadd.f32 %v5187, %v5228
        %v5244 = vadd.f32 %v5188, %v5230
        %v5245 = vadd.f32 %v5189, %v5232
        %v5246 = vadd.f32 %v5190, %v5234
        %v5247 = vadd.f32 %v5191, %v5236
        %v5248 = vadd.f32 %v5192, %v5238
        %v5249 = vadd.f32 %v5193, %v5240
        %v5250 = vadd.f32 %v5194, %v5242
        %v5251 = vunpack.c.l.bf16 %v3193
        %v5252 = vunpack.c.l.bf16 %v3194
        %v5253 = vunpack.c.l.bf16 %v3195
        %v5254 = vunpack.c.l.bf16 %v3196
        %v5255 = vunpack.c.l.bf16 %v3197
        %v5256 = vunpack.c.l.bf16 %v3198
        %v5257 = vunpack.c.l.bf16 %v3199
        %v5258 = vunpack.c.l.bf16 %v3200
        %v5259 = vmul.f32 %v5228, %v5251
        %v5260 = vmul.f32 %v5230, %v5252
        %v5261 = vmul.f32 %v5232, %v5253
        %v5262 = vmul.f32 %v5234, %v5254
        %v5263 = vmul.f32 %v5236, %v5255
        %v5264 = vmul.f32 %v5238, %v5256
        %v5265 = vmul.f32 %v5240, %v5257
        %v5266 = vmul.f32 %v5242, %v5258
        %v5267 = vadd.f32 %v5211, %v5259
        %v5268 = vadd.f32 %v5212, %v5260
        %v5269 = vadd.f32 %v5213, %v5261
        %v5270 = vadd.f32 %v5214, %v5262
        %v5271 = vadd.f32 %v5215, %v5263
        %v5272 = vadd.f32 %v5216, %v5264
        %v5273 = vadd.f32 %v5217, %v5265
        %v5274 = vadd.f32 %v5218, %v5266
        %v5275 = vsub.f32 %v3451, %v5043
        %v5276 = vsub.f32 %v3453, %v5044
        %v5277 = vsub.f32 %v3456, %v5045
        %v5278 = vsub.f32 %v3458, %v5046
        %v5279 = vsub.f32 %v3461, %v5047
        %v5280 = vsub.f32 %v3463, %v5048
        %v5281 = vsub.f32 %v3466, %v5049
        %v5282 = vsub.f32 %v3468, %v5050
        %v5283 = vmul.f32 %v5275, 1.442695
        %v5284 = vpow.pop %v5283
        %v5285 = vmul.f32 %v5276, 1.442695
        %v5286 = vpow.pop %v5285
        %v5287 = vmul.f32 %v5277, 1.442695
        %v5288 = vpow.pop %v5287
        %v5289 = vmul.f32 %v5278, 1.442695
        %v5290 = vpow.pop %v5289
        %v5291 = vmul.f32 %v5279, 1.442695
        %v5292 = vpow.pop %v5291
        %v5293 = vmul.f32 %v5280, 1.442695
        %v5294 = vpow.pop %v5293
        %v5295 = vmul.f32 %v5281, 1.442695
        %v5296 = vpow.pop %v5295
        %v5297 = vmul.f32 %v5282, 1.442695
        %v5298 = vpow.pop %v5297
        %v5299 = vadd.f32 %v5243, %v5284
        %v5300 = vadd.f32 %v5244, %v5286
        %v5301 = vadd.f32 %v5245, %v5288
        %v5302 = vadd.f32 %v5246, %v5290
        %v5303 = vadd.f32 %v5247, %v5292
        %v5304 = vadd.f32 %v5248, %v5294
        %v5305 = vadd.f32 %v5249, %v5296
        %v5306 = vadd.f32 %v5250, %v5298
        %v5307 = vunpack.c.l.bf16 %v3336
        %v5308 = vunpack.c.l.bf16 %v3337
        %v5309 = vunpack.c.l.bf16 %v3338
        %v5310 = vunpack.c.l.bf16 %v3339
        %v5311 = vunpack.c.l.bf16 %v3340
        %v5312 = vunpack.c.l.bf16 %v3341
        %v5313 = vunpack.c.l.bf16 %v3342
        %v5314 = vunpack.c.l.bf16 %v3343
        %v5315 = vmul.f32 %v5284, %v5307
        %v5316 = vmul.f32 %v5286, %v5308
        %v5317 = vmul.f32 %v5288, %v5309
        %v5318 = vmul.f32 %v5290, %v5310
        %v5319 = vmul.f32 %v5292, %v5311
        %v5320 = vmul.f32 %v5294, %v5312
        %v5321 = vmul.f32 %v5296, %v5313
        %v5322 = vmul.f32 %v5298, %v5314
        %v5323 = vadd.f32 %v5267, %v5315
        %v5324 = vadd.f32 %v5268, %v5316
        %v5325 = vadd.f32 %v5269, %v5317
        %v5326 = vadd.f32 %v5270, %v5318
        %v5327 = vadd.f32 %v5271, %v5319
        %v5328 = vadd.f32 %v5272, %v5320
        %v5329 = vadd.f32 %v5273, %v5321
        %v5330 = vadd.f32 %v5274, %v5322
        %v5331 = vsub.f32 %v3594, %v5043
        %v5332 = vsub.f32 %v3596, %v5044
        %v5333 = vsub.f32 %v3599, %v5045
        %v5334 = vsub.f32 %v3601, %v5046
        %v5335 = vsub.f32 %v3604, %v5047
        %v5336 = vsub.f32 %v3606, %v5048
        %v5337 = vsub.f32 %v3609, %v5049
        %v5338 = vsub.f32 %v3611, %v5050
        %v5339 = vmul.f32 %v5331, 1.442695
        %v5340 = vpow.pop %v5339
        %v5341 = vmul.f32 %v5332, 1.442695
        %v5342 = vpow.pop %v5341
        %v5343 = vmul.f32 %v5333, 1.442695
        %v5344 = vpow.pop %v5343
        %v5345 = vmul.f32 %v5334, 1.442695
        %v5346 = vpow.pop %v5345
        %v5347 = vmul.f32 %v5335, 1.442695
        %v5348 = vpow.pop %v5347
        %v5349 = vmul.f32 %v5336, 1.442695
        %v5350 = vpow.pop %v5349
        %v5351 = vmul.f32 %v5337, 1.442695
        %v5352 = vpow.pop %v5351
        %v5353 = vmul.f32 %v5338, 1.442695
        %v5354 = vpow.pop %v5353
        %v5355 = vadd.f32 %v5299, %v5340
        %v5356 = vadd.f32 %v5300, %v5342
        %v5357 = vadd.f32 %v5301, %v5344
        %v5358 = vadd.f32 %v5302, %v5346
        %v5359 = vadd.f32 %v5303, %v5348
        %v5360 = vadd.f32 %v5304, %v5350
        %v5361 = vadd.f32 %v5305, %v5352
        %v5362 = vadd.f32 %v5306, %v5354
        %v5363 = vunpack.c.l.bf16 %v3479
        %v5364 = vunpack.c.l.bf16 %v3480
        %v5365 = vunpack.c.l.bf16 %v3481
        %v5366 = vunpack.c.l.bf16 %v3482
        %v5367 = vunpack.c.l.bf16 %v3483
        %v5368 = vunpack.c.l.bf16 %v3484
        %v5369 = vunpack.c.l.bf16 %v3485
        %v5370 = vunpack.c.l.bf16 %v3486
        %v5371 = vmul.f32 %v5340, %v5363
        %v5372 = vmul.f32 %v5342, %v5364
        %v5373 = vmul.f32 %v5344, %v5365
        %v5374 = vmul.f32 %v5346, %v5366
        %v5375 = vmul.f32 %v5348, %v5367
        %v5376 = vmul.f32 %v5350, %v5368
        %v5377 = vmul.f32 %v5352, %v5369
        %v5378 = vmul.f32 %v5354, %v5370
        %v5379 = vadd.f32 %v5323, %v5371
        %v5380 = vadd.f32 %v5324, %v5372
        %v5381 = vadd.f32 %v5325, %v5373
        %v5382 = vadd.f32 %v5326, %v5374
        %v5383 = vadd.f32 %v5327, %v5375
        %v5384 = vadd.f32 %v5328, %v5376
        %v5385 = vadd.f32 %v5329, %v5377
        %v5386 = vadd.f32 %v5330, %v5378
        %v5387 = vsub.f32 %v3737, %v5043
        %v5388 = vsub.f32 %v3739, %v5044
        %v5389 = vsub.f32 %v3742, %v5045
        %v5390 = vsub.f32 %v3744, %v5046
        %v5391 = vsub.f32 %v3747, %v5047
        %v5392 = vsub.f32 %v3749, %v5048
        %v5393 = vsub.f32 %v3752, %v5049
        %v5394 = vsub.f32 %v3754, %v5050
        %v5395 = vmul.f32 %v5387, 1.442695
        %v5396 = vpow.pop %v5395
        %v5397 = vmul.f32 %v5388, 1.442695
        %v5398 = vpow.pop %v5397
        %v5399 = vmul.f32 %v5389, 1.442695
        %v5400 = vpow.pop %v5399
        %v5401 = vmul.f32 %v5390, 1.442695
        %v5402 = vpow.pop %v5401
        %v5403 = vmul.f32 %v5391, 1.442695
        %v5404 = vpow.pop %v5403
        %v5405 = vmul.f32 %v5392, 1.442695
        %v5406 = vpow.pop %v5405
        %v5407 = vmul.f32 %v5393, 1.442695
        %v5408 = vpow.pop %v5407
        %v5409 = vmul.f32 %v5394, 1.442695
        %v5410 = vpow.pop %v5409
        %v5411 = vadd.f32 %v5355, %v5396
        %v5412 = vadd.f32 %v5356, %v5398
        %v5413 = vadd.f32 %v5357, %v5400
        %v5414 = vadd.f32 %v5358, %v5402
        %v5415 = vadd.f32 %v5359, %v5404
        %v5416 = vadd.f32 %v5360, %v5406
        %v5417 = vadd.f32 %v5361, %v5408
        %v5418 = vadd.f32 %v5362, %v5410
        %v5419 = vunpack.c.l.bf16 %v3622
        %v5420 = vunpack.c.l.bf16 %v3623
        %v5421 = vunpack.c.l.bf16 %v3624
        %v5422 = vunpack.c.l.bf16 %v3625
        %v5423 = vunpack.c.l.bf16 %v3626
        %v5424 = vunpack.c.l.bf16 %v3627
        %v5425 = vunpack.c.l.bf16 %v3628
        %v5426 = vunpack.c.l.bf16 %v3629
        %v5427 = vmul.f32 %v5396, %v5419
        %v5428 = vmul.f32 %v5398, %v5420
        %v5429 = vmul.f32 %v5400, %v5421
        %v5430 = vmul.f32 %v5402, %v5422
        %v5431 = vmul.f32 %v5404, %v5423
        %v5432 = vmul.f32 %v5406, %v5424
        %v5433 = vmul.f32 %v5408, %v5425
        %v5434 = vmul.f32 %v5410, %v5426
        %v5435 = vadd.f32 %v5379, %v5427
        %v5436 = vadd.f32 %v5380, %v5428
        %v5437 = vadd.f32 %v5381, %v5429
        %v5438 = vadd.f32 %v5382, %v5430
        %v5439 = vadd.f32 %v5383, %v5431
        %v5440 = vadd.f32 %v5384, %v5432
        %v5441 = vadd.f32 %v5385, %v5433
        %v5442 = vadd.f32 %v5386, %v5434
        %v5443 = vsub.f32 %v3880, %v5043
        %v5444 = vsub.f32 %v3882, %v5044
        %v5445 = vsub.f32 %v3885, %v5045
        %v5446 = vsub.f32 %v3887, %v5046
        %v5447 = vsub.f32 %v3890, %v5047
        %v5448 = vsub.f32 %v3892, %v5048
        %v5449 = vsub.f32 %v3895, %v5049
        %v5450 = vsub.f32 %v3897, %v5050
        %v5451 = vmul.f32 %v5443, 1.442695
        %v5452 = vpow.pop %v5451
        %v5453 = vmul.f32 %v5444, 1.442695
        %v5454 = vpow.pop %v5453
        %v5455 = vmul.f32 %v5445, 1.442695
        %v5456 = vpow.pop %v5455
        %v5457 = vmul.f32 %v5446, 1.442695
        %v5458 = vpow.pop %v5457
        %v5459 = vmul.f32 %v5447, 1.442695
        %v5460 = vpow.pop %v5459
        %v5461 = vmul.f32 %v5448, 1.442695
        %v5462 = vpow.pop %v5461
        %v5463 = vmul.f32 %v5449, 1.442695
        %v5464 = vpow.pop %v5463
        %v5465 = vmul.f32 %v5450, 1.442695
        %v5466 = vpow.pop %v5465
        %v5467 = vadd.f32 %v5411, %v5452
        %v5468 = vadd.f32 %v5412, %v5454
        %v5469 = vadd.f32 %v5413, %v5456
        %v5470 = vadd.f32 %v5414, %v5458
        %v5471 = vadd.f32 %v5415, %v5460
        %v5472 = vadd.f32 %v5416, %v5462
        %v5473 = vadd.f32 %v5417, %v5464
        %v5474 = vadd.f32 %v5418, %v5466
        %v5475 = vunpack.c.l.bf16 %v3765
        %v5476 = vunpack.c.l.bf16 %v3766
        %v5477 = vunpack.c.l.bf16 %v3767
        %v5478 = vunpack.c.l.bf16 %v3768
        %v5479 = vunpack.c.l.bf16 %v3769
        %v5480 = vunpack.c.l.bf16 %v3770
        %v5481 = vunpack.c.l.bf16 %v3771
        %v5482 = vunpack.c.l.bf16 %v3772
        %v5483 = vmul.f32 %v5452, %v5475
        %v5484 = vmul.f32 %v5454, %v5476
        %v5485 = vmul.f32 %v5456, %v5477
        %v5486 = vmul.f32 %v5458, %v5478
        %v5487 = vmul.f32 %v5460, %v5479
        %v5488 = vmul.f32 %v5462, %v5480
        %v5489 = vmul.f32 %v5464, %v5481
        %v5490 = vmul.f32 %v5466, %v5482
        %v5491 = vadd.f32 %v5435, %v5483
        %v5492 = vadd.f32 %v5436, %v5484
        %v5493 = vadd.f32 %v5437, %v5485
        %v5494 = vadd.f32 %v5438, %v5486
        %v5495 = vadd.f32 %v5439, %v5487
        %v5496 = vadd.f32 %v5440, %v5488
        %v5497 = vadd.f32 %v5441, %v5489
        %v5498 = vadd.f32 %v5442, %v5490
        %v5499 = vsub.f32 %v4023, %v5043
        %v5500 = vsub.f32 %v4025, %v5044
        %v5501 = vsub.f32 %v4028, %v5045
        %v5502 = vsub.f32 %v4030, %v5046
        %v5503 = vsub.f32 %v4033, %v5047
        %v5504 = vsub.f32 %v4035, %v5048
        %v5505 = vsub.f32 %v4038, %v5049
        %v5506 = vsub.f32 %v4040, %v5050
        %v5507 = vmul.f32 %v5499, 1.442695
        %v5508 = vpow.pop %v5507
        %v5509 = vmul.f32 %v5500, 1.442695
        %v5510 = vpow.pop %v5509
        %v5511 = vmul.f32 %v5501, 1.442695
        %v5512 = vpow.pop %v5511
        %v5513 = vmul.f32 %v5502, 1.442695
        %v5514 = vpow.pop %v5513
        %v5515 = vmul.f32 %v5503, 1.442695
        %v5516 = vpow.pop %v5515
        %v5517 = vmul.f32 %v5504, 1.442695
        %v5518 = vpow.pop %v5517
        %v5519 = vmul.f32 %v5505, 1.442695
        %v5520 = vpow.pop %v5519
        %v5521 = vmul.f32 %v5506, 1.442695
        %v5522 = vpow.pop %v5521
        %v5523 = vadd.f32 %v5467, %v5508
        %v5524 = vadd.f32 %v5468, %v5510
        %v5525 = vadd.f32 %v5469, %v5512
        %v5526 = vadd.f32 %v5470, %v5514
        %v5527 = vadd.f32 %v5471, %v5516
        %v5528 = vadd.f32 %v5472, %v5518
        %v5529 = vadd.f32 %v5473, %v5520
        %v5530 = vadd.f32 %v5474, %v5522
        %v5531 = vunpack.c.l.bf16 %v3908
        %v5532 = vunpack.c.l.bf16 %v3909
        %v5533 = vunpack.c.l.bf16 %v3910
        %v5534 = vunpack.c.l.bf16 %v3911
        %v5535 = vunpack.c.l.bf16 %v3912
        %v5536 = vunpack.c.l.bf16 %v3913
        %v5537 = vunpack.c.l.bf16 %v3914
        %v5538 = vunpack.c.l.bf16 %v3915
        %v5539 = vmul.f32 %v5508, %v5531
        %v5540 = vmul.f32 %v5510, %v5532
        %v5541 = vmul.f32 %v5512, %v5533
        %v5542 = vmul.f32 %v5514, %v5534
        %v5543 = vmul.f32 %v5516, %v5535
        %v5544 = vmul.f32 %v5518, %v5536
        %v5545 = vmul.f32 %v5520, %v5537
        %v5546 = vmul.f32 %v5522, %v5538
        %v5547 = vadd.f32 %v5491, %v5539
        %v5548 = vadd.f32 %v5492, %v5540
        %v5549 = vadd.f32 %v5493, %v5541
        %v5550 = vadd.f32 %v5494, %v5542
        %v5551 = vadd.f32 %v5495, %v5543
        %v5552 = vadd.f32 %v5496, %v5544
        %v5553 = vadd.f32 %v5497, %v5545
        %v5554 = vadd.f32 %v5498, %v5546
        %v5555 = vsub.f32 %v4166, %v5043
        %v5556 = vsub.f32 %v4168, %v5044
        %v5557 = vsub.f32 %v4171, %v5045
        %v5558 = vsub.f32 %v4173, %v5046
        %v5559 = vsub.f32 %v4176, %v5047
        %v5560 = vsub.f32 %v4178, %v5048
        %v5561 = vsub.f32 %v4181, %v5049
        %v5562 = vsub.f32 %v4183, %v5050
        %v5563 = vmul.f32 %v5555, 1.442695
        %v5564 = vpow.pop %v5563
        %v5565 = vmul.f32 %v5556, 1.442695
        %v5566 = vpow.pop %v5565
        %v5567 = vmul.f32 %v5557, 1.442695
        %v5568 = vpow.pop %v5567
        %v5569 = vmul.f32 %v5558, 1.442695
        %v5570 = vpow.pop %v5569
        %v5571 = vmul.f32 %v5559, 1.442695
        %v5572 = vpow.pop %v5571
        %v5573 = vmul.f32 %v5560, 1.442695
        %v5574 = vpow.pop %v5573
        %v5575 = vmul.f32 %v5561, 1.442695
        %v5576 = vpow.pop %v5575
        %v5577 = vmul.f32 %v5562, 1.442695
        %v5578 = vpow.pop %v5577
        %v5579 = vadd.f32 %v5523, %v5564
        %v5580 = vadd.f32 %v5524, %v5566
        %v5581 = vadd.f32 %v5525, %v5568
        %v5582 = vadd.f32 %v5526, %v5570
        %v5583 = vadd.f32 %v5527, %v5572
        %v5584 = vadd.f32 %v5528, %v5574
        %v5585 = vadd.f32 %v5529, %v5576
        %v5586 = vadd.f32 %v5530, %v5578
        %v5587 = vunpack.c.l.bf16 %v4051
        %v5588 = vunpack.c.l.bf16 %v4052
        %v5589 = vunpack.c.l.bf16 %v4053
        %v5590 = vunpack.c.l.bf16 %v4054
        %v5591 = vunpack.c.l.bf16 %v4055
        %v5592 = vunpack.c.l.bf16 %v4056
        %v5593 = vunpack.c.l.bf16 %v4057
        %v5594 = vunpack.c.l.bf16 %v4058
        %v5595 = vmul.f32 %v5564, %v5587
        %v5596 = vmul.f32 %v5566, %v5588
        %v5597 = vmul.f32 %v5568, %v5589
        %v5598 = vmul.f32 %v5570, %v5590
        %v5599 = vmul.f32 %v5572, %v5591
        %v5600 = vmul.f32 %v5574, %v5592
        %v5601 = vmul.f32 %v5576, %v5593
        %v5602 = vmul.f32 %v5578, %v5594
        %v5603 = vadd.f32 %v5547, %v5595
        %v5604 = vadd.f32 %v5548, %v5596
        %v5605 = vadd.f32 %v5549, %v5597
        %v5606 = vadd.f32 %v5550, %v5598
        %v5607 = vadd.f32 %v5551, %v5599
        %v5608 = vadd.f32 %v5552, %v5600
        %v5609 = vadd.f32 %v5553, %v5601
        %v5610 = vadd.f32 %v5554, %v5602
        %v5611 = vsub.f32 %v4309, %v5043
        %v5612 = vsub.f32 %v4311, %v5044
        %v5613 = vsub.f32 %v4314, %v5045
        %v5614 = vsub.f32 %v4316, %v5046
        %v5615 = vsub.f32 %v4319, %v5047
        %v5616 = vsub.f32 %v4321, %v5048
        %v5617 = vsub.f32 %v4324, %v5049
        %v5618 = vsub.f32 %v4326, %v5050
        %v5619 = vmul.f32 %v5611, 1.442695
        %v5620 = vpow.pop %v5619
        %v5621 = vmul.f32 %v5612, 1.442695
        %v5622 = vpow.pop %v5621
        %v5623 = vmul.f32 %v5613, 1.442695
        %v5624 = vpow.pop %v5623
        %v5625 = vmul.f32 %v5614, 1.442695
        %v5626 = vpow.pop %v5625
        %v5627 = vmul.f32 %v5615, 1.442695
        %v5628 = vpow.pop %v5627
        %v5629 = vmul.f32 %v5616, 1.442695
        %v5630 = vpow.pop %v5629
        %v5631 = vmul.f32 %v5617, 1.442695
        %v5632 = vpow.pop %v5631
        %v5633 = vmul.f32 %v5618, 1.442695
        %v5634 = vpow.pop %v5633
        %v5635 = vadd.f32 %v5579, %v5620
        %v5636 = vadd.f32 %v5580, %v5622
        %v5637 = vadd.f32 %v5581, %v5624
        %v5638 = vadd.f32 %v5582, %v5626
        %v5639 = vadd.f32 %v5583, %v5628
        %v5640 = vadd.f32 %v5584, %v5630
        %v5641 = vadd.f32 %v5585, %v5632
        %v5642 = vadd.f32 %v5586, %v5634
        %v5643 = vunpack.c.l.bf16 %v4194
        %v5644 = vunpack.c.l.bf16 %v4195
        %v5645 = vunpack.c.l.bf16 %v4196
        %v5646 = vunpack.c.l.bf16 %v4197
        %v5647 = vunpack.c.l.bf16 %v4198
        %v5648 = vunpack.c.l.bf16 %v4199
        %v5649 = vunpack.c.l.bf16 %v4200
        %v5650 = vunpack.c.l.bf16 %v4201
        %v5651 = vmul.f32 %v5620, %v5643
        %v5652 = vmul.f32 %v5622, %v5644
        %v5653 = vmul.f32 %v5624, %v5645
        %v5654 = vmul.f32 %v5626, %v5646
        %v5655 = vmul.f32 %v5628, %v5647
        %v5656 = vmul.f32 %v5630, %v5648
        %v5657 = vmul.f32 %v5632, %v5649
        %v5658 = vmul.f32 %v5634, %v5650
        %v5659 = vadd.f32 %v5603, %v5651
        %v5660 = vadd.f32 %v5604, %v5652
        %v5661 = vadd.f32 %v5605, %v5653
        %v5662 = vadd.f32 %v5606, %v5654
        %v5663 = vadd.f32 %v5607, %v5655
        %v5664 = vadd.f32 %v5608, %v5656
        %v5665 = vadd.f32 %v5609, %v5657
        %v5666 = vadd.f32 %v5610, %v5658
        %v5667 = vsub.f32 %v4452, %v5043
        %v5668 = vsub.f32 %v4454, %v5044
        %v5669 = vsub.f32 %v4457, %v5045
        %v5670 = vsub.f32 %v4459, %v5046
        %v5671 = vsub.f32 %v4462, %v5047
        %v5672 = vsub.f32 %v4464, %v5048
        %v5673 = vsub.f32 %v4467, %v5049
        %v5674 = vsub.f32 %v4469, %v5050
        %v5675 = vmul.f32 %v5667, 1.442695
        %v5676 = vpow.pop %v5675
        %v5677 = vmul.f32 %v5668, 1.442695
        %v5678 = vpow.pop %v5677
        %v5679 = vmul.f32 %v5669, 1.442695
        %v5680 = vpow.pop %v5679
        %v5681 = vmul.f32 %v5670, 1.442695
        %v5682 = vpow.pop %v5681
        %v5683 = vmul.f32 %v5671, 1.442695
        %v5684 = vpow.pop %v5683
        %v5685 = vmul.f32 %v5672, 1.442695
        %v5686 = vpow.pop %v5685
        %v5687 = vmul.f32 %v5673, 1.442695
        %v5688 = vpow.pop %v5687
        %v5689 = vmul.f32 %v5674, 1.442695
        %v5690 = vpow.pop %v5689
        %v5691 = vadd.f32 %v5635, %v5676
        %v5692 = vadd.f32 %v5636, %v5678
        %v5693 = vadd.f32 %v5637, %v5680
        %v5694 = vadd.f32 %v5638, %v5682
        %v5695 = vadd.f32 %v5639, %v5684
        %v5696 = vadd.f32 %v5640, %v5686
        %v5697 = vadd.f32 %v5641, %v5688
        %v5698 = vadd.f32 %v5642, %v5690
        %v5699 = vunpack.c.l.bf16 %v4337
        %v5700 = vunpack.c.l.bf16 %v4338
        %v5701 = vunpack.c.l.bf16 %v4339
        %v5702 = vunpack.c.l.bf16 %v4340
        %v5703 = vunpack.c.l.bf16 %v4341
        %v5704 = vunpack.c.l.bf16 %v4342
        %v5705 = vunpack.c.l.bf16 %v4343
        %v5706 = vunpack.c.l.bf16 %v4344
        %v5707 = vmul.f32 %v5676, %v5699
        %v5708 = vmul.f32 %v5678, %v5700
        %v5709 = vmul.f32 %v5680, %v5701
        %v5710 = vmul.f32 %v5682, %v5702
        %v5711 = vmul.f32 %v5684, %v5703
        %v5712 = vmul.f32 %v5686, %v5704
        %v5713 = vmul.f32 %v5688, %v5705
        %v5714 = vmul.f32 %v5690, %v5706
        %v5715 = vadd.f32 %v5659, %v5707
        %v5716 = vadd.f32 %v5660, %v5708
        %v5717 = vadd.f32 %v5661, %v5709
        %v5718 = vadd.f32 %v5662, %v5710
        %v5719 = vadd.f32 %v5663, %v5711
        %v5720 = vadd.f32 %v5664, %v5712
        %v5721 = vadd.f32 %v5665, %v5713
        %v5722 = vadd.f32 %v5666, %v5714
        %v5723 = vsub.f32 %v4595, %v5043
        %v5724 = vsub.f32 %v4597, %v5044
        %v5725 = vsub.f32 %v4600, %v5045
        %v5726 = vsub.f32 %v4602, %v5046
        %v5727 = vsub.f32 %v4605, %v5047
        %v5728 = vsub.f32 %v4607, %v5048
        %v5729 = vsub.f32 %v4610, %v5049
        %v5730 = vsub.f32 %v4612, %v5050
        %v5731 = vmul.f32 %v5723, 1.442695
        %v5732 = vpow.pop %v5731
        %v5733 = vmul.f32 %v5724, 1.442695
        %v5734 = vpow.pop %v5733
        %v5735 = vmul.f32 %v5725, 1.442695
        %v5736 = vpow.pop %v5735
        %v5737 = vmul.f32 %v5726, 1.442695
        %v5738 = vpow.pop %v5737
        %v5739 = vmul.f32 %v5727, 1.442695
        %v5740 = vpow.pop %v5739
        %v5741 = vmul.f32 %v5728, 1.442695
        %v5742 = vpow.pop %v5741
        %v5743 = vmul.f32 %v5729, 1.442695
        %v5744 = vpow.pop %v5743
        %v5745 = vmul.f32 %v5730, 1.442695
        %v5746 = vpow.pop %v5745
        %v5747 = vadd.f32 %v5691, %v5732
        %v5748 = vadd.f32 %v5692, %v5734
        %v5749 = vadd.f32 %v5693, %v5736
        %v5750 = vadd.f32 %v5694, %v5738
        %v5751 = vadd.f32 %v5695, %v5740
        %v5752 = vadd.f32 %v5696, %v5742
        %v5753 = vadd.f32 %v5697, %v5744
        %v5754 = vadd.f32 %v5698, %v5746
        %v5755 = vunpack.c.l.bf16 %v4480
        %v5756 = vunpack.c.l.bf16 %v4481
        %v5757 = vunpack.c.l.bf16 %v4482
        %v5758 = vunpack.c.l.bf16 %v4483
        %v5759 = vunpack.c.l.bf16 %v4484
        %v5760 = vunpack.c.l.bf16 %v4485
        %v5761 = vunpack.c.l.bf16 %v4486
        %v5762 = vunpack.c.l.bf16 %v4487
        %v5763 = vmul.f32 %v5732, %v5755
        %v5764 = vmul.f32 %v5734, %v5756
        %v5765 = vmul.f32 %v5736, %v5757
        %v5766 = vmul.f32 %v5738, %v5758
        %v5767 = vmul.f32 %v5740, %v5759
        %v5768 = vmul.f32 %v5742, %v5760
        %v5769 = vmul.f32 %v5744, %v5761
        %v5770 = vmul.f32 %v5746, %v5762
        %v5771 = vadd.f32 %v5715, %v5763
        %v5772 = vadd.f32 %v5716, %v5764
        %v5773 = vadd.f32 %v5717, %v5765
        %v5774 = vadd.f32 %v5718, %v5766
        %v5775 = vadd.f32 %v5719, %v5767
        %v5776 = vadd.f32 %v5720, %v5768
        %v5777 = vadd.f32 %v5721, %v5769
        %v5778 = vadd.f32 %v5722, %v5770
        %v5779 = vsub.f32 %v4738, %v5043
        %v5780 = vsub.f32 %v4740, %v5044
        %v5781 = vsub.f32 %v4743, %v5045
        %v5782 = vsub.f32 %v4745, %v5046
        %v5783 = vsub.f32 %v4748, %v5047
        %v5784 = vsub.f32 %v4750, %v5048
        %v5785 = vsub.f32 %v4753, %v5049
        %v5786 = vsub.f32 %v4755, %v5050
        %v5787 = vmul.f32 %v5779, 1.442695
        %v5788 = vpow.pop %v5787
        %v5789 = vmul.f32 %v5780, 1.442695
        %v5790 = vpow.pop %v5789
        %v5791 = vmul.f32 %v5781, 1.442695
        %v5792 = vpow.pop %v5791
        %v5793 = vmul.f32 %v5782, 1.442695
        %v5794 = vpow.pop %v5793
        %v5795 = vmul.f32 %v5783, 1.442695
        %v5796 = vpow.pop %v5795
        %v5797 = vmul.f32 %v5784, 1.442695
        %v5798 = vpow.pop %v5797
        %v5799 = vmul.f32 %v5785, 1.442695
        %v5800 = vpow.pop %v5799
        %v5801 = vmul.f32 %v5786, 1.442695
        %v5802 = vpow.pop %v5801
        %v5803 = vadd.f32 %v5747, %v5788
        %v5804 = vadd.f32 %v5748, %v5790
        %v5805 = vadd.f32 %v5749, %v5792
        %v5806 = vadd.f32 %v5750, %v5794
        %v5807 = vadd.f32 %v5751, %v5796
        %v5808 = vadd.f32 %v5752, %v5798
        %v5809 = vadd.f32 %v5753, %v5800
        %v5810 = vadd.f32 %v5754, %v5802
        %v5811 = vunpack.c.l.bf16 %v4623
        %v5812 = vunpack.c.l.bf16 %v4624
        %v5813 = vunpack.c.l.bf16 %v4625
        %v5814 = vunpack.c.l.bf16 %v4626
        %v5815 = vunpack.c.l.bf16 %v4627
        %v5816 = vunpack.c.l.bf16 %v4628
        %v5817 = vunpack.c.l.bf16 %v4629
        %v5818 = vunpack.c.l.bf16 %v4630
        %v5819 = vmul.f32 %v5788, %v5811
        %v5820 = vmul.f32 %v5790, %v5812
        %v5821 = vmul.f32 %v5792, %v5813
        %v5822 = vmul.f32 %v5794, %v5814
        %v5823 = vmul.f32 %v5796, %v5815
        %v5824 = vmul.f32 %v5798, %v5816
        %v5825 = vmul.f32 %v5800, %v5817
        %v5826 = vmul.f32 %v5802, %v5818
        %v5827 = vadd.f32 %v5771, %v5819
        %v5828 = vadd.f32 %v5772, %v5820
        %v5829 = vadd.f32 %v5773, %v5821
        %v5830 = vadd.f32 %v5774, %v5822
        %v5831 = vadd.f32 %v5775, %v5823
        %v5832 = vadd.f32 %v5776, %v5824
        %v5833 = vadd.f32 %v5777, %v5825
        %v5834 = vadd.f32 %v5778, %v5826
        %v5835 = vsub.f32 %v4881, %v5043
        %v5836 = vsub.f32 %v4883, %v5044
        %v5837 = vsub.f32 %v4886, %v5045
        %v5838 = vsub.f32 %v4888, %v5046
        %v5839 = vsub.f32 %v4891, %v5047
        %v5840 = vsub.f32 %v4893, %v5048
        %v5841 = vsub.f32 %v4896, %v5049
        %v5842 = vsub.f32 %v4898, %v5050
        %v5843 = vmul.f32 %v5835, 1.442695
        %v5844 = vpow.pop %v5843
        %v5845 = vmul.f32 %v5836, 1.442695
        %v5846 = vpow.pop %v5845
        %v5847 = vmul.f32 %v5837, 1.442695
        %v5848 = vpow.pop %v5847
        %v5849 = vmul.f32 %v5838, 1.442695
        %v5850 = vpow.pop %v5849
        %v5851 = vmul.f32 %v5839, 1.442695
        %v5852 = vpow.pop %v5851
        %v5853 = vmul.f32 %v5840, 1.442695
        %v5854 = vpow.pop %v5853
        %v5855 = vmul.f32 %v5841, 1.442695
        %v5856 = vpow.pop %v5855
        %v5857 = vmul.f32 %v5842, 1.442695
        %v5858 = vpow.pop %v5857
        %v5859 = vadd.f32 %v5803, %v5844
        %v5860 = vadd.f32 %v5804, %v5846
        %v5861 = vadd.f32 %v5805, %v5848
        %v5862 = vadd.f32 %v5806, %v5850
        %v5863 = vadd.f32 %v5807, %v5852
        %v5864 = vadd.f32 %v5808, %v5854
        %v5865 = vadd.f32 %v5809, %v5856
        %v5866 = vadd.f32 %v5810, %v5858
        %v5867 = vunpack.c.l.bf16 %v4766
        %v5868 = vunpack.c.l.bf16 %v4767
        %v5869 = vunpack.c.l.bf16 %v4768
        %v5870 = vunpack.c.l.bf16 %v4769
        %v5871 = vunpack.c.l.bf16 %v4770
        %v5872 = vunpack.c.l.bf16 %v4771
        %v5873 = vunpack.c.l.bf16 %v4772
        %v5874 = vunpack.c.l.bf16 %v4773
        %v5875 = vmul.f32 %v5844, %v5867
        %v5876 = vmul.f32 %v5846, %v5868
        %v5877 = vmul.f32 %v5848, %v5869
        %v5878 = vmul.f32 %v5850, %v5870
        %v5879 = vmul.f32 %v5852, %v5871
        %v5880 = vmul.f32 %v5854, %v5872
        %v5881 = vmul.f32 %v5856, %v5873
        %v5882 = vmul.f32 %v5858, %v5874
        %v5883 = vadd.f32 %v5827, %v5875
        %v5884 = vadd.f32 %v5828, %v5876
        %v5885 = vadd.f32 %v5829, %v5877
        %v5886 = vadd.f32 %v5830, %v5878
        %v5887 = vadd.f32 %v5831, %v5879
        %v5888 = vadd.f32 %v5832, %v5880
        %v5889 = vadd.f32 %v5833, %v5881
        %v5890 = vadd.f32 %v5834, %v5882
        %v5891 = vsub.f32 %v5024, %v5043
        %v5892 = vsub.f32 %v5026, %v5044
        %v5893 = vsub.f32 %v5029, %v5045
        %v5894 = vsub.f32 %v5031, %v5046
        %v5895 = vsub.f32 %v5034, %v5047
        %v5896 = vsub.f32 %v5036, %v5048
        %v5897 = vsub.f32 %v5039, %v5049
        %v5898 = vsub.f32 %v5041, %v5050
        %v5899 = vmul.f32 %v5891, 1.442695
        %v5900 = vpow.pop %v5899
        %v5901 = vmul.f32 %v5892, 1.442695
        %v5902 = vpow.pop %v5901
        %v5903 = vmul.f32 %v5893, 1.442695
        %v5904 = vpow.pop %v5903
        %v5905 = vmul.f32 %v5894, 1.442695
        %v5906 = vpow.pop %v5905
        %v5907 = vmul.f32 %v5895, 1.442695
        %v5908 = vpow.pop %v5907
        %v5909 = vmul.f32 %v5896, 1.442695
        %v5910 = vpow.pop %v5909
        %v5911 = vmul.f32 %v5897, 1.442695
        %v5912 = vpow.pop %v5911
        %v5913 = vmul.f32 %v5898, 1.442695
        %v5914 = vpow.pop %v5913
        %v5915 = vadd.f32 %v5859, %v5900
        %v5916 = vadd.f32 %v5860, %v5902
        %v5917 = vadd.f32 %v5861, %v5904
        %v5918 = vadd.f32 %v5862, %v5906
        %v5919 = vadd.f32 %v5863, %v5908
        %v5920 = vadd.f32 %v5864, %v5910
        %v5921 = vadd.f32 %v5865, %v5912
        %v5922 = vadd.f32 %v5866, %v5914
        %v5923 = vunpack.c.l.bf16 %v4909
        %v5924 = vunpack.c.l.bf16 %v4910
        %v5925 = vunpack.c.l.bf16 %v4911
        %v5926 = vunpack.c.l.bf16 %v4912
        %v5927 = vunpack.c.l.bf16 %v4913
        %v5928 = vunpack.c.l.bf16 %v4914
        %v5929 = vunpack.c.l.bf16 %v4915
        %v5930 = vunpack.c.l.bf16 %v4916
        %v5931 = vmul.f32 %v5900, %v5923
        %v5932 = vmul.f32 %v5902, %v5924
        %v5933 = vmul.f32 %v5904, %v5925
        %v5934 = vmul.f32 %v5906, %v5926
        %v5935 = vmul.f32 %v5908, %v5927
        %v5936 = vmul.f32 %v5910, %v5928
        %v5937 = vmul.f32 %v5912, %v5929
        %v5938 = vmul.f32 %v5914, %v5930
        %v5939 = vadd.f32 %v5883, %v5931
        %v5940 = vadd.f32 %v5884, %v5932
        %v5941 = vadd.f32 %v5885, %v5933
        %v5942 = vadd.f32 %v5886, %v5934
        %v5943 = vadd.f32 %v5887, %v5935
        %v5944 = vadd.f32 %v5888, %v5936
        %v5945 = vadd.f32 %v5889, %v5937
        %v5946 = vadd.f32 %v5890, %v5938
        %v5947 = vrcp.pop %v5915
        %v5948 = vrcp.pop %v5916
        %v5949 = vrcp.pop %v5917
        %v5950 = vrcp.pop %v5918
        %v5951 = vrcp.pop %v5919
        %v5952 = vrcp.pop %v5920
        %v5953 = vrcp.pop %v5921
        %v5954 = vrcp.pop %v5922
        %v5955 = vmul.f32 %v5939, %v5947
        %v5956 = vmul.f32 %v5940, %v5948
        %v5957 = vmul.f32 %v5941, %v5949
        %v5958 = vmul.f32 %v5942, %v5950
        %v5959 = vmul.f32 %v5943, %v5951
        %v5960 = vmul.f32 %v5944, %v5952
        %v5961 = vmul.f32 %v5945, %v5953
        %v5962 = vmul.f32 %v5946, %v5954
        %v5963 = vpack.c.bf16 %v5956, %v5955
        %v5964 = vpack.c.bf16 %v5958, %v5957
        %v5965 = vpack.c.bf16 %v5960, %v5959
        %v5966 = vpack.c.bf16 %v5962, %v5961
        %v5967 = vpack.c.bf16 %v2509, %v2508
        %v5968 = vpack.c.bf16 %v2511, %v2510
        %v5969 = vpack.c.bf16 %v2513, %v2512
        %v5970 = vpack.c.bf16 %v2515, %v2514
        %v5971 = vld [vmem:[%s9] sm:$0xf]
        %v5972 = vld [vmem:[%s9 + $0x4] sm:$0xf]
        %v5973 = vld [vmem:[%s9 + $0x8] sm:$0xf]
        %v5974 = vld [vmem:[%s9 + $0xc] sm:$0xf]
        %v5975 = vld [vmem:[%s9 + $0x10] sm:$0xf]
        %v5976 = vld [vmem:[%s9 + $0x14] sm:$0xf]
        %v5977 = vld [vmem:[%s9 + $0x18] sm:$0xf]
        %v5978 = vld [vmem:[%s9 + $0x1c] sm:$0xf]
        %v5979 = vld [vmem:[%s9 + $0x20] sm:$0xf]
        %v5980 = vld [vmem:[%s9 + $0x24] sm:$0xf]
        %v5981 = vld [vmem:[%s9 + $0x28] sm:$0xf]
        %v5982 = vld [vmem:[%s9 + $0x2c] sm:$0xf]
        %v5983 = vld [vmem:[%s9 + $0x30] sm:$0xf]
        %v5984 = vld [vmem:[%s9 + $0x34] sm:$0xf]
        %v5985 = vld [vmem:[%s9 + $0x38] sm:$0xf]
        %v5986 = vld [vmem:[%s9 + $0x3c] sm:$0xf]
        %v5987 = vld [vmem:[%s10] sm:$0xff]
        %v5988 = vld [vmem:[%s10 + $0x8] sm:$0xff]
        %v5989 = vld [vmem:[%s10 + $0x10] sm:$0xff]
        %v5990 = vld [vmem:[%s10 + $0x18] sm:$0xff]
        %v5991 = vld [vmem:[%s10 + $0x20] sm:$0xff]
        %v5992 = vld [vmem:[%s10 + $0x28] sm:$0xff]
        %v5993 = vld [vmem:[%s10 + $0x30] sm:$0xff]
        %v5994 = vld [vmem:[%s10 + $0x38] sm:$0xff]
        %v5995 = vld [vmem:[%s10 + $0x40] sm:$0xff]
        %v5996 = vld [vmem:[%s10 + $0x48] sm:$0xff]
        %v5997 = vld [vmem:[%s10 + $0x50] sm:$0xff]
        %v5998 = vld [vmem:[%s10 + $0x58] sm:$0xff]
        %v5999 = vld [vmem:[%s10 + $0x60] sm:$0xff]
        %v6000 = vld [vmem:[%s10 + $0x68] sm:$0xff]
        %v6001 = vld [vmem:[%s10 + $0x70] sm:$0xff]
        %v6002 = vld [vmem:[%s10 + $0x78] sm:$0xff]
        %6004 = vset.pattern.permute.xlu0 0
        %6005 = vperm.xlu0 %6004, %v5987
        %v6006 = vpop.permute.xlu0 %6005
        %6009 = vset.pattern.permute.xlu0 0
        %6010 = vperm.xlu0 %6009, %v5988
        %v6011 = vpop.permute.xlu0 %6010
        %6014 = vset.pattern.permute.xlu0 0
        %6015 = vperm.xlu0 %6014, %v5989
        %v6016 = vpop.permute.xlu0 %6015
        %6019 = vset.pattern.permute.xlu0 0
        %6020 = vperm.xlu0 %6019, %v5990
        %v6021 = vpop.permute.xlu0 %6020
        %6024 = vset.pattern.permute.xlu0 0
        %6025 = vperm.xlu0 %6024, %v5991
        %v6026 = vpop.permute.xlu0 %6025
        %6029 = vset.pattern.permute.xlu0 0
        %6030 = vperm.xlu0 %6029, %v5992
        %v6031 = vpop.permute.xlu0 %6030
        %6034 = vset.pattern.permute.xlu0 0
        %6035 = vperm.xlu0 %6034, %v5993
        %v6036 = vpop.permute.xlu0 %6035
        %6039 = vset.pattern.permute.xlu0 0
        %6040 = vperm.xlu0 %6039, %v5994
        %v6041 = vpop.permute.xlu0 %6040
        %6044 = vset.pattern.permute.xlu0 0
        %6045 = vperm.xlu0 %6044, %v5995
        %v6046 = vpop.permute.xlu0 %6045
        %6049 = vset.pattern.permute.xlu0 0
        %6050 = vperm.xlu0 %6049, %v5996
        %v6051 = vpop.permute.xlu0 %6050
        %6054 = vset.pattern.permute.xlu0 0
        %6055 = vperm.xlu0 %6054, %v5997
        %v6056 = vpop.permute.xlu0 %6055
        %6059 = vset.pattern.permute.xlu0 0
        %6060 = vperm.xlu0 %6059, %v5998
        %v6061 = vpop.permute.xlu0 %6060
        %6064 = vset.pattern.permute.xlu0 0
        %6065 = vperm.xlu0 %6064, %v5999
        %v6066 = vpop.permute.xlu0 %6065
        %6069 = vset.pattern.permute.xlu0 0
        %6070 = vperm.xlu0 %6069, %v6000
        %v6071 = vpop.permute.xlu0 %6070
        %6074 = vset.pattern.permute.xlu0 0
        %6075 = vperm.xlu0 %6074, %v6001
        %v6076 = vpop.permute.xlu0 %6075
        %6079 = vset.pattern.permute.xlu0 0
        %6080 = vperm.xlu0 %6079, %v6002
        %v6081 = vpop.permute.xlu0 %6080
        %v6099 = vunpack.c.l.b16 %v5971
        %v6100 = vunpack.c.l.b16 %v5972
        %v6101 = vunpack.c.l.b16 %v5973
        %v6102 = vunpack.c.l.b16 %v5974
        %v6103 = vunpack.c.l.b16 %v5975
        %v6104 = vunpack.c.l.b16 %v5976
        %v6105 = vunpack.c.l.b16 %v5977
        %v6106 = vunpack.c.l.b16 %v5978
        %v6107 = vunpack.c.l.b16 %v5979
        %v6108 = vunpack.c.l.b16 %v5980
        %v6109 = vunpack.c.l.b16 %v5981
        %v6110 = vunpack.c.l.b16 %v5982
        %v6111 = vunpack.c.l.b16 %v5983
        %v6112 = vunpack.c.l.b16 %v5984
        %v6113 = vunpack.c.l.b16 %v5985
        %v6114 = vunpack.c.l.b16 %v5986
        %v6115 = vpack.c.b16 %v6100, %v6099
        %v6116 = vpack.c.b16 %v6102, %v6101
        %v6117 = vpack.c.b16 %v6104, %v6103
        %v6118 = vpack.c.b16 %v6106, %v6105
        %v6119 = vpack.c.b16 %v6108, %v6107
        %v6120 = vpack.c.b16 %v6110, %v6109
        %v6121 = vpack.c.b16 %v6112, %v6111
        %v6122 = vpack.c.b16 %v6114, %v6113
        %6131 = vmatpush.bf16.msra.mxu0 %v5970
        %6132 = vmatpush.bf16.msra.mxu0 %v5969
        %6133 = vmatpush.bf16.msra.mxu0 %v5968
        %6134 = vmatpush.bf16.msra.mxu0 %v5967
        %6135 = vmatpush.bf16.msra.mxu0 %v5966
        %6136 = vmatpush.bf16.msra.mxu0 %v5965
        %6137 = vmatpush.bf16.msra.mxu0 %v5964
        %6138 = vmatpush.bf16.msra.mxu0 %v5963
        %6139 = vmatmul.bf16.gmra.mxu0 %v6115
        %v6140 = vpop.f32.mrf.mxu0
        %v6141 = vadd.f32 %v6006, %v6140
        %v6142 = vpop.f32.mrf.mxu0
        %v6143 = vadd.f32 %v6011, %v6142
        %6144 = vmatmul.bf16.gmra.mxu0 %v6116
        %v6145 = vpop.f32.mrf.mxu0
        %v6146 = vadd.f32 %v6016, %v6145
        %v6147 = vpop.f32.mrf.mxu0
        %v6148 = vadd.f32 %v6021, %v6147
        %6149 = vmatmul.bf16.gmra.mxu0 %v6117
        %v6150 = vpop.f32.mrf.mxu0
        %v6151 = vadd.f32 %v6026, %v6150
        %v6152 = vpop.f32.mrf.mxu0
        %v6153 = vadd.f32 %v6031, %v6152
        %6154 = vmatmul.bf16.gmra.mxu0 %v6118
        %v6155 = vpop.f32.mrf.mxu0
        %v6156 = vadd.f32 %v6036, %v6155
        %v6157 = vpop.f32.mrf.mxu0
        %v6158 = vadd.f32 %v6041, %v6157
        %6159 = vmatmul.bf16.gmra.mxu0 %v6119
        %v6160 = vpop.f32.mrf.mxu0
        %v6161 = vadd.f32 %v6046, %v6160
        %v6162 = vpop.f32.mrf.mxu0
        %v6163 = vadd.f32 %v6051, %v6162
        %6164 = vmatmul.bf16.gmra.mxu0 %v6120
        %v6165 = vpop.f32.mrf.mxu0
        %v6166 = vadd.f32 %v6056, %v6165
        %v6167 = vpop.f32.mrf.mxu0
        %v6168 = vadd.f32 %v6061, %v6167
        %6169 = vmatmul.bf16.gmra.mxu0 %v6121
        %v6170 = vpop.f32.mrf.mxu0
        %v6171 = vadd.f32 %v6066, %v6170
        %v6172 = vpop.f32.mrf.mxu0
        %v6173 = vadd.f32 %v6071, %v6172
        %6174 = vmatmul.bf16.gmra.mxu0 %v6122
        %v6175 = vpop.f32.mrf.mxu0
        %v6176 = vadd.f32 %v6076, %v6175
        %v6177 = vpop.f32.mrf.mxu0
        %v6178 = vadd.f32 %v6081, %v6177
        %6179 = vdwg.mxu0
        %v6180 = vmax.f32 %v6141, 0.0
        %v6181 = vmax.f32 %v6143, 0.0
        %v6182 = vmax.f32 %v6146, 0.0
        %v6183 = vmax.f32 %v6148, 0.0
        %v6184 = vmax.f32 %v6151, 0.0
        %v6185 = vmax.f32 %v6153, 0.0
        %v6186 = vmax.f32 %v6156, 0.0
        %v6187 = vmax.f32 %v6158, 0.0
        %v6188 = vmax.f32 %v6161, 0.0
        %v6189 = vmax.f32 %v6163, 0.0
        %v6190 = vmax.f32 %v6166, 0.0
        %v6191 = vmax.f32 %v6168, 0.0
        %v6192 = vmax.f32 %v6171, 0.0
        %v6193 = vmax.f32 %v6173, 0.0
        %v6194 = vmax.f32 %v6176, 0.0
        %v6195 = vmax.f32 %v6178, 0.0
        %v6196 = vld [vmem:[%s11] sm:$0x7]
        %v6197 = vpack.c.bf16 %v6181, %v6180
        %v6198 = vpack.c.bf16 %v6183, %v6182
        %v6199 = vpack.c.bf16 %v6185, %v6184
        %v6200 = vpack.c.bf16 %v6187, %v6186
        %v6201 = vpack.c.bf16 %v6189, %v6188
        %v6202 = vpack.c.bf16 %v6191, %v6190
        %v6203 = vpack.c.bf16 %v6193, %v6192
        %v6204 = vpack.c.bf16 %v6195, %v6194
        %v6205 = vld [vmem:[%s12] sm:$0x3f]
        %6207 = vset.pattern.permute.xlu0 0
        %6208 = vperm.xlu0 %6207, %v6205
        %v6209 = vpop.permute.xlu0 %6208
        %6211 = vmatpush.bf16.msra.mxu0 %v6204
        %6212 = vmatpush.bf16.msra.mxu0 %v6203
        %6213 = vmatpush.bf16.msra.mxu0 %v6202
        %6214 = vmatpush.bf16.msra.mxu0 %v6201
        %6215 = vmatpush.bf16.msra.mxu0 %v6200
        %6216 = vmatpush.bf16.msra.mxu0 %v6199
        %6217 = vmatpush.bf16.msra.mxu0 %v6198
        %6218 = vmatpush.bf16.msra.mxu0 %v6197
        %6219 = vmatmul.bf16.gmra.mxu0 %v6196
        %v6220 = vpop.f32.mrf.mxu0
        %v6221 = vadd.f32 %v6209, %v6220
        %v6222 = vpop.f32.mrf.mxu0
        %6223 = vdwg.mxu0
        %6224 = vst [vmem:[%s1094] sm:$0x3f] %v6221
        %p6225 = scmp.lt.s32.totalorder %s28, 1
        %s6226 = scalar_select %p6225, %s28, 1
        %p6227 = scmp.lt.s32.totalorder %s29, 1
        %s6228 = scalar_select %p6227, %s29, 1
        %s6229 = smul.addr %s6226, 2
        %s6230 = sadd.s32 %s6228, %s6229
        %s6231 = smul.addr %s6230, 8
        %s6232 = scalar_lea.vmem %s13, %s6231
        // Predicated region
        $region152: #{re_forward.5} parent=142 // pred_check
          %p6233 = pneg %p343
        $region153: #{re_forward.5} parent=142 // pred_check_branch
          %6235 = sbr.rel (%p6233) target = $region155
        $region154: #{re_forward.5} parent=142 // pred_region
          _
        $region155: #{re_forward.5} parent=142 // pred_fallthru
          _
      $region143: #{re_forward.5} parent=5 // pred_fallthru
        _
      %p6236 = scmp.le.s32.totalorder 2, %s19
      // Predicated region
      $region156: #{re_forward.5} parent=5 // pred_check
        %p6237 = pneg %p6236
      $region157: #{re_forward.5} parent=5 // pred_check_branch
        %6239 = sbr.rel (%p6237) target = $region159
      $region158: #{re_forward.5} parent=5 // pred_region
        %s6240 = ssub.s32 %s19, 2
        // Predicated region
        $region160: #{re_forward.5} parent=158 // pred_check
          %p6241 = pneg %p349
        $region161: #{re_forward.5} parent=158 // pred_check_branch
          %6243 = sbr.rel (%p6241) target = $region163
        $region162: #{re_forward.5} parent=158 // pred_region
          %p6244 = scmp.lt.s32.totalorder %s30, 1
          %s6245 = scalar_select %p6244, %s30, 1
          %p6246 = scmp.lt.s32.totalorder %s31, 1
          %s6247 = scalar_select %p6246, %s31, 1
          %s6248 = smul.addr %s6245, 2
          %s6249 = sadd.s32 %s6247, %s6248
          %s6250 = smul.addr %s6249, 8
          %s6251 = scalar_lea.vmem %s13, %s6250
        $region163: #{re_forward.5} parent=158 // pred_fallthru
          _
      $region159: #{re_forward.5} parent=5 // pred_fallthru
        _
    $region6: #{re_forward.5} parent=1 // loop_footer
      %s23 = sadd.s32 1, %s19
    $region7: #{re_forward.5} parent=1 // loop_footer_branch
      %18 = sbr.rel target = $region3
    $region8: #{re_forward.5} parent=1 // loop_exit
      _

</llo_original>
